<compile_context>
chip_gen: v6e
topology: v6e:2x2x1
jax: 0.10.0
libtpu: 0.0.40
codegen_flags: <defaults>
</compile_context>

<pallas_src>
import numpy as np
import jax
import jax.numpy as jnp
from jax import lax
from jax.experimental import pallas as pl
from jax.experimental.pallas import tpu as pltpu

EPS = 1e-5  # nn.InstanceNorm3d default eps (affine=False, track_running_stats=False)


def make_resnet_block_kernel(C, P, L, base, taps1, taps2, ring_shifts, n_valid):
    """Fully fused ResnetBlock kernel for one batch element.

    Layout: channels on sublanes, flattened padded spatial volume on lanes.
      xp_ref   : (C, P)   reflect-padded input, flat spatial coords
      vmask_ref: (1, L)   1.0 where a window lane is a real output voxel
      rmask_ref: (6, P)   the six 1-deep reflect-pad ring planes for stage 2
      w*_ref   : (C, 27C) packed conv taps, b*_ref: (C, 1) bias
      o_ref    : (C, L)   output window (valid voxels at j = d*Sd + h*Sh + w)
      col_ref  : (27C, L) im2col scratch (reused by both convs)
      y_ref    : (C, P)   stage-1 output placed back in the padded frame
    """
    inv_n = 1.0 / float(n_valid)

    def kernel(xp_ref, vmask_ref, rmask_ref, w1_ref, b1_ref, w2_ref, b2_ref,
               o_ref, col_ref, y_ref):
        vm = vmask_ref[...]                                     # (1, L) lane-dense

        def conv_instnorm(src_ref, taps, w_ref, b_ref):
            # im2col: 27 static shifted (C, L) lane-windows stacked on sublanes.
            for t, off in enumerate(taps):
                col_ref[t * C:(t + 1) * C, :] = src_ref[:, off:off + L]
            # single K = 27*C matmul on the MXU, default precision, f32 accum.
            z = jnp.dot(w_ref[...], col_ref[...],
                        preferred_element_type=jnp.float32) + b_ref[...]
            # masked instance norm over the real voxels (lane reductions -> XLU)
            mu = jnp.sum(z * vm, axis=1, keepdims=True) * inv_n
            zc = z - mu
            var = jnp.sum(zc * zc * vm, axis=1, keepdims=True) * inv_n
            return zc * lax.rsqrt(var + EPS)                    # (C, L)

        # ---- stage 1: dilated conv + InstanceNorm + ReLU -------------------
        y1 = jnp.maximum(conv_instnorm(xp_ref, taps1, w1_ref, b1_ref), 0.0)

        # ---- ReflectionPad3d(1) of y1, done in-place in the padded frame ----
        # Place y1 at its natural padded coordinates, then fill the 1-deep ring
        # around the valid region with reflected values (6 static masked shifts;
        # garbage elsewhere is zeroed so no NaNs can reach later reductions).
        y_ref[...] = jnp.zeros_like(y_ref)
        y_ref[:, base:base + L] = y1
        yv = y_ref[...]
        for k, shift in enumerate(ring_shifts):                 # 6 static fills
            m = rmask_ref[k:k + 1, :]                           # (1, P) lane-dense
            yv = yv * (1.0 - m) + jnp.roll(yv, shift, axis=1) * m
        y_ref[...] = yv

        # ---- stage 2: dilation-1 conv + InstanceNorm + residual ------------
        y2 = conv_instnorm(y_ref, taps2, w2_ref, b2_ref)
        # valid voxels of the padded input are exactly x -> residual for free.
        o_ref[...] = y2 + xp_ref[:, base:base + L]

    return kernel


def resnet_block_forward(x, w1, b1, w2, b2, dilation):
    """ResnetBlock.forward.  x: (N, C, D, H, W); w*: (C, C, 3, 3, 3); b*: (C,)."""
    N, C, D, H, W = x.shape
    dl = int(dilation)
    assert dl >= 1 and min(D, H, W) > dl, "reflect pad needs dilation < spatial dims"

    Dp, Hp, Wp = D + 2 * dl, H + 2 * dl, W + 2 * dl
    Sd, Sh = Hp * Wp, Wp                      # flat strides of the padded frame
    P = Dp * Hp * Wp                          # flat padded volume
    L = (D - 1) * Sd + (H - 1) * Sh + W       # flat output-window length
    base = dl * (Sd + Sh + 1)                 # flat coordinate of voxel (0,0,0)

    # static tap offsets: conv == 27 shifted lane windows of the flat volume
    taps1 = tuple(dl * (kd * Sd + kh * Sh + kw)
                  for kd in range(3) for kh in range(3) for kw in range(3))
    taps2 = tuple((dl - 1) * (Sd + Sh + 1) + kd * Sd + kh * Sh + kw
                  for kd in range(3) for kh in range(3) for kw in range(3))

    # host-side static masks (lane-dense)
    q = np.arange(P, dtype=np.int64)
    dd, hh, ww = q // Sd, (q % Sd) // Sh, q % Sh
    jd, jh, jw = dd[base:base + L], hh[base:base + L], ww[base:base + L]
    valid = ((jd >= dl) & (jd < dl + D) & (jh >= dl) & (jh < dl + H) &
             (jw >= dl) & (jw < dl + W))
    vmask = jnp.asarray(valid.astype(np.float32)[None, :])           # (1, L)
    rings = np.stack([dd == dl - 1, dd == dl + D,
                      hh == dl - 1, hh == dl + H,
                      ww == dl - 1, ww == dl + W]).astype(np.float32)
    rmask = jnp.asarray(rings)                                        # (6, P)
    # reflect source is 2 steps inside along the ring's axis
    ring_shifts = (-2 * Sd, 2 * Sd, -2 * Sh, 2 * Sh, -2, 2)

    # PyTorch (Co, Ci, kd, kh, kw) -> (Co, 27*Ci), rows ordered like the im2col
    def pack_w(w):
        return (jnp.transpose(w, (2, 3, 4, 1, 0))
                .reshape(27 * C, C).T.astype(jnp.float32))

    # the only pre-kernel glue: one reflect pad + flatten (already NCDHW)
    xpf = jnp.pad(x.astype(jnp.float32),
                  ((0, 0), (0, 0), (dl, dl), (dl, dl), (dl, dl)),
                  mode="reflect").reshape(N, C, P)

    kernel = make_resnet_block_kernel(C, P, L, base, taps1, taps2,
                                      ring_shifts, D * H * W)

    out_win = pl.pallas_call(
        kernel,
        grid=(N,),
        in_specs=[
            pl.BlockSpec((None, C, P), lambda n: (n, 0, 0)),    # padded x (per batch)
            pl.BlockSpec((1, L), lambda n: (0, 0)),             # valid-voxel mask
            pl.BlockSpec((6, P), lambda n: (0, 0)),             # reflect-ring masks
            pl.BlockSpec((C, 27 * C), lambda n: (0, 0)),        # conv1 weights
            pl.BlockSpec((C, 1), lambda n: (0, 0)),             # conv1 bias
            pl.BlockSpec((C, 27 * C), lambda n: (0, 0)),        # conv2 weights
            pl.BlockSpec((C, 1), lambda n: (0, 0)),             # conv2 bias
        ],
        out_specs=pl.BlockSpec((None, C, L), lambda n: (n, 0, 0)),
        out_shape=jax.ShapeDtypeStruct((N, C, L), jnp.float32),
        scratch_shapes=[pltpu.VMEM((27 * C, L), jnp.float32),   # im2col buffer
                        pltpu.VMEM((C, P), jnp.float32)],       # padded intermediate
        compiler_params=pltpu.CompilerParams(dimension_semantics=("parallel",)),
    )(xpf, vmask, rmask,
      pack_w(w1), b1.reshape(C, 1).astype(jnp.float32),
      pack_w(w2), b2.reshape(C, 1).astype(jnp.float32))

    # post-kernel glue: window index of voxel (d,h,w) is d*Sd + h*Sh + w
    out_full = jnp.pad(out_win, ((0, 0), (0, 0), (0, D * Sd - L)))
    return out_full.reshape(N, C, D, Hp, Wp)[:, :, :, :H, :W]


def resnet_block_reference(x, w1, b1, w2, b2, dilation):
    """Pure-JAX (XLA, f32 HIGHEST) reference for verification."""
    xt = jnp.transpose(x, (0, 2, 3, 4, 1)).astype(jnp.float32)   # NDHWC
    w1d = jnp.transpose(w1, (2, 3, 4, 1, 0))
    w2d = jnp.transpose(w2, (2, 3, 4, 1, 0))

    def conv(xp, w, rd):
        return lax.conv_general_dilated(
            xp, w, window_strides=(1, 1, 1), padding="VALID",
            rhs_dilation=(rd, rd, rd),
            dimension_numbers=("NDHWC", "DHWIO", "NDHWC"),
            precision=lax.Precision.HIGHEST,
            preferred_element_type=jnp.float32)

    def inorm(y):
        m = jnp.mean(y, axis=(1, 2, 3), keepdims=True)
        v = jnp.mean((y - m) ** 2, axis=(1, 2, 3), keepdims=True)
        return (y - m) * lax.rsqrt(v + EPS)

    rp = lambda a, p: jnp.pad(a, ((0, 0), (p, p), (p, p), (p, p), (0, 0)),
                              mode="reflect")
    y = conv(rp(xt, dilation), w1d, dilation) + b1
    y = jnp.maximum(inorm(y), 0.0)
    y = conv(rp(y, 1), w2d, 1) + b2
    out = xt + inorm(y)
    return jnp.transpose(out, (0, 4, 1, 2, 3))


if __name__ == "__main__":
    # Small shapes consistent with ResnetBlock(dim, dilation=2) on 3-D volumes.
    N, C, D, H, W = 2, 8, 8, 8, 8
    dilation = 2                       # EdgeGenerator uses ResnetBlock(dim, 2, ...)

    key = jax.random.PRNGKey(0)
    kx, k1, k2, kb1, kb2 = jax.random.split(key, 5)
    x = jax.random.normal(kx, (N, C, D, H, W), jnp.float32)
    # init_weights('normal', gain=0.02) style synthetic parameters
    w1 = 0.02 * jax.random.normal(k1, (C, C, 3, 3, 3), jnp.float32)
    w2 = 0.02 * jax.random.normal(k2, (C, C, 3, 3, 3), jnp.float32)
    b1 = 0.01 * jax.random.normal(kb1, (C,), jnp.float32)
    b2 = 0.01 * jax.random.normal(kb2, (C,), jnp.float32)

    fwd = jax.jit(resnet_block_forward, static_argnums=5)
    out = jax.block_until_ready(fwd(x, w1, b1, w2, b2, dilation))
    ref = jax.block_until_ready(resnet_block_reference(x, w1, b1, w2, b2, dilation))

    assert out.shape == x.shape and out.dtype == jnp.float32
    err = float(jnp.max(jnp.abs(out - ref)))
    # kernel matmuls run at default MXU precision vs an f32-HIGHEST reference
    assert jnp.allclose(out, ref, atol=2e-2, rtol=2e-2), err
    print("KERNEL_OK")
</pallas_src>

<mosaic_0001>
module attributes {stable_mosaic.version = 11 : i64} {
  func.func @kernel(%arg0: i32, %arg1: memref<1x8x1728xf32, #tpu.memory_space<vmem>>, %arg2: memref<1x1100xf32, #tpu.memory_space<vmem>>, %arg3: memref<6x1728xf32, #tpu.memory_space<vmem>>, %arg4: memref<8x216xf32, #tpu.memory_space<vmem>>, %arg5: memref<8x1xf32, #tpu.memory_space<vmem>>, %arg6: memref<8x216xf32, #tpu.memory_space<vmem>>, %arg7: memref<8x1xf32, #tpu.memory_space<vmem>>, %arg8: memref<1x8x1100xf32, #tpu.memory_space<vmem>>, %arg9: memref<216x1100xf32, #tpu.memory_space<vmem>>, %arg10: memref<8x1728xf32, #tpu.memory_space<vmem>>) attributes {dimension_semantics = [#tpu.dimension_semantics<parallel>], iteration_bounds = array<i64: 2>, scalar_prefetch = 0 : i64, scratch_operands = 2 : i64, tpu.core_type = #tpu.core_type<tc>, window_params = [{transform_indices = @transform_0, window_bounds = array<i64: 1, 8, 1728>}, {pipeline_mode = #tpu.pipeline_mode<synchronous>, transform_indices = @transform_1, window_bounds = array<i64: 1, 1100>}, {pipeline_mode = #tpu.pipeline_mode<synchronous>, transform_indices = @transform_2, window_bounds = array<i64: 6, 1728>}, {pipeline_mode = #tpu.pipeline_mode<synchronous>, transform_indices = @transform_3, window_bounds = array<i64: 8, 216>}, {pipeline_mode = #tpu.pipeline_mode<synchronous>, transform_indices = @transform_4, window_bounds = array<i64: 8, 1>}, {pipeline_mode = #tpu.pipeline_mode<synchronous>, transform_indices = @transform_5, window_bounds = array<i64: 8, 216>}, {pipeline_mode = #tpu.pipeline_mode<synchronous>, transform_indices = @transform_6, window_bounds = array<i64: 8, 1>}, {transform_indices = @transform_7, window_bounds = array<i64: 1, 8, 1100>}]} {
    %c0 = arith.constant 0 : index
    %c0_0 = arith.constant 0 : index
    %0 = vector.load %arg2[%c0, %c0_0] : memref<1x1100xf32, #tpu.memory_space<vmem>>, vector<1x1100xf32>
    %c0_1 = arith.constant 0 : index
    %c0_2 = arith.constant 0 : index
    %c0_3 = arith.constant 0 : index
    %1 = vector.load %arg1[%c0_1, %c0_2, %c0_3] : memref<1x8x1728xf32, #tpu.memory_space<vmem>>, vector<1x8x1100xf32>
    %2 = vector.shape_cast %1 : vector<1x8x1100xf32> to vector<8x1100xf32>
    %c0_4 = arith.constant 0 : index
    %c0_5 = arith.constant 0 : index
    %3 = vector.load %arg9[%c0_4, %c0_5] : memref<216x1100xf32, #tpu.memory_space<vmem>>, vector<8x1100xf32>
    tpu.vector_store %arg9[%c0_4, %c0_5], %2 {strides = array<i32>} : memref<216x1100xf32, #tpu.memory_space<vmem>>, vector<8x1100xf32>,
    %c0_6 = arith.constant 0 : index
    %c0_7 = arith.constant 0 : index
    %c2 = arith.constant 2 : index
    %4 = vector.load %arg1[%c0_6, %c0_7, %c2] : memref<1x8x1728xf32, #tpu.memory_space<vmem>>, vector<1x8x1100xf32>
    %5 = vector.shape_cast %4 : vector<1x8x1100xf32> to vector<8x1100xf32>
    %c8 = arith.constant 8 : index
    %c0_8 = arith.constant 0 : index
    %6 = vector.load %arg9[%c8, %c0_8] : memref<216x1100xf32, #tpu.memory_space<vmem>>, vector<8x1100xf32>
    tpu.vector_store %arg9[%c8, %c0_8], %5 {strides = array<i32>} : memref<216x1100xf32, #tpu.memory_space<vmem>>, vector<8x1100xf32>,
    %c0_9 = arith.constant 0 : index
    %c0_10 = arith.constant 0 : index
    %c4 = arith.constant 4 : index
    %7 = vector.load %arg1[%c0_9, %c0_10, %c4] : memref<1x8x1728xf32, #tpu.memory_space<vmem>>, vector<1x8x1100xf32>
    %8 = vector.shape_cast %7 : vector<1x8x1100xf32> to vector<8x1100xf32>
    %c16 = arith.constant 16 : index
    %c0_11 = arith.constant 0 : index
    %9 = vector.load %arg9[%c16, %c0_11] : memref<216x1100xf32, #tpu.memory_space<vmem>>, vector<8x1100xf32>
    tpu.vector_store %arg9[%c16, %c0_11], %8 {strides = array<i32>} : memref<216x1100xf32, #tpu.memory_space<vmem>>, vector<8x1100xf32>,
    %c0_12 = arith.constant 0 : index
    %c0_13 = arith.constant 0 : index
    %c24 = arith.constant 24 : index
    %10 = vector.load %arg1[%c0_12, %c0_13, %c24] : memref<1x8x1728xf32, #tpu.memory_space<vmem>>, vector<1x8x1100xf32>
    %11 = vector.shape_cast %10 : vector<1x8x1100xf32> to vector<8x1100xf32>
    %c24_14 = arith.constant 24 : index
    %c0_15 = arith.constant 0 : index
    %12 = vector.load %arg9[%c24_14, %c0_15] : memref<216x1100xf32, #tpu.memory_space<vmem>>, vector<8x1100xf32>
    tpu.vector_store %arg9[%c24_14, %c0_15], %11 {strides = array<i32>} : memref<216x1100xf32, #tpu.memory_space<vmem>>, vector<8x1100xf32>,
    %c0_16 = arith.constant 0 : index
    %c0_17 = arith.constant 0 : index
    %c26 = arith.constant 26 : index
    %13 = vector.load %arg1[%c0_16, %c0_17, %c26] : memref<1x8x1728xf32, #tpu.memory_space<vmem>>, vector<1x8x1100xf32>
    %14 = vector.shape_cast %13 : vector<1x8x1100xf32> to vector<8x1100xf32>
    %c32 = arith.constant 32 : index
    %c0_18 = arith.constant 0 : index
    %15 = vector.load %arg9[%c32, %c0_18] : memref<216x1100xf32, #tpu.memory_space<vmem>>, vector<8x1100xf32>
    tpu.vector_store %arg9[%c32, %c0_18], %14 {strides = array<i32>} : memref<216x1100xf32, #tpu.memory_space<vmem>>, vector<8x1100xf32>,
    %c0_19 = arith.constant 0 : index
    %c0_20 = arith.constant 0 : index
    %c28 = arith.constant 28 : index
    %16 = vector.load %arg1[%c0_19, %c0_20, %c28] : memref<1x8x1728xf32, #tpu.memory_space<vmem>>, vector<1x8x1100xf32>
    %17 = vector.shape_cast %16 : vector<1x8x1100xf32> to vector<8x1100xf32>
    %c40 = arith.constant 40 : index
    %c0_21 = arith.constant 0 : index
    %18 = vector.load %arg9[%c40, %c0_21] : memref<216x1100xf32, #tpu.memory_space<vmem>>, vector<8x1100xf32>
    tpu.vector_store %arg9[%c40, %c0_21], %17 {strides = array<i32>} : memref<216x1100xf32, #tpu.memory_space<vmem>>, vector<8x1100xf32>,
    %c0_22 = arith.constant 0 : index
    %c0_23 = arith.constant 0 : index
    %c48 = arith.constant 48 : index
    %19 = vector.load %arg1[%c0_22, %c0_23, %c48] : memref<1x8x1728xf32, #tpu.memory_space<vmem>>, vector<1x8x1100xf32>
    %20 = vector.shape_cast %19 : vector<1x8x1100xf32> to vector<8x1100xf32>
    %c48_24 = arith.constant 48 : index
    %c0_25 = arith.constant 0 : index
    %21 = vector.load %arg9[%c48_24, %c0_25] : memref<216x1100xf32, #tpu.memory_space<vmem>>, vector<8x1100xf32>
    tpu.vector_store %arg9[%c48_24, %c0_25], %20 {strides = array<i32>} : memref<216x1100xf32, #tpu.memory_space<vmem>>, vector<8x1100xf32>,
    %c0_26 = arith.constant 0 : index
    %c0_27 = arith.constant 0 : index
    %c50 = arith.constant 50 : index
    %22 = vector.load %arg1[%c0_26, %c0_27, %c50] : memref<1x8x1728xf32, #tpu.memory_space<vmem>>, vector<1x8x1100xf32>
    %23 = vector.shape_cast %22 : vector<1x8x1100xf32> to vector<8x1100xf32>
    %c56 = arith.constant 56 : index
    %c0_28 = arith.constant 0 : index
    %24 = vector.load %arg9[%c56, %c0_28] : memref<216x1100xf32, #tpu.memory_space<vmem>>, vector<8x1100xf32>
    tpu.vector_store %arg9[%c56, %c0_28], %23 {strides = array<i32>} : memref<216x1100xf32, #tpu.memory_space<vmem>>, vector<8x1100xf32>,
    %c0_29 = arith.constant 0 : index
    %c0_30 = arith.constant 0 : index
    %c52 = arith.constant 52 : index
    %25 = vector.load %arg1[%c0_29, %c0_30, %c52] : memref<1x8x1728xf32, #tpu.memory_space<vmem>>, vector<1x8x1100xf32>
    %26 = vector.shape_cast %25 : vector<1x8x1100xf32> to vector<8x1100xf32>
    %c64 = arith.constant 64 : index
    %c0_31 = arith.constant 0 : index
    %27 = vector.load %arg9[%c64, %c0_31] : memref<216x1100xf32, #tpu.memory_space<vmem>>, vector<8x1100xf32>
    tpu.vector_store %arg9[%c64, %c0_31], %26 {strides = array<i32>} : memref<216x1100xf32, #tpu.memory_space<vmem>>, vector<8x1100xf32>,
    %c0_32 = arith.constant 0 : index
    %c0_33 = arith.constant 0 : index
    %c288 = arith.constant 288 : index
    %28 = vector.load %arg1[%c0_32, %c0_33, %c288] : memref<1x8x1728xf32, #tpu.memory_space<vmem>>, vector<1x8x1100xf32>
    %29 = vector.shape_cast %28 : vector<1x8x1100xf32> to vector<8x1100xf32>
    %c72 = arith.constant 72 : index
    %c0_34 = arith.constant 0 : index
    %30 = vector.load %arg9[%c72, %c0_34] : memref<216x1100xf32, #tpu.memory_space<vmem>>, vector<8x1100xf32>
    tpu.vector_store %arg9[%c72, %c0_34], %29 {strides = array<i32>} : memref<216x1100xf32, #tpu.memory_space<vmem>>, vector<8x1100xf32>,
    %c0_35 = arith.constant 0 : index
    %c0_36 = arith.constant 0 : index
    %c290 = arith.constant 290 : index
    %31 = vector.load %arg1[%c0_35, %c0_36, %c290] : memref<1x8x1728xf32, #tpu.memory_space<vmem>>, vector<1x8x1100xf32>
    %32 = vector.shape_cast %31 : vector<1x8x1100xf32> to vector<8x1100xf32>
    %c80 = arith.constant 80 : index
    %c0_37 = arith.constant 0 : index
    %33 = vector.load %arg9[%c80, %c0_37] : memref<216x1100xf32, #tpu.memory_space<vmem>>, vector<8x1100xf32>
    tpu.vector_store %arg9[%c80, %c0_37], %32 {strides = array<i32>} : memref<216x1100xf32, #tpu.memory_space<vmem>>, vector<8x1100xf32>,
    %c0_38 = arith.constant 0 : index
    %c0_39 = arith.constant 0 : index
    %c292 = arith.constant 292 : index
    %34 = vector.load %arg1[%c0_38, %c0_39, %c292] : memref<1x8x1728xf32, #tpu.memory_space<vmem>>, vector<1x8x1100xf32>
    %35 = vector.shape_cast %34 : vector<1x8x1100xf32> to vector<8x1100xf32>
    %c88 = arith.constant 88 : index
    %c0_40 = arith.constant 0 : index
    %36 = vector.load %arg9[%c88, %c0_40] : memref<216x1100xf32, #tpu.memory_space<vmem>>, vector<8x1100xf32>
    tpu.vector_store %arg9[%c88, %c0_40], %35 {strides = array<i32>} : memref<216x1100xf32, #tpu.memory_space<vmem>>, vector<8x1100xf32>,
    %c0_41 = arith.constant 0 : index
    %c0_42 = arith.constant 0 : index
    %c312 = arith.constant 312 : index
    %37 = vector.load %arg1[%c0_41, %c0_42, %c312] : memref<1x8x1728xf32, #tpu.memory_space<vmem>>, vector<1x8x1100xf32>
    %38 = vector.shape_cast %37 : vector<1x8x1100xf32> to vector<8x1100xf32>
    %c96 = arith.constant 96 : index
    %c0_43 = arith.constant 0 : index
    %39 = vector.load %arg9[%c96, %c0_43] : memref<216x1100xf32, #tpu.memory_space<vmem>>, vector<8x1100xf32>
    tpu.vector_store %arg9[%c96, %c0_43], %38 {strides = array<i32>} : memref<216x1100xf32, #tpu.memory_space<vmem>>, vector<8x1100xf32>,
    %c0_44 = arith.constant 0 : index
    %c0_45 = arith.constant 0 : index
    %c314 = arith.constant 314 : index
    %40 = vector.load %arg1[%c0_44, %c0_45, %c314] : memref<1x8x1728xf32, #tpu.memory_space<vmem>>, vector<1x8x1100xf32>
    %41 = vector.shape_cast %40 : vector<1x8x1100xf32> to vector<8x1100xf32>
    %c104 = arith.constant 104 : index
    %c0_46 = arith.constant 0 : index
    %42 = vector.load %arg9[%c104, %c0_46] : memref<216x1100xf32, #tpu.memory_space<vmem>>, vector<8x1100xf32>
    tpu.vector_store %arg9[%c104, %c0_46], %41 {strides = array<i32>} : memref<216x1100xf32, #tpu.memory_space<vmem>>, vector<8x1100xf32>,
    %c0_47 = arith.constant 0 : index
    %c0_48 = arith.constant 0 : index
    %c316 = arith.constant 316 : index
    %43 = vector.load %arg1[%c0_47, %c0_48, %c316] : memref<1x8x1728xf32, #tpu.memory_space<vmem>>, vector<1x8x1100xf32>
    %44 = vector.shape_cast %43 : vector<1x8x1100xf32> to vector<8x1100xf32>
    %c112 = arith.constant 112 : index
    %c0_49 = arith.constant 0 : index
    %45 = vector.load %arg9[%c112, %c0_49] : memref<216x1100xf32, #tpu.memory_space<vmem>>, vector<8x1100xf32>
    tpu.vector_store %arg9[%c112, %c0_49], %44 {strides = array<i32>} : memref<216x1100xf32, #tpu.memory_space<vmem>>, vector<8x1100xf32>,
    %c0_50 = arith.constant 0 : index
    %c0_51 = arith.constant 0 : index
    %c336 = arith.constant 336 : index
    %46 = vector.load %arg1[%c0_50, %c0_51, %c336] : memref<1x8x1728xf32, #tpu.memory_space<vmem>>, vector<1x8x1100xf32>
    %47 = vector.shape_cast %46 : vector<1x8x1100xf32> to vector<8x1100xf32>
    %c120 = arith.constant 120 : index
    %c0_52 = arith.constant 0 : index
    %48 = vector.load %arg9[%c120, %c0_52] : memref<216x1100xf32, #tpu.memory_space<vmem>>, vector<8x1100xf32>
    tpu.vector_store %arg9[%c120, %c0_52], %47 {strides = array<i32>} : memref<216x1100xf32, #tpu.memory_space<vmem>>, vector<8x1100xf32>,
    %c0_53 = arith.constant 0 : index
    %c0_54 = arith.constant 0 : index
    %c338 = arith.constant 338 : index
    %49 = vector.load %arg1[%c0_53, %c0_54, %c338] : memref<1x8x1728xf32, #tpu.memory_space<vmem>>, vector<1x8x1100xf32>
    %50 = vector.shape_cast %49 : vector<1x8x1100xf32> to vector<8x1100xf32>
    %c128 = arith.constant 128 : index
    %c0_55 = arith.constant 0 : index
    %51 = vector.load %arg9[%c128, %c0_55] : memref<216x1100xf32, #tpu.memory_space<vmem>>, vector<8x1100xf32>
    tpu.vector_store %arg9[%c128, %c0_55], %50 {strides = array<i32>} : memref<216x1100xf32, #tpu.memory_space<vmem>>, vector<8x1100xf32>,
    %c0_56 = arith.constant 0 : index
    %c0_57 = arith.constant 0 : index
    %c340 = arith.constant 340 : index
    %52 = vector.load %arg1[%c0_56, %c0_57, %c340] : memref<1x8x1728xf32, #tpu.memory_space<vmem>>, vector<1x8x1100xf32>
    %53 = vector.shape_cast %52 : vector<1x8x1100xf32> to vector<8x1100xf32>
    %c136 = arith.constant 136 : index
    %c0_58 = arith.constant 0 : index
    %54 = vector.load %arg9[%c136, %c0_58] : memref<216x1100xf32, #tpu.memory_space<vmem>>, vector<8x1100xf32>
    tpu.vector_store %arg9[%c136, %c0_58], %53 {strides = array<i32>} : memref<216x1100xf32, #tpu.memory_space<vmem>>, vector<8x1100xf32>,
    %c0_59 = arith.constant 0 : index
    %c0_60 = arith.constant 0 : index
    %c576 = arith.constant 576 : index
    %55 = vector.load %arg1[%c0_59, %c0_60, %c576] : memref<1x8x1728xf32, #tpu.memory_space<vmem>>, vector<1x8x1100xf32>
    %56 = vector.shape_cast %55 : vector<1x8x1100xf32> to vector<8x1100xf32>
    %c144 = arith.constant 144 : index
    %c0_61 = arith.constant 0 : index
    %57 = vector.load %arg9[%c144, %c0_61] : memref<216x1100xf32, #tpu.memory_space<vmem>>, vector<8x1100xf32>
    tpu.vector_store %arg9[%c144, %c0_61], %56 {strides = array<i32>} : memref<216x1100xf32, #tpu.memory_space<vmem>>, vector<8x1100xf32>,
    %c0_62 = arith.constant 0 : index
    %c0_63 = arith.constant 0 : index
    %c578 = arith.constant 578 : index
    %58 = vector.load %arg1[%c0_62, %c0_63, %c578] : memref<1x8x1728xf32, #tpu.memory_space<vmem>>, vector<1x8x1100xf32>
    %59 = vector.shape_cast %58 : vector<1x8x1100xf32> to vector<8x1100xf32>
    %c152 = arith.constant 152 : index
    %c0_64 = arith.constant 0 : index
    %60 = vector.load %arg9[%c152, %c0_64] : memref<216x1100xf32, #tpu.memory_space<vmem>>, vector<8x1100xf32>
    tpu.vector_store %arg9[%c152, %c0_64], %59 {strides = array<i32>} : memref<216x1100xf32, #tpu.memory_space<vmem>>, vector<8x1100xf32>,
    %c0_65 = arith.constant 0 : index
    %c0_66 = arith.constant 0 : index
    %c580 = arith.constant 580 : index
    %61 = vector.load %arg1[%c0_65, %c0_66, %c580] : memref<1x8x1728xf32, #tpu.memory_space<vmem>>, vector<1x8x1100xf32>
    %62 = vector.shape_cast %61 : vector<1x8x1100xf32> to vector<8x1100xf32>
    %c160 = arith.constant 160 : index
    %c0_67 = arith.constant 0 : index
    %63 = vector.load %arg9[%c160, %c0_67] : memref<216x1100xf32, #tpu.memory_space<vmem>>, vector<8x1100xf32>
    tpu.vector_store %arg9[%c160, %c0_67], %62 {strides = array<i32>} : memref<216x1100xf32, #tpu.memory_space<vmem>>, vector<8x1100xf32>,
    %c0_68 = arith.constant 0 : index
    %c0_69 = arith.constant 0 : index
    %c600 = arith.constant 600 : index
    %64 = vector.load %arg1[%c0_68, %c0_69, %c600] : memref<1x8x1728xf32, #tpu.memory_space<vmem>>, vector<1x8x1100xf32>
    %65 = vector.shape_cast %64 : vector<1x8x1100xf32> to vector<8x1100xf32>
    %c168 = arith.constant 168 : index
    %c0_70 = arith.constant 0 : index
    %66 = vector.load %arg9[%c168, %c0_70] : memref<216x1100xf32, #tpu.memory_space<vmem>>, vector<8x1100xf32>
    tpu.vector_store %arg9[%c168, %c0_70], %65 {strides = array<i32>} : memref<216x1100xf32, #tpu.memory_space<vmem>>, vector<8x1100xf32>,
    %c0_71 = arith.constant 0 : index
    %c0_72 = arith.constant 0 : index
    %c602 = arith.constant 602 : index
    %67 = vector.load %arg1[%c0_71, %c0_72, %c602] : memref<1x8x1728xf32, #tpu.memory_space<vmem>>, vector<1x8x1100xf32>
    %68 = vector.shape_cast %67 : vector<1x8x1100xf32> to vector<8x1100xf32>
    %c176 = arith.constant 176 : index
    %c0_73 = arith.constant 0 : index
    %69 = vector.load %arg9[%c176, %c0_73] : memref<216x1100xf32, #tpu.memory_space<vmem>>, vector<8x1100xf32>
    tpu.vector_store %arg9[%c176, %c0_73], %68 {strides = array<i32>} : memref<216x1100xf32, #tpu.memory_space<vmem>>, vector<8x1100xf32>,
    %c0_74 = arith.constant 0 : index
    %c0_75 = arith.constant 0 : index
    %c604 = arith.constant 604 : index
    %70 = vector.load %arg1[%c0_74, %c0_75, %c604] : memref<1x8x1728xf32, #tpu.memory_space<vmem>>, vector<1x8x1100xf32>
    %71 = vector.shape_cast %70 : vector<1x8x1100xf32> to vector<8x1100xf32>
    %c184 = arith.constant 184 : index
    %c0_76 = arith.constant 0 : index
    %72 = vector.load %arg9[%c184, %c0_76] : memref<216x1100xf32, #tpu.memory_space<vmem>>, vector<8x1100xf32>
    tpu.vector_store %arg9[%c184, %c0_76], %71 {strides = array<i32>} : memref<216x1100xf32, #tpu.memory_space<vmem>>, vector<8x1100xf32>,
    %c0_77 = arith.constant 0 : index
    %c0_78 = arith.constant 0 : index
    %c624 = arith.constant 624 : index
    %73 = vector.load %arg1[%c0_77, %c0_78, %c624] : memref<1x8x1728xf32, #tpu.memory_space<vmem>>, vector<1x8x1100xf32>
    %74 = vector.shape_cast %73 : vector<1x8x1100xf32> to vector<8x1100xf32>
    %c192 = arith.constant 192 : index
    %c0_79 = arith.constant 0 : index
    %75 = vector.load %arg9[%c192, %c0_79] : memref<216x1100xf32, #tpu.memory_space<vmem>>, vector<8x1100xf32>
    tpu.vector_store %arg9[%c192, %c0_79], %74 {strides = array<i32>} : memref<216x1100xf32, #tpu.memory_space<vmem>>, vector<8x1100xf32>,
    %c0_80 = arith.constant 0 : index
    %c0_81 = arith.constant 0 : index
    %c626 = arith.constant 626 : index
    %76 = vector.load %arg1[%c0_80, %c0_81, %c626] : memref<1x8x1728xf32, #tpu.memory_space<vmem>>, vector<1x8x1100xf32>
    %77 = vector.shape_cast %76 : vector<1x8x1100xf32> to vector<8x1100xf32>
    %c200 = arith.constant 200 : index
    %c0_82 = arith.constant 0 : index
    %78 = vector.load %arg9[%c200, %c0_82] : memref<216x1100xf32, #tpu.memory_space<vmem>>, vector<8x1100xf32>
    tpu.vector_store %arg9[%c200, %c0_82], %77 {strides = array<i32>} : memref<216x1100xf32, #tpu.memory_space<vmem>>, vector<8x1100xf32>,
    %c0_83 = arith.constant 0 : index
    %c0_84 = arith.constant 0 : index
    %c628 = arith.constant 628 : index
    %79 = vector.load %arg1[%c0_83, %c0_84, %c628] : memref<1x8x1728xf32, #tpu.memory_space<vmem>>, vector<1x8x1100xf32>
    %80 = vector.shape_cast %79 : vector<1x8x1100xf32> to vector<8x1100xf32>
    %c208 = arith.constant 208 : index
    %c0_85 = arith.constant 0 : index
    %81 = vector.load %arg9[%c208, %c0_85] : memref<216x1100xf32, #tpu.memory_space<vmem>>, vector<8x1100xf32>
    tpu.vector_store %arg9[%c208, %c0_85], %80 {strides = array<i32>} : memref<216x1100xf32, #tpu.memory_space<vmem>>, vector<8x1100xf32>,
    %c0_86 = arith.constant 0 : index
    %c0_87 = arith.constant 0 : index
    %82 = vector.load %arg4[%c0_86, %c0_87] : memref<8x216xf32, #tpu.memory_space<vmem>>, vector<8x216xf32>
    %c0_88 = arith.constant 0 : index
    %c0_89 = arith.constant 0 : index
    %83 = vector.load %arg9[%c0_88, %c0_89] : memref<216x1100xf32, #tpu.memory_space<vmem>>, vector<216x1100xf32>
    %cst = arith.constant dense<0.000000e+00> : vector<8x1100xf32>
    %84 = tpu.matmul %82, %83, %cst {dimension_numbers = #tpu.dot_dimension_numbers<[1], [0], [0], [1], [0, 0, 1, 1], [], []>} : vector<8x216xf32>, vector<216x1100xf32>, vector<8x1100xf32> -> vector<8x1100xf32>
    %c0_90 = arith.constant 0 : index
    %c0_91 = arith.constant 0 : index
    %85 = vector.load %arg5[%c0_90, %c0_91] : memref<8x1xf32, #tpu.memory_space<vmem>>, vector<8x1xf32>
    %86 = vector.broadcast %85 : vector<8x1xf32> to vector<8x1100xf32>
    %87 = arith.addf %84, %86 : vector<8x1100xf32>
    %88 = vector.broadcast %0 : vector<1x1100xf32> to vector<8x1100xf32>
    %89 = arith.mulf %87, %88 : vector<8x1100xf32>
    %cst_92 = arith.constant dense<0.000000e+00> : vector<8xf32>
    %90 = vector.multi_reduction <add>, %89, %cst_92 [1] : vector<8x1100xf32> to vector<8xf32>
    %91 = vector.shape_cast %90 : vector<8xf32> to vector<8x1xf32>
    %cst_93 = arith.constant 0.001953125 : f32
    %92 = vector.broadcast %cst_93 : f32 to vector<8x1xf32>
    %93 = arith.mulf %91, %92 : vector<8x1xf32>
    %94 = vector.broadcast %93 : vector<8x1xf32> to vector<8x1100xf32>
    %95 = arith.subf %87, %94 : vector<8x1100xf32>
    %96 = arith.mulf %95, %95 : vector<8x1100xf32>
    %97 = vector.broadcast %0 : vector<1x1100xf32> to vector<8x1100xf32>
    %98 = arith.mulf %96, %97 : vector<8x1100xf32>
    %cst_94 = arith.constant dense<0.000000e+00> : vector<8xf32>
    %99 = vector.multi_reduction <add>, %98, %cst_94 [1] : vector<8x1100xf32> to vector<8xf32>
    %100 = vector.shape_cast %99 : vector<8xf32> to vector<8x1xf32>
    %cst_95 = arith.constant 0.001953125 : f32
    %101 = vector.broadcast %cst_95 : f32 to vector<8x1xf32>
    %102 = arith.mulf %100, %101 : vector<8x1xf32>
    %cst_96 = arith.constant 9.99999974E-6 : f32
    %103 = vector.broadcast %cst_96 : f32 to vector<8x1xf32>
    %104 = arith.addf %102, %103 : vector<8x1xf32>
    %105 = math.rsqrt %104 : vector<8x1xf32>
    %106 = vector.broadcast %105 : vector<8x1xf32> to vector<8x1100xf32>
    %107 = arith.mulf %95, %106 : vector<8x1100xf32>
    %cst_97 = arith.constant 0.000000e+00 : f32
    %108 = vector.broadcast %cst_97 : f32 to vector<8x1100xf32>
    %109 = arith.maximumf %107, %108 : vector<8x1100xf32>
    %cst_98 = arith.constant 0.000000e+00 : f32
    %110 = vector.broadcast %cst_98 : f32 to vector<8x1728xf32>
    %c0_99 = arith.constant 0 : index
    %c0_100 = arith.constant 0 : index
    %111 = vector.load %arg10[%c0_99, %c0_100] : memref<8x1728xf32, #tpu.memory_space<vmem>>, vector<8x1728xf32>
    tpu.vector_store %arg10[%c0_99, %c0_100], %110 {strides = array<i32>} : memref<8x1728xf32, #tpu.memory_space<vmem>>, vector<8x1728xf32>,
    %c0_101 = arith.constant 0 : index
    %c314_102 = arith.constant 314 : index
    %112 = vector.load %arg10[%c0_101, %c314_102] : memref<8x1728xf32, #tpu.memory_space<vmem>>, vector<8x1100xf32>
    tpu.vector_store %arg10[%c0_101, %c314_102], %109 {strides = array<i32>} : memref<8x1728xf32, #tpu.memory_space<vmem>>, vector<8x1100xf32>,
    %c0_103 = arith.constant 0 : index
    %c0_104 = arith.constant 0 : index
    %113 = vector.load %arg10[%c0_103, %c0_104] : memref<8x1728xf32, #tpu.memory_space<vmem>>, vector<8x1728xf32>
    %c0_105 = arith.constant 0 : index
    %c0_106 = arith.constant 0 : index
    %114 = vector.load %arg3[%c0_105, %c0_106] : memref<6x1728xf32, #tpu.memory_space<vmem>>, vector<1x1728xf32>
    %cst_107 = arith.constant 1.000000e+00 : f32
    %115 = vector.broadcast %cst_107 : f32 to vector<1x1728xf32>
    %116 = arith.subf %115, %114 : vector<1x1728xf32>
    %117 = vector.broadcast %116 : vector<1x1728xf32> to vector<8x1728xf32>
    %118 = arith.mulf %113, %117 : vector<8x1728xf32>
    %119 = vector.extract_strided_slice %113 {offsets = [0, 288], sizes = [8, 1440], strides = [1, 1]} : vector<8x1728xf32> to vector<8x1440xf32>
    %120 = vector.extract_strided_slice %113 {offsets = [0, 0], sizes = [8, 288], strides = [1, 1]} : vector<8x1728xf32> to vector<8x288xf32>
    %121 = tpu.concatenate %119, %120 in 1 : vector<8x1440xf32>, vector<8x288xf32> -> vector<8x1728xf32>
    %122 = vector.broadcast %114 : vector<1x1728xf32> to vector<8x1728xf32>
    %123 = arith.mulf %121, %122 : vector<8x1728xf32>
    %124 = arith.addf %118, %123 : vector<8x1728xf32>
    %c1 = arith.constant 1 : index
    %c0_108 = arith.constant 0 : index
    %125 = vector.load %arg3[%c1, %c0_108] : memref<6x1728xf32, #tpu.memory_space<vmem>>, vector<1x1728xf32>
    %cst_109 = arith.constant 1.000000e+00 : f32
    %126 = vector.broadcast %cst_109 : f32 to vector<1x1728xf32>
    %127 = arith.subf %126, %125 : vector<1x1728xf32>
    %128 = vector.broadcast %127 : vector<1x1728xf32> to vector<8x1728xf32>
    %129 = arith.mulf %124, %128 : vector<8x1728xf32>
    %130 = vector.extract_strided_slice %124 {offsets = [0, 1440], sizes = [8, 288], strides = [1, 1]} : vector<8x1728xf32> to vector<8x288xf32>
    %131 = vector.extract_strided_slice %124 {offsets = [0, 0], sizes = [8, 1440], strides = [1, 1]} : vector<8x1728xf32> to vector<8x1440xf32>
    %132 = tpu.concatenate %130, %131 in 1 : vector<8x288xf32>, vector<8x1440xf32> -> vector<8x1728xf32>
    %133 = vector.broadcast %125 : vector<1x1728xf32> to vector<8x1728xf32>
    %134 = arith.mulf %132, %133 : vector<8x1728xf32>
    %135 = arith.addf %129, %134 : vector<8x1728xf32>
    %c2_110 = arith.constant 2 : index
    %c0_111 = arith.constant 0 : index
    %136 = vector.load %arg3[%c2_110, %c0_111] : memref<6x1728xf32, #tpu.memory_space<vmem>>, vector<1x1728xf32>
    %cst_112 = arith.constant 1.000000e+00 : f32
    %137 = vector.broadcast %cst_112 : f32 to vector<1x1728xf32>
    %138 = arith.subf %137, %136 : vector<1x1728xf32>
    %139 = vector.broadcast %138 : vector<1x1728xf32> to vector<8x1728xf32>
    %140 = arith.mulf %135, %139 : vector<8x1728xf32>
    %141 = vector.extract_strided_slice %135 {offsets = [0, 24], sizes = [8, 1704], strides = [1, 1]} : vector<8x1728xf32> to vector<8x1704xf32>
    %142 = vector.extract_strided_slice %135 {offsets = [0, 0], sizes = [8, 24], strides = [1, 1]} : vector<8x1728xf32> to vector<8x24xf32>
    %143 = tpu.concatenate %141, %142 in 1 : vector<8x1704xf32>, vector<8x24xf32> -> vector<8x1728xf32>
    %144 = vector.broadcast %136 : vector<1x1728xf32> to vector<8x1728xf32>
    %145 = arith.mulf %143, %144 : vector<8x1728xf32>
    %146 = arith.addf %140, %145 : vector<8x1728xf32>
    %c3 = arith.constant 3 : index
    %c0_113 = arith.constant 0 : index
    %147 = vector.load %arg3[%c3, %c0_113] : memref<6x1728xf32, #tpu.memory_space<vmem>>, vector<1x1728xf32>
    %cst_114 = arith.constant 1.000000e+00 : f32
    %148 = vector.broadcast %cst_114 : f32 to vector<1x1728xf32>
    %149 = arith.subf %148, %147 : vector<1x1728xf32>
    %150 = vector.broadcast %149 : vector<1x1728xf32> to vector<8x1728xf32>
    %151 = arith.mulf %146, %150 : vector<8x1728xf32>
    %152 = vector.extract_strided_slice %146 {offsets = [0, 1704], sizes = [8, 24], strides = [1, 1]} : vector<8x1728xf32> to vector<8x24xf32>
    %153 = vector.extract_strided_slice %146 {offsets = [0, 0], sizes = [8, 1704], strides = [1, 1]} : vector<8x1728xf32> to vector<8x1704xf32>
    %154 = tpu.concatenate %152, %153 in 1 : vector<8x24xf32>, vector<8x1704xf32> -> vector<8x1728xf32>
    %155 = vector.broadcast %147 : vector<1x1728xf32> to vector<8x1728xf32>
    %156 = arith.mulf %154, %155 : vector<8x1728xf32>
    %157 = arith.addf %151, %156 : vector<8x1728xf32>
    %c4_115 = arith.constant 4 : index
    %c0_116 = arith.constant 0 : index
    %158 = vector.load %arg3[%c4_115, %c0_116] : memref<6x1728xf32, #tpu.memory_space<vmem>>, vector<1x1728xf32>
    %cst_117 = arith.constant 1.000000e+00 : f32
    %159 = vector.broadcast %cst_117 : f32 to vector<1x1728xf32>
    %160 = arith.subf %159, %158 : vector<1x1728xf32>
    %161 = vector.broadcast %160 : vector<1x1728xf32> to vector<8x1728xf32>
    %162 = arith.mulf %157, %161 : vector<8x1728xf32>
    %163 = vector.extract_strided_slice %157 {offsets = [0, 2], sizes = [8, 1726], strides = [1, 1]} : vector<8x1728xf32> to vector<8x1726xf32>
    %164 = vector.extract_strided_slice %157 {offsets = [0, 0], sizes = [8, 2], strides = [1, 1]} : vector<8x1728xf32> to vector<8x2xf32>
    %165 = tpu.concatenate %163, %164 in 1 : vector<8x1726xf32>, vector<8x2xf32> -> vector<8x1728xf32>
    %166 = vector.broadcast %158 : vector<1x1728xf32> to vector<8x1728xf32>
    %167 = arith.mulf %165, %166 : vector<8x1728xf32>
    %168 = arith.addf %162, %167 : vector<8x1728xf32>
    %c5 = arith.constant 5 : index
    %c0_118 = arith.constant 0 : index
    %169 = vector.load %arg3[%c5, %c0_118] : memref<6x1728xf32, #tpu.memory_space<vmem>>, vector<1x1728xf32>
    %cst_119 = arith.constant 1.000000e+00 : f32
    %170 = vector.broadcast %cst_119 : f32 to vector<1x1728xf32>
    %171 = arith.subf %170, %169 : vector<1x1728xf32>
    %172 = vector.broadcast %171 : vector<1x1728xf32> to vector<8x1728xf32>
    %173 = arith.mulf %168, %172 : vector<8x1728xf32>
    %174 = vector.extract_strided_slice %168 {offsets = [0, 1726], sizes = [8, 2], strides = [1, 1]} : vector<8x1728xf32> to vector<8x2xf32>
    %175 = vector.extract_strided_slice %168 {offsets = [0, 0], sizes = [8, 1726], strides = [1, 1]} : vector<8x1728xf32> to vector<8x1726xf32>
    %176 = tpu.concatenate %174, %175 in 1 : vector<8x2xf32>, vector<8x1726xf32> -> vector<8x1728xf32>
    %177 = vector.broadcast %169 : vector<1x1728xf32> to vector<8x1728xf32>
    %178 = arith.mulf %176, %177 : vector<8x1728xf32>
    %179 = arith.addf %173, %178 : vector<8x1728xf32>
    %c0_120 = arith.constant 0 : index
    %c0_121 = arith.constant 0 : index
    %180 = vector.load %arg10[%c0_120, %c0_121] : memref<8x1728xf32, #tpu.memory_space<vmem>>, vector<8x1728xf32>
    tpu.vector_store %arg10[%c0_120, %c0_121], %179 {strides = array<i32>} : memref<8x1728xf32, #tpu.memory_space<vmem>>, vector<8x1728xf32>,
    %c0_122 = arith.constant 0 : index
    %c157 = arith.constant 157 : index
    %181 = vector.load %arg10[%c0_122, %c157] : memref<8x1728xf32, #tpu.memory_space<vmem>>, vector<8x1100xf32>
    %c0_123 = arith.constant 0 : index
    %c0_124 = arith.constant 0 : index
    %182 = vector.load %arg9[%c0_123, %c0_124] : memref<216x1100xf32, #tpu.memory_space<vmem>>, vector<8x1100xf32>
    tpu.vector_store %arg9[%c0_123, %c0_124], %181 {strides = array<i32>} : memref<216x1100xf32, #tpu.memory_space<vmem>>, vector<8x1100xf32>,
    %c0_125 = arith.constant 0 : index
    %c158 = arith.constant 158 : index
    %183 = vector.load %arg10[%c0_125, %c158] : memref<8x1728xf32, #tpu.memory_space<vmem>>, vector<8x1100xf32>
    %c8_126 = arith.constant 8 : index
    %c0_127 = arith.constant 0 : index
    %184 = vector.load %arg9[%c8_126, %c0_127] : memref<216x1100xf32, #tpu.memory_space<vmem>>, vector<8x1100xf32>
    tpu.vector_store %arg9[%c8_126, %c0_127], %183 {strides = array<i32>} : memref<216x1100xf32, #tpu.memory_space<vmem>>, vector<8x1100xf32>,
    %c0_128 = arith.constant 0 : index
    %c159 = arith.constant 159 : index
    %185 = vector.load %arg10[%c0_128, %c159] : memref<8x1728xf32, #tpu.memory_space<vmem>>, vector<8x1100xf32>
    %c16_129 = arith.constant 16 : index
    %c0_130 = arith.constant 0 : index
    %186 = vector.load %arg9[%c16_129, %c0_130] : memref<216x1100xf32, #tpu.memory_space<vmem>>, vector<8x1100xf32>
    tpu.vector_store %arg9[%c16_129, %c0_130], %185 {strides = array<i32>} : memref<216x1100xf32, #tpu.memory_space<vmem>>, vector<8x1100xf32>,
    %c0_131 = arith.constant 0 : index
    %c169 = arith.constant 169 : index
    %187 = vector.load %arg10[%c0_131, %c169] : memref<8x1728xf32, #tpu.memory_space<vmem>>, vector<8x1100xf32>
    %c24_132 = arith.constant 24 : index
    %c0_133 = arith.constant 0 : index
    %188 = vector.load %arg9[%c24_132, %c0_133] : memref<216x1100xf32, #tpu.memory_space<vmem>>, vector<8x1100xf32>
    tpu.vector_store %arg9[%c24_132, %c0_133], %187 {strides = array<i32>} : memref<216x1100xf32, #tpu.memory_space<vmem>>, vector<8x1100xf32>,
    %c0_134 = arith.constant 0 : index
    %c170 = arith.constant 170 : index
    %189 = vector.load %arg10[%c0_134, %c170] : memref<8x1728xf32, #tpu.memory_space<vmem>>, vector<8x1100xf32>
    %c32_135 = arith.constant 32 : index
    %c0_136 = arith.constant 0 : index
    %190 = vector.load %arg9[%c32_135, %c0_136] : memref<216x1100xf32, #tpu.memory_space<vmem>>, vector<8x1100xf32>
    tpu.vector_store %arg9[%c32_135, %c0_136], %189 {strides = array<i32>} : memref<216x1100xf32, #tpu.memory_space<vmem>>, vector<8x1100xf32>,
    %c0_137 = arith.constant 0 : index
    %c171 = arith.constant 171 : index
    %191 = vector.load %arg10[%c0_137, %c171] : memref<8x1728xf32, #tpu.memory_space<vmem>>, vector<8x1100xf32>
    %c40_138 = arith.constant 40 : index
    %c0_139 = arith.constant 0 : index
    %192 = vector.load %arg9[%c40_138, %c0_139] : memref<216x1100xf32, #tpu.memory_space<vmem>>, vector<8x1100xf32>
    tpu.vector_store %arg9[%c40_138, %c0_139], %191 {strides = array<i32>} : memref<216x1100xf32, #tpu.memory_space<vmem>>, vector<8x1100xf32>,
    %c0_140 = arith.constant 0 : index
    %c181 = arith.constant 181 : index
    %193 = vector.load %arg10[%c0_140, %c181] : memref<8x1728xf32, #tpu.memory_space<vmem>>, vector<8x1100xf32>
    %c48_141 = arith.constant 48 : index
    %c0_142 = arith.constant 0 : index
    %194 = vector.load %arg9[%c48_141, %c0_142] : memref<216x1100xf32, #tpu.memory_space<vmem>>, vector<8x1100xf32>
    tpu.vector_store %arg9[%c48_141, %c0_142], %193 {strides = array<i32>} : memref<216x1100xf32, #tpu.memory_space<vmem>>, vector<8x1100xf32>,
    %c0_143 = arith.constant 0 : index
    %c182 = arith.constant 182 : index
    %195 = vector.load %arg10[%c0_143, %c182] : memref<8x1728xf32, #tpu.memory_space<vmem>>, vector<8x1100xf32>
    %c56_144 = arith.constant 56 : index
    %c0_145 = arith.constant 0 : index
    %196 = vector.load %arg9[%c56_144, %c0_145] : memref<216x1100xf32, #tpu.memory_space<vmem>>, vector<8x1100xf32>
    tpu.vector_store %arg9[%c56_144, %c0_145], %195 {strides = array<i32>} : memref<216x1100xf32, #tpu.memory_space<vmem>>, vector<8x1100xf32>,
    %c0_146 = arith.constant 0 : index
    %c183 = arith.constant 183 : index
    %197 = vector.load %arg10[%c0_146, %c183] : memref<8x1728xf32, #tpu.memory_space<vmem>>, vector<8x1100xf32>
    %c64_147 = arith.constant 64 : index
    %c0_148 = arith.constant 0 : index
    %198 = vector.load %arg9[%c64_147, %c0_148] : memref<216x1100xf32, #tpu.memory_space<vmem>>, vector<8x1100xf32>
    tpu.vector_store %arg9[%c64_147, %c0_148], %197 {strides = array<i32>} : memref<216x1100xf32, #tpu.memory_space<vmem>>, vector<8x1100xf32>,
    %c0_149 = arith.constant 0 : index
    %c301 = arith.constant 301 : index
    %199 = vector.load %arg10[%c0_149, %c301] : memref<8x1728xf32, #tpu.memory_space<vmem>>, vector<8x1100xf32>
    %c72_150 = arith.constant 72 : index
    %c0_151 = arith.constant 0 : index
    %200 = vector.load %arg9[%c72_150, %c0_151] : memref<216x1100xf32, #tpu.memory_space<vmem>>, vector<8x1100xf32>
    tpu.vector_store %arg9[%c72_150, %c0_151], %199 {strides = array<i32>} : memref<216x1100xf32, #tpu.memory_space<vmem>>, vector<8x1100xf32>,
    %c0_152 = arith.constant 0 : index
    %c302 = arith.constant 302 : index
    %201 = vector.load %arg10[%c0_152, %c302] : memref<8x1728xf32, #tpu.memory_space<vmem>>, vector<8x1100xf32>
    %c80_153 = arith.constant 80 : index
    %c0_154 = arith.constant 0 : index
    %202 = vector.load %arg9[%c80_153, %c0_154] : memref<216x1100xf32, #tpu.memory_space<vmem>>, vector<8x1100xf32>
    tpu.vector_store %arg9[%c80_153, %c0_154], %201 {strides = array<i32>} : memref<216x1100xf32, #tpu.memory_space<vmem>>, vector<8x1100xf32>,
    %c0_155 = arith.constant 0 : index
    %c303 = arith.constant 303 : index
    %203 = vector.load %arg10[%c0_155, %c303] : memref<8x1728xf32, #tpu.memory_space<vmem>>, vector<8x1100xf32>
    %c88_156 = arith.constant 88 : index
    %c0_157 = arith.constant 0 : index
    %204 = vector.load %arg9[%c88_156, %c0_157] : memref<216x1100xf32, #tpu.memory_space<vmem>>, vector<8x1100xf32>
    tpu.vector_store %arg9[%c88_156, %c0_157], %203 {strides = array<i32>} : memref<216x1100xf32, #tpu.memory_space<vmem>>, vector<8x1100xf32>,
    %c0_158 = arith.constant 0 : index
    %c313 = arith.constant 313 : index
    %205 = vector.load %arg10[%c0_158, %c313] : memref<8x1728xf32, #tpu.memory_space<vmem>>, vector<8x1100xf32>
    %c96_159 = arith.constant 96 : index
    %c0_160 = arith.constant 0 : index
    %206 = vector.load %arg9[%c96_159, %c0_160] : memref<216x1100xf32, #tpu.memory_space<vmem>>, vector<8x1100xf32>
    tpu.vector_store %arg9[%c96_159, %c0_160], %205 {strides = array<i32>} : memref<216x1100xf32, #tpu.memory_space<vmem>>, vector<8x1100xf32>,
    %c0_161 = arith.constant 0 : index
    %c314_162 = arith.constant 314 : index
    %207 = vector.load %arg10[%c0_161, %c314_162] : memref<8x1728xf32, #tpu.memory_space<vmem>>, vector<8x1100xf32>
    %c104_163 = arith.constant 104 : index
    %c0_164 = arith.constant 0 : index
    %208 = vector.load %arg9[%c104_163, %c0_164] : memref<216x1100xf32, #tpu.memory_space<vmem>>, vector<8x1100xf32>
    tpu.vector_store %arg9[%c104_163, %c0_164], %207 {strides = array<i32>} : memref<216x1100xf32, #tpu.memory_space<vmem>>, vector<8x1100xf32>,
    %c0_165 = arith.constant 0 : index
    %c315 = arith.constant 315 : index
    %209 = vector.load %arg10[%c0_165, %c315] : memref<8x1728xf32, #tpu.memory_space<vmem>>, vector<8x1100xf32>
    %c112_166 = arith.constant 112 : index
    %c0_167 = arith.constant 0 : index
    %210 = vector.load %arg9[%c112_166, %c0_167] : memref<216x1100xf32, #tpu.memory_space<vmem>>, vector<8x1100xf32>
    tpu.vector_store %arg9[%c112_166, %c0_167], %209 {strides = array<i32>} : memref<216x1100xf32, #tpu.memory_space<vmem>>, vector<8x1100xf32>,
    %c0_168 = arith.constant 0 : index
    %c325 = arith.constant 325 : index
    %211 = vector.load %arg10[%c0_168, %c325] : memref<8x1728xf32, #tpu.memory_space<vmem>>, vector<8x1100xf32>
    %c120_169 = arith.constant 120 : index
    %c0_170 = arith.constant 0 : index
    %212 = vector.load %arg9[%c120_169, %c0_170] : memref<216x1100xf32, #tpu.memory_space<vmem>>, vector<8x1100xf32>
    tpu.vector_store %arg9[%c120_169, %c0_170], %211 {strides = array<i32>} : memref<216x1100xf32, #tpu.memory_space<vmem>>, vector<8x1100xf32>,
    %c0_171 = arith.constant 0 : index
    %c326 = arith.constant 326 : index
    %213 = vector.load %arg10[%c0_171, %c326] : memref<8x1728xf32, #tpu.memory_space<vmem>>, vector<8x1100xf32>
    %c128_172 = arith.constant 128 : index
    %c0_173 = arith.constant 0 : index
    %214 = vector.load %arg9[%c128_172, %c0_173] : memref<216x1100xf32, #tpu.memory_space<vmem>>, vector<8x1100xf32>
    tpu.vector_store %arg9[%c128_172, %c0_173], %213 {strides = array<i32>} : memref<216x1100xf32, #tpu.memory_space<vmem>>, vector<8x1100xf32>,
    %c0_174 = arith.constant 0 : index
    %c327 = arith.constant 327 : index
    %215 = vector.load %arg10[%c0_174, %c327] : memref<8x1728xf32, #tpu.memory_space<vmem>>, vector<8x1100xf32>
    %c136_175 = arith.constant 136 : index
    %c0_176 = arith.constant 0 : index
    %216 = vector.load %arg9[%c136_175, %c0_176] : memref<216x1100xf32, #tpu.memory_space<vmem>>, vector<8x1100xf32>
    tpu.vector_store %arg9[%c136_175, %c0_176], %215 {strides = array<i32>} : memref<216x1100xf32, #tpu.memory_space<vmem>>, vector<8x1100xf32>,
    %c0_177 = arith.constant 0 : index
    %c445 = arith.constant 445 : index
    %217 = vector.load %arg10[%c0_177, %c445] : memref<8x1728xf32, #tpu.memory_space<vmem>>, vector<8x1100xf32>
    %c144_178 = arith.constant 144 : index
    %c0_179 = arith.constant 0 : index
    %218 = vector.load %arg9[%c144_178, %c0_179] : memref<216x1100xf32, #tpu.memory_space<vmem>>, vector<8x1100xf32>
    tpu.vector_store %arg9[%c144_178, %c0_179], %217 {strides = array<i32>} : memref<216x1100xf32, #tpu.memory_space<vmem>>, vector<8x1100xf32>,
    %c0_180 = arith.constant 0 : index
    %c446 = arith.constant 446 : index
    %219 = vector.load %arg10[%c0_180, %c446] : memref<8x1728xf32, #tpu.memory_space<vmem>>, vector<8x1100xf32>
    %c152_181 = arith.constant 152 : index
    %c0_182 = arith.constant 0 : index
    %220 = vector.load %arg9[%c152_181, %c0_182] : memref<216x1100xf32, #tpu.memory_space<vmem>>, vector<8x1100xf32>
    tpu.vector_store %arg9[%c152_181, %c0_182], %219 {strides = array<i32>} : memref<216x1100xf32, #tpu.memory_space<vmem>>, vector<8x1100xf32>,
    %c0_183 = arith.constant 0 : index
    %c447 = arith.constant 447 : index
    %221 = vector.load %arg10[%c0_183, %c447] : memref<8x1728xf32, #tpu.memory_space<vmem>>, vector<8x1100xf32>
    %c160_184 = arith.constant 160 : index
    %c0_185 = arith.constant 0 : index
    %222 = vector.load %arg9[%c160_184, %c0_185] : memref<216x1100xf32, #tpu.memory_space<vmem>>, vector<8x1100xf32>
    tpu.vector_store %arg9[%c160_184, %c0_185], %221 {strides = array<i32>} : memref<216x1100xf32, #tpu.memory_space<vmem>>, vector<8x1100xf32>,
    %c0_186 = arith.constant 0 : index
    %c457 = arith.constant 457 : index
    %223 = vector.load %arg10[%c0_186, %c457] : memref<8x1728xf32, #tpu.memory_space<vmem>>, vector<8x1100xf32>
    %c168_187 = arith.constant 168 : index
    %c0_188 = arith.constant 0 : index
    %224 = vector.load %arg9[%c168_187, %c0_188] : memref<216x1100xf32, #tpu.memory_space<vmem>>, vector<8x1100xf32>
    tpu.vector_store %arg9[%c168_187, %c0_188], %223 {strides = array<i32>} : memref<216x1100xf32, #tpu.memory_space<vmem>>, vector<8x1100xf32>,
    %c0_189 = arith.constant 0 : index
    %c458 = arith.constant 458 : index
    %225 = vector.load %arg10[%c0_189, %c458] : memref<8x1728xf32, #tpu.memory_space<vmem>>, vector<8x1100xf32>
    %c176_190 = arith.constant 176 : index
    %c0_191 = arith.constant 0 : index
    %226 = vector.load %arg9[%c176_190, %c0_191] : memref<216x1100xf32, #tpu.memory_space<vmem>>, vector<8x1100xf32>
    tpu.vector_store %arg9[%c176_190, %c0_191], %225 {strides = array<i32>} : memref<216x1100xf32, #tpu.memory_space<vmem>>, vector<8x1100xf32>,
    %c0_192 = arith.constant 0 : index
    %c459 = arith.constant 459 : index
    %227 = vector.load %arg10[%c0_192, %c459] : memref<8x1728xf32, #tpu.memory_space<vmem>>, vector<8x1100xf32>
    %c184_193 = arith.constant 184 : index
    %c0_194 = arith.constant 0 : index
    %228 = vector.load %arg9[%c184_193, %c0_194] : memref<216x1100xf32, #tpu.memory_space<vmem>>, vector<8x1100xf32>
    tpu.vector_store %arg9[%c184_193, %c0_194], %227 {strides = array<i32>} : memref<216x1100xf32, #tpu.memory_space<vmem>>, vector<8x1100xf32>,
    %c0_195 = arith.constant 0 : index
    %c469 = arith.constant 469 : index
    %229 = vector.load %arg10[%c0_195, %c469] : memref<8x1728xf32, #tpu.memory_space<vmem>>, vector<8x1100xf32>
    %c192_196 = arith.constant 192 : index
    %c0_197 = arith.constant 0 : index
    %230 = vector.load %arg9[%c192_196, %c0_197] : memref<216x1100xf32, #tpu.memory_space<vmem>>, vector<8x1100xf32>
    tpu.vector_store %arg9[%c192_196, %c0_197], %229 {strides = array<i32>} : memref<216x1100xf32, #tpu.memory_space<vmem>>, vector<8x1100xf32>,
    %c0_198 = arith.constant 0 : index
    %c470 = arith.constant 470 : index
    %231 = vector.load %arg10[%c0_198, %c470] : memref<8x1728xf32, #tpu.memory_space<vmem>>, vector<8x1100xf32>
    %c200_199 = arith.constant 200 : index
    %c0_200 = arith.constant 0 : index
    %232 = vector.load %arg9[%c200_199, %c0_200] : memref<216x1100xf32, #tpu.memory_space<vmem>>, vector<8x1100xf32>
    tpu.vector_store %arg9[%c200_199, %c0_200], %231 {strides = array<i32>} : memref<216x1100xf32, #tpu.memory_space<vmem>>, vector<8x1100xf32>,
    %c0_201 = arith.constant 0 : index
    %c471 = arith.constant 471 : index
    %233 = vector.load %arg10[%c0_201, %c471] : memref<8x1728xf32, #tpu.memory_space<vmem>>, vector<8x1100xf32>
    %c208_202 = arith.constant 208 : index
    %c0_203 = arith.constant 0 : index
    %234 = vector.load %arg9[%c208_202, %c0_203] : memref<216x1100xf32, #tpu.memory_space<vmem>>, vector<8x1100xf32>
    tpu.vector_store %arg9[%c208_202, %c0_203], %233 {strides = array<i32>} : memref<216x1100xf32, #tpu.memory_space<vmem>>, vector<8x1100xf32>,
    %c0_204 = arith.constant 0 : index
    %c0_205 = arith.constant 0 : index
    %235 = vector.load %arg6[%c0_204, %c0_205] : memref<8x216xf32, #tpu.memory_space<vmem>>, vector<8x216xf32>
    %c0_206 = arith.constant 0 : index
    %c0_207 = arith.constant 0 : index
    %236 = vector.load %arg9[%c0_206, %c0_207] : memref<216x1100xf32, #tpu.memory_space<vmem>>, vector<216x1100xf32>
    %cst_208 = arith.constant dense<0.000000e+00> : vector<8x1100xf32>
    %237 = tpu.matmul %235, %236, %cst_208 {dimension_numbers = #tpu.dot_dimension_numbers<[1], [0], [0], [1], [0, 0, 1, 1], [], []>} : vector<8x216xf32>, vector<216x1100xf32>, vector<8x1100xf32> -> vector<8x1100xf32>
    %c0_209 = arith.constant 0 : index
    %c0_210 = arith.constant 0 : index
    %238 = vector.load %arg7[%c0_209, %c0_210] : memref<8x1xf32, #tpu.memory_space<vmem>>, vector<8x1xf32>
    %239 = vector.broadcast %238 : vector<8x1xf32> to vector<8x1100xf32>
    %240 = arith.addf %237, %239 : vector<8x1100xf32>
    %241 = vector.broadcast %0 : vector<1x1100xf32> to vector<8x1100xf32>
    %242 = arith.mulf %240, %241 : vector<8x1100xf32>
    %cst_211 = arith.constant dense<0.000000e+00> : vector<8xf32>
    %243 = vector.multi_reduction <add>, %242, %cst_211 [1] : vector<8x1100xf32> to vector<8xf32>
    %244 = vector.shape_cast %243 : vector<8xf32> to vector<8x1xf32>
    %cst_212 = arith.constant 0.001953125 : f32
    %245 = vector.broadcast %cst_212 : f32 to vector<8x1xf32>
    %246 = arith.mulf %244, %245 : vector<8x1xf32>
    %247 = vector.broadcast %246 : vector<8x1xf32> to vector<8x1100xf32>
    %248 = arith.subf %240, %247 : vector<8x1100xf32>
    %249 = arith.mulf %248, %248 : vector<8x1100xf32>
    %250 = vector.broadcast %0 : vector<1x1100xf32> to vector<8x1100xf32>
    %251 = arith.mulf %249, %250 : vector<8x1100xf32>
    %cst_213 = arith.constant dense<0.000000e+00> : vector<8xf32>
    %252 = vector.multi_reduction <add>, %251, %cst_213 [1] : vector<8x1100xf32> to vector<8xf32>
    %253 = vector.shape_cast %252 : vector<8xf32> to vector<8x1xf32>
    %cst_214 = arith.constant 0.001953125 : f32
    %254 = vector.broadcast %cst_214 : f32 to vector<8x1xf32>
    %255 = arith.mulf %253, %254 : vector<8x1xf32>
    %cst_215 = arith.constant 9.99999974E-6 : f32
    %256 = vector.broadcast %cst_215 : f32 to vector<8x1xf32>
    %257 = arith.addf %255, %256 : vector<8x1xf32>
    %258 = math.rsqrt %257 : vector<8x1xf32>
    %259 = vector.broadcast %258 : vector<8x1xf32> to vector<8x1100xf32>
    %260 = arith.mulf %248, %259 : vector<8x1100xf32>
    %c0_216 = arith.constant 0 : index
    %c0_217 = arith.constant 0 : index
    %c314_218 = arith.constant 314 : index
    %261 = vector.load %arg1[%c0_216, %c0_217, %c314_218] : memref<1x8x1728xf32, #tpu.memory_space<vmem>>, vector<1x8x1100xf32>
    %262 = vector.shape_cast %261 : vector<1x8x1100xf32> to vector<8x1100xf32>
    %263 = arith.addf %260, %262 : vector<8x1100xf32>
    %c0_219 = arith.constant 0 : index
    %c0_220 = arith.constant 0 : index
    %c0_221 = arith.constant 0 : index
    %264 = vector.load %arg8[%c0_219, %c0_220, %c0_221] : memref<1x8x1100xf32, #tpu.memory_space<vmem>>, vector<1x8x1100xf32>
    %265 = vector.shape_cast %264 : vector<1x8x1100xf32> to vector<8x1100xf32>
    %266 = vector.shape_cast %263 : vector<8x1100xf32> to vector<1x8x1100xf32>
    tpu.vector_store %arg8[%c0_219, %c0_220, %c0_221], %266 {strides = array<i32>} : memref<1x8x1100xf32, #tpu.memory_space<vmem>>, vector<1x8x1100xf32>,
    return
  }
  func.func @transform_0(%arg0: i32) -> (i32, i32, i32) {
    %c0_i32 = arith.constant 0 : i32
    %c0_i32_0 = arith.constant 0 : i32
    %c0_i32_1 = arith.constant 0 : i32
    return %arg0, %c0_i32, %c0_i32_0 : i32, i32, i32
  }
  func.func @transform_1(%arg0: i32) -> (i32, i32) {
    %c0_i32 = arith.constant 0 : i32
    %c0_i32_0 = arith.constant 0 : i32
    %c0_i32_1 = arith.constant 0 : i32
    return %c0_i32, %c0_i32_0 : i32, i32
  }
  func.func @transform_2(%arg0: i32) -> (i32, i32) {
    %c0_i32 = arith.constant 0 : i32
    %c0_i32_0 = arith.constant 0 : i32
    %c0_i32_1 = arith.constant 0 : i32
    return %c0_i32, %c0_i32_0 : i32, i32
  }
  func.func @transform_3(%arg0: i32) -> (i32, i32) {
    %c0_i32 = arith.constant 0 : i32
    %c0_i32_0 = arith.constant 0 : i32
    %c0_i32_1 = arith.constant 0 : i32
    return %c0_i32, %c0_i32_0 : i32, i32
  }
  func.func @transform_4(%arg0: i32) -> (i32, i32) {
    %c0_i32 = arith.constant 0 : i32
    %c0_i32_0 = arith.constant 0 : i32
    %c0_i32_1 = arith.constant 0 : i32
    return %c0_i32, %c0_i32_0 : i32, i32
  }
  func.func @transform_5(%arg0: i32) -> (i32, i32) {
    %c0_i32 = arith.constant 0 : i32
    %c0_i32_0 = arith.constant 0 : i32
    %c0_i32_1 = arith.constant 0 : i32
    return %c0_i32, %c0_i32_0 : i32, i32
  }
  func.func @transform_6(%arg0: i32) -> (i32, i32) {
    %c0_i32 = arith.constant 0 : i32
    %c0_i32_0 = arith.constant 0 : i32
    %c0_i32_1 = arith.constant 0 : i32
    return %c0_i32, %c0_i32_0 : i32, i32
  }
  func.func @transform_7(%arg0: i32) -> (i32, i32, i32) {
    %c0_i32 = arith.constant 0 : i32
    %c0_i32_0 = arith.constant 0 : i32
    %c0_i32_1 = arith.constant 0 : i32
    return %arg0, %c0_i32, %c0_i32_0 : i32, i32, i32
  }
}

</mosaic_0001>

<llo_original>
// kernel: resnet_block_forward.1
$region0: #{resnet_block_forward.1}
  #allocation0 [shape = 'u32[]', space=smem, size = 0x4, offset = 0x4, fixed_abs, tag = 'smem constant byte address 0x4 - core index']
  #allocation1 [shape = 'u32[144,128]{1,0:T(1,128)}', space=vmem, size = 0x12000, scoped, tag = 'internal scratch']
  #allocation2 [shape = 'f32[216,1100]{1,0:T(8,128)}', space=vmem, size = 0xf3000, scoped, tag = 'scratch operand']
  #allocation3 [shape = 'f32[8,1728]{1,0:T(8,128)}', space=vmem, size = 0xe000, scoped, tag = 'scratch operand']
  %s0 = inlined_call_operand.vmem [shape: f32[2,8,1728], index: 0, kind: input, shape index: {}]
  %s1 = inlined_call_operand.vmem [shape: f32[1,1100], index: 1, kind: input, shape index: {}]
  %s2 = inlined_call_operand.vmem [shape: f32[6,1728], index: 2, kind: input, shape index: {}]
  %s3 = inlined_call_operand.vmem [shape: f32[8,216], index: 3, kind: input, shape index: {}]
  %s4 = inlined_call_operand.vmem [shape: f32[8,1], index: 4, kind: input, shape index: {}]
  %s5 = inlined_call_operand.vmem [shape: f32[8,216], index: 5, kind: input, shape index: {}]
  %s6 = inlined_call_operand.vmem [shape: f32[8,1], index: 6, kind: input, shape index: {}]
  %s7 = inlined_call_operand.vmem [shape: f32[2,8,1100], index: 7, kind: output, shape index: {}]
  %s8 = sld [smem:[#allocation0]]
  $region61: #{resnet_block_forward.1} parent=0
    _
  %s10 = ssub.s32 1, %s8
  %s11 = scalar_select 0, %s10, %s8
  loop: start=0, step=1, limit=4
  $region2: #{resnet_block_forward.1} parent=0 // loop_pre_header
    _
  $region3: #{resnet_block_forward.1} parent=0 // loop_header
    %s13 = sphi 0, %s17
    %p14 = scmp.ge.s32.totalorder %s13, 4
    %s23 = sphi 0, %s25
    %s26 = sphi 0, %s23
    %s27 = sphi 0, %s26
    %s43 = sphi 0, %s27
    %s47 = sphi 0, %s47
    %s49 = sphi 0, %s47
    %s50 = sphi 0, %s49
    %s64 = sphi 0, %s50
    %s68 = sphi 0, %s68
    %s70 = sphi 0, %s68
    %s71 = sphi 0, %s70
    %s85 = sphi 0, %s71
    %s89 = sphi 0, %s89
    %s91 = sphi 0, %s89
    %s92 = sphi 0, %s91
    %s106 = sphi 0, %s92
    %s110 = sphi 0, %s110
    %s112 = sphi 0, %s110
    %s113 = sphi 0, %s112
    %s127 = sphi 0, %s113
    %s131 = sphi 0, %s131
    %s133 = sphi 0, %s131
    %s134 = sphi 0, %s133
    %s148 = sphi 0, %s134
    %s152 = sphi 0, %s152
    %s154 = sphi 0, %s152
    %s155 = sphi 0, %s154
    %s169 = sphi 0, %s155
    %s175 = sphi 0, %s177
    %s178 = sphi 0, %s175
    %s179 = sphi 0, %s178
    %s195 = sphi 0, %s179
  $region4: #{resnet_block_forward.1} parent=0 // loop_header_branch
    %16 = sbr.rel (%p14) target = $region8
  $region5: #{resnet_block_forward.1} parent=0 // loop_body
    %s18 = ssub.s32 %s13, 1
    %s19 = ssub.s32 %s13, 2
    %s20 = sadd.s32 %s13, 1
    %s21 = ssub.s32 %s13, %s20
    %p22 = scmp.eq.s32.totalorder %s21, 0
    %s24 = sadd.s32 %s23, 1
    %s25 = scalar_select %p22, %s23, %s24
    %p28 = pneg %p22
    %p29 = scmp.eq.s32.totalorder %s13, 1
    %p30 = por %p28, %p29
    %p31 = scmp.ne.s32.totalorder %s23, %s26
    %p32 = scmp.eq.s32.totalorder %s13, 0
    %p33 = por %p31, %p32
    %p34 = scmp.ne.s32.totalorder %s23, %s26
    %p35 = scmp.eq.s32.totalorder %s18, 1
    %p36 = por %p34, %p35
    %p37 = scmp.ne.s32.totalorder %s26, %s27
    %p38 = scmp.eq.s32.totalorder %s18, 0
    %p39 = por %p37, %p38
    %p40 = scmp.ne.s32.totalorder %s26, %s27
    %p41 = scmp.eq.s32.totalorder %s19, 1
    %p42 = por %p40, %p41
    %p44 = scmp.ne.s32.totalorder %s27, %s43
    %p45 = scmp.eq.s32.totalorder %s19, 0
    %p46 = por %p44, %p45
    %s48 = sadd.s32 %s47, 1
    %p51 = scmp.eq.s32.totalorder %s13, 1
    %p52 = scmp.ne.s32.totalorder %s47, %s49
    %p53 = scmp.eq.s32.totalorder %s13, 0
    %p54 = por %p52, %p53
    %p55 = scmp.ne.s32.totalorder %s47, %s49
    %p56 = scmp.eq.s32.totalorder %s18, 1
    %p57 = por %p55, %p56
    %p58 = scmp.ne.s32.totalorder %s49, %s50
    %p59 = scmp.eq.s32.totalorder %s18, 0
    %p60 = por %p58, %p59
    %p61 = scmp.ne.s32.totalorder %s49, %s50
    %p62 = scmp.eq.s32.totalorder %s19, 1
    %p63 = por %p61, %p62
    %p65 = scmp.ne.s32.totalorder %s50, %s64
    %p66 = scmp.eq.s32.totalorder %s19, 0
    %p67 = por %p65, %p66
    %s69 = sadd.s32 %s68, 1
    %p72 = scmp.eq.s32.totalorder %s13, 1
    %p73 = scmp.ne.s32.totalorder %s68, %s70
    %p74 = scmp.eq.s32.totalorder %s13, 0
    %p75 = por %p73, %p74
    %p76 = scmp.ne.s32.totalorder %s68, %s70
    %p77 = scmp.eq.s32.totalorder %s18, 1
    %p78 = por %p76, %p77
    %p79 = scmp.ne.s32.totalorder %s70, %s71
    %p80 = scmp.eq.s32.totalorder %s18, 0
    %p81 = por %p79, %p80
    %p82 = scmp.ne.s32.totalorder %s70, %s71
    %p83 = scmp.eq.s32.totalorder %s19, 1
    %p84 = por %p82, %p83
    %p86 = scmp.ne.s32.totalorder %s71, %s85
    %p87 = scmp.eq.s32.totalorder %s19, 0
    %p88 = por %p86, %p87
    %s90 = sadd.s32 %s89, 1
    %p93 = scmp.eq.s32.totalorder %s13, 1
    %p94 = scmp.ne.s32.totalorder %s89, %s91
    %p95 = scmp.eq.s32.totalorder %s13, 0
    %p96 = por %p94, %p95
    %p97 = scmp.ne.s32.totalorder %s89, %s91
    %p98 = scmp.eq.s32.totalorder %s18, 1
    %p99 = por %p97, %p98
    %p100 = scmp.ne.s32.totalorder %s91, %s92
    %p101 = scmp.eq.s32.totalorder %s18, 0
    %p102 = por %p100, %p101
    %p103 = scmp.ne.s32.totalorder %s91, %s92
    %p104 = scmp.eq.s32.totalorder %s19, 1
    %p105 = por %p103, %p104
    %p107 = scmp.ne.s32.totalorder %s92, %s106
    %p108 = scmp.eq.s32.totalorder %s19, 0
    %p109 = por %p107, %p108
    %s111 = sadd.s32 %s110, 1
    %p114 = scmp.eq.s32.totalorder %s13, 1
    %p115 = scmp.ne.s32.totalorder %s110, %s112
    %p116 = scmp.eq.s32.totalorder %s13, 0
    %p117 = por %p115, %p116
    %p118 = scmp.ne.s32.totalorder %s110, %s112
    %p119 = scmp.eq.s32.totalorder %s18, 1
    %p120 = por %p118, %p119
    %p121 = scmp.ne.s32.totalorder %s112, %s113
    %p122 = scmp.eq.s32.totalorder %s18, 0
    %p123 = por %p121, %p122
    %p124 = scmp.ne.s32.totalorder %s112, %s113
    %p125 = scmp.eq.s32.totalorder %s19, 1
    %p126 = por %p124, %p125
    %p128 = scmp.ne.s32.totalorder %s113, %s127
    %p129 = scmp.eq.s32.totalorder %s19, 0
    %p130 = por %p128, %p129
    %s132 = sadd.s32 %s131, 1
    %p135 = scmp.eq.s32.totalorder %s13, 1
    %p136 = scmp.ne.s32.totalorder %s131, %s133
    %p137 = scmp.eq.s32.totalorder %s13, 0
    %p138 = por %p136, %p137
    %p139 = scmp.ne.s32.totalorder %s131, %s133
    %p140 = scmp.eq.s32.totalorder %s18, 1
    %p141 = por %p139, %p140
    %p142 = scmp.ne.s32.totalorder %s133, %s134
    %p143 = scmp.eq.s32.totalorder %s18, 0
    %p144 = por %p142, %p143
    %p145 = scmp.ne.s32.totalorder %s133, %s134
    %p146 = scmp.eq.s32.totalorder %s19, 1
    %p147 = por %p145, %p146
    %p149 = scmp.ne.s32.totalorder %s134, %s148
    %p150 = scmp.eq.s32.totalorder %s19, 0
    %p151 = por %p149, %p150
    %s153 = sadd.s32 %s152, 1
    %p156 = scmp.eq.s32.totalorder %s13, 1
    %p157 = scmp.ne.s32.totalorder %s152, %s154
    %p158 = scmp.eq.s32.totalorder %s13, 0
    %p159 = por %p157, %p158
    %p160 = scmp.ne.s32.totalorder %s152, %s154
    %p161 = scmp.eq.s32.totalorder %s18, 1
    %p162 = por %p160, %p161
    %p163 = scmp.ne.s32.totalorder %s154, %s155
    %p164 = scmp.eq.s32.totalorder %s18, 0
    %p165 = por %p163, %p164
    %p166 = scmp.ne.s32.totalorder %s154, %s155
    %p167 = scmp.eq.s32.totalorder %s19, 1
    %p168 = por %p166, %p167
    %p170 = scmp.ne.s32.totalorder %s155, %s169
    %p171 = scmp.eq.s32.totalorder %s19, 0
    %p172 = por %p170, %p171
    %s173 = ssub.s32 %s13, %s20
    %p174 = scmp.eq.s32.totalorder %s173, 0
    %s176 = sadd.s32 %s175, 1
    %s177 = scalar_select %p174, %s175, %s176
    %p180 = pneg %p174
    %p181 = scmp.eq.s32.totalorder %s13, 1
    %p182 = por %p180, %p181
    %p183 = scmp.ne.s32.totalorder %s175, %s178
    %p184 = scmp.eq.s32.totalorder %s13, 0
    %p185 = por %p183, %p184
    %p186 = scmp.ne.s32.totalorder %s175, %s178
    %p187 = scmp.eq.s32.totalorder %s18, 1
    %p188 = por %p186, %p187
    %p189 = scmp.ne.s32.totalorder %s178, %s179
    %p190 = scmp.eq.s32.totalorder %s18, 0
    %p191 = por %p189, %p190
    %p192 = scmp.ne.s32.totalorder %s178, %s179
    %p193 = scmp.eq.s32.totalorder %s19, 1
    %p194 = por %p192, %p193
    %p196 = scmp.ne.s32.totalorder %s179, %s195
    %p197 = scmp.eq.s32.totalorder %s19, 0
    %p198 = por %p196, %p197
    %p199 = scmp.le.s32.totalorder 1, %s13
    %p200 = scmp.lt.s32.totalorder %s13, 3
    %p201 = pnand %p199, %p200
    %p202 = pneg %p201
    // Predicated region
    $region9: #{resnet_block_forward.1} parent=5 // pred_check
      _
    $region10: #{resnet_block_forward.1} parent=5 // pred_check_branch
      %204 = sbr.rel (%p201) target = $region12
    $region11: #{resnet_block_forward.1} parent=5 // pred_region
      %s205 = ssub.s32 %s13, 1
      // Predicated region
      $region13: #{resnet_block_forward.1} parent=11 // pred_check
        %p206 = pneg %p60
      $region14: #{resnet_block_forward.1} parent=11 // pred_check_branch
        %208 = sbr.rel (%p206) target = $region16
      $region15: #{resnet_block_forward.1} parent=11 // pred_region
        _
      $region16: #{resnet_block_forward.1} parent=11 // pred_fallthru
        _
      // Predicated region
      $region17: #{resnet_block_forward.1} parent=11 // pred_check
        %p209 = pneg %p81
      $region18: #{resnet_block_forward.1} parent=11 // pred_check_branch
        %211 = sbr.rel (%p209) target = $region20
      $region19: #{resnet_block_forward.1} parent=11 // pred_region
        _
      $region20: #{resnet_block_forward.1} parent=11 // pred_fallthru
        _
      // Predicated region
      $region21: #{resnet_block_forward.1} parent=11 // pred_check
        %p212 = pneg %p102
      $region22: #{resnet_block_forward.1} parent=11 // pred_check_branch
        %214 = sbr.rel (%p212) target = $region24
      $region23: #{resnet_block_forward.1} parent=11 // pred_region
        _
      $region24: #{resnet_block_forward.1} parent=11 // pred_fallthru
        _
      // Predicated region
      $region25: #{resnet_block_forward.1} parent=11 // pred_check
        %p215 = pneg %p123
      $region26: #{resnet_block_forward.1} parent=11 // pred_check_branch
        %217 = sbr.rel (%p215) target = $region28
      $region27: #{resnet_block_forward.1} parent=11 // pred_region
        _
      $region28: #{resnet_block_forward.1} parent=11 // pred_fallthru
        _
      // Predicated region
      $region29: #{resnet_block_forward.1} parent=11 // pred_check
        %p218 = pneg %p144
      $region30: #{resnet_block_forward.1} parent=11 // pred_check_branch
        %220 = sbr.rel (%p218) target = $region32
      $region31: #{resnet_block_forward.1} parent=11 // pred_region
        _
      $region32: #{resnet_block_forward.1} parent=11 // pred_fallthru
        _
      // Predicated region
      $region33: #{resnet_block_forward.1} parent=11 // pred_check
        %p221 = pneg %p165
      $region34: #{resnet_block_forward.1} parent=11 // pred_check_branch
        %223 = sbr.rel (%p221) target = $region36
      $region35: #{resnet_block_forward.1} parent=11 // pred_region
        _
      $region36: #{resnet_block_forward.1} parent=11 // pred_fallthru
        _
    $region12: #{resnet_block_forward.1} parent=5 // pred_fallthru
      _
    %p224 = scmp.lt.s32.totalorder %s13, 2
    // Predicated region
    $region37: #{resnet_block_forward.1} parent=5 // pred_check
      %p225 = pneg %p224
    $region38: #{resnet_block_forward.1} parent=5 // pred_check_branch
      %227 = sbr.rel (%p225) target = $region40
    $region39: #{resnet_block_forward.1} parent=5 // pred_region
      // Predicated region
      $region41: #{resnet_block_forward.1} parent=39 // pred_check
        %p228 = pneg %p33
      $region42: #{resnet_block_forward.1} parent=39 // pred_check_branch
        %230 = sbr.rel (%p228) target = $region44
      $region43: #{resnet_block_forward.1} parent=39 // pred_region
        %p231 = scmp.lt.s32.totalorder %s13, 1
        %s232 = scalar_select %p231, %s13, 1
        %s233 = smul.addr %s232, 14
        %s234 = smul.addr %s233, 8
        %s235 = scalar_lea.vmem %s0, %s234
      $region44: #{resnet_block_forward.1} parent=39 // pred_fallthru
        _
    $region40: #{resnet_block_forward.1} parent=5 // pred_fallthru
      _
    %p236 = scmp.le.s32.totalorder 1, %s13
    %p237 = scmp.lt.s32.totalorder %s13, 3
    %p238 = pnand %p236, %p237
    %p239 = pneg %p238
    // Predicated region
    $region45: #{resnet_block_forward.1} parent=5 // pred_check
      _
    $region46: #{resnet_block_forward.1} parent=5 // pred_check_branch
      %241 = sbr.rel (%p238) target = $region48
    $region47: #{resnet_block_forward.1} parent=5 // pred_region
      %s242 = ssub.s32 %s13, 1
      %p243 = scmp.lt.s32.totalorder %s18, 1
      %s244 = scalar_select %p243, %s18, 1
      %s245 = smul.addr %s244, 14
      %s246 = smul.addr %s245, 8
      %s247 = scalar_lea.vmem %s0, %s246
      %p248 = pneg %p39
      %p249 = pneg %p36
      %p250 = pneg %p60
      %p251 = pneg %p57
      %p252 = pneg %p81
      %p253 = pneg %p78
      %p254 = pneg %p102
      %p255 = pneg %p99
      %p256 = pneg %p123
      %p257 = pneg %p120
      %p258 = pneg %p144
      %p259 = pneg %p141
      %p260 = pneg %p165
      %p261 = pneg %p162
      %p262 = pneg %p191
      %p263 = pneg %p188
      %p264 = scmp.lt.s32.totalorder %s18, 1
      %s265 = scalar_select %p264, %s18, 1
      %s266 = smul.addr %s265, 9
      %s267 = smul.addr %s266, 8
      %s268 = scalar_lea.vmem %s7, %s267
      %p269 = scmp.lt.s32.totalorder %s18, 1
      %s270 = scalar_select %p269, %s18, 1
      %s271 = smul.addr %s270, 14
      %s272 = smul.addr %s271, 8
      %s273 = scalar_lea.vmem %s0, %s272
      %p274 = scmp.lt.s32.totalorder %s18, 1
      %s275 = scalar_select %p274, %s18, 1
      %s276 = smul.addr %s275, 9
      %s277 = smul.addr %s276, 8
      %s278 = scalar_lea.vmem %s7, %s277
      %v279 = vld [vmem:[%s1] sm:$0xff]
      %v280 = vld [vmem:[%s1 + $0x8] sm:$0x1]
      %v281 = vld [vmem:[%s273] sm:$0xff]
      %v282 = vld [vmem:[%s273 + $0x8] sm:$0xff]
      %v283 = vld [vmem:[%s273 + $0x10] sm:$0xff]
      %v284 = vld [vmem:[%s273 + $0x18] sm:$0xff]
      %v285 = vld [vmem:[%s273 + $0x20] sm:$0xff]
      %v286 = vld [vmem:[%s273 + $0x28] sm:$0xff]
      %v287 = vld [vmem:[%s273 + $0x30] sm:$0xff]
      %v288 = vld [vmem:[%s273 + $0x38] sm:$0xff]
      %v289 = vld [vmem:[%s273 + $0x40] sm:$0xff]
      %290 = vst [vmem:[#allocation2] sm:$0xff] %v281
      %291 = vst [vmem:[#allocation2 + $0x8] sm:$0xff] %v282
      %292 = vst [vmem:[#allocation2 + $0x10] sm:$0xff] %v283
      %293 = vst [vmem:[#allocation2 + $0x18] sm:$0xff] %v284
      %294 = vst [vmem:[#allocation2 + $0x20] sm:$0xff] %v285
      %295 = vst [vmem:[#allocation2 + $0x28] sm:$0xff] %v286
      %296 = vst [vmem:[#allocation2 + $0x30] sm:$0xff] %v287
      %297 = vst [vmem:[#allocation2 + $0x38] sm:$0xff] %v288
      %vm298 = vcmask 621568
      %299 = vst.msk [vmem:[#allocation2 + $0x40] sm:$0xff] %vm298, %v289
      %v300 = vld [vmem:[%s273] sm:$0xff]
      %v301 = vld [vmem:[%s273 + $0x8] sm:$0xff]
      %v302 = vld [vmem:[%s273 + $0x10] sm:$0xff]
      %v303 = vld [vmem:[%s273 + $0x18] sm:$0xff]
      %v304 = vld [vmem:[%s273 + $0x20] sm:$0xff]
      %v305 = vld [vmem:[%s273 + $0x28] sm:$0xff]
      %v306 = vld [vmem:[%s273 + $0x30] sm:$0xff]
      %v307 = vld [vmem:[%s273 + $0x38] sm:$0xff]
      %v308 = vld [vmem:[%s273 + $0x40] sm:$0xff]
      %318 = vrot.lane.b32.xlu0 %v300, 126
      %v319 = vpop.permute.xlu0 %318
      %320 = vrot.lane.b32.xlu0 %v301, 126
      %v321 = vpop.permute.xlu0 %320
      %322 = vrot.lane.b32.xlu0 %v302, 126
      %v323 = vpop.permute.xlu0 %322
      %324 = vrot.lane.b32.xlu0 %v303, 126
      %v325 = vpop.permute.xlu0 %324
      %326 = vrot.lane.b32.xlu0 %v304, 126
      %v327 = vpop.permute.xlu0 %326
      %328 = vrot.lane.b32.xlu0 %v305, 126
      %v329 = vpop.permute.xlu0 %328
      %330 = vrot.lane.b32.xlu0 %v306, 126
      %v331 = vpop.permute.xlu0 %330
      %332 = vrot.lane.b32.xlu0 %v307, 126
      %v333 = vpop.permute.xlu0 %332
      %334 = vrot.lane.b32.xlu0 %v308, 126
      %v335 = vpop.permute.xlu0 %334
      %vm336 = vcmask 1031168
      %v337 = vsel %vm336, %v319, %v321
      %v338 = vsel %vm336, %v321, %v323
      %v339 = vsel %vm336, %v323, %v325
      %v340 = vsel %vm336, %v325, %v327
      %v341 = vsel %vm336, %v327, %v329
      %v342 = vsel %vm336, %v329, %v331
      %v343 = vsel %vm336, %v331, %v333
      %v344 = vsel %vm336, %v333, %v335
      %354 = vst [vmem:[#allocation2 + $0x48] sm:$0xff] %v337
      %355 = vst [vmem:[#allocation2 + $0x50] sm:$0xff] %v338
      %356 = vst [vmem:[#allocation2 + $0x58] sm:$0xff] %v339
      %357 = vst [vmem:[#allocation2 + $0x60] sm:$0xff] %v340
      %358 = vst [vmem:[#allocation2 + $0x68] sm:$0xff] %v341
      %359 = vst [vmem:[#allocation2 + $0x70] sm:$0xff] %v342
      %360 = vst [vmem:[#allocation2 + $0x78] sm:$0xff] %v343
      %361 = vst [vmem:[#allocation2 + $0x80] sm:$0xff] %v344
      %362 = vst.msk [vmem:[#allocation2 + $0x88] sm:$0xff] %vm298, %v335
      %v363 = vld [vmem:[%s273] sm:$0xff]
      %v364 = vld [vmem:[%s273 + $0x8] sm:$0xff]
      %v365 = vld [vmem:[%s273 + $0x10] sm:$0xff]
      %v366 = vld [vmem:[%s273 + $0x18] sm:$0xff]
      %v367 = vld [vmem:[%s273 + $0x20] sm:$0xff]
      %v368 = vld [vmem:[%s273 + $0x28] sm:$0xff]
      %v369 = vld [vmem:[%s273 + $0x30] sm:$0xff]
      %v370 = vld [vmem:[%s273 + $0x38] sm:$0xff]
      %v371 = vld [vmem:[%s273 + $0x40] sm:$0xff]
      %381 = vrot.lane.b32.xlu0 %v363, 124
      %v382 = vpop.permute.xlu0 %381
      %383 = vrot.lane.b32.xlu0 %v364, 124
      %v384 = vpop.permute.xlu0 %383
      %385 = vrot.lane.b32.xlu0 %v365, 124
      %v386 = vpop.permute.xlu0 %385
      %387 = vrot.lane.b32.xlu0 %v366, 124
      %v388 = vpop.permute.xlu0 %387
      %389 = vrot.lane.b32.xlu0 %v367, 124
      %v390 = vpop.permute.xlu0 %389
      %391 = vrot.lane.b32.xlu0 %v368, 124
      %v392 = vpop.permute.xlu0 %391
      %393 = vrot.lane.b32.xlu0 %v369, 124
      %v394 = vpop.permute.xlu0 %393
      %395 = vrot.lane.b32.xlu0 %v370, 124
      %v396 = vpop.permute.xlu0 %395
      %397 = vrot.lane.b32.xlu0 %v371, 124
      %v398 = vpop.permute.xlu0 %397
      %vm399 = vcmask 1014784
      %v400 = vsel %vm399, %v382, %v384
      %v401 = vsel %vm399, %v384, %v386
      %v402 = vsel %vm399, %v386, %v388
      %v403 = vsel %vm399, %v388, %v390
      %v404 = vsel %vm399, %v390, %v392
      %v405 = vsel %vm399, %v392, %v394
      %v406 = vsel %vm399, %v394, %v396
      %v407 = vsel %vm399, %v396, %v398
      %417 = vst [vmem:[#allocation2 + $0x90] sm:$0xff] %v400
      %418 = vst [vmem:[#allocation2 + $0x98] sm:$0xff] %v401
      %419 = vst [vmem:[#allocation2 + $0xa0] sm:$0xff] %v402
      %420 = vst [vmem:[#allocation2 + $0xa8] sm:$0xff] %v403
      %421 = vst [vmem:[#allocation2 + $0xb0] sm:$0xff] %v404
      %422 = vst [vmem:[#allocation2 + $0xb8] sm:$0xff] %v405
      %423 = vst [vmem:[#allocation2 + $0xc0] sm:$0xff] %v406
      %424 = vst [vmem:[#allocation2 + $0xc8] sm:$0xff] %v407
      %425 = vst.msk [vmem:[#allocation2 + $0xd0] sm:$0xff] %vm298, %v398
      %v426 = vld [vmem:[%s273] sm:$0xff]
      %v427 = vld [vmem:[%s273 + $0x8] sm:$0xff]
      %v428 = vld [vmem:[%s273 + $0x10] sm:$0xff]
      %v429 = vld [vmem:[%s273 + $0x18] sm:$0xff]
      %v430 = vld [vmem:[%s273 + $0x20] sm:$0xff]
      %v431 = vld [vmem:[%s273 + $0x28] sm:$0xff]
      %v432 = vld [vmem:[%s273 + $0x30] sm:$0xff]
      %v433 = vld [vmem:[%s273 + $0x38] sm:$0xff]
      %v434 = vld [vmem:[%s273 + $0x40] sm:$0xff]
      %444 = vrot.lane.b32.xlu0 %v426, 104
      %v445 = vpop.permute.xlu0 %444
      %446 = vrot.lane.b32.xlu0 %v427, 104
      %v447 = vpop.permute.xlu0 %446
      %448 = vrot.lane.b32.xlu0 %v428, 104
      %v449 = vpop.permute.xlu0 %448
      %450 = vrot.lane.b32.xlu0 %v429, 104
      %v451 = vpop.permute.xlu0 %450
      %452 = vrot.lane.b32.xlu0 %v430, 104
      %v453 = vpop.permute.xlu0 %452
      %454 = vrot.lane.b32.xlu0 %v431, 104
      %v455 = vpop.permute.xlu0 %454
      %456 = vrot.lane.b32.xlu0 %v432, 104
      %v457 = vpop.permute.xlu0 %456
      %458 = vrot.lane.b32.xlu0 %v433, 104
      %v459 = vpop.permute.xlu0 %458
      %460 = vrot.lane.b32.xlu0 %v434, 104
      %v461 = vpop.permute.xlu0 %460
      %vm462 = vcmask 850944
      %v463 = vsel %vm462, %v445, %v447
      %v464 = vsel %vm462, %v447, %v449
      %v465 = vsel %vm462, %v449, %v451
      %v466 = vsel %vm462, %v451, %v453
      %v467 = vsel %vm462, %v453, %v455
      %v468 = vsel %vm462, %v455, %v457
      %v469 = vsel %vm462, %v457, %v459
      %v470 = vsel %vm462, %v459, %v461
      %480 = vst [vmem:[#allocation2 + $0xd8] sm:$0xff] %v463
      %481 = vst [vmem:[#allocation2 + $0xe0] sm:$0xff] %v464
      %482 = vst [vmem:[#allocation2 + $0xe8] sm:$0xff] %v465
      %483 = vst [vmem:[#allocation2 + $0xf0] sm:$0xff] %v466
      %484 = vst [vmem:[#allocation2 + $0xf8] sm:$0xff] %v467
      %485 = vst [vmem:[#allocation2 + $0x100] sm:$0xff] %v468
      %486 = vst [vmem:[#allocation2 + $0x108] sm:$0xff] %v469
      %487 = vst [vmem:[#allocation2 + $0x110] sm:$0xff] %v470
      %488 = vst.msk [vmem:[#allocation2 + $0x118] sm:$0xff] %vm298, %v461
      %v489 = vld [vmem:[%s273] sm:$0xff]
      %v490 = vld [vmem:[%s273 + $0x8] sm:$0xff]
      %v491 = vld [vmem:[%s273 + $0x10] sm:$0xff]
      %v492 = vld [vmem:[%s273 + $0x18] sm:$0xff]
      %v493 = vld [vmem:[%s273 + $0x20] sm:$0xff]
      %v494 = vld [vmem:[%s273 + $0x28] sm:$0xff]
      %v495 = vld [vmem:[%s273 + $0x30] sm:$0xff]
      %v496 = vld [vmem:[%s273 + $0x38] sm:$0xff]
      %v497 = vld [vmem:[%s273 + $0x40] sm:$0xff]
      %507 = vrot.lane.b32.xlu0 %v489, 102
      %v508 = vpop.permute.xlu0 %507
      %509 = vrot.lane.b32.xlu0 %v490, 102
      %v510 = vpop.permute.xlu0 %509
      %511 = vrot.lane.b32.xlu0 %v491, 102
      %v512 = vpop.permute.xlu0 %511
      %513 = vrot.lane.b32.xlu0 %v492, 102
      %v514 = vpop.permute.xlu0 %513
      %515 = vrot.lane.b32.xlu0 %v493, 102
      %v516 = vpop.permute.xlu0 %515
      %517 = vrot.lane.b32.xlu0 %v494, 102
      %v518 = vpop.permute.xlu0 %517
      %519 = vrot.lane.b32.xlu0 %v495, 102
      %v520 = vpop.permute.xlu0 %519
      %521 = vrot.lane.b32.xlu0 %v496, 102
      %v522 = vpop.permute.xlu0 %521
      %523 = vrot.lane.b32.xlu0 %v497, 102
      %v524 = vpop.permute.xlu0 %523
      %vm525 = vcmask 834560
      %v526 = vsel %vm525, %v508, %v510
      %v527 = vsel %vm525, %v510, %v512
      %v528 = vsel %vm525, %v512, %v514
      %v529 = vsel %vm525, %v514, %v516
      %v530 = vsel %vm525, %v516, %v518
      %v531 = vsel %vm525, %v518, %v520
      %v532 = vsel %vm525, %v520, %v522
      %v533 = vsel %vm525, %v522, %v524
      %543 = vst [vmem:[#allocation2 + $0x120] sm:$0xff] %v526
      %544 = vst [vmem:[#allocation2 + $0x128] sm:$0xff] %v527
      %545 = vst [vmem:[#allocation2 + $0x130] sm:$0xff] %v528
      %546 = vst [vmem:[#allocation2 + $0x138] sm:$0xff] %v529
      %547 = vst [vmem:[#allocation2 + $0x140] sm:$0xff] %v530
      %548 = vst [vmem:[#allocation2 + $0x148] sm:$0xff] %v531
      %549 = vst [vmem:[#allocation2 + $0x150] sm:$0xff] %v532
      %550 = vst [vmem:[#allocation2 + $0x158] sm:$0xff] %v533
      %551 = vst.msk [vmem:[#allocation2 + $0x160] sm:$0xff] %vm298, %v524
      %v552 = vld [vmem:[%s273] sm:$0xff]
      %v553 = vld [vmem:[%s273 + $0x8] sm:$0xff]
      %v554 = vld [vmem:[%s273 + $0x10] sm:$0xff]
      %v555 = vld [vmem:[%s273 + $0x18] sm:$0xff]
      %v556 = vld [vmem:[%s273 + $0x20] sm:$0xff]
      %v557 = vld [vmem:[%s273 + $0x28] sm:$0xff]
      %v558 = vld [vmem:[%s273 + $0x30] sm:$0xff]
      %v559 = vld [vmem:[%s273 + $0x38] sm:$0xff]
      %v560 = vld [vmem:[%s273 + $0x40] sm:$0xff]
      %570 = vrot.lane.b32.xlu0 %v552, 100
      %v571 = vpop.permute.xlu0 %570
      %572 = vrot.lane.b32.xlu0 %v553, 100
      %v573 = vpop.permute.xlu0 %572
      %574 = vrot.lane.b32.xlu0 %v554, 100
      %v575 = vpop.permute.xlu0 %574
      %576 = vrot.lane.b32.xlu0 %v555, 100
      %v577 = vpop.permute.xlu0 %576
      %578 = vrot.lane.b32.xlu0 %v556, 100
      %v579 = vpop.permute.xlu0 %578
      %580 = vrot.lane.b32.xlu0 %v557, 100
      %v581 = vpop.permute.xlu0 %580
      %582 = vrot.lane.b32.xlu0 %v558, 100
      %v583 = vpop.permute.xlu0 %582
      %584 = vrot.lane.b32.xlu0 %v559, 100
      %v585 = vpop.permute.xlu0 %584
      %586 = vrot.lane.b32.xlu0 %v560, 100
      %v587 = vpop.permute.xlu0 %586
      %vm588 = vcmask 818176
      %v589 = vsel %vm588, %v571, %v573
      %v590 = vsel %vm588, %v573, %v575
      %v591 = vsel %vm588, %v575, %v577
      %v592 = vsel %vm588, %v577, %v579
      %v593 = vsel %vm588, %v579, %v581
      %v594 = vsel %vm588, %v581, %v583
      %v595 = vsel %vm588, %v583, %v585
      %v596 = vsel %vm588, %v585, %v587
      %606 = vst [vmem:[#allocation2 + $0x168] sm:$0xff] %v589
      %607 = vst [vmem:[#allocation2 + $0x170] sm:$0xff] %v590
      %608 = vst [vmem:[#allocation2 + $0x178] sm:$0xff] %v591
      %609 = vst [vmem:[#allocation2 + $0x180] sm:$0xff] %v592
      %610 = vst [vmem:[#allocation2 + $0x188] sm:$0xff] %v593
      %611 = vst [vmem:[#allocation2 + $0x190] sm:$0xff] %v594
      %612 = vst [vmem:[#allocation2 + $0x198] sm:$0xff] %v595
      %613 = vst [vmem:[#allocation2 + $0x1a0] sm:$0xff] %v596
      %614 = vst.msk [vmem:[#allocation2 + $0x1a8] sm:$0xff] %vm298, %v587
      %v615 = vld [vmem:[%s273] sm:$0xff]
      %v616 = vld [vmem:[%s273 + $0x8] sm:$0xff]
      %v617 = vld [vmem:[%s273 + $0x10] sm:$0xff]
      %v618 = vld [vmem:[%s273 + $0x18] sm:$0xff]
      %v619 = vld [vmem:[%s273 + $0x20] sm:$0xff]
      %v620 = vld [vmem:[%s273 + $0x28] sm:$0xff]
      %v621 = vld [vmem:[%s273 + $0x30] sm:$0xff]
      %v622 = vld [vmem:[%s273 + $0x38] sm:$0xff]
      %v623 = vld [vmem:[%s273 + $0x40] sm:$0xff]
      %633 = vrot.lane.b32.xlu0 %v615, 80
      %v634 = vpop.permute.xlu0 %633
      %635 = vrot.lane.b32.xlu0 %v616, 80
      %v636 = vpop.permute.xlu0 %635
      %637 = vrot.lane.b32.xlu0 %v617, 80
      %v638 = vpop.permute.xlu0 %637
      %639 = vrot.lane.b32.xlu0 %v618, 80
      %v640 = vpop.permute.xlu0 %639
      %641 = vrot.lane.b32.xlu0 %v619, 80
      %v642 = vpop.permute.xlu0 %641
      %643 = vrot.lane.b32.xlu0 %v620, 80
      %v644 = vpop.permute.xlu0 %643
      %645 = vrot.lane.b32.xlu0 %v621, 80
      %v646 = vpop.permute.xlu0 %645
      %647 = vrot.lane.b32.xlu0 %v622, 80
      %v648 = vpop.permute.xlu0 %647
      %649 = vrot.lane.b32.xlu0 %v623, 80
      %v650 = vpop.permute.xlu0 %649
      %vm651 = vcmask 654336
      %v652 = vsel %vm651, %v634, %v636
      %v653 = vsel %vm651, %v636, %v638
      %v654 = vsel %vm651, %v638, %v640
      %v655 = vsel %vm651, %v640, %v642
      %v656 = vsel %vm651, %v642, %v644
      %v657 = vsel %vm651, %v644, %v646
      %v658 = vsel %vm651, %v646, %v648
      %v659 = vsel %vm651, %v648, %v650
      %669 = vst [vmem:[#allocation2 + $0x1b0] sm:$0xff] %v652
      %670 = vst [vmem:[#allocation2 + $0x1b8] sm:$0xff] %v653
      %671 = vst [vmem:[#allocation2 + $0x1c0] sm:$0xff] %v654
      %672 = vst [vmem:[#allocation2 + $0x1c8] sm:$0xff] %v655
      %673 = vst [vmem:[#allocation2 + $0x1d0] sm:$0xff] %v656
      %674 = vst [vmem:[#allocation2 + $0x1d8] sm:$0xff] %v657
      %675 = vst [vmem:[#allocation2 + $0x1e0] sm:$0xff] %v658
      %676 = vst [vmem:[#allocation2 + $0x1e8] sm:$0xff] %v659
      %677 = vst.msk [vmem:[#allocation2 + $0x1f0] sm:$0xff] %vm298, %v650
      %v678 = vld [vmem:[%s273] sm:$0xff]
      %v679 = vld [vmem:[%s273 + $0x8] sm:$0xff]
      %v680 = vld [vmem:[%s273 + $0x10] sm:$0xff]
      %v681 = vld [vmem:[%s273 + $0x18] sm:$0xff]
      %v682 = vld [vmem:[%s273 + $0x20] sm:$0xff]
      %v683 = vld [vmem:[%s273 + $0x28] sm:$0xff]
      %v684 = vld [vmem:[%s273 + $0x30] sm:$0xff]
      %v685 = vld [vmem:[%s273 + $0x38] sm:$0xff]
      %v686 = vld [vmem:[%s273 + $0x40] sm:$0xff]
      %696 = vrot.lane.b32.xlu0 %v678, 78
      %v697 = vpop.permute.xlu0 %696
      %698 = vrot.lane.b32.xlu0 %v679, 78
      %v699 = vpop.permute.xlu0 %698
      %700 = vrot.lane.b32.xlu0 %v680, 78
      %v701 = vpop.permute.xlu0 %700
      %702 = vrot.lane.b32.xlu0 %v681, 78
      %v703 = vpop.permute.xlu0 %702
      %704 = vrot.lane.b32.xlu0 %v682, 78
      %v705 = vpop.permute.xlu0 %704
      %706 = vrot.lane.b32.xlu0 %v683, 78
      %v707 = vpop.permute.xlu0 %706
      %708 = vrot.lane.b32.xlu0 %v684, 78
      %v709 = vpop.permute.xlu0 %708
      %710 = vrot.lane.b32.xlu0 %v685, 78
      %v711 = vpop.permute.xlu0 %710
      %712 = vrot.lane.b32.xlu0 %v686, 78
      %v713 = vpop.permute.xlu0 %712
      %vm714 = vcmask 637952
      %v715 = vsel %vm714, %v697, %v699
      %v716 = vsel %vm714, %v699, %v701
      %v717 = vsel %vm714, %v701, %v703
      %v718 = vsel %vm714, %v703, %v705
      %v719 = vsel %vm714, %v705, %v707
      %v720 = vsel %vm714, %v707, %v709
      %v721 = vsel %vm714, %v709, %v711
      %v722 = vsel %vm714, %v711, %v713
      %732 = vst [vmem:[#allocation2 + $0x1f8] sm:$0xff] %v715
      %733 = vst [vmem:[#allocation2 + $0x200] sm:$0xff] %v716
      %734 = vst [vmem:[#allocation2 + $0x208] sm:$0xff] %v717
      %735 = vst [vmem:[#allocation2 + $0x210] sm:$0xff] %v718
      %736 = vst [vmem:[#allocation2 + $0x218] sm:$0xff] %v719
      %737 = vst [vmem:[#allocation2 + $0x220] sm:$0xff] %v720
      %738 = vst [vmem:[#allocation2 + $0x228] sm:$0xff] %v721
      %739 = vst [vmem:[#allocation2 + $0x230] sm:$0xff] %v722
      %740 = vst.msk [vmem:[#allocation2 + $0x238] sm:$0xff] %vm298, %v713
      %v741 = vld [vmem:[%s273] sm:$0xff]
      %v742 = vld [vmem:[%s273 + $0x8] sm:$0xff]
      %v743 = vld [vmem:[%s273 + $0x10] sm:$0xff]
      %v744 = vld [vmem:[%s273 + $0x18] sm:$0xff]
      %v745 = vld [vmem:[%s273 + $0x20] sm:$0xff]
      %v746 = vld [vmem:[%s273 + $0x28] sm:$0xff]
      %v747 = vld [vmem:[%s273 + $0x30] sm:$0xff]
      %v748 = vld [vmem:[%s273 + $0x38] sm:$0xff]
      %v749 = vld [vmem:[%s273 + $0x40] sm:$0xff]
      %759 = vrot.lane.b32.xlu0 %v741, 76
      %v760 = vpop.permute.xlu0 %759
      %761 = vrot.lane.b32.xlu0 %v742, 76
      %v762 = vpop.permute.xlu0 %761
      %763 = vrot.lane.b32.xlu0 %v743, 76
      %v764 = vpop.permute.xlu0 %763
      %765 = vrot.lane.b32.xlu0 %v744, 76
      %v766 = vpop.permute.xlu0 %765
      %767 = vrot.lane.b32.xlu0 %v745, 76
      %v768 = vpop.permute.xlu0 %767
      %769 = vrot.lane.b32.xlu0 %v746, 76
      %v770 = vpop.permute.xlu0 %769
      %771 = vrot.lane.b32.xlu0 %v747, 76
      %v772 = vpop.permute.xlu0 %771
      %773 = vrot.lane.b32.xlu0 %v748, 76
      %v774 = vpop.permute.xlu0 %773
      %775 = vrot.lane.b32.xlu0 %v749, 76
      %v776 = vpop.permute.xlu0 %775
      %v777 = vsel %vm298, %v760, %v762
      %v778 = vsel %vm298, %v762, %v764
      %v779 = vsel %vm298, %v764, %v766
      %v780 = vsel %vm298, %v766, %v768
      %v781 = vsel %vm298, %v768, %v770
      %v782 = vsel %vm298, %v770, %v772
      %v783 = vsel %vm298, %v772, %v774
      %v784 = vsel %vm298, %v774, %v776
      %794 = vst [vmem:[#allocation2 + $0x240] sm:$0xff] %v777
      %795 = vst [vmem:[#allocation2 + $0x248] sm:$0xff] %v778
      %796 = vst [vmem:[#allocation2 + $0x250] sm:$0xff] %v779
      %797 = vst [vmem:[#allocation2 + $0x258] sm:$0xff] %v780
      %798 = vst [vmem:[#allocation2 + $0x260] sm:$0xff] %v781
      %799 = vst [vmem:[#allocation2 + $0x268] sm:$0xff] %v782
      %800 = vst [vmem:[#allocation2 + $0x270] sm:$0xff] %v783
      %801 = vst [vmem:[#allocation2 + $0x278] sm:$0xff] %v784
      %802 = vst.msk [vmem:[#allocation2 + $0x280] sm:$0xff] %vm298, %v776
      %v803 = vld [vmem:[%s273 + $0x10] sm:$0xff]
      %v804 = vld [vmem:[%s273 + $0x18] sm:$0xff]
      %v805 = vld [vmem:[%s273 + $0x20] sm:$0xff]
      %v806 = vld [vmem:[%s273 + $0x28] sm:$0xff]
      %v807 = vld [vmem:[%s273 + $0x30] sm:$0xff]
      %v808 = vld [vmem:[%s273 + $0x38] sm:$0xff]
      %v809 = vld [vmem:[%s273 + $0x40] sm:$0xff]
      %v810 = vld [vmem:[%s273 + $0x48] sm:$0xff]
      %v811 = vld [vmem:[%s273 + $0x50] sm:$0xff]
      %821 = vrot.lane.b32.xlu0 %v803, 96
      %v822 = vpop.permute.xlu0 %821
      %823 = vrot.lane.b32.xlu0 %v804, 96
      %v824 = vpop.permute.xlu0 %823
      %825 = vrot.lane.b32.xlu0 %v805, 96
      %v826 = vpop.permute.xlu0 %825
      %827 = vrot.lane.b32.xlu0 %v806, 96
      %v828 = vpop.permute.xlu0 %827
      %829 = vrot.lane.b32.xlu0 %v807, 96
      %v830 = vpop.permute.xlu0 %829
      %831 = vrot.lane.b32.xlu0 %v808, 96
      %v832 = vpop.permute.xlu0 %831
      %833 = vrot.lane.b32.xlu0 %v809, 96
      %v834 = vpop.permute.xlu0 %833
      %835 = vrot.lane.b32.xlu0 %v810, 96
      %v836 = vpop.permute.xlu0 %835
      %837 = vrot.lane.b32.xlu0 %v811, 96
      %v838 = vpop.permute.xlu0 %837
      %vm839 = vcmask 785408
      %v840 = vsel %vm839, %v822, %v824
      %v841 = vsel %vm839, %v824, %v826
      %v842 = vsel %vm839, %v826, %v828
      %v843 = vsel %vm839, %v828, %v830
      %v844 = vsel %vm839, %v830, %v832
      %v845 = vsel %vm839, %v832, %v834
      %v846 = vsel %vm839, %v834, %v836
      %v847 = vsel %vm839, %v836, %v838
      %857 = vst [vmem:[#allocation2 + $0x288] sm:$0xff] %v840
      %858 = vst [vmem:[#allocation2 + $0x290] sm:$0xff] %v841
      %859 = vst [vmem:[#allocation2 + $0x298] sm:$0xff] %v842
      %860 = vst [vmem:[#allocation2 + $0x2a0] sm:$0xff] %v843
      %861 = vst [vmem:[#allocation2 + $0x2a8] sm:$0xff] %v844
      %862 = vst [vmem:[#allocation2 + $0x2b0] sm:$0xff] %v845
      %863 = vst [vmem:[#allocation2 + $0x2b8] sm:$0xff] %v846
      %864 = vst [vmem:[#allocation2 + $0x2c0] sm:$0xff] %v847
      %865 = vst.msk [vmem:[#allocation2 + $0x2c8] sm:$0xff] %vm298, %v838
      %v866 = vld [vmem:[%s273 + $0x10] sm:$0xff]
      %v867 = vld [vmem:[%s273 + $0x18] sm:$0xff]
      %v868 = vld [vmem:[%s273 + $0x20] sm:$0xff]
      %v869 = vld [vmem:[%s273 + $0x28] sm:$0xff]
      %v870 = vld [vmem:[%s273 + $0x30] sm:$0xff]
      %v871 = vld [vmem:[%s273 + $0x38] sm:$0xff]
      %v872 = vld [vmem:[%s273 + $0x40] sm:$0xff]
      %v873 = vld [vmem:[%s273 + $0x48] sm:$0xff]
      %v874 = vld [vmem:[%s273 + $0x50] sm:$0xff]
      %884 = vrot.lane.b32.xlu0 %v866, 94
      %v885 = vpop.permute.xlu0 %884
      %886 = vrot.lane.b32.xlu0 %v867, 94
      %v887 = vpop.permute.xlu0 %886
      %888 = vrot.lane.b32.xlu0 %v868, 94
      %v889 = vpop.permute.xlu0 %888
      %890 = vrot.lane.b32.xlu0 %v869, 94
      %v891 = vpop.permute.xlu0 %890
      %892 = vrot.lane.b32.xlu0 %v870, 94
      %v893 = vpop.permute.xlu0 %892
      %894 = vrot.lane.b32.xlu0 %v871, 94
      %v895 = vpop.permute.xlu0 %894
      %896 = vrot.lane.b32.xlu0 %v872, 94
      %v897 = vpop.permute.xlu0 %896
      %898 = vrot.lane.b32.xlu0 %v873, 94
      %v899 = vpop.permute.xlu0 %898
      %900 = vrot.lane.b32.xlu0 %v874, 94
      %v901 = vpop.permute.xlu0 %900
      %vm902 = vcmask 769024
      %v903 = vsel %vm902, %v885, %v887
      %v904 = vsel %vm902, %v887, %v889
      %v905 = vsel %vm902, %v889, %v891
      %v906 = vsel %vm902, %v891, %v893
      %v907 = vsel %vm902, %v893, %v895
      %v908 = vsel %vm902, %v895, %v897
      %v909 = vsel %vm902, %v897, %v899
      %v910 = vsel %vm902, %v899, %v901
      %920 = vst [vmem:[#allocation2 + $0x2d0] sm:$0xff] %v903
      %921 = vst [vmem:[#allocation2 + $0x2d8] sm:$0xff] %v904
      %922 = vst [vmem:[#allocation2 + $0x2e0] sm:$0xff] %v905
      %923 = vst [vmem:[#allocation2 + $0x2e8] sm:$0xff] %v906
      %924 = vst [vmem:[#allocation2 + $0x2f0] sm:$0xff] %v907
      %925 = vst [vmem:[#allocation2 + $0x2f8] sm:$0xff] %v908
      %926 = vst [vmem:[#allocation2 + $0x300] sm:$0xff] %v909
      %927 = vst [vmem:[#allocation2 + $0x308] sm:$0xff] %v910
      %928 = vst.msk [vmem:[#allocation2 + $0x310] sm:$0xff] %vm298, %v901
      %v929 = vld [vmem:[%s273 + $0x10] sm:$0xff]
      %v930 = vld [vmem:[%s273 + $0x18] sm:$0xff]
      %v931 = vld [vmem:[%s273 + $0x20] sm:$0xff]
      %v932 = vld [vmem:[%s273 + $0x28] sm:$0xff]
      %v933 = vld [vmem:[%s273 + $0x30] sm:$0xff]
      %v934 = vld [vmem:[%s273 + $0x38] sm:$0xff]
      %v935 = vld [vmem:[%s273 + $0x40] sm:$0xff]
      %v936 = vld [vmem:[%s273 + $0x48] sm:$0xff]
      %v937 = vld [vmem:[%s273 + $0x50] sm:$0xff]
      %947 = vrot.lane.b32.xlu0 %v929, 92
      %v948 = vpop.permute.xlu0 %947
      %949 = vrot.lane.b32.xlu0 %v930, 92
      %v950 = vpop.permute.xlu0 %949
      %951 = vrot.lane.b32.xlu0 %v931, 92
      %v952 = vpop.permute.xlu0 %951
      %953 = vrot.lane.b32.xlu0 %v932, 92
      %v954 = vpop.permute.xlu0 %953
      %955 = vrot.lane.b32.xlu0 %v933, 92
      %v956 = vpop.permute.xlu0 %955
      %957 = vrot.lane.b32.xlu0 %v934, 92
      %v958 = vpop.permute.xlu0 %957
      %959 = vrot.lane.b32.xlu0 %v935, 92
      %v960 = vpop.permute.xlu0 %959
      %961 = vrot.lane.b32.xlu0 %v936, 92
      %v962 = vpop.permute.xlu0 %961
      %963 = vrot.lane.b32.xlu0 %v937, 92
      %v964 = vpop.permute.xlu0 %963
      %vm965 = vcmask 752640
      %v966 = vsel %vm965, %v948, %v950
      %v967 = vsel %vm965, %v950, %v952
      %v968 = vsel %vm965, %v952, %v954
      %v969 = vsel %vm965, %v954, %v956
      %v970 = vsel %vm965, %v956, %v958
      %v971 = vsel %vm965, %v958, %v960
      %v972 = vsel %vm965, %v960, %v962
      %v973 = vsel %vm965, %v962, %v964
      %983 = vst [vmem:[#allocation2 + $0x318] sm:$0xff] %v966
      %984 = vst [vmem:[#allocation2 + $0x320] sm:$0xff] %v967
      %985 = vst [vmem:[#allocation2 + $0x328] sm:$0xff] %v968
      %986 = vst [vmem:[#allocation2 + $0x330] sm:$0xff] %v969
      %987 = vst [vmem:[#allocation2 + $0x338] sm:$0xff] %v970
      %988 = vst [vmem:[#allocation2 + $0x340] sm:$0xff] %v971
      %989 = vst [vmem:[#allocation2 + $0x348] sm:$0xff] %v972
      %990 = vst [vmem:[#allocation2 + $0x350] sm:$0xff] %v973
      %991 = vst.msk [vmem:[#allocation2 + $0x358] sm:$0xff] %vm298, %v964
      %v992 = vld [vmem:[%s273 + $0x10] sm:$0xff]
      %v993 = vld [vmem:[%s273 + $0x18] sm:$0xff]
      %v994 = vld [vmem:[%s273 + $0x20] sm:$0xff]
      %v995 = vld [vmem:[%s273 + $0x28] sm:$0xff]
      %v996 = vld [vmem:[%s273 + $0x30] sm:$0xff]
      %v997 = vld [vmem:[%s273 + $0x38] sm:$0xff]
      %v998 = vld [vmem:[%s273 + $0x40] sm:$0xff]
      %v999 = vld [vmem:[%s273 + $0x48] sm:$0xff]
      %v1000 = vld [vmem:[%s273 + $0x50] sm:$0xff]
      %v1001 = vld [vmem:[%s273 + $0x58] sm:$0xff]
      %1012 = vrot.lane.b32.xlu0 %v992, 72
      %v1013 = vpop.permute.xlu0 %1012
      %1014 = vrot.lane.b32.xlu0 %v993, 72
      %v1015 = vpop.permute.xlu0 %1014
      %1016 = vrot.lane.b32.xlu0 %v994, 72
      %v1017 = vpop.permute.xlu0 %1016
      %1018 = vrot.lane.b32.xlu0 %v995, 72
      %v1019 = vpop.permute.xlu0 %1018
      %1020 = vrot.lane.b32.xlu0 %v996, 72
      %v1021 = vpop.permute.xlu0 %1020
      %1022 = vrot.lane.b32.xlu0 %v997, 72
      %v1023 = vpop.permute.xlu0 %1022
      %1024 = vrot.lane.b32.xlu0 %v998, 72
      %v1025 = vpop.permute.xlu0 %1024
      %1026 = vrot.lane.b32.xlu0 %v999, 72
      %v1027 = vpop.permute.xlu0 %1026
      %1028 = vrot.lane.b32.xlu0 %v1000, 72
      %v1029 = vpop.permute.xlu0 %1028
      %1030 = vrot.lane.b32.xlu0 %v1001, 72
      %v1031 = vpop.permute.xlu0 %1030
      %vm1032 = vcmask 588800
      %v1033 = vsel %vm1032, %v1013, %v1015
      %v1034 = vsel %vm1032, %v1015, %v1017
      %v1035 = vsel %vm1032, %v1017, %v1019
      %v1036 = vsel %vm1032, %v1019, %v1021
      %v1037 = vsel %vm1032, %v1021, %v1023
      %v1038 = vsel %vm1032, %v1023, %v1025
      %v1039 = vsel %vm1032, %v1025, %v1027
      %v1040 = vsel %vm1032, %v1027, %v1029
      %v1041 = vsel %vm1032, %v1029, %v1031
      %1051 = vst [vmem:[#allocation2 + $0x360] sm:$0xff] %v1033
      %1052 = vst [vmem:[#allocation2 + $0x368] sm:$0xff] %v1034
      %1053 = vst [vmem:[#allocation2 + $0x370] sm:$0xff] %v1035
      %1054 = vst [vmem:[#allocation2 + $0x378] sm:$0xff] %v1036
      %1055 = vst [vmem:[#allocation2 + $0x380] sm:$0xff] %v1037
      %1056 = vst [vmem:[#allocation2 + $0x388] sm:$0xff] %v1038
      %1057 = vst [vmem:[#allocation2 + $0x390] sm:$0xff] %v1039
      %1058 = vst [vmem:[#allocation2 + $0x398] sm:$0xff] %v1040
      %1059 = vst.msk [vmem:[#allocation2 + $0x3a0] sm:$0xff] %vm298, %v1041
      %v1060 = vld [vmem:[%s273 + $0x10] sm:$0xff]
      %v1061 = vld [vmem:[%s273 + $0x18] sm:$0xff]
      %v1062 = vld [vmem:[%s273 + $0x20] sm:$0xff]
      %v1063 = vld [vmem:[%s273 + $0x28] sm:$0xff]
      %v1064 = vld [vmem:[%s273 + $0x30] sm:$0xff]
      %v1065 = vld [vmem:[%s273 + $0x38] sm:$0xff]
      %v1066 = vld [vmem:[%s273 + $0x40] sm:$0xff]
      %v1067 = vld [vmem:[%s273 + $0x48] sm:$0xff]
      %v1068 = vld [vmem:[%s273 + $0x50] sm:$0xff]
      %v1069 = vld [vmem:[%s273 + $0x58] sm:$0xff]
      %1080 = vrot.lane.b32.xlu0 %v1060, 70
      %v1081 = vpop.permute.xlu0 %1080
      %1082 = vrot.lane.b32.xlu0 %v1061, 70
      %v1083 = vpop.permute.xlu0 %1082
      %1084 = vrot.lane.b32.xlu0 %v1062, 70
      %v1085 = vpop.permute.xlu0 %1084
      %1086 = vrot.lane.b32.xlu0 %v1063, 70
      %v1087 = vpop.permute.xlu0 %1086
      %1088 = vrot.lane.b32.xlu0 %v1064, 70
      %v1089 = vpop.permute.xlu0 %1088
      %1090 = vrot.lane.b32.xlu0 %v1065, 70
      %v1091 = vpop.permute.xlu0 %1090
      %1092 = vrot.lane.b32.xlu0 %v1066, 70
      %v1093 = vpop.permute.xlu0 %1092
      %1094 = vrot.lane.b32.xlu0 %v1067, 70
      %v1095 = vpop.permute.xlu0 %1094
      %1096 = vrot.lane.b32.xlu0 %v1068, 70
      %v1097 = vpop.permute.xlu0 %1096
      %1098 = vrot.lane.b32.xlu0 %v1069, 70
      %v1099 = vpop.permute.xlu0 %1098
      %vm1100 = vcmask 572416
      %v1101 = vsel %vm1100, %v1081, %v1083
      %v1102 = vsel %vm1100, %v1083, %v1085
      %v1103 = vsel %vm1100, %v1085, %v1087
      %v1104 = vsel %vm1100, %v1087, %v1089
      %v1105 = vsel %vm1100, %v1089, %v1091
      %v1106 = vsel %vm1100, %v1091, %v1093
      %v1107 = vsel %vm1100, %v1093, %v1095
      %v1108 = vsel %vm1100, %v1095, %v1097
      %v1109 = vsel %vm1100, %v1097, %v1099
      %1119 = vst [vmem:[#allocation2 + $0x3a8] sm:$0xff] %v1101
      %1120 = vst [vmem:[#allocation2 + $0x3b0] sm:$0xff] %v1102
      %1121 = vst [vmem:[#allocation2 + $0x3b8] sm:$0xff] %v1103
      %1122 = vst [vmem:[#allocation2 + $0x3c0] sm:$0xff] %v1104
      %1123 = vst [vmem:[#allocation2 + $0x3c8] sm:$0xff] %v1105
      %1124 = vst [vmem:[#allocation2 + $0x3d0] sm:$0xff] %v1106
      %1125 = vst [vmem:[#allocation2 + $0x3d8] sm:$0xff] %v1107
      %1126 = vst [vmem:[#allocation2 + $0x3e0] sm:$0xff] %v1108
      %1127 = vst.msk [vmem:[#allocation2 + $0x3e8] sm:$0xff] %vm298, %v1109
      %v1128 = vld [vmem:[%s273 + $0x10] sm:$0xff]
      %v1129 = vld [vmem:[%s273 + $0x18] sm:$0xff]
      %v1130 = vld [vmem:[%s273 + $0x20] sm:$0xff]
      %v1131 = vld [vmem:[%s273 + $0x28] sm:$0xff]
      %v1132 = vld [vmem:[%s273 + $0x30] sm:$0xff]
      %v1133 = vld [vmem:[%s273 + $0x38] sm:$0xff]
      %v1134 = vld [vmem:[%s273 + $0x40] sm:$0xff]
      %v1135 = vld [vmem:[%s273 + $0x48] sm:$0xff]
      %v1136 = vld [vmem:[%s273 + $0x50] sm:$0xff]
      %v1137 = vld [vmem:[%s273 + $0x58] sm:$0xff]
      %1148 = vrot.lane.b32.xlu0 %v1128, 68
      %v1149 = vpop.permute.xlu0 %1148
      %1150 = vrot.lane.b32.xlu0 %v1129, 68
      %v1151 = vpop.permute.xlu0 %1150
      %1152 = vrot.lane.b32.xlu0 %v1130, 68
      %v1153 = vpop.permute.xlu0 %1152
      %1154 = vrot.lane.b32.xlu0 %v1131, 68
      %v1155 = vpop.permute.xlu0 %1154
      %1156 = vrot.lane.b32.xlu0 %v1132, 68
      %v1157 = vpop.permute.xlu0 %1156
      %1158 = vrot.lane.b32.xlu0 %v1133, 68
      %v1159 = vpop.permute.xlu0 %1158
      %1160 = vrot.lane.b32.xlu0 %v1134, 68
      %v1161 = vpop.permute.xlu0 %1160
      %1162 = vrot.lane.b32.xlu0 %v1135, 68
      %v1163 = vpop.permute.xlu0 %1162
      %1164 = vrot.lane.b32.xlu0 %v1136, 68
      %v1165 = vpop.permute.xlu0 %1164
      %1166 = vrot.lane.b32.xlu0 %v1137, 68
      %v1167 = vpop.permute.xlu0 %1166
      %vm1168 = vcmask 556032
      %v1169 = vsel %vm1168, %v1149, %v1151
      %v1170 = vsel %vm1168, %v1151, %v1153
      %v1171 = vsel %vm1168, %v1153, %v1155
      %v1172 = vsel %vm1168, %v1155, %v1157
      %v1173 = vsel %vm1168, %v1157, %v1159
      %v1174 = vsel %vm1168, %v1159, %v1161
      %v1175 = vsel %vm1168, %v1161, %v1163
      %v1176 = vsel %vm1168, %v1163, %v1165
      %v1177 = vsel %vm1168, %v1165, %v1167
      %1187 = vst [vmem:[#allocation2 + $0x3f0] sm:$0xff] %v1169
      %1188 = vst [vmem:[#allocation2 + $0x3f8] sm:$0xff] %v1170
      %1189 = vst [vmem:[#allocation2 + $0x400] sm:$0xff] %v1171
      %1190 = vst [vmem:[#allocation2 + $0x408] sm:$0xff] %v1172
      %1191 = vst [vmem:[#allocation2 + $0x410] sm:$0xff] %v1173
      %1192 = vst [vmem:[#allocation2 + $0x418] sm:$0xff] %v1174
      %1193 = vst [vmem:[#allocation2 + $0x420] sm:$0xff] %v1175
      %1194 = vst [vmem:[#allocation2 + $0x428] sm:$0xff] %v1176
      %1195 = vst.msk [vmem:[#allocation2 + $0x430] sm:$0xff] %vm298, %v1177
      %v1196 = vld [vmem:[%s273 + $0x10] sm:$0xff]
      %v1197 = vld [vmem:[%s273 + $0x18] sm:$0xff]
      %v1198 = vld [vmem:[%s273 + $0x20] sm:$0xff]
      %v1199 = vld [vmem:[%s273 + $0x28] sm:$0xff]
      %v1200 = vld [vmem:[%s273 + $0x30] sm:$0xff]
      %v1201 = vld [vmem:[%s273 + $0x38] sm:$0xff]
      %v1202 = vld [vmem:[%s273 + $0x40] sm:$0xff]
      %v1203 = vld [vmem:[%s273 + $0x48] sm:$0xff]
      %v1204 = vld [vmem:[%s273 + $0x50] sm:$0xff]
      %v1205 = vld [vmem:[%s273 + $0x58] sm:$0xff]
      %1216 = vrot.lane.b32.xlu0 %v1196, 48
      %v1217 = vpop.permute.xlu0 %1216
      %1218 = vrot.lane.b32.xlu0 %v1197, 48
      %v1219 = vpop.permute.xlu0 %1218
      %1220 = vrot.lane.b32.xlu0 %v1198, 48
      %v1221 = vpop.permute.xlu0 %1220
      %1222 = vrot.lane.b32.xlu0 %v1199, 48
      %v1223 = vpop.permute.xlu0 %1222
      %1224 = vrot.lane.b32.xlu0 %v1200, 48
      %v1225 = vpop.permute.xlu0 %1224
      %1226 = vrot.lane.b32.xlu0 %v1201, 48
      %v1227 = vpop.permute.xlu0 %1226
      %1228 = vrot.lane.b32.xlu0 %v1202, 48
      %v1229 = vpop.permute.xlu0 %1228
      %1230 = vrot.lane.b32.xlu0 %v1203, 48
      %v1231 = vpop.permute.xlu0 %1230
      %1232 = vrot.lane.b32.xlu0 %v1204, 48
      %v1233 = vpop.permute.xlu0 %1232
      %1234 = vrot.lane.b32.xlu0 %v1205, 48
      %v1235 = vpop.permute.xlu0 %1234
      %vm1236 = vcmask 392192
      %v1237 = vsel %vm1236, %v1217, %v1219
      %v1238 = vsel %vm1236, %v1219, %v1221
      %v1239 = vsel %vm1236, %v1221, %v1223
      %v1240 = vsel %vm1236, %v1223, %v1225
      %v1241 = vsel %vm1236, %v1225, %v1227
      %v1242 = vsel %vm1236, %v1227, %v1229
      %v1243 = vsel %vm1236, %v1229, %v1231
      %v1244 = vsel %vm1236, %v1231, %v1233
      %v1245 = vsel %vm1236, %v1233, %v1235
      %1255 = vst [vmem:[#allocation2 + $0x438] sm:$0xff] %v1237
      %1256 = vst [vmem:[#allocation2 + $0x440] sm:$0xff] %v1238
      %1257 = vst [vmem:[#allocation2 + $0x448] sm:$0xff] %v1239
      %1258 = vst [vmem:[#allocation2 + $0x450] sm:$0xff] %v1240
      %1259 = vst [vmem:[#allocation2 + $0x458] sm:$0xff] %v1241
      %1260 = vst [vmem:[#allocation2 + $0x460] sm:$0xff] %v1242
      %1261 = vst [vmem:[#allocation2 + $0x468] sm:$0xff] %v1243
      %1262 = vst [vmem:[#allocation2 + $0x470] sm:$0xff] %v1244
      %1263 = vst.msk [vmem:[#allocation2 + $0x478] sm:$0xff] %vm298, %v1245
      %v1264 = vld [vmem:[%s273 + $0x10] sm:$0xff]
      %v1265 = vld [vmem:[%s273 + $0x18] sm:$0xff]
      %v1266 = vld [vmem:[%s273 + $0x20] sm:$0xff]
      %v1267 = vld [vmem:[%s273 + $0x28] sm:$0xff]
      %v1268 = vld [vmem:[%s273 + $0x30] sm:$0xff]
      %v1269 = vld [vmem:[%s273 + $0x38] sm:$0xff]
      %v1270 = vld [vmem:[%s273 + $0x40] sm:$0xff]
      %v1271 = vld [vmem:[%s273 + $0x48] sm:$0xff]
      %v1272 = vld [vmem:[%s273 + $0x50] sm:$0xff]
      %v1273 = vld [vmem:[%s273 + $0x58] sm:$0xff]
      %1284 = vrot.lane.b32.xlu0 %v1264, 46
      %v1285 = vpop.permute.xlu0 %1284
      %1286 = vrot.lane.b32.xlu0 %v1265, 46
      %v1287 = vpop.permute.xlu0 %1286
      %1288 = vrot.lane.b32.xlu0 %v1266, 46
      %v1289 = vpop.permute.xlu0 %1288
      %1290 = vrot.lane.b32.xlu0 %v1267, 46
      %v1291 = vpop.permute.xlu0 %1290
      %1292 = vrot.lane.b32.xlu0 %v1268, 46
      %v1293 = vpop.permute.xlu0 %1292
      %1294 = vrot.lane.b32.xlu0 %v1269, 46
      %v1295 = vpop.permute.xlu0 %1294
      %1296 = vrot.lane.b32.xlu0 %v1270, 46
      %v1297 = vpop.permute.xlu0 %1296
      %1298 = vrot.lane.b32.xlu0 %v1271, 46
      %v1299 = vpop.permute.xlu0 %1298
      %1300 = vrot.lane.b32.xlu0 %v1272, 46
      %v1301 = vpop.permute.xlu0 %1300
      %1302 = vrot.lane.b32.xlu0 %v1273, 46
      %v1303 = vpop.permute.xlu0 %1302
      %vm1304 = vcmask 375808
      %v1305 = vsel %vm1304, %v1285, %v1287
      %v1306 = vsel %vm1304, %v1287, %v1289
      %v1307 = vsel %vm1304, %v1289, %v1291
      %v1308 = vsel %vm1304, %v1291, %v1293
      %v1309 = vsel %vm1304, %v1293, %v1295
      %v1310 = vsel %vm1304, %v1295, %v1297
      %v1311 = vsel %vm1304, %v1297, %v1299
      %v1312 = vsel %vm1304, %v1299, %v1301
      %v1313 = vsel %vm1304, %v1301, %v1303
      %1323 = vst [vmem:[#allocation2 + $0x480] sm:$0xff] %v1305
      %1324 = vst [vmem:[#allocation2 + $0x488] sm:$0xff] %v1306
      %1325 = vst [vmem:[#allocation2 + $0x490] sm:$0xff] %v1307
      %1326 = vst [vmem:[#allocation2 + $0x498] sm:$0xff] %v1308
      %1327 = vst [vmem:[#allocation2 + $0x4a0] sm:$0xff] %v1309
      %1328 = vst [vmem:[#allocation2 + $0x4a8] sm:$0xff] %v1310
      %1329 = vst [vmem:[#allocation2 + $0x4b0] sm:$0xff] %v1311
      %1330 = vst [vmem:[#allocation2 + $0x4b8] sm:$0xff] %v1312
      %1331 = vst.msk [vmem:[#allocation2 + $0x4c0] sm:$0xff] %vm298, %v1313
      %v1332 = vld [vmem:[%s273 + $0x10] sm:$0xff]
      %v1333 = vld [vmem:[%s273 + $0x18] sm:$0xff]
      %v1334 = vld [vmem:[%s273 + $0x20] sm:$0xff]
      %v1335 = vld [vmem:[%s273 + $0x28] sm:$0xff]
      %v1336 = vld [vmem:[%s273 + $0x30] sm:$0xff]
      %v1337 = vld [vmem:[%s273 + $0x38] sm:$0xff]
      %v1338 = vld [vmem:[%s273 + $0x40] sm:$0xff]
      %v1339 = vld [vmem:[%s273 + $0x48] sm:$0xff]
      %v1340 = vld [vmem:[%s273 + $0x50] sm:$0xff]
      %v1341 = vld [vmem:[%s273 + $0x58] sm:$0xff]
      %1352 = vrot.lane.b32.xlu0 %v1332, 44
      %v1353 = vpop.permute.xlu0 %1352
      %1354 = vrot.lane.b32.xlu0 %v1333, 44
      %v1355 = vpop.permute.xlu0 %1354
      %1356 = vrot.lane.b32.xlu0 %v1334, 44
      %v1357 = vpop.permute.xlu0 %1356
      %1358 = vrot.lane.b32.xlu0 %v1335, 44
      %v1359 = vpop.permute.xlu0 %1358
      %1360 = vrot.lane.b32.xlu0 %v1336, 44
      %v1361 = vpop.permute.xlu0 %1360
      %1362 = vrot.lane.b32.xlu0 %v1337, 44
      %v1363 = vpop.permute.xlu0 %1362
      %1364 = vrot.lane.b32.xlu0 %v1338, 44
      %v1365 = vpop.permute.xlu0 %1364
      %1366 = vrot.lane.b32.xlu0 %v1339, 44
      %v1367 = vpop.permute.xlu0 %1366
      %1368 = vrot.lane.b32.xlu0 %v1340, 44
      %v1369 = vpop.permute.xlu0 %1368
      %1370 = vrot.lane.b32.xlu0 %v1341, 44
      %v1371 = vpop.permute.xlu0 %1370
      %vm1372 = vcmask 359424
      %v1373 = vsel %vm1372, %v1353, %v1355
      %v1374 = vsel %vm1372, %v1355, %v1357
      %v1375 = vsel %vm1372, %v1357, %v1359
      %v1376 = vsel %vm1372, %v1359, %v1361
      %v1377 = vsel %vm1372, %v1361, %v1363
      %v1378 = vsel %vm1372, %v1363, %v1365
      %v1379 = vsel %vm1372, %v1365, %v1367
      %v1380 = vsel %vm1372, %v1367, %v1369
      %v1381 = vsel %vm1372, %v1369, %v1371
      %1391 = vst [vmem:[#allocation2 + $0x4c8] sm:$0xff] %v1373
      %1392 = vst [vmem:[#allocation2 + $0x4d0] sm:$0xff] %v1374
      %1393 = vst [vmem:[#allocation2 + $0x4d8] sm:$0xff] %v1375
      %1394 = vst [vmem:[#allocation2 + $0x4e0] sm:$0xff] %v1376
      %1395 = vst [vmem:[#allocation2 + $0x4e8] sm:$0xff] %v1377
      %1396 = vst [vmem:[#allocation2 + $0x4f0] sm:$0xff] %v1378
      %1397 = vst [vmem:[#allocation2 + $0x4f8] sm:$0xff] %v1379
      %1398 = vst [vmem:[#allocation2 + $0x500] sm:$0xff] %v1380
      %1399 = vst.msk [vmem:[#allocation2 + $0x508] sm:$0xff] %vm298, %v1381
      %v1400 = vld [vmem:[%s273 + $0x20] sm:$0xff]
      %v1401 = vld [vmem:[%s273 + $0x28] sm:$0xff]
      %v1402 = vld [vmem:[%s273 + $0x30] sm:$0xff]
      %v1403 = vld [vmem:[%s273 + $0x38] sm:$0xff]
      %v1404 = vld [vmem:[%s273 + $0x40] sm:$0xff]
      %v1405 = vld [vmem:[%s273 + $0x48] sm:$0xff]
      %v1406 = vld [vmem:[%s273 + $0x50] sm:$0xff]
      %v1407 = vld [vmem:[%s273 + $0x58] sm:$0xff]
      %v1408 = vld [vmem:[%s273 + $0x60] sm:$0xff]
      %v1409 = vld [vmem:[%s273 + $0x68] sm:$0xff]
      %1420 = vrot.lane.b32.xlu0 %v1400, 64
      %v1421 = vpop.permute.xlu0 %1420
      %1422 = vrot.lane.b32.xlu0 %v1401, 64
      %v1423 = vpop.permute.xlu0 %1422
      %1424 = vrot.lane.b32.xlu0 %v1402, 64
      %v1425 = vpop.permute.xlu0 %1424
      %1426 = vrot.lane.b32.xlu0 %v1403, 64
      %v1427 = vpop.permute.xlu0 %1426
      %1428 = vrot.lane.b32.xlu0 %v1404, 64
      %v1429 = vpop.permute.xlu0 %1428
      %1430 = vrot.lane.b32.xlu0 %v1405, 64
      %v1431 = vpop.permute.xlu0 %1430
      %1432 = vrot.lane.b32.xlu0 %v1406, 64
      %v1433 = vpop.permute.xlu0 %1432
      %1434 = vrot.lane.b32.xlu0 %v1407, 64
      %v1435 = vpop.permute.xlu0 %1434
      %1436 = vrot.lane.b32.xlu0 %v1408, 64
      %v1437 = vpop.permute.xlu0 %1436
      %1438 = vrot.lane.b32.xlu0 %v1409, 64
      %v1439 = vpop.permute.xlu0 %1438
      %vm1440 = vcmask 523264
      %v1441 = vsel %vm1440, %v1421, %v1423
      %v1442 = vsel %vm1440, %v1423, %v1425
      %v1443 = vsel %vm1440, %v1425, %v1427
      %v1444 = vsel %vm1440, %v1427, %v1429
      %v1445 = vsel %vm1440, %v1429, %v1431
      %v1446 = vsel %vm1440, %v1431, %v1433
      %v1447 = vsel %vm1440, %v1433, %v1435
      %v1448 = vsel %vm1440, %v1435, %v1437
      %v1449 = vsel %vm1440, %v1437, %v1439
      %1459 = vst [vmem:[#allocation2 + $0x510] sm:$0xff] %v1441
      %1460 = vst [vmem:[#allocation2 + $0x518] sm:$0xff] %v1442
      %1461 = vst [vmem:[#allocation2 + $0x520] sm:$0xff] %v1443
      %1462 = vst [vmem:[#allocation2 + $0x528] sm:$0xff] %v1444
      %1463 = vst [vmem:[#allocation2 + $0x530] sm:$0xff] %v1445
      %1464 = vst [vmem:[#allocation2 + $0x538] sm:$0xff] %v1446
      %1465 = vst [vmem:[#allocation2 + $0x540] sm:$0xff] %v1447
      %1466 = vst [vmem:[#allocation2 + $0x548] sm:$0xff] %v1448
      %1467 = vst.msk [vmem:[#allocation2 + $0x550] sm:$0xff] %vm298, %v1449
      %v1468 = vld [vmem:[%s273 + $0x20] sm:$0xff]
      %v1469 = vld [vmem:[%s273 + $0x28] sm:$0xff]
      %v1470 = vld [vmem:[%s273 + $0x30] sm:$0xff]
      %v1471 = vld [vmem:[%s273 + $0x38] sm:$0xff]
      %v1472 = vld [vmem:[%s273 + $0x40] sm:$0xff]
      %v1473 = vld [vmem:[%s273 + $0x48] sm:$0xff]
      %v1474 = vld [vmem:[%s273 + $0x50] sm:$0xff]
      %v1475 = vld [vmem:[%s273 + $0x58] sm:$0xff]
      %v1476 = vld [vmem:[%s273 + $0x60] sm:$0xff]
      %v1477 = vld [vmem:[%s273 + $0x68] sm:$0xff]
      %1488 = vrot.lane.b32.xlu0 %v1468, 62
      %v1489 = vpop.permute.xlu0 %1488
      %1490 = vrot.lane.b32.xlu0 %v1469, 62
      %v1491 = vpop.permute.xlu0 %1490
      %1492 = vrot.lane.b32.xlu0 %v1470, 62
      %v1493 = vpop.permute.xlu0 %1492
      %1494 = vrot.lane.b32.xlu0 %v1471, 62
      %v1495 = vpop.permute.xlu0 %1494
      %1496 = vrot.lane.b32.xlu0 %v1472, 62
      %v1497 = vpop.permute.xlu0 %1496
      %1498 = vrot.lane.b32.xlu0 %v1473, 62
      %v1499 = vpop.permute.xlu0 %1498
      %1500 = vrot.lane.b32.xlu0 %v1474, 62
      %v1501 = vpop.permute.xlu0 %1500
      %1502 = vrot.lane.b32.xlu0 %v1475, 62
      %v1503 = vpop.permute.xlu0 %1502
      %1504 = vrot.lane.b32.xlu0 %v1476, 62
      %v1505 = vpop.permute.xlu0 %1504
      %1506 = vrot.lane.b32.xlu0 %v1477, 62
      %v1507 = vpop.permute.xlu0 %1506
      %vm1508 = vcmask 506880
      %v1509 = vsel %vm1508, %v1489, %v1491
      %v1510 = vsel %vm1508, %v1491, %v1493
      %v1511 = vsel %vm1508, %v1493, %v1495
      %v1512 = vsel %vm1508, %v1495, %v1497
      %v1513 = vsel %vm1508, %v1497, %v1499
      %v1514 = vsel %vm1508, %v1499, %v1501
      %v1515 = vsel %vm1508, %v1501, %v1503
      %v1516 = vsel %vm1508, %v1503, %v1505
      %v1517 = vsel %vm1508, %v1505, %v1507
      %1527 = vst [vmem:[#allocation2 + $0x558] sm:$0xff] %v1509
      %1528 = vst [vmem:[#allocation2 + $0x560] sm:$0xff] %v1510
      %1529 = vst [vmem:[#allocation2 + $0x568] sm:$0xff] %v1511
      %1530 = vst [vmem:[#allocation2 + $0x570] sm:$0xff] %v1512
      %1531 = vst [vmem:[#allocation2 + $0x578] sm:$0xff] %v1513
      %1532 = vst [vmem:[#allocation2 + $0x580] sm:$0xff] %v1514
      %1533 = vst [vmem:[#allocation2 + $0x588] sm:$0xff] %v1515
      %1534 = vst [vmem:[#allocation2 + $0x590] sm:$0xff] %v1516
      %1535 = vst.msk [vmem:[#allocation2 + $0x598] sm:$0xff] %vm298, %v1517
      %v1536 = vld [vmem:[%s273 + $0x20] sm:$0xff]
      %v1537 = vld [vmem:[%s273 + $0x28] sm:$0xff]
      %v1538 = vld [vmem:[%s273 + $0x30] sm:$0xff]
      %v1539 = vld [vmem:[%s273 + $0x38] sm:$0xff]
      %v1540 = vld [vmem:[%s273 + $0x40] sm:$0xff]
      %v1541 = vld [vmem:[%s273 + $0x48] sm:$0xff]
      %v1542 = vld [vmem:[%s273 + $0x50] sm:$0xff]
      %v1543 = vld [vmem:[%s273 + $0x58] sm:$0xff]
      %v1544 = vld [vmem:[%s273 + $0x60] sm:$0xff]
      %v1545 = vld [vmem:[%s273 + $0x68] sm:$0xff]
      %1556 = vrot.lane.b32.xlu0 %v1536, 60
      %v1557 = vpop.permute.xlu0 %1556
      %1558 = vrot.lane.b32.xlu0 %v1537, 60
      %v1559 = vpop.permute.xlu0 %1558
      %1560 = vrot.lane.b32.xlu0 %v1538, 60
      %v1561 = vpop.permute.xlu0 %1560
      %1562 = vrot.lane.b32.xlu0 %v1539, 60
      %v1563 = vpop.permute.xlu0 %1562
      %1564 = vrot.lane.b32.xlu0 %v1540, 60
      %v1565 = vpop.permute.xlu0 %1564
      %1566 = vrot.lane.b32.xlu0 %v1541, 60
      %v1567 = vpop.permute.xlu0 %1566
      %1568 = vrot.lane.b32.xlu0 %v1542, 60
      %v1569 = vpop.permute.xlu0 %1568
      %1570 = vrot.lane.b32.xlu0 %v1543, 60
      %v1571 = vpop.permute.xlu0 %1570
      %1572 = vrot.lane.b32.xlu0 %v1544, 60
      %v1573 = vpop.permute.xlu0 %1572
      %1574 = vrot.lane.b32.xlu0 %v1545, 60
      %v1575 = vpop.permute.xlu0 %1574
      %vm1576 = vcmask 490496
      %v1577 = vsel %vm1576, %v1557, %v1559
      %v1578 = vsel %vm1576, %v1559, %v1561
      %v1579 = vsel %vm1576, %v1561, %v1563
      %v1580 = vsel %vm1576, %v1563, %v1565
      %v1581 = vsel %vm1576, %v1565, %v1567
      %v1582 = vsel %vm1576, %v1567, %v1569
      %v1583 = vsel %vm1576, %v1569, %v1571
      %v1584 = vsel %vm1576, %v1571, %v1573
      %v1585 = vsel %vm1576, %v1573, %v1575
      %1595 = vst [vmem:[#allocation2 + $0x5a0] sm:$0xff] %v1577
      %1596 = vst [vmem:[#allocation2 + $0x5a8] sm:$0xff] %v1578
      %1597 = vst [vmem:[#allocation2 + $0x5b0] sm:$0xff] %v1579
      %1598 = vst [vmem:[#allocation2 + $0x5b8] sm:$0xff] %v1580
      %1599 = vst [vmem:[#allocation2 + $0x5c0] sm:$0xff] %v1581
      %1600 = vst [vmem:[#allocation2 + $0x5c8] sm:$0xff] %v1582
      %1601 = vst [vmem:[#allocation2 + $0x5d0] sm:$0xff] %v1583
      %1602 = vst [vmem:[#allocation2 + $0x5d8] sm:$0xff] %v1584
      %1603 = vst.msk [vmem:[#allocation2 + $0x5e0] sm:$0xff] %vm298, %v1585
      %v1604 = vld [vmem:[%s273 + $0x20] sm:$0xff]
      %v1605 = vld [vmem:[%s273 + $0x28] sm:$0xff]
      %v1606 = vld [vmem:[%s273 + $0x30] sm:$0xff]
      %v1607 = vld [vmem:[%s273 + $0x38] sm:$0xff]
      %v1608 = vld [vmem:[%s273 + $0x40] sm:$0xff]
      %v1609 = vld [vmem:[%s273 + $0x48] sm:$0xff]
      %v1610 = vld [vmem:[%s273 + $0x50] sm:$0xff]
      %v1611 = vld [vmem:[%s273 + $0x58] sm:$0xff]
      %v1612 = vld [vmem:[%s273 + $0x60] sm:$0xff]
      %v1613 = vld [vmem:[%s273 + $0x68] sm:$0xff]
      %1624 = vrot.lane.b32.xlu0 %v1604, 40
      %v1625 = vpop.permute.xlu0 %1624
      %1626 = vrot.lane.b32.xlu0 %v1605, 40
      %v1627 = vpop.permute.xlu0 %1626
      %1628 = vrot.lane.b32.xlu0 %v1606, 40
      %v1629 = vpop.permute.xlu0 %1628
      %1630 = vrot.lane.b32.xlu0 %v1607, 40
      %v1631 = vpop.permute.xlu0 %1630
      %1632 = vrot.lane.b32.xlu0 %v1608, 40
      %v1633 = vpop.permute.xlu0 %1632
      %1634 = vrot.lane.b32.xlu0 %v1609, 40
      %v1635 = vpop.permute.xlu0 %1634
      %1636 = vrot.lane.b32.xlu0 %v1610, 40
      %v1637 = vpop.permute.xlu0 %1636
      %1638 = vrot.lane.b32.xlu0 %v1611, 40
      %v1639 = vpop.permute.xlu0 %1638
      %1640 = vrot.lane.b32.xlu0 %v1612, 40
      %v1641 = vpop.permute.xlu0 %1640
      %1642 = vrot.lane.b32.xlu0 %v1613, 40
      %v1643 = vpop.permute.xlu0 %1642
      %vm1644 = vcmask 326656
      %v1645 = vsel %vm1644, %v1625, %v1627
      %v1646 = vsel %vm1644, %v1627, %v1629
      %v1647 = vsel %vm1644, %v1629, %v1631
      %v1648 = vsel %vm1644, %v1631, %v1633
      %v1649 = vsel %vm1644, %v1633, %v1635
      %v1650 = vsel %vm1644, %v1635, %v1637
      %v1651 = vsel %vm1644, %v1637, %v1639
      %v1652 = vsel %vm1644, %v1639, %v1641
      %v1653 = vsel %vm1644, %v1641, %v1643
      %1663 = vst [vmem:[#allocation2 + $0x5e8] sm:$0xff] %v1645
      %1664 = vst [vmem:[#allocation2 + $0x5f0] sm:$0xff] %v1646
      %1665 = vst [vmem:[#allocation2 + $0x5f8] sm:$0xff] %v1647
      %1666 = vst [vmem:[#allocation2 + $0x600] sm:$0xff] %v1648
      %1667 = vst [vmem:[#allocation2 + $0x608] sm:$0xff] %v1649
      %1668 = vst [vmem:[#allocation2 + $0x610] sm:$0xff] %v1650
      %1669 = vst [vmem:[#allocation2 + $0x618] sm:$0xff] %v1651
      %1670 = vst [vmem:[#allocation2 + $0x620] sm:$0xff] %v1652
      %1671 = vst.msk [vmem:[#allocation2 + $0x628] sm:$0xff] %vm298, %v1653
      %v1672 = vld [vmem:[%s273 + $0x20] sm:$0xff]
      %v1673 = vld [vmem:[%s273 + $0x28] sm:$0xff]
      %v1674 = vld [vmem:[%s273 + $0x30] sm:$0xff]
      %v1675 = vld [vmem:[%s273 + $0x38] sm:$0xff]
      %v1676 = vld [vmem:[%s273 + $0x40] sm:$0xff]
      %v1677 = vld [vmem:[%s273 + $0x48] sm:$0xff]
      %v1678 = vld [vmem:[%s273 + $0x50] sm:$0xff]
      %v1679 = vld [vmem:[%s273 + $0x58] sm:$0xff]
      %v1680 = vld [vmem:[%s273 + $0x60] sm:$0xff]
      %v1681 = vld [vmem:[%s273 + $0x68] sm:$0xff]
      %1692 = vrot.lane.b32.xlu0 %v1672, 38
      %v1693 = vpop.permute.xlu0 %1692
      %1694 = vrot.lane.b32.xlu0 %v1673, 38
      %v1695 = vpop.permute.xlu0 %1694
      %1696 = vrot.lane.b32.xlu0 %v1674, 38
      %v1697 = vpop.permute.xlu0 %1696
      %1698 = vrot.lane.b32.xlu0 %v1675, 38
      %v1699 = vpop.permute.xlu0 %1698
      %1700 = vrot.lane.b32.xlu0 %v1676, 38
      %v1701 = vpop.permute.xlu0 %1700
      %1702 = vrot.lane.b32.xlu0 %v1677, 38
      %v1703 = vpop.permute.xlu0 %1702
      %1704 = vrot.lane.b32.xlu0 %v1678, 38
      %v1705 = vpop.permute.xlu0 %1704
      %1706 = vrot.lane.b32.xlu0 %v1679, 38
      %v1707 = vpop.permute.xlu0 %1706
      %1708 = vrot.lane.b32.xlu0 %v1680, 38
      %v1709 = vpop.permute.xlu0 %1708
      %1710 = vrot.lane.b32.xlu0 %v1681, 38
      %v1711 = vpop.permute.xlu0 %1710
      %vm1712 = vcmask 310272
      %v1713 = vsel %vm1712, %v1693, %v1695
      %v1714 = vsel %vm1712, %v1695, %v1697
      %v1715 = vsel %vm1712, %v1697, %v1699
      %v1716 = vsel %vm1712, %v1699, %v1701
      %v1717 = vsel %vm1712, %v1701, %v1703
      %v1718 = vsel %vm1712, %v1703, %v1705
      %v1719 = vsel %vm1712, %v1705, %v1707
      %v1720 = vsel %vm1712, %v1707, %v1709
      %v1721 = vsel %vm1712, %v1709, %v1711
      %1731 = vst [vmem:[#allocation2 + $0x630] sm:$0xff] %v1713
      %1732 = vst [vmem:[#allocation2 + $0x638] sm:$0xff] %v1714
      %1733 = vst [vmem:[#allocation2 + $0x640] sm:$0xff] %v1715
      %1734 = vst [vmem:[#allocation2 + $0x648] sm:$0xff] %v1716
      %1735 = vst [vmem:[#allocation2 + $0x650] sm:$0xff] %v1717
      %1736 = vst [vmem:[#allocation2 + $0x658] sm:$0xff] %v1718
      %1737 = vst [vmem:[#allocation2 + $0x660] sm:$0xff] %v1719
      %1738 = vst [vmem:[#allocation2 + $0x668] sm:$0xff] %v1720
      %1739 = vst.msk [vmem:[#allocation2 + $0x670] sm:$0xff] %vm298, %v1721
      %v1740 = vld [vmem:[%s273 + $0x20] sm:$0xff]
      %v1741 = vld [vmem:[%s273 + $0x28] sm:$0xff]
      %v1742 = vld [vmem:[%s273 + $0x30] sm:$0xff]
      %v1743 = vld [vmem:[%s273 + $0x38] sm:$0xff]
      %v1744 = vld [vmem:[%s273 + $0x40] sm:$0xff]
      %v1745 = vld [vmem:[%s273 + $0x48] sm:$0xff]
      %v1746 = vld [vmem:[%s273 + $0x50] sm:$0xff]
      %v1747 = vld [vmem:[%s273 + $0x58] sm:$0xff]
      %v1748 = vld [vmem:[%s273 + $0x60] sm:$0xff]
      %v1749 = vld [vmem:[%s273 + $0x68] sm:$0xff]
      %1760 = vrot.lane.b32.xlu0 %v1740, 36
      %v1761 = vpop.permute.xlu0 %1760
      %1762 = vrot.lane.b32.xlu0 %v1741, 36
      %v1763 = vpop.permute.xlu0 %1762
      %1764 = vrot.lane.b32.xlu0 %v1742, 36
      %v1765 = vpop.permute.xlu0 %1764
      %1766 = vrot.lane.b32.xlu0 %v1743, 36
      %v1767 = vpop.permute.xlu0 %1766
      %1768 = vrot.lane.b32.xlu0 %v1744, 36
      %v1769 = vpop.permute.xlu0 %1768
      %1770 = vrot.lane.b32.xlu0 %v1745, 36
      %v1771 = vpop.permute.xlu0 %1770
      %1772 = vrot.lane.b32.xlu0 %v1746, 36
      %v1773 = vpop.permute.xlu0 %1772
      %1774 = vrot.lane.b32.xlu0 %v1747, 36
      %v1775 = vpop.permute.xlu0 %1774
      %1776 = vrot.lane.b32.xlu0 %v1748, 36
      %v1777 = vpop.permute.xlu0 %1776
      %1778 = vrot.lane.b32.xlu0 %v1749, 36
      %v1779 = vpop.permute.xlu0 %1778
      %vm1780 = vcmask 293888
      %v1781 = vsel %vm1780, %v1761, %v1763
      %v1782 = vsel %vm1780, %v1763, %v1765
      %v1783 = vsel %vm1780, %v1765, %v1767
      %v1784 = vsel %vm1780, %v1767, %v1769
      %v1785 = vsel %vm1780, %v1769, %v1771
      %v1786 = vsel %vm1780, %v1771, %v1773
      %v1787 = vsel %vm1780, %v1773, %v1775
      %v1788 = vsel %vm1780, %v1775, %v1777
      %v1789 = vsel %vm1780, %v1777, %v1779
      %1799 = vst [vmem:[#allocation2 + $0x678] sm:$0xff] %v1781
      %1800 = vst [vmem:[#allocation2 + $0x680] sm:$0xff] %v1782
      %1801 = vst [vmem:[#allocation2 + $0x688] sm:$0xff] %v1783
      %1802 = vst [vmem:[#allocation2 + $0x690] sm:$0xff] %v1784
      %1803 = vst [vmem:[#allocation2 + $0x698] sm:$0xff] %v1785
      %1804 = vst [vmem:[#allocation2 + $0x6a0] sm:$0xff] %v1786
      %1805 = vst [vmem:[#allocation2 + $0x6a8] sm:$0xff] %v1787
      %1806 = vst [vmem:[#allocation2 + $0x6b0] sm:$0xff] %v1788
      %1807 = vst.msk [vmem:[#allocation2 + $0x6b8] sm:$0xff] %vm298, %v1789
      %v1808 = vld [vmem:[%s273 + $0x20] sm:$0xff]
      %v1809 = vld [vmem:[%s273 + $0x28] sm:$0xff]
      %v1810 = vld [vmem:[%s273 + $0x30] sm:$0xff]
      %v1811 = vld [vmem:[%s273 + $0x38] sm:$0xff]
      %v1812 = vld [vmem:[%s273 + $0x40] sm:$0xff]
      %v1813 = vld [vmem:[%s273 + $0x48] sm:$0xff]
      %v1814 = vld [vmem:[%s273 + $0x50] sm:$0xff]
      %v1815 = vld [vmem:[%s273 + $0x58] sm:$0xff]
      %v1816 = vld [vmem:[%s273 + $0x60] sm:$0xff]
      %v1817 = vld [vmem:[%s273 + $0x68] sm:$0xff]
      %1828 = vrot.lane.b32.xlu0 %v1808, 16
      %v1829 = vpop.permute.xlu0 %1828
      %1830 = vrot.lane.b32.xlu0 %v1809, 16
      %v1831 = vpop.permute.xlu0 %1830
      %1832 = vrot.lane.b32.xlu0 %v1810, 16
      %v1833 = vpop.permute.xlu0 %1832
      %1834 = vrot.lane.b32.xlu0 %v1811, 16
      %v1835 = vpop.permute.xlu0 %1834
      %1836 = vrot.lane.b32.xlu0 %v1812, 16
      %v1837 = vpop.permute.xlu0 %1836
      %1838 = vrot.lane.b32.xlu0 %v1813, 16
      %v1839 = vpop.permute.xlu0 %1838
      %1840 = vrot.lane.b32.xlu0 %v1814, 16
      %v1841 = vpop.permute.xlu0 %1840
      %1842 = vrot.lane.b32.xlu0 %v1815, 16
      %v1843 = vpop.permute.xlu0 %1842
      %1844 = vrot.lane.b32.xlu0 %v1816, 16
      %v1845 = vpop.permute.xlu0 %1844
      %1846 = vrot.lane.b32.xlu0 %v1817, 16
      %v1847 = vpop.permute.xlu0 %1846
      %vm1848 = vcmask 130048
      %v1849 = vsel %vm1848, %v1829, %v1831
      %v1850 = vsel %vm1848, %v1831, %v1833
      %v1851 = vsel %vm1848, %v1833, %v1835
      %v1852 = vsel %vm1848, %v1835, %v1837
      %v1853 = vsel %vm1848, %v1837, %v1839
      %v1854 = vsel %vm1848, %v1839, %v1841
      %v1855 = vsel %vm1848, %v1841, %v1843
      %v1856 = vsel %vm1848, %v1843, %v1845
      %v1857 = vsel %vm1848, %v1845, %v1847
      %1867 = vst [vmem:[#allocation2 + $0x6c0] sm:$0xff] %v1849
      %1868 = vst [vmem:[#allocation2 + $0x6c8] sm:$0xff] %v1850
      %1869 = vst [vmem:[#allocation2 + $0x6d0] sm:$0xff] %v1851
      %1870 = vst [vmem:[#allocation2 + $0x6d8] sm:$0xff] %v1852
      %1871 = vst [vmem:[#allocation2 + $0x6e0] sm:$0xff] %v1853
      %1872 = vst [vmem:[#allocation2 + $0x6e8] sm:$0xff] %v1854
      %1873 = vst [vmem:[#allocation2 + $0x6f0] sm:$0xff] %v1855
      %1874 = vst [vmem:[#allocation2 + $0x6f8] sm:$0xff] %v1856
      %1875 = vst.msk [vmem:[#allocation2 + $0x700] sm:$0xff] %vm298, %v1857
      %v1876 = vld [vmem:[%s273 + $0x20] sm:$0xff]
      %v1877 = vld [vmem:[%s273 + $0x28] sm:$0xff]
      %v1878 = vld [vmem:[%s273 + $0x30] sm:$0xff]
      %v1879 = vld [vmem:[%s273 + $0x38] sm:$0xff]
      %v1880 = vld [vmem:[%s273 + $0x40] sm:$0xff]
      %v1881 = vld [vmem:[%s273 + $0x48] sm:$0xff]
      %v1882 = vld [vmem:[%s273 + $0x50] sm:$0xff]
      %v1883 = vld [vmem:[%s273 + $0x58] sm:$0xff]
      %v1884 = vld [vmem:[%s273 + $0x60] sm:$0xff]
      %v1885 = vld [vmem:[%s273 + $0x68] sm:$0xff]
      %1896 = vrot.lane.b32.xlu0 %v1876, 14
      %v1897 = vpop.permute.xlu0 %1896
      %1898 = vrot.lane.b32.xlu0 %v1877, 14
      %v1899 = vpop.permute.xlu0 %1898
      %1900 = vrot.lane.b32.xlu0 %v1878, 14
      %v1901 = vpop.permute.xlu0 %1900
      %1902 = vrot.lane.b32.xlu0 %v1879, 14
      %v1903 = vpop.permute.xlu0 %1902
      %1904 = vrot.lane.b32.xlu0 %v1880, 14
      %v1905 = vpop.permute.xlu0 %1904
      %1906 = vrot.lane.b32.xlu0 %v1881, 14
      %v1907 = vpop.permute.xlu0 %1906
      %1908 = vrot.lane.b32.xlu0 %v1882, 14
      %v1909 = vpop.permute.xlu0 %1908
      %1910 = vrot.lane.b32.xlu0 %v1883, 14
      %v1911 = vpop.permute.xlu0 %1910
      %1912 = vrot.lane.b32.xlu0 %v1884, 14
      %v1913 = vpop.permute.xlu0 %1912
      %1914 = vrot.lane.b32.xlu0 %v1885, 14
      %v1915 = vpop.permute.xlu0 %1914
      %vm1916 = vcmask 113664
      %v1917 = vsel %vm1916, %v1897, %v1899
      %v1918 = vsel %vm1916, %v1899, %v1901
      %v1919 = vsel %vm1916, %v1901, %v1903
      %v1920 = vsel %vm1916, %v1903, %v1905
      %v1921 = vsel %vm1916, %v1905, %v1907
      %v1922 = vsel %vm1916, %v1907, %v1909
      %v1923 = vsel %vm1916, %v1909, %v1911
      %v1924 = vsel %vm1916, %v1911, %v1913
      %v1925 = vsel %vm1916, %v1913, %v1915
      %1935 = vst [vmem:[#allocation2 + $0x708] sm:$0xff] %v1917
      %1936 = vst [vmem:[#allocation2 + $0x710] sm:$0xff] %v1918
      %1937 = vst [vmem:[#allocation2 + $0x718] sm:$0xff] %v1919
      %1938 = vst [vmem:[#allocation2 + $0x720] sm:$0xff] %v1920
      %1939 = vst [vmem:[#allocation2 + $0x728] sm:$0xff] %v1921
      %1940 = vst [vmem:[#allocation2 + $0x730] sm:$0xff] %v1922
      %1941 = vst [vmem:[#allocation2 + $0x738] sm:$0xff] %v1923
      %1942 = vst [vmem:[#allocation2 + $0x740] sm:$0xff] %v1924
      %1943 = vst.msk [vmem:[#allocation2 + $0x748] sm:$0xff] %vm298, %v1925
      %v1944 = vld [vmem:[%s273 + $0x20] sm:$0xff]
      %v1945 = vld [vmem:[%s273 + $0x28] sm:$0xff]
      %v1946 = vld [vmem:[%s273 + $0x30] sm:$0xff]
      %v1947 = vld [vmem:[%s273 + $0x38] sm:$0xff]
      %v1948 = vld [vmem:[%s273 + $0x40] sm:$0xff]
      %v1949 = vld [vmem:[%s273 + $0x48] sm:$0xff]
      %v1950 = vld [vmem:[%s273 + $0x50] sm:$0xff]
      %v1951 = vld [vmem:[%s273 + $0x58] sm:$0xff]
      %v1952 = vld [vmem:[%s273 + $0x60] sm:$0xff]
      %v1953 = vld [vmem:[%s273 + $0x68] sm:$0xff]
      %1964 = vrot.lane.b32.xlu0 %v1944, 12
      %v1965 = vpop.permute.xlu0 %1964
      %1966 = vrot.lane.b32.xlu0 %v1945, 12
      %v1967 = vpop.permute.xlu0 %1966
      %1968 = vrot.lane.b32.xlu0 %v1946, 12
      %v1969 = vpop.permute.xlu0 %1968
      %1970 = vrot.lane.b32.xlu0 %v1947, 12
      %v1971 = vpop.permute.xlu0 %1970
      %1972 = vrot.lane.b32.xlu0 %v1948, 12
      %v1973 = vpop.permute.xlu0 %1972
      %1974 = vrot.lane.b32.xlu0 %v1949, 12
      %v1975 = vpop.permute.xlu0 %1974
      %1976 = vrot.lane.b32.xlu0 %v1950, 12
      %v1977 = vpop.permute.xlu0 %1976
      %1978 = vrot.lane.b32.xlu0 %v1951, 12
      %v1979 = vpop.permute.xlu0 %1978
      %1980 = vrot.lane.b32.xlu0 %v1952, 12
      %v1981 = vpop.permute.xlu0 %1980
      %1982 = vrot.lane.b32.xlu0 %v1953, 12
      %v1983 = vpop.permute.xlu0 %1982
      %vm1984 = vcmask 97280
      %v1985 = vsel %vm1984, %v1965, %v1967
      %v1986 = vsel %vm1984, %v1967, %v1969
      %v1987 = vsel %vm1984, %v1969, %v1971
      %v1988 = vsel %vm1984, %v1971, %v1973
      %v1989 = vsel %vm1984, %v1973, %v1975
      %v1990 = vsel %vm1984, %v1975, %v1977
      %v1991 = vsel %vm1984, %v1977, %v1979
      %v1992 = vsel %vm1984, %v1979, %v1981
      %v1993 = vsel %vm1984, %v1981, %v1983
      %2003 = vst [vmem:[#allocation2 + $0x750] sm:$0xff] %v1985
      %2004 = vst [vmem:[#allocation2 + $0x758] sm:$0xff] %v1986
      %2005 = vst [vmem:[#allocation2 + $0x760] sm:$0xff] %v1987
      %2006 = vst [vmem:[#allocation2 + $0x768] sm:$0xff] %v1988
      %2007 = vst [vmem:[#allocation2 + $0x770] sm:$0xff] %v1989
      %2008 = vst [vmem:[#allocation2 + $0x778] sm:$0xff] %v1990
      %2009 = vst [vmem:[#allocation2 + $0x780] sm:$0xff] %v1991
      %2010 = vst [vmem:[#allocation2 + $0x788] sm:$0xff] %v1992
      %2011 = vst.msk [vmem:[#allocation2 + $0x790] sm:$0xff] %vm298, %v1993
      %v2012 = vld [vmem:[%s3] sm:$0xff]
      %v2013 = vld [vmem:[%s3 + $0x8] sm:$0xff]
      %v2014 = vld [vmem:[#allocation2] sm:$0xff]
      %v2015 = vld [vmem:[#allocation2 + $0x8] sm:$0xff]
      %v2016 = vld [vmem:[#allocation2 + $0x10] sm:$0xff]
      %v2017 = vld [vmem:[#allocation2 + $0x18] sm:$0xff]
      %v2018 = vld [vmem:[#allocation2 + $0x20] sm:$0xff]
      %v2019 = vld [vmem:[#allocation2 + $0x28] sm:$0xff]
      %v2020 = vld [vmem:[#allocation2 + $0x30] sm:$0xff]
      %v2021 = vld [vmem:[#allocation2 + $0x38] sm:$0xff]
      %v2022 = vld [vmem:[#allocation2 + $0x40] sm:$0xff]
      %v2023 = vld [vmem:[#allocation2 + $0x48] sm:$0xff]
      %v2024 = vld [vmem:[#allocation2 + $0x50] sm:$0xff]
      %v2025 = vld [vmem:[#allocation2 + $0x58] sm:$0xff]
      %v2026 = vld [vmem:[#allocation2 + $0x60] sm:$0xff]
      %v2027 = vld [vmem:[#allocation2 + $0x68] sm:$0xff]
      %v2028 = vld [vmem:[#allocation2 + $0x70] sm:$0xff]
      %v2029 = vld [vmem:[#allocation2 + $0x78] sm:$0xff]
      %v2030 = vld [vmem:[#allocation2 + $0x80] sm:$0xff]
      %v2031 = vld [vmem:[#allocation2 + $0x88] sm:$0xff]
      %v2032 = vld [vmem:[#allocation2 + $0x90] sm:$0xff]
      %v2033 = vld [vmem:[#allocation2 + $0x98] sm:$0xff]
      %v2034 = vld [vmem:[#allocation2 + $0xa0] sm:$0xff]
      %v2035 = vld [vmem:[#allocation2 + $0xa8] sm:$0xff]
      %v2036 = vld [vmem:[#allocation2 + $0xb0] sm:$0xff]
      %v2037 = vld [vmem:[#allocation2 + $0xb8] sm:$0xff]
      %v2038 = vld [vmem:[#allocation2 + $0xc0] sm:$0xff]
      %v2039 = vld [vmem:[#allocation2 + $0xc8] sm:$0xff]
      %v2040 = vld [vmem:[#allocation2 + $0xd0] sm:$0xff]
      %v2041 = vld [vmem:[#allocation2 + $0xd8] sm:$0xff]
      %v2042 = vld [vmem:[#allocation2 + $0xe0] sm:$0xff]
      %v2043 = vld [vmem:[#allocation2 + $0xe8] sm:$0xff]
      %v2044 = vld [vmem:[#allocation2 + $0xf0] sm:$0xff]
      %v2045 = vld [vmem:[#allocation2 + $0xf8] sm:$0xff]
      %v2046 = vld [vmem:[#allocation2 + $0x100] sm:$0xff]
      %v2047 = vld [vmem:[#allocation2 + $0x108] sm:$0xff]
      %v2048 = vld [vmem:[#allocation2 + $0x110] sm:$0xff]
      %v2049 = vld [vmem:[#allocation2 + $0x118] sm:$0xff]
      %v2050 = vld [vmem:[#allocation2 + $0x120] sm:$0xff]
      %v2051 = vld [vmem:[#allocation2 + $0x128] sm:$0xff]
      %v2052 = vld [vmem:[#allocation2 + $0x130] sm:$0xff]
      %v2053 = vld [vmem:[#allocation2 + $0x138] sm:$0xff]
      %v2054 = vld [vmem:[#allocation2 + $0x140] sm:$0xff]
      %v2055 = vld [vmem:[#allocation2 + $0x148] sm:$0xff]
      %v2056 = vld [vmem:[#allocation2 + $0x150] sm:$0xff]
      %v2057 = vld [vmem:[#allocation2 + $0x158] sm:$0xff]
      %v2058 = vld [vmem:[#allocation2 + $0x160] sm:$0xff]
      %v2059 = vld [vmem:[#allocation2 + $0x168] sm:$0xff]
      %v2060 = vld [vmem:[#allocation2 + $0x170] sm:$0xff]
      %v2061 = vld [vmem:[#allocation2 + $0x178] sm:$0xff]
      %v2062 = vld [vmem:[#allocation2 + $0x180] sm:$0xff]
      %v2063 = vld [vmem:[#allocation2 + $0x188] sm:$0xff]
      %v2064 = vld [vmem:[#allocation2 + $0x190] sm:$0xff]
      %v2065 = vld [vmem:[#allocation2 + $0x198] sm:$0xff]
      %v2066 = vld [vmem:[#allocation2 + $0x1a0] sm:$0xff]
      %v2067 = vld [vmem:[#allocation2 + $0x1a8] sm:$0xff]
      %v2068 = vld [vmem:[#allocation2 + $0x1b0] sm:$0xff]
      %v2069 = vld [vmem:[#allocation2 + $0x1b8] sm:$0xff]
      %v2070 = vld [vmem:[#allocation2 + $0x1c0] sm:$0xff]
      %v2071 = vld [vmem:[#allocation2 + $0x1c8] sm:$0xff]
      %v2072 = vld [vmem:[#allocation2 + $0x1d0] sm:$0xff]
      %v2073 = vld [vmem:[#allocation2 + $0x1d8] sm:$0xff]
      %v2074 = vld [vmem:[#allocation2 + $0x1e0] sm:$0xff]
      %v2075 = vld [vmem:[#allocation2 + $0x1e8] sm:$0xff]
      %v2076 = vld [vmem:[#allocation2 + $0x1f0] sm:$0xff]
      %v2077 = vld [vmem:[#allocation2 + $0x1f8] sm:$0xff]
      %v2078 = vld [vmem:[#allocation2 + $0x200] sm:$0xff]
      %v2079 = vld [vmem:[#allocation2 + $0x208] sm:$0xff]
      %v2080 = vld [vmem:[#allocation2 + $0x210] sm:$0xff]
      %v2081 = vld [vmem:[#allocation2 + $0x218] sm:$0xff]
      %v2082 = vld [vmem:[#allocation2 + $0x220] sm:$0xff]
      %v2083 = vld [vmem:[#allocation2 + $0x228] sm:$0xff]
      %v2084 = vld [vmem:[#allocation2 + $0x230] sm:$0xff]
      %v2085 = vld [vmem:[#allocation2 + $0x238] sm:$0xff]
      %v2086 = vld [vmem:[#allocation2 + $0x240] sm:$0xff]
      %v2087 = vld [vmem:[#allocation2 + $0x248] sm:$0xff]
      %v2088 = vld [vmem:[#allocation2 + $0x250] sm:$0xff]
      %v2089 = vld [vmem:[#allocation2 + $0x258] sm:$0xff]
      %v2090 = vld [vmem:[#allocation2 + $0x260] sm:$0xff]
      %v2091 = vld [vmem:[#allocation2 + $0x268] sm:$0xff]
      %v2092 = vld [vmem:[#allocation2 + $0x270] sm:$0xff]
      %v2093 = vld [vmem:[#allocation2 + $0x278] sm:$0xff]
      %v2094 = vld [vmem:[#allocation2 + $0x280] sm:$0xff]
      %v2095 = vld [vmem:[#allocation2 + $0x288] sm:$0xff]
      %v2096 = vld [vmem:[#allocation2 + $0x290] sm:$0xff]
      %v2097 = vld [vmem:[#allocation2 + $0x298] sm:$0xff]
      %v2098 = vld [vmem:[#allocation2 + $0x2a0] sm:$0xff]
      %v2099 = vld [vmem:[#allocation2 + $0x2a8] sm:$0xff]
      %v2100 = vld [vmem:[#allocation2 + $0x2b0] sm:$0xff]
      %v2101 = vld [vmem:[#allocation2 + $0x2b8] sm:$0xff]
      %v2102 = vld [vmem:[#allocation2 + $0x2c0] sm:$0xff]
      %v2103 = vld [vmem:[#allocation2 + $0x2c8] sm:$0xff]
      %v2104 = vld [vmem:[#allocation2 + $0x2d0] sm:$0xff]
      %v2105 = vld [vmem:[#allocation2 + $0x2d8] sm:$0xff]
      %v2106 = vld [vmem:[#allocation2 + $0x2e0] sm:$0xff]
      %v2107 = vld [vmem:[#allocation2 + $0x2e8] sm:$0xff]
      %v2108 = vld [vmem:[#allocation2 + $0x2f0] sm:$0xff]
      %v2109 = vld [vmem:[#allocation2 + $0x2f8] sm:$0xff]
      %v2110 = vld [vmem:[#allocation2 + $0x300] sm:$0xff]
      %v2111 = vld [vmem:[#allocation2 + $0x308] sm:$0xff]
      %v2112 = vld [vmem:[#allocation2 + $0x310] sm:$0xff]
      %v2113 = vld [vmem:[#allocation2 + $0x318] sm:$0xff]
      %v2114 = vld [vmem:[#allocation2 + $0x320] sm:$0xff]
      %v2115 = vld [vmem:[#allocation2 + $0x328] sm:$0xff]
      %v2116 = vld [vmem:[#allocation2 + $0x330] sm:$0xff]
      %v2117 = vld [vmem:[#allocation2 + $0x338] sm:$0xff]
      %v2118 = vld [vmem:[#allocation2 + $0x340] sm:$0xff]
      %v2119 = vld [vmem:[#allocation2 + $0x348] sm:$0xff]
      %v2120 = vld [vmem:[#allocation2 + $0x350] sm:$0xff]
      %v2121 = vld [vmem:[#allocation2 + $0x358] sm:$0xff]
      %v2122 = vld [vmem:[#allocation2 + $0x360] sm:$0xff]
      %v2123 = vld [vmem:[#allocation2 + $0x368] sm:$0xff]
      %v2124 = vld [vmem:[#allocation2 + $0x370] sm:$0xff]
      %v2125 = vld [vmem:[#allocation2 + $0x378] sm:$0xff]
      %v2126 = vld [vmem:[#allocation2 + $0x380] sm:$0xff]
      %v2127 = vld [vmem:[#allocation2 + $0x388] sm:$0xff]
      %v2128 = vld [vmem:[#allocation2 + $0x390] sm:$0xff]
      %v2129 = vld [vmem:[#allocation2 + $0x398] sm:$0xff]
      %v2130 = vld [vmem:[#allocation2 + $0x3a0] sm:$0xff]
      %v2131 = vld [vmem:[#allocation2 + $0x3a8] sm:$0xff]
      %v2132 = vld [vmem:[#allocation2 + $0x3b0] sm:$0xff]
      %v2133 = vld [vmem:[#allocation2 + $0x3b8] sm:$0xff]
      %v2134 = vld [vmem:[#allocation2 + $0x3c0] sm:$0xff]
      %v2135 = vld [vmem:[#allocation2 + $0x3c8] sm:$0xff]
      %v2136 = vld [vmem:[#allocation2 + $0x3d0] sm:$0xff]
      %v2137 = vld [vmem:[#allocation2 + $0x3d8] sm:$0xff]
      %v2138 = vld [vmem:[#allocation2 + $0x3e0] sm:$0xff]
      %v2139 = vld [vmem:[#allocation2 + $0x3e8] sm:$0xff]
      %v2140 = vld [vmem:[#allocation2 + $0x3f0] sm:$0xff]
      %v2141 = vld [vmem:[#allocation2 + $0x3f8] sm:$0xff]
      %v2142 = vld [vmem:[#allocation2 + $0x400] sm:$0xff]
      %v2143 = vld [vmem:[#allocation2 + $0x408] sm:$0xff]
      %v2144 = vld [vmem:[#allocation2 + $0x410] sm:$0xff]
      %v2145 = vld [vmem:[#allocation2 + $0x418] sm:$0xff]
      %v2146 = vld [vmem:[#allocation2 + $0x420] sm:$0xff]
      %v2147 = vld [vmem:[#allocation2 + $0x428] sm:$0xff]
      %v2148 = vld [vmem:[#allocation2 + $0x430] sm:$0xff]
      %v2149 = vld [vmem:[#allocation2 + $0x438] sm:$0xff]
      %v2150 = vld [vmem:[#allocation2 + $0x440] sm:$0xff]
      %v2151 = vld [vmem:[#allocation2 + $0x448] sm:$0xff]
      %v2152 = vld [vmem:[#allocation2 + $0x450] sm:$0xff]
      %v2153 = vld [vmem:[#allocation2 + $0x458] sm:$0xff]
      %v2154 = vld [vmem:[#allocation2 + $0x460] sm:$0xff]
      %v2155 = vld [vmem:[#allocation2 + $0x468] sm:$0xff]
      %v2156 = vld [vmem:[#allocation2 + $0x470] sm:$0xff]
      %v2157 = vld [vmem:[#allocation2 + $0x478] sm:$0xff]
      %v2158 = vld [vmem:[#allocation2 + $0x480] sm:$0xff]
      %v2159 = vld [vmem:[#allocation2 + $0x488] sm:$0xff]
      %v2160 = vld [vmem:[#allocation2 + $0x490] sm:$0xff]
      %v2161 = vld [vmem:[#allocation2 + $0x498] sm:$0xff]
      %v2162 = vld [vmem:[#allocation2 + $0x4a0] sm:$0xff]
      %v2163 = vld [vmem:[#allocation2 + $0x4a8] sm:$0xff]
      %v2164 = vld [vmem:[#allocation2 + $0x4b0] sm:$0xff]
      %v2165 = vld [vmem:[#allocation2 + $0x4b8] sm:$0xff]
      %v2166 = vld [vmem:[#allocation2 + $0x4c0] sm:$0xff]
      %v2167 = vld [vmem:[#allocation2 + $0x4c8] sm:$0xff]
      %v2168 = vld [vmem:[#allocation2 + $0x4d0] sm:$0xff]
      %v2169 = vld [vmem:[#allocation2 + $0x4d8] sm:$0xff]
      %v2170 = vld [vmem:[#allocation2 + $0x4e0] sm:$0xff]
      %v2171 = vld [vmem:[#allocation2 + $0x4e8] sm:$0xff]
      %v2172 = vld [vmem:[#allocation2 + $0x4f0] sm:$0xff]
      %v2173 = vld [vmem:[#allocation2 + $0x4f8] sm:$0xff]
      %v2174 = vld [vmem:[#allocation2 + $0x500] sm:$0xff]
      %v2175 = vld [vmem:[#allocation2 + $0x508] sm:$0xff]
      %v2176 = vld [vmem:[#allocation2 + $0x510] sm:$0xff]
      %v2177 = vld [vmem:[#allocation2 + $0x518] sm:$0xff]
      %v2178 = vld [vmem:[#allocation2 + $0x520] sm:$0xff]
      %v2179 = vld [vmem:[#allocation2 + $0x528] sm:$0xff]
      %v2180 = vld [vmem:[#allocation2 + $0x530] sm:$0xff]
      %v2181 = vld [vmem:[#allocation2 + $0x538] sm:$0xff]
      %v2182 = vld [vmem:[#allocation2 + $0x540] sm:$0xff]
      %v2183 = vld [vmem:[#allocation2 + $0x548] sm:$0xff]
      %v2184 = vld [vmem:[#allocation2 + $0x550] sm:$0xff]
      %v2185 = vld [vmem:[#allocation2 + $0x558] sm:$0xff]
      %v2186 = vld [vmem:[#allocation2 + $0x560] sm:$0xff]
      %v2187 = vld [vmem:[#allocation2 + $0x568] sm:$0xff]
      %v2188 = vld [vmem:[#allocation2 + $0x570] sm:$0xff]
      %v2189 = vld [vmem:[#allocation2 + $0x578] sm:$0xff]
      %v2190 = vld [vmem:[#allocation2 + $0x580] sm:$0xff]
      %v2191 = vld [vmem:[#allocation2 + $0x588] sm:$0xff]
      %v2192 = vld [vmem:[#allocation2 + $0x590] sm:$0xff]
      %v2193 = vld [vmem:[#allocation2 + $0x598] sm:$0xff]
      %v2194 = vld [vmem:[#allocation2 + $0x5a0] sm:$0xff]
      %v2195 = vld [vmem:[#allocation2 + $0x5a8] sm:$0xff]
      %v2196 = vld [vmem:[#allocation2 + $0x5b0] sm:$0xff]
      %v2197 = vld [vmem:[#allocation2 + $0x5b8] sm:$0xff]
      %v2198 = vld [vmem:[#allocation2 + $0x5c0] sm:$0xff]
      %v2199 = vld [vmem:[#allocation2 + $0x5c8] sm:$0xff]
      %v2200 = vld [vmem:[#allocation2 + $0x5d0] sm:$0xff]
      %v2201 = vld [vmem:[#allocation2 + $0x5d8] sm:$0xff]
      %v2202 = vld [vmem:[#allocation2 + $0x5e0] sm:$0xff]
      %v2203 = vld [vmem:[#allocation2 + $0x5e8] sm:$0xff]
      %v2204 = vld [vmem:[#allocation2 + $0x5f0] sm:$0xff]
      %v2205 = vld [vmem:[#allocation2 + $0x5f8] sm:$0xff]
      %v2206 = vld [vmem:[#allocation2 + $0x600] sm:$0xff]
      %v2207 = vld [vmem:[#allocation2 + $0x608] sm:$0xff]
      %v2208 = vld [vmem:[#allocation2 + $0x610] sm:$0xff]
      %v2209 = vld [vmem:[#allocation2 + $0x618] sm:$0xff]
      %v2210 = vld [vmem:[#allocation2 + $0x620] sm:$0xff]
      %v2211 = vld [vmem:[#allocation2 + $0x628] sm:$0xff]
      %v2212 = vld [vmem:[#allocation2 + $0x630] sm:$0xff]
      %v2213 = vld [vmem:[#allocation2 + $0x638] sm:$0xff]
      %v2214 = vld [vmem:[#allocation2 + $0x640] sm:$0xff]
      %v2215 = vld [vmem:[#allocation2 + $0x648] sm:$0xff]
      %v2216 = vld [vmem:[#allocation2 + $0x650] sm:$0xff]
      %v2217 = vld [vmem:[#allocation2 + $0x658] sm:$0xff]
      %v2218 = vld [vmem:[#allocation2 + $0x660] sm:$0xff]
      %v2219 = vld [vmem:[#allocation2 + $0x668] sm:$0xff]
      %v2220 = vld [vmem:[#allocation2 + $0x670] sm:$0xff]
      %v2221 = vld [vmem:[#allocation2 + $0x678] sm:$0xff]
      %v2222 = vld [vmem:[#allocation2 + $0x680] sm:$0xff]
      %v2223 = vld [vmem:[#allocation2 + $0x688] sm:$0xff]
      %v2224 = vld [vmem:[#allocation2 + $0x690] sm:$0xff]
      %v2225 = vld [vmem:[#allocation2 + $0x698] sm:$0xff]
      %v2226 = vld [vmem:[#allocation2 + $0x6a0] sm:$0xff]
      %v2227 = vld [vmem:[#allocation2 + $0x6a8] sm:$0xff]
      %v2228 = vld [vmem:[#allocation2 + $0x6b0] sm:$0xff]
      %v2229 = vld [vmem:[#allocation2 + $0x6b8] sm:$0xff]
      %v2230 = vld [vmem:[#allocation2 + $0x6c0] sm:$0xff]
      %v2231 = vld [vmem:[#allocation2 + $0x6c8] sm:$0xff]
      %v2232 = vld [vmem:[#allocation2 + $0x6d0] sm:$0xff]
      %v2233 = vld [vmem:[#allocation2 + $0x6d8] sm:$0xff]
      %v2234 = vld [vmem:[#allocation2 + $0x6e0] sm:$0xff]
      %v2235 = vld [vmem:[#allocation2 + $0x6e8] sm:$0xff]
      %v2236 = vld [vmem:[#allocation2 + $0x6f0] sm:$0xff]
      %v2237 = vld [vmem:[#allocation2 + $0x6f8] sm:$0xff]
      %v2238 = vld [vmem:[#allocation2 + $0x700] sm:$0xff]
      %v2239 = vld [vmem:[#allocation2 + $0x708] sm:$0xff]
      %v2240 = vld [vmem:[#allocation2 + $0x710] sm:$0xff]
      %v2241 = vld [vmem:[#allocation2 + $0x718] sm:$0xff]
      %v2242 = vld [vmem:[#allocation2 + $0x720] sm:$0xff]
      %v2243 = vld [vmem:[#allocation2 + $0x728] sm:$0xff]
      %v2244 = vld [vmem:[#allocation2 + $0x730] sm:$0xff]
      %v2245 = vld [vmem:[#allocation2 + $0x738] sm:$0xff]
      %v2246 = vld [vmem:[#allocation2 + $0x740] sm:$0xff]
      %v2247 = vld [vmem:[#allocation2 + $0x748] sm:$0xff]
      %v2248 = vld [vmem:[#allocation2 + $0x750] sm:$0xff]
      %v2249 = vld [vmem:[#allocation2 + $0x758] sm:$0xff]
      %v2250 = vld [vmem:[#allocation2 + $0x760] sm:$0xff]
      %v2251 = vld [vmem:[#allocation2 + $0x768] sm:$0xff]
      %v2252 = vld [vmem:[#allocation2 + $0x770] sm:$0xff]
      %v2253 = vld [vmem:[#allocation2 + $0x778] sm:$0xff]
      %v2254 = vld [vmem:[#allocation2 + $0x780] sm:$0xff]
      %v2255 = vld [vmem:[#allocation2 + $0x788] sm:$0xff]
      %v2256 = vld [vmem:[#allocation2 + $0x790] sm:$0xff]
      %v2257 = vld [vmem:[%s4] sm:$0xff]
      %2259 = vset.pattern.permute.xlu0 0
      %2260 = vperm.xlu0 %2259, %v2257
      %v2261 = vpop.permute.xlu0 %2260
      %vm2263 = vcmask 719872
      %v2265 = vsel %vm2263, %v2013, 0
      %2267 = vmatprep.subr.mxu0 %v2150
      %2268 = vmatpush1.msra.mxu0 %v2149
      %2269 = vmatprep.subr.mxu0 %v2141
      %2270 = vmatpush1.msra.mxu0 %v2140
      %2271 = vmatprep.subr.mxu0 %v2132
      %2272 = vmatpush1.msra.mxu0 %v2131
      %2273 = vmatprep.subr.mxu0 %v2123
      %2274 = vmatpush1.msra.mxu0 %v2122
      %2275 = vmatprep.subr.mxu0 %v2114
      %2276 = vmatpush1.msra.mxu0 %v2113
      %2277 = vmatprep.subr.mxu0 %v2105
      %2278 = vmatpush1.msra.mxu0 %v2104
      %2279 = vmatprep.subr.mxu0 %v2096
      %2280 = vmatpush1.msra.mxu0 %v2095
      %2281 = vmatprep.subr.mxu0 %v2087
      %2282 = vmatpush1.msra.mxu0 %v2086
      %2283 = vmatprep.subr.mxu0 %v2078
      %2284 = vmatpush1.msra.mxu0 %v2077
      %2285 = vmatprep.subr.mxu0 %v2069
      %2286 = vmatpush1.msra.mxu0 %v2068
      %2287 = vmatprep.subr.mxu0 %v2060
      %2288 = vmatpush1.msra.mxu0 %v2059
      %2289 = vmatprep.subr.mxu0 %v2051
      %2290 = vmatpush1.msra.mxu0 %v2050
      %2291 = vmatprep.subr.mxu0 %v2042
      %2292 = vmatpush1.msra.mxu0 %v2041
      %2293 = vmatprep.subr.mxu0 %v2033
      %2294 = vmatpush1.msra.mxu0 %v2032
      %2295 = vmatprep.subr.mxu0 %v2024
      %2296 = vmatpush1.msra.mxu0 %v2023
      %2297 = vmatprep.subr.mxu0 %v2015
      %2298 = vmatpush1.msra.mxu0 %v2014
      %2299 = vmatprep.subr.mxu0 0.0
      %2300 = vmatpush2.msra.mxu0 0.0
      %2301 = vmatprep.subr.mxu0 0.0
      %2302 = vmatpush2.msra.mxu0 0.0
      %2303 = vmatprep.subr.mxu0 0.0
      %2304 = vmatpush2.msra.mxu0 0.0
      %2305 = vmatprep.subr.mxu0 0.0
      %2306 = vmatpush2.msra.mxu0 0.0
      %2307 = vmatprep.subr.mxu0 0.0
      %2308 = vmatpush2.msra.mxu0 0.0
      %2309 = vmatprep.subr.mxu0 %v2249
      %2310 = vmatpush2.msra.mxu0 %v2248
      %2311 = vmatprep.subr.mxu0 %v2240
      %2312 = vmatpush2.msra.mxu0 %v2239
      %2313 = vmatprep.subr.mxu0 %v2231
      %2314 = vmatpush2.msra.mxu0 %v2230
      %2315 = vmatprep.subr.mxu0 %v2222
      %2316 = vmatpush2.msra.mxu0 %v2221
      %2317 = vmatprep.subr.mxu0 %v2213
      %2318 = vmatpush2.msra.mxu0 %v2212
      %2319 = vmatprep.subr.mxu0 %v2204
      %2320 = vmatpush2.msra.mxu0 %v2203
      %2321 = vmatprep.subr.mxu0 %v2195
      %2322 = vmatpush2.msra.mxu0 %v2194
      %2323 = vmatprep.subr.mxu0 %v2186
      %2324 = vmatpush2.msra.mxu0 %v2185
      %2325 = vmatprep.subr.mxu0 %v2177
      %2326 = vmatpush2.msra.mxu0 %v2176
      %2327 = vmatprep.subr.mxu0 %v2168
      %2328 = vmatpush2.msra.mxu0 %v2167
      %2329 = vmatprep.subr.mxu0 %v2159
      %2330 = vmatpush2.msra.mxu0 %v2158
      %2331 = vmatprep.mubr.f32.mxu0 %v2265
      %2332 = vmatmul.mubr.f32.gmra.mxu0 %v2012
      %v2333 = vpop.f32.mrf.mxu0
      %v2334 = vadd.f32 %v2261, %v2333
      %v2335 = vpop.f32.mrf.mxu0
      %v2336 = vadd.f32 %v2261, %v2335
      %2337 = vdwg.mxu0
      %2338 = vmatprep.subr.mxu0 %v2152
      %2339 = vmatpush1.msra.mxu0 %v2151
      %2340 = vmatprep.subr.mxu0 %v2143
      %2341 = vmatpush1.msra.mxu0 %v2142
      %2342 = vmatprep.subr.mxu0 %v2134
      %2343 = vmatpush1.msra.mxu0 %v2133
      %2344 = vmatprep.subr.mxu0 %v2125
      %2345 = vmatpush1.msra.mxu0 %v2124
      %2346 = vmatprep.subr.mxu0 %v2116
      %2347 = vmatpush1.msra.mxu0 %v2115
      %2348 = vmatprep.subr.mxu0 %v2107
      %2349 = vmatpush1.msra.mxu0 %v2106
      %2350 = vmatprep.subr.mxu0 %v2098
      %2351 = vmatpush1.msra.mxu0 %v2097
      %2352 = vmatprep.subr.mxu0 %v2089
      %2353 = vmatpush1.msra.mxu0 %v2088
      %2354 = vmatprep.subr.mxu0 %v2080
      %2355 = vmatpush1.msra.mxu0 %v2079
      %2356 = vmatprep.subr.mxu0 %v2071
      %2357 = vmatpush1.msra.mxu0 %v2070
      %2358 = vmatprep.subr.mxu0 %v2062
      %2359 = vmatpush1.msra.mxu0 %v2061
      %2360 = vmatprep.subr.mxu0 %v2053
      %2361 = vmatpush1.msra.mxu0 %v2052
      %2362 = vmatprep.subr.mxu0 %v2044
      %2363 = vmatpush1.msra.mxu0 %v2043
      %2364 = vmatprep.subr.mxu0 %v2035
      %2365 = vmatpush1.msra.mxu0 %v2034
      %2366 = vmatprep.subr.mxu0 %v2026
      %2367 = vmatpush1.msra.mxu0 %v2025
      %2368 = vmatprep.subr.mxu0 %v2017
      %2369 = vmatpush1.msra.mxu0 %v2016
      %2370 = vmatprep.subr.mxu0 0.0
      %2371 = vmatpush2.msra.mxu0 0.0
      %2372 = vmatprep.subr.mxu0 0.0
      %2373 = vmatpush2.msra.mxu0 0.0
      %2374 = vmatprep.subr.mxu0 0.0
      %2375 = vmatpush2.msra.mxu0 0.0
      %2376 = vmatprep.subr.mxu0 0.0
      %2377 = vmatpush2.msra.mxu0 0.0
      %2378 = vmatprep.subr.mxu0 0.0
      %2379 = vmatpush2.msra.mxu0 0.0
      %2380 = vmatprep.subr.mxu0 %v2251
      %2381 = vmatpush2.msra.mxu0 %v2250
      %2382 = vmatprep.subr.mxu0 %v2242
      %2383 = vmatpush2.msra.mxu0 %v2241
      %2384 = vmatprep.subr.mxu0 %v2233
      %2385 = vmatpush2.msra.mxu0 %v2232
      %2386 = vmatprep.subr.mxu0 %v2224
      %2387 = vmatpush2.msra.mxu0 %v2223
      %2388 = vmatprep.subr.mxu0 %v2215
      %2389 = vmatpush2.msra.mxu0 %v2214
      %2390 = vmatprep.subr.mxu0 %v2206
      %2391 = vmatpush2.msra.mxu0 %v2205
      %2392 = vmatprep.subr.mxu0 %v2197
      %2393 = vmatpush2.msra.mxu0 %v2196
      %2394 = vmatprep.subr.mxu0 %v2188
      %2395 = vmatpush2.msra.mxu0 %v2187
      %2396 = vmatprep.subr.mxu0 %v2179
      %2397 = vmatpush2.msra.mxu0 %v2178
      %2398 = vmatprep.subr.mxu0 %v2170
      %2399 = vmatpush2.msra.mxu0 %v2169
      %2400 = vmatprep.subr.mxu0 %v2161
      %2401 = vmatpush2.msra.mxu0 %v2160
      %2402 = vmatprep.mubr.f32.mxu0 %v2265
      %2403 = vmatmul.mubr.f32.gmra.mxu0 %v2012
      %v2404 = vpop.f32.mrf.mxu0
      %v2405 = vadd.f32 %v2261, %v2404
      %v2406 = vpop.f32.mrf.mxu0
      %v2407 = vadd.f32 %v2261, %v2406
      %2408 = vdwg.mxu0
      %2409 = vmatprep.subr.mxu0 %v2154
      %2410 = vmatpush1.msra.mxu0 %v2153
      %2411 = vmatprep.subr.mxu0 %v2145
      %2412 = vmatpush1.msra.mxu0 %v2144
      %2413 = vmatprep.subr.mxu0 %v2136
      %2414 = vmatpush1.msra.mxu0 %v2135
      %2415 = vmatprep.subr.mxu0 %v2127
      %2416 = vmatpush1.msra.mxu0 %v2126
      %2417 = vmatprep.subr.mxu0 %v2118
      %2418 = vmatpush1.msra.mxu0 %v2117
      %2419 = vmatprep.subr.mxu0 %v2109
      %2420 = vmatpush1.msra.mxu0 %v2108
      %2421 = vmatprep.subr.mxu0 %v2100
      %2422 = vmatpush1.msra.mxu0 %v2099
      %2423 = vmatprep.subr.mxu0 %v2091
      %2424 = vmatpush1.msra.mxu0 %v2090
      %2425 = vmatprep.subr.mxu0 %v2082
      %2426 = vmatpush1.msra.mxu0 %v2081
      %2427 = vmatprep.subr.mxu0 %v2073
      %2428 = vmatpush1.msra.mxu0 %v2072
      %2429 = vmatprep.subr.mxu0 %v2064
      %2430 = vmatpush1.msra.mxu0 %v2063
      %2431 = vmatprep.subr.mxu0 %v2055
      %2432 = vmatpush1.msra.mxu0 %v2054
      %2433 = vmatprep.subr.mxu0 %v2046
      %2434 = vmatpush1.msra.mxu0 %v2045
      %2435 = vmatprep.subr.mxu0 %v2037
      %2436 = vmatpush1.msra.mxu0 %v2036
      %2437 = vmatprep.subr.mxu0 %v2028
      %2438 = vmatpush1.msra.mxu0 %v2027
      %2439 = vmatprep.subr.mxu0 %v2019
      %2440 = vmatpush1.msra.mxu0 %v2018
      %2441 = vmatprep.subr.mxu0 0.0
      %2442 = vmatpush2.msra.mxu0 0.0
      %2443 = vmatprep.subr.mxu0 0.0
      %2444 = vmatpush2.msra.mxu0 0.0
      %2445 = vmatprep.subr.mxu0 0.0
      %2446 = vmatpush2.msra.mxu0 0.0
      %2447 = vmatprep.subr.mxu0 0.0
      %2448 = vmatpush2.msra.mxu0 0.0
      %2449 = vmatprep.subr.mxu0 0.0
      %2450 = vmatpush2.msra.mxu0 0.0
      %2451 = vmatprep.subr.mxu0 %v2253
      %2452 = vmatpush2.msra.mxu0 %v2252
      %2453 = vmatprep.subr.mxu0 %v2244
      %2454 = vmatpush2.msra.mxu0 %v2243
      %2455 = vmatprep.subr.mxu0 %v2235
      %2456 = vmatpush2.msra.mxu0 %v2234
      %2457 = vmatprep.subr.mxu0 %v2226
      %2458 = vmatpush2.msra.mxu0 %v2225
      %2459 = vmatprep.subr.mxu0 %v2217
      %2460 = vmatpush2.msra.mxu0 %v2216
      %2461 = vmatprep.subr.mxu0 %v2208
      %2462 = vmatpush2.msra.mxu0 %v2207
      %2463 = vmatprep.subr.mxu0 %v2199
      %2464 = vmatpush2.msra.mxu0 %v2198
      %2465 = vmatprep.subr.mxu0 %v2190
      %2466 = vmatpush2.msra.mxu0 %v2189
      %2467 = vmatprep.subr.mxu0 %v2181
      %2468 = vmatpush2.msra.mxu0 %v2180
      %2469 = vmatprep.subr.mxu0 %v2172
      %2470 = vmatpush2.msra.mxu0 %v2171
      %2471 = vmatprep.subr.mxu0 %v2163
      %2472 = vmatpush2.msra.mxu0 %v2162
      %2473 = vmatprep.mubr.f32.mxu0 %v2265
      %2474 = vmatmul.mubr.f32.gmra.mxu0 %v2012
      %v2475 = vpop.f32.mrf.mxu0
      %v2476 = vadd.f32 %v2261, %v2475
      %v2477 = vpop.f32.mrf.mxu0
      %v2478 = vadd.f32 %v2261, %v2477
      %2479 = vdwg.mxu0
      %2480 = vmatprep.subr.mxu0 %v2156
      %2481 = vmatpush1.msra.mxu0 %v2155
      %2482 = vmatprep.subr.mxu0 %v2147
      %2483 = vmatpush1.msra.mxu0 %v2146
      %2484 = vmatprep.subr.mxu0 %v2138
      %2485 = vmatpush1.msra.mxu0 %v2137
      %2486 = vmatprep.subr.mxu0 %v2129
      %2487 = vmatpush1.msra.mxu0 %v2128
      %2488 = vmatprep.subr.mxu0 %v2120
      %2489 = vmatpush1.msra.mxu0 %v2119
      %2490 = vmatprep.subr.mxu0 %v2111
      %2491 = vmatpush1.msra.mxu0 %v2110
      %2492 = vmatprep.subr.mxu0 %v2102
      %2493 = vmatpush1.msra.mxu0 %v2101
      %2494 = vmatprep.subr.mxu0 %v2093
      %2495 = vmatpush1.msra.mxu0 %v2092
      %2496 = vmatprep.subr.mxu0 %v2084
      %2497 = vmatpush1.msra.mxu0 %v2083
      %2498 = vmatprep.subr.mxu0 %v2075
      %2499 = vmatpush1.msra.mxu0 %v2074
      %2500 = vmatprep.subr.mxu0 %v2066
      %2501 = vmatpush1.msra.mxu0 %v2065
      %2502 = vmatprep.subr.mxu0 %v2057
      %2503 = vmatpush1.msra.mxu0 %v2056
      %2504 = vmatprep.subr.mxu0 %v2048
      %2505 = vmatpush1.msra.mxu0 %v2047
      %2506 = vmatprep.subr.mxu0 %v2039
      %2507 = vmatpush1.msra.mxu0 %v2038
      %2508 = vmatprep.subr.mxu0 %v2030
      %2509 = vmatpush1.msra.mxu0 %v2029
      %2510 = vmatprep.subr.mxu0 %v2021
      %2511 = vmatpush1.msra.mxu0 %v2020
      %2512 = vmatprep.subr.mxu0 0.0
      %2513 = vmatpush2.msra.mxu0 0.0
      %2514 = vmatprep.subr.mxu0 0.0
      %2515 = vmatpush2.msra.mxu0 0.0
      %2516 = vmatprep.subr.mxu0 0.0
      %2517 = vmatpush2.msra.mxu0 0.0
      %2518 = vmatprep.subr.mxu0 0.0
      %2519 = vmatpush2.msra.mxu0 0.0
      %2520 = vmatprep.subr.mxu0 0.0
      %2521 = vmatpush2.msra.mxu0 0.0
      %2522 = vmatprep.subr.mxu0 %v2255
      %2523 = vmatpush2.msra.mxu0 %v2254
      %2524 = vmatprep.subr.mxu0 %v2246
      %2525 = vmatpush2.msra.mxu0 %v2245
      %2526 = vmatprep.subr.mxu0 %v2237
      %2527 = vmatpush2.msra.mxu0 %v2236
      %2528 = vmatprep.subr.mxu0 %v2228
      %2529 = vmatpush2.msra.mxu0 %v2227
      %2530 = vmatprep.subr.mxu0 %v2219
      %2531 = vmatpush2.msra.mxu0 %v2218
      %2532 = vmatprep.subr.mxu0 %v2210
      %2533 = vmatpush2.msra.mxu0 %v2209
      %2534 = vmatprep.subr.mxu0 %v2201
      %2535 = vmatpush2.msra.mxu0 %v2200
      %2536 = vmatprep.subr.mxu0 %v2192
      %2537 = vmatpush2.msra.mxu0 %v2191
      %2538 = vmatprep.subr.mxu0 %v2183
      %2539 = vmatpush2.msra.mxu0 %v2182
      %2540 = vmatprep.subr.mxu0 %v2174
      %2541 = vmatpush2.msra.mxu0 %v2173
      %2542 = vmatprep.subr.mxu0 %v2165
      %2543 = vmatpush2.msra.mxu0 %v2164
      %2544 = vmatprep.mubr.f32.mxu0 %v2265
      %2545 = vmatmul.mubr.f32.gmra.mxu0 %v2012
      %v2546 = vpop.f32.mrf.mxu0
      %v2547 = vadd.f32 %v2261, %v2546
      %v2548 = vpop.f32.mrf.mxu0
      %v2549 = vadd.f32 %v2261, %v2548
      %2550 = vdwg.mxu0
      %2551 = vmatprep.subr.mxu0 0.0
      %2552 = vmatpush1.msra.mxu0 %v2157
      %2553 = vmatprep.subr.mxu0 0.0
      %2554 = vmatpush1.msra.mxu0 %v2148
      %2555 = vmatprep.subr.mxu0 0.0
      %2556 = vmatpush1.msra.mxu0 %v2139
      %2557 = vmatprep.subr.mxu0 0.0
      %2558 = vmatpush1.msra.mxu0 %v2130
      %2559 = vmatprep.subr.mxu0 0.0
      %2560 = vmatpush1.msra.mxu0 %v2121
      %2561 = vmatprep.subr.mxu0 0.0
      %2562 = vmatpush1.msra.mxu0 %v2112
      %2563 = vmatprep.subr.mxu0 0.0
      %2564 = vmatpush1.msra.mxu0 %v2103
      %2565 = vmatprep.subr.mxu0 0.0
      %2566 = vmatpush1.msra.mxu0 %v2094
      %2567 = vmatprep.subr.mxu0 0.0
      %2568 = vmatpush1.msra.mxu0 %v2085
      %2569 = vmatprep.subr.mxu0 0.0
      %2570 = vmatpush1.msra.mxu0 %v2076
      %2571 = vmatprep.subr.mxu0 0.0
      %2572 = vmatpush1.msra.mxu0 %v2067
      %2573 = vmatprep.subr.mxu0 0.0
      %2574 = vmatpush1.msra.mxu0 %v2058
      %2575 = vmatprep.subr.mxu0 0.0
      %2576 = vmatpush1.msra.mxu0 %v2049
      %2577 = vmatprep.subr.mxu0 0.0
      %2578 = vmatpush1.msra.mxu0 %v2040
      %2579 = vmatprep.subr.mxu0 0.0
      %2580 = vmatpush1.msra.mxu0 %v2031
      %2581 = vmatprep.subr.mxu0 0.0
      %2582 = vmatpush1.msra.mxu0 %v2022
      %2583 = vmatprep.subr.mxu0 0.0
      %2584 = vmatpush2.msra.mxu0 0.0
      %2585 = vmatprep.subr.mxu0 0.0
      %2586 = vmatpush2.msra.mxu0 0.0
      %2587 = vmatprep.subr.mxu0 0.0
      %2588 = vmatpush2.msra.mxu0 0.0
      %2589 = vmatprep.subr.mxu0 0.0
      %2590 = vmatpush2.msra.mxu0 0.0
      %2591 = vmatprep.subr.mxu0 0.0
      %2592 = vmatpush2.msra.mxu0 0.0
      %2593 = vmatprep.subr.mxu0 0.0
      %2594 = vmatpush2.msra.mxu0 %v2256
      %2595 = vmatprep.subr.mxu0 0.0
      %2596 = vmatpush2.msra.mxu0 %v2247
      %2597 = vmatprep.subr.mxu0 0.0
      %2598 = vmatpush2.msra.mxu0 %v2238
      %2599 = vmatprep.subr.mxu0 0.0
      %2600 = vmatpush2.msra.mxu0 %v2229
      %2601 = vmatprep.subr.mxu0 0.0
      %2602 = vmatpush2.msra.mxu0 %v2220
      %2603 = vmatprep.subr.mxu0 0.0
      %2604 = vmatpush2.msra.mxu0 %v2211
      %2605 = vmatprep.subr.mxu0 0.0
      %2606 = vmatpush2.msra.mxu0 %v2202
      %2607 = vmatprep.subr.mxu0 0.0
      %2608 = vmatpush2.msra.mxu0 %v2193
      %2609 = vmatprep.subr.mxu0 0.0
      %2610 = vmatpush2.msra.mxu0 %v2184
      %2611 = vmatprep.subr.mxu0 0.0
      %2612 = vmatpush2.msra.mxu0 %v2175
      %2613 = vmatprep.subr.mxu0 0.0
      %2614 = vmatpush2.msra.mxu0 %v2166
      %2615 = vmatprep.mubr.f32.mxu0 %v2265
      %2616 = vmatmul.mubr.f32.gmra.mxu0 %v2012
      %v2617 = vpop.f32.mrf.mxu0
      %v2618 = vadd.f32 %v2261, %v2617
      %v2619 = vpop.f32.mrf.mxu0
      %2620 = vdwg.mxu0
      %v2623 = vlaneseq
      %v2624 = vshrl.u32 %v2623, 7
      %v2625 = vsub.s32 0, %v2624
      %v2626 = vrot.slane %v279, %v2625
      %v2627 = vlaneseq
      %v2628 = vshrl.u32 %v2627, 7
      %v2629 = vsub.s32 1, %v2628
      %v2630 = vrot.slane %v279, %v2629
      %v2631 = vlaneseq
      %v2632 = vshrl.u32 %v2631, 7
      %v2633 = vsub.s32 2, %v2632
      %v2634 = vrot.slane %v279, %v2633
      %v2635 = vlaneseq
      %v2636 = vshrl.u32 %v2635, 7
      %v2637 = vsub.s32 3, %v2636
      %v2638 = vrot.slane %v279, %v2637
      %v2639 = vlaneseq
      %v2640 = vshrl.u32 %v2639, 7
      %v2641 = vsub.s32 4, %v2640
      %v2642 = vrot.slane %v279, %v2641
      %v2643 = vlaneseq
      %v2644 = vshrl.u32 %v2643, 7
      %v2645 = vsub.s32 5, %v2644
      %v2646 = vrot.slane %v279, %v2645
      %v2647 = vlaneseq
      %v2648 = vshrl.u32 %v2647, 7
      %v2649 = vsub.s32 6, %v2648
      %v2650 = vrot.slane %v279, %v2649
      %v2651 = vlaneseq
      %v2652 = vshrl.u32 %v2651, 7
      %v2653 = vsub.s32 7, %v2652
      %v2654 = vrot.slane %v279, %v2653
      %v2655 = vlaneseq
      %v2656 = vshrl.u32 %v2655, 7
      %v2657 = vsub.s32 0, %v2656
      %v2658 = vrot.slane %v280, %v2657
      %v2668 = vmul.f32 %v2334, %v2626
      %v2669 = vmul.f32 %v2336, %v2630
      %v2670 = vmul.f32 %v2405, %v2634
      %v2671 = vmul.f32 %v2407, %v2638
      %v2672 = vmul.f32 %v2476, %v2642
      %v2673 = vmul.f32 %v2478, %v2646
      %v2674 = vmul.f32 %v2547, %v2650
      %v2675 = vmul.f32 %v2549, %v2654
      %v2676 = vmul.f32 %v2618, %v2658
      %v2677 = vadd.f32 %v2668, %v2669
      %v2678 = vadd.f32 %v2677, %v2670
      %v2679 = vadd.f32 %v2678, %v2671
      %v2680 = vadd.f32 %v2679, %v2672
      %v2681 = vadd.f32 %v2680, %v2673
      %v2682 = vadd.f32 %v2681, %v2674
      %v2683 = vadd.f32 %v2682, %v2675
      %v2684 = vsel %vm298, %v2676, 0.0
      %v2685 = vadd.f32 %v2683, %v2684
      %2686 = vadd.xlane.f32.xlu0 %v2685
      %v2687 = vpop.xlane.xlu0 %2686
      %v2688 = vmul.f32 %v2687, 0.001953125
      %v2689 = vsub.f32 %v2334, %v2688
      %v2690 = vsub.f32 %v2336, %v2688
      %v2691 = vsub.f32 %v2405, %v2688
      %v2692 = vsub.f32 %v2407, %v2688
      %v2693 = vsub.f32 %v2476, %v2688
      %v2694 = vsub.f32 %v2478, %v2688
      %v2695 = vsub.f32 %v2547, %v2688
      %v2696 = vsub.f32 %v2549, %v2688
      %v2697 = vsub.f32 %v2618, %v2688
      %v2698 = vmul.f32 %v2689, %v2689
      %v2699 = vmul.f32 %v2690, %v2690
      %v2700 = vmul.f32 %v2691, %v2691
      %v2701 = vmul.f32 %v2692, %v2692
      %v2702 = vmul.f32 %v2693, %v2693
      %v2703 = vmul.f32 %v2694, %v2694
      %v2704 = vmul.f32 %v2695, %v2695
      %v2705 = vmul.f32 %v2696, %v2696
      %v2706 = vmul.f32 %v2697, %v2697
      %v2707 = vmul.f32 %v2698, %v2626
      %v2708 = vmul.f32 %v2699, %v2630
      %v2709 = vmul.f32 %v2700, %v2634
      %v2710 = vmul.f32 %v2701, %v2638
      %v2711 = vmul.f32 %v2702, %v2642
      %v2712 = vmul.f32 %v2703, %v2646
      %v2713 = vmul.f32 %v2704, %v2650
      %v2714 = vmul.f32 %v2705, %v2654
      %v2715 = vmul.f32 %v2706, %v2658
      %v2716 = vadd.f32 %v2707, %v2708
      %v2717 = vadd.f32 %v2716, %v2709
      %v2718 = vadd.f32 %v2717, %v2710
      %v2719 = vadd.f32 %v2718, %v2711
      %v2720 = vadd.f32 %v2719, %v2712
      %v2721 = vadd.f32 %v2720, %v2713
      %v2722 = vadd.f32 %v2721, %v2714
      %v2723 = vsel %vm298, %v2715, 0.0
      %v2724 = vadd.f32 %v2722, %v2723
      %2725 = vadd.xlane.f32.xlu0 %v2724
      %v2726 = vpop.xlane.xlu0 %2725
      %v2727 = vmul.f32 %v2726, 0.001953125
      %v2728 = vadd.f32 %v2727, 1e-05
      %v2729 = vrsqrt.pop %v2728
      %v2730 = vmul.f32 %v2689, %v2729
      %v2731 = vmul.f32 %v2690, %v2729
      %v2732 = vmul.f32 %v2691, %v2729
      %v2733 = vmul.f32 %v2692, %v2729
      %v2734 = vmul.f32 %v2693, %v2729
      %v2735 = vmul.f32 %v2694, %v2729
      %v2736 = vmul.f32 %v2695, %v2729
      %v2737 = vmul.f32 %v2696, %v2729
      %v2738 = vmul.f32 %v2697, %v2729
      %v2739 = vmax.f32 %v2730, 0.0
      %v2740 = vmax.f32 %v2731, 0.0
      %v2741 = vmax.f32 %v2732, 0.0
      %v2742 = vmax.f32 %v2733, 0.0
      %v2743 = vmax.f32 %v2734, 0.0
      %v2744 = vmax.f32 %v2735, 0.0
      %v2745 = vmax.f32 %v2736, 0.0
      %v2746 = vmax.f32 %v2737, 0.0
      %v2747 = vmax.f32 %v2738, 0.0
      %2748 = vst [vmem:[#allocation3] sm:$0xff] 0.0
      %2749 = vst [vmem:[#allocation3 + $0x8] sm:$0xff] 0.0
      %2750 = vst [vmem:[#allocation3 + $0x10] sm:$0xff] 0.0
      %2751 = vst [vmem:[#allocation3 + $0x18] sm:$0xff] 0.0
      %2752 = vst [vmem:[#allocation3 + $0x20] sm:$0xff] 0.0
      %2753 = vst [vmem:[#allocation3 + $0x28] sm:$0xff] 0.0
      %2754 = vst [vmem:[#allocation3 + $0x30] sm:$0xff] 0.0
      %2755 = vst [vmem:[#allocation3 + $0x38] sm:$0xff] 0.0
      %2756 = vst [vmem:[#allocation3 + $0x40] sm:$0xff] 0.0
      %2757 = vst [vmem:[#allocation3 + $0x48] sm:$0xff] 0.0
      %2758 = vst [vmem:[#allocation3 + $0x50] sm:$0xff] 0.0
      %2759 = vst [vmem:[#allocation3 + $0x58] sm:$0xff] 0.0
      %2760 = vst [vmem:[#allocation3 + $0x60] sm:$0xff] 0.0
      %2761 = vst.msk [vmem:[#allocation3 + $0x68] sm:$0xff] %vm1440, 0.0
      %2771 = vrot.lane.b32.xlu0 %v2739, 58
      %v2772 = vpop.permute.xlu0 %2771
      %2773 = vrot.lane.b32.xlu0 %v2740, 58
      %v2774 = vpop.permute.xlu0 %2773
      %2775 = vrot.lane.b32.xlu0 %v2741, 58
      %v2776 = vpop.permute.xlu0 %2775
      %2777 = vrot.lane.b32.xlu0 %v2742, 58
      %v2778 = vpop.permute.xlu0 %2777
      %2779 = vrot.lane.b32.xlu0 %v2743, 58
      %v2780 = vpop.permute.xlu0 %2779
      %2781 = vrot.lane.b32.xlu0 %v2744, 58
      %v2782 = vpop.permute.xlu0 %2781
      %2783 = vrot.lane.b32.xlu0 %v2745, 58
      %v2784 = vpop.permute.xlu0 %2783
      %2785 = vrot.lane.b32.xlu0 %v2746, 58
      %v2786 = vpop.permute.xlu0 %2785
      %2787 = vrot.lane.b32.xlu0 %v2747, 58
      %v2788 = vpop.permute.xlu0 %2787
      %vm2789 = vcmask 474112
      %v2790 = vsel %vm2789, %v2772, %v2774
      %v2791 = vsel %vm2789, %v2774, %v2776
      %v2792 = vsel %vm2789, %v2776, %v2778
      %v2793 = vsel %vm2789, %v2778, %v2780
      %v2794 = vsel %vm2789, %v2780, %v2782
      %v2795 = vsel %vm2789, %v2782, %v2784
      %v2796 = vsel %vm2789, %v2784, %v2786
      %v2797 = vsel %vm2789, %v2786, %v2788
      %vm2808 = vcmask 1048016
      %2809 = vst.msk [vmem:[#allocation3 + $0x10] sm:$0xff] %vm2808, %v2772
      %2810 = vst [vmem:[#allocation3 + $0x18] sm:$0xff] %v2790
      %2811 = vst [vmem:[#allocation3 + $0x20] sm:$0xff] %v2791
      %2812 = vst [vmem:[#allocation3 + $0x28] sm:$0xff] %v2792
      %2813 = vst [vmem:[#allocation3 + $0x30] sm:$0xff] %v2793
      %2814 = vst [vmem:[#allocation3 + $0x38] sm:$0xff] %v2794
      %2815 = vst [vmem:[#allocation3 + $0x40] sm:$0xff] %v2795
      %2816 = vst [vmem:[#allocation3 + $0x48] sm:$0xff] %v2796
      %2817 = vst [vmem:[#allocation3 + $0x50] sm:$0xff] %v2797
      %vm2818 = vcmask 48128
      %2819 = vst.msk [vmem:[#allocation3 + $0x58] sm:$0xff] %vm2818, %v2788
      %v2820 = vld [vmem:[#allocation3] sm:$0xff]
      %v2821 = vld [vmem:[#allocation3 + $0x8] sm:$0xff]
      %v2822 = vld [vmem:[#allocation3 + $0x10] sm:$0xff]
      %v2823 = vld [vmem:[#allocation3 + $0x18] sm:$0xff]
      %v2824 = vld [vmem:[#allocation3 + $0x20] sm:$0xff]
      %v2825 = vld [vmem:[#allocation3 + $0x28] sm:$0xff]
      %v2826 = vld [vmem:[#allocation3 + $0x30] sm:$0xff]
      %v2827 = vld [vmem:[#allocation3 + $0x38] sm:$0xff]
      %v2828 = vld [vmem:[#allocation3 + $0x40] sm:$0xff]
      %v2829 = vld [vmem:[#allocation3 + $0x48] sm:$0xff]
      %v2830 = vld [vmem:[#allocation3 + $0x50] sm:$0xff]
      %v2831 = vld [vmem:[#allocation3 + $0x58] sm:$0xff]
      %v2832 = vld [vmem:[#allocation3 + $0x60] sm:$0xff]
      %v2833 = vld [vmem:[#allocation3 + $0x68] sm:$0xff]
      %v2834 = vld [vmem:[%s2] ss:$8 sm:$0xf]
      %v2835 = vld [vmem:[%s2] ss:$8 sm:$0xf0]
      %v2836 = vor.u32 %v2834, %v2835
      %s2837 = scalar_lea.vmem %s2, 64
      %v2838 = vld [vmem:[%s2837] ss:$8 sm:$0xf]
      %v2839 = vld [vmem:[%s2837] ss:$8 sm:$0x30]
      %v2840 = vor.u32 %v2838, %v2839
      %v2841 = vsub.f32 1.0, %v2836
      %v2842 = vsub.f32 1.0, %v2840
      %v2845 = vlaneseq
      %v2846 = vshrl.u32 %v2845, 7
      %v2847 = vsub.s32 0, %v2846
      %v2848 = vrot.slane %v2841, %v2847
      %v2849 = vlaneseq
      %v2850 = vshrl.u32 %v2849, 7
      %v2851 = vsub.s32 1, %v2850
      %v2852 = vrot.slane %v2841, %v2851
      %v2853 = vlaneseq
      %v2854 = vshrl.u32 %v2853, 7
      %v2855 = vsub.s32 2, %v2854
      %v2856 = vrot.slane %v2841, %v2855
      %v2857 = vlaneseq
      %v2858 = vshrl.u32 %v2857, 7
      %v2859 = vsub.s32 3, %v2858
      %v2860 = vrot.slane %v2841, %v2859
      %v2861 = vlaneseq
      %v2862 = vshrl.u32 %v2861, 7
      %v2863 = vsub.s32 4, %v2862
      %v2864 = vrot.slane %v2841, %v2863
      %v2865 = vlaneseq
      %v2866 = vshrl.u32 %v2865, 7
      %v2867 = vsub.s32 5, %v2866
      %v2868 = vrot.slane %v2841, %v2867
      %v2869 = vlaneseq
      %v2870 = vshrl.u32 %v2869, 7
      %v2871 = vsub.s32 6, %v2870
      %v2872 = vrot.slane %v2841, %v2871
      %v2873 = vlaneseq
      %v2874 = vshrl.u32 %v2873, 7
      %v2875 = vsub.s32 7, %v2874
      %v2876 = vrot.slane %v2841, %v2875
      %v2877 = vlaneseq
      %v2878 = vshrl.u32 %v2877, 7
      %v2879 = vsub.s32 0, %v2878
      %v2880 = vrot.slane %v2842, %v2879
      %v2881 = vlaneseq
      %v2882 = vshrl.u32 %v2881, 7
      %v2883 = vsub.s32 1, %v2882
      %v2884 = vrot.slane %v2842, %v2883
      %v2885 = vlaneseq
      %v2886 = vshrl.u32 %v2885, 7
      %v2887 = vsub.s32 2, %v2886
      %v2888 = vrot.slane %v2842, %v2887
      %v2889 = vlaneseq
      %v2890 = vshrl.u32 %v2889, 7
      %v2891 = vsub.s32 3, %v2890
      %v2892 = vrot.slane %v2842, %v2891
      %v2893 = vlaneseq
      %v2894 = vshrl.u32 %v2893, 7
      %v2895 = vsub.s32 4, %v2894
      %v2896 = vrot.slane %v2842, %v2895
      %v2897 = vlaneseq
      %v2898 = vshrl.u32 %v2897, 7
      %v2899 = vsub.s32 5, %v2898
      %v2900 = vrot.slane %v2842, %v2899
      %v2915 = vmul.f32 %v2820, %v2848
      %v2916 = vmul.f32 %v2821, %v2852
      %v2917 = vmul.f32 %v2822, %v2856
      %v2918 = vmul.f32 %v2823, %v2860
      %v2919 = vmul.f32 %v2824, %v2864
      %v2920 = vmul.f32 %v2825, %v2868
      %v2921 = vmul.f32 %v2826, %v2872
      %v2922 = vmul.f32 %v2827, %v2876
      %v2923 = vmul.f32 %v2828, %v2880
      %v2924 = vmul.f32 %v2829, %v2884
      %v2925 = vmul.f32 %v2830, %v2888
      %v2926 = vmul.f32 %v2831, %v2892
      %v2927 = vmul.f32 %v2832, %v2896
      %v2928 = vmul.f32 %v2833, %v2900
      %2941 = vrot.lane.b32.xlu0 %v2822, 96
      %v2942 = vpop.permute.xlu0 %2941
      %2943 = vrot.lane.b32.xlu0 %v2823, 96
      %v2944 = vpop.permute.xlu0 %2943
      %2945 = vrot.lane.b32.xlu0 %v2824, 96
      %v2946 = vpop.permute.xlu0 %2945
      %2947 = vrot.lane.b32.xlu0 %v2825, 96
      %v2948 = vpop.permute.xlu0 %2947
      %2949 = vrot.lane.b32.xlu0 %v2826, 96
      %v2950 = vpop.permute.xlu0 %2949
      %2951 = vrot.lane.b32.xlu0 %v2827, 96
      %v2952 = vpop.permute.xlu0 %2951
      %2953 = vrot.lane.b32.xlu0 %v2828, 96
      %v2954 = vpop.permute.xlu0 %2953
      %2955 = vrot.lane.b32.xlu0 %v2829, 96
      %v2956 = vpop.permute.xlu0 %2955
      %2957 = vrot.lane.b32.xlu0 %v2830, 96
      %v2958 = vpop.permute.xlu0 %2957
      %2959 = vrot.lane.b32.xlu0 %v2831, 96
      %v2960 = vpop.permute.xlu0 %2959
      %2961 = vrot.lane.b32.xlu0 %v2832, 96
      %v2962 = vpop.permute.xlu0 %2961
      %2963 = vrot.lane.b32.xlu0 %v2833, 96
      %v2964 = vpop.permute.xlu0 %2963
      %v2965 = vsel %vm839, %v2942, %v2944
      %v2966 = vsel %vm839, %v2944, %v2946
      %v2967 = vsel %vm839, %v2946, %v2948
      %v2968 = vsel %vm839, %v2948, %v2950
      %v2969 = vsel %vm839, %v2950, %v2952
      %v2970 = vsel %vm839, %v2952, %v2954
      %v2971 = vsel %vm839, %v2954, %v2956
      %v2972 = vsel %vm839, %v2956, %v2958
      %v2973 = vsel %vm839, %v2958, %v2960
      %v2974 = vsel %vm839, %v2960, %v2962
      %v2975 = vsel %vm839, %v2962, %v2964
      %2990 = vrot.lane.b32.xlu0 %v2820, 32
      %v2991 = vpop.permute.xlu0 %2990
      %2992 = vrot.lane.b32.xlu0 %v2821, 32
      %v2993 = vpop.permute.xlu0 %2992
      %2994 = vrot.lane.b32.xlu0 %v2822, 32
      %v2995 = vpop.permute.xlu0 %2994
      %vm2996 = vcmask 261120
      %v2997 = vsel %vm2996, %v2991, %v2993
      %v2998 = vsel %vm2996, %v2993, %v2995
      %v3002 = vsel %vm2996, %v2964, %v2991
      %v3005 = vlaneseq
      %v3006 = vshrl.u32 %v3005, 7
      %v3007 = vsub.s32 0, %v3006
      %v3008 = vrot.slane %v2836, %v3007
      %v3009 = vlaneseq
      %v3010 = vshrl.u32 %v3009, 7
      %v3011 = vsub.s32 1, %v3010
      %v3012 = vrot.slane %v2836, %v3011
      %v3013 = vlaneseq
      %v3014 = vshrl.u32 %v3013, 7
      %v3015 = vsub.s32 2, %v3014
      %v3016 = vrot.slane %v2836, %v3015
      %v3017 = vlaneseq
      %v3018 = vshrl.u32 %v3017, 7
      %v3019 = vsub.s32 3, %v3018
      %v3020 = vrot.slane %v2836, %v3019
      %v3021 = vlaneseq
      %v3022 = vshrl.u32 %v3021, 7
      %v3023 = vsub.s32 4, %v3022
      %v3024 = vrot.slane %v2836, %v3023
      %v3025 = vlaneseq
      %v3026 = vshrl.u32 %v3025, 7
      %v3027 = vsub.s32 5, %v3026
      %v3028 = vrot.slane %v2836, %v3027
      %v3029 = vlaneseq
      %v3030 = vshrl.u32 %v3029, 7
      %v3031 = vsub.s32 6, %v3030
      %v3032 = vrot.slane %v2836, %v3031
      %v3033 = vlaneseq
      %v3034 = vshrl.u32 %v3033, 7
      %v3035 = vsub.s32 7, %v3034
      %v3036 = vrot.slane %v2836, %v3035
      %v3037 = vlaneseq
      %v3038 = vshrl.u32 %v3037, 7
      %v3039 = vsub.s32 0, %v3038
      %v3040 = vrot.slane %v2840, %v3039
      %v3041 = vlaneseq
      %v3042 = vshrl.u32 %v3041, 7
      %v3043 = vsub.s32 1, %v3042
      %v3044 = vrot.slane %v2840, %v3043
      %v3045 = vlaneseq
      %v3046 = vshrl.u32 %v3045, 7
      %v3047 = vsub.s32 2, %v3046
      %v3048 = vrot.slane %v2840, %v3047
      %v3049 = vlaneseq
      %v3050 = vshrl.u32 %v3049, 7
      %v3051 = vsub.s32 3, %v3050
      %v3052 = vrot.slane %v2840, %v3051
      %v3053 = vlaneseq
      %v3054 = vshrl.u32 %v3053, 7
      %v3055 = vsub.s32 4, %v3054
      %v3056 = vrot.slane %v2840, %v3055
      %v3057 = vlaneseq
      %v3058 = vshrl.u32 %v3057, 7
      %v3059 = vsub.s32 5, %v3058
      %v3060 = vrot.slane %v2840, %v3059
      %v3075 = vmul.f32 %v2965, %v3008
      %v3076 = vmul.f32 %v2966, %v3012
      %v3077 = vmul.f32 %v2967, %v3016
      %v3078 = vmul.f32 %v2968, %v3020
      %v3079 = vmul.f32 %v2969, %v3024
      %v3080 = vmul.f32 %v2970, %v3028
      %v3081 = vmul.f32 %v2971, %v3032
      %v3082 = vmul.f32 %v2972, %v3036
      %v3083 = vmul.f32 %v2973, %v3040
      %v3084 = vmul.f32 %v2974, %v3044
      %v3085 = vmul.f32 %v2975, %v3048
      %v3086 = vmul.f32 %v3002, %v3052
      %v3087 = vmul.f32 %v2997, %v3056
      %v3088 = vmul.f32 %v2998, %v3060
      %v3089 = vadd.f32 %v2915, %v3075
      %v3090 = vadd.f32 %v2916, %v3076
      %v3091 = vadd.f32 %v2917, %v3077
      %v3092 = vadd.f32 %v2918, %v3078
      %v3093 = vadd.f32 %v2919, %v3079
      %v3094 = vadd.f32 %v2920, %v3080
      %v3095 = vadd.f32 %v2921, %v3081
      %v3096 = vadd.f32 %v2922, %v3082
      %v3097 = vadd.f32 %v2923, %v3083
      %v3098 = vadd.f32 %v2924, %v3084
      %v3099 = vadd.f32 %v2925, %v3085
      %v3100 = vadd.f32 %v2926, %v3086
      %v3101 = vadd.f32 %v2927, %v3087
      %v3102 = vadd.f32 %v2928, %v3088
      %s3103 = scalar_lea.vmem %s2, 1
      %v3104 = vld [vmem:[%s3103] ss:$8 sm:$0xf]
      %v3105 = vld [vmem:[%s3103] ss:$8 sm:$0xf0]
      %v3106 = vor.u32 %v3104, %v3105
      %s3107 = scalar_lea.vmem %s2, 65
      %v3108 = vld [vmem:[%s3107] ss:$8 sm:$0xf]
      %v3109 = vld [vmem:[%s3107] ss:$8 sm:$0x30]
      %v3110 = vor.u32 %v3108, %v3109
      %v3111 = vsub.f32 1.0, %v3106
      %v3112 = vsub.f32 1.0, %v3110
      %v3115 = vlaneseq
      %v3116 = vshrl.u32 %v3115, 7
      %v3117 = vsub.s32 0, %v3116
      %v3118 = vrot.slane %v3111, %v3117
      %v3119 = vlaneseq
      %v3120 = vshrl.u32 %v3119, 7
      %v3121 = vsub.s32 1, %v3120
      %v3122 = vrot.slane %v3111, %v3121
      %v3123 = vlaneseq
      %v3124 = vshrl.u32 %v3123, 7
      %v3125 = vsub.s32 2, %v3124
      %v3126 = vrot.slane %v3111, %v3125
      %v3127 = vlaneseq
      %v3128 = vshrl.u32 %v3127, 7
      %v3129 = vsub.s32 3, %v3128
      %v3130 = vrot.slane %v3111, %v3129
      %v3131 = vlaneseq
      %v3132 = vshrl.u32 %v3131, 7
      %v3133 = vsub.s32 4, %v3132
      %v3134 = vrot.slane %v3111, %v3133
      %v3135 = vlaneseq
      %v3136 = vshrl.u32 %v3135, 7
      %v3137 = vsub.s32 5, %v3136
      %v3138 = vrot.slane %v3111, %v3137
      %v3139 = vlaneseq
      %v3140 = vshrl.u32 %v3139, 7
      %v3141 = vsub.s32 6, %v3140
      %v3142 = vrot.slane %v3111, %v3141
      %v3143 = vlaneseq
      %v3144 = vshrl.u32 %v3143, 7
      %v3145 = vsub.s32 7, %v3144
      %v3146 = vrot.slane %v3111, %v3145
      %v3147 = vlaneseq
      %v3148 = vshrl.u32 %v3147, 7
      %v3149 = vsub.s32 0, %v3148
      %v3150 = vrot.slane %v3112, %v3149
      %v3151 = vlaneseq
      %v3152 = vshrl.u32 %v3151, 7
      %v3153 = vsub.s32 1, %v3152
      %v3154 = vrot.slane %v3112, %v3153
      %v3155 = vlaneseq
      %v3156 = vshrl.u32 %v3155, 7
      %v3157 = vsub.s32 2, %v3156
      %v3158 = vrot.slane %v3112, %v3157
      %v3159 = vlaneseq
      %v3160 = vshrl.u32 %v3159, 7
      %v3161 = vsub.s32 3, %v3160
      %v3162 = vrot.slane %v3112, %v3161
      %v3163 = vlaneseq
      %v3164 = vshrl.u32 %v3163, 7
      %v3165 = vsub.s32 4, %v3164
      %v3166 = vrot.slane %v3112, %v3165
      %v3167 = vlaneseq
      %v3168 = vshrl.u32 %v3167, 7
      %v3169 = vsub.s32 5, %v3168
      %v3170 = vrot.slane %v3112, %v3169
      %v3185 = vmul.f32 %v3089, %v3118
      %v3186 = vmul.f32 %v3090, %v3122
      %v3187 = vmul.f32 %v3091, %v3126
      %v3188 = vmul.f32 %v3092, %v3130
      %v3189 = vmul.f32 %v3093, %v3134
      %v3190 = vmul.f32 %v3094, %v3138
      %v3191 = vmul.f32 %v3095, %v3142
      %v3192 = vmul.f32 %v3096, %v3146
      %v3193 = vmul.f32 %v3097, %v3150
      %v3194 = vmul.f32 %v3098, %v3154
      %v3195 = vmul.f32 %v3099, %v3158
      %v3196 = vmul.f32 %v3100, %v3162
      %v3197 = vmul.f32 %v3101, %v3166
      %v3198 = vmul.f32 %v3102, %v3170
      %3202 = vrot.lane.b32.xlu0 %v3100, 96
      %v3203 = vpop.permute.xlu0 %3202
      %3204 = vrot.lane.b32.xlu0 %v3101, 96
      %v3205 = vpop.permute.xlu0 %3204
      %3206 = vrot.lane.b32.xlu0 %v3102, 96
      %v3207 = vpop.permute.xlu0 %3206
      %v3208 = vsel %vm839, %v3203, %v3205
      %v3209 = vsel %vm839, %v3205, %v3207
      %3224 = vrot.lane.b32.xlu0 %v3089, 32
      %v3225 = vpop.permute.xlu0 %3224
      %3226 = vrot.lane.b32.xlu0 %v3090, 32
      %v3227 = vpop.permute.xlu0 %3226
      %3228 = vrot.lane.b32.xlu0 %v3091, 32
      %v3229 = vpop.permute.xlu0 %3228
      %3230 = vrot.lane.b32.xlu0 %v3092, 32
      %v3231 = vpop.permute.xlu0 %3230
      %3232 = vrot.lane.b32.xlu0 %v3093, 32
      %v3233 = vpop.permute.xlu0 %3232
      %3234 = vrot.lane.b32.xlu0 %v3094, 32
      %v3235 = vpop.permute.xlu0 %3234
      %3236 = vrot.lane.b32.xlu0 %v3095, 32
      %v3237 = vpop.permute.xlu0 %3236
      %3238 = vrot.lane.b32.xlu0 %v3096, 32
      %v3239 = vpop.permute.xlu0 %3238
      %3240 = vrot.lane.b32.xlu0 %v3097, 32
      %v3241 = vpop.permute.xlu0 %3240
      %3242 = vrot.lane.b32.xlu0 %v3098, 32
      %v3243 = vpop.permute.xlu0 %3242
      %3244 = vrot.lane.b32.xlu0 %v3099, 32
      %v3245 = vpop.permute.xlu0 %3244
      %3246 = vrot.lane.b32.xlu0 %v3100, 32
      %v3247 = vpop.permute.xlu0 %3246
      %v3248 = vsel %vm2996, %v3225, %v3227
      %v3249 = vsel %vm2996, %v3227, %v3229
      %v3250 = vsel %vm2996, %v3229, %v3231
      %v3251 = vsel %vm2996, %v3231, %v3233
      %v3252 = vsel %vm2996, %v3233, %v3235
      %v3253 = vsel %vm2996, %v3235, %v3237
      %v3254 = vsel %vm2996, %v3237, %v3239
      %v3255 = vsel %vm2996, %v3239, %v3241
      %v3256 = vsel %vm2996, %v3241, %v3243
      %v3257 = vsel %vm2996, %v3243, %v3245
      %v3258 = vsel %vm2996, %v3245, %v3247
      %v3271 = vsel %vm2996, %v3207, %v3225
      %v3274 = vlaneseq
      %v3275 = vshrl.u32 %v3274, 7
      %v3276 = vsub.s32 0, %v3275
      %v3277 = vrot.slane %v3106, %v3276
      %v3278 = vlaneseq
      %v3279 = vshrl.u32 %v3278, 7
      %v3280 = vsub.s32 1, %v3279
      %v3281 = vrot.slane %v3106, %v3280
      %v3282 = vlaneseq
      %v3283 = vshrl.u32 %v3282, 7
      %v3284 = vsub.s32 2, %v3283
      %v3285 = vrot.slane %v3106, %v3284
      %v3286 = vlaneseq
      %v3287 = vshrl.u32 %v3286, 7
      %v3288 = vsub.s32 3, %v3287
      %v3289 = vrot.slane %v3106, %v3288
      %v3290 = vlaneseq
      %v3291 = vshrl.u32 %v3290, 7
      %v3292 = vsub.s32 4, %v3291
      %v3293 = vrot.slane %v3106, %v3292
      %v3294 = vlaneseq
      %v3295 = vshrl.u32 %v3294, 7
      %v3296 = vsub.s32 5, %v3295
      %v3297 = vrot.slane %v3106, %v3296
      %v3298 = vlaneseq
      %v3299 = vshrl.u32 %v3298, 7
      %v3300 = vsub.s32 6, %v3299
      %v3301 = vrot.slane %v3106, %v3300
      %v3302 = vlaneseq
      %v3303 = vshrl.u32 %v3302, 7
      %v3304 = vsub.s32 7, %v3303
      %v3305 = vrot.slane %v3106, %v3304
      %v3306 = vlaneseq
      %v3307 = vshrl.u32 %v3306, 7
      %v3308 = vsub.s32 0, %v3307
      %v3309 = vrot.slane %v3110, %v3308
      %v3310 = vlaneseq
      %v3311 = vshrl.u32 %v3310, 7
      %v3312 = vsub.s32 1, %v3311
      %v3313 = vrot.slane %v3110, %v3312
      %v3314 = vlaneseq
      %v3315 = vshrl.u32 %v3314, 7
      %v3316 = vsub.s32 2, %v3315
      %v3317 = vrot.slane %v3110, %v3316
      %v3318 = vlaneseq
      %v3319 = vshrl.u32 %v3318, 7
      %v3320 = vsub.s32 3, %v3319
      %v3321 = vrot.slane %v3110, %v3320
      %v3322 = vlaneseq
      %v3323 = vshrl.u32 %v3322, 7
      %v3324 = vsub.s32 4, %v3323
      %v3325 = vrot.slane %v3110, %v3324
      %v3326 = vlaneseq
      %v3327 = vshrl.u32 %v3326, 7
      %v3328 = vsub.s32 5, %v3327
      %v3329 = vrot.slane %v3110, %v3328
      %v3344 = vmul.f32 %v3208, %v3277
      %v3345 = vmul.f32 %v3209, %v3281
      %v3346 = vmul.f32 %v3271, %v3285
      %v3347 = vmul.f32 %v3248, %v3289
      %v3348 = vmul.f32 %v3249, %v3293
      %v3349 = vmul.f32 %v3250, %v3297
      %v3350 = vmul.f32 %v3251, %v3301
      %v3351 = vmul.f32 %v3252, %v3305
      %v3352 = vmul.f32 %v3253, %v3309
      %v3353 = vmul.f32 %v3254, %v3313
      %v3354 = vmul.f32 %v3255, %v3317
      %v3355 = vmul.f32 %v3256, %v3321
      %v3356 = vmul.f32 %v3257, %v3325
      %v3357 = vmul.f32 %v3258, %v3329
      %v3358 = vadd.f32 %v3185, %v3344
      %v3359 = vadd.f32 %v3186, %v3345
      %v3360 = vadd.f32 %v3187, %v3346
      %v3361 = vadd.f32 %v3188, %v3347
      %v3362 = vadd.f32 %v3189, %v3348
      %v3363 = vadd.f32 %v3190, %v3349
      %v3364 = vadd.f32 %v3191, %v3350
      %v3365 = vadd.f32 %v3192, %v3351
      %v3366 = vadd.f32 %v3193, %v3352
      %v3367 = vadd.f32 %v3194, %v3353
      %v3368 = vadd.f32 %v3195, %v3354
      %v3369 = vadd.f32 %v3196, %v3355
      %v3370 = vadd.f32 %v3197, %v3356
      %v3371 = vadd.f32 %v3198, %v3357
      %s3372 = scalar_lea.vmem %s2, 2
      %v3373 = vld [vmem:[%s3372] ss:$8 sm:$0xf]
      %v3374 = vld [vmem:[%s3372] ss:$8 sm:$0xf0]
      %v3375 = vor.u32 %v3373, %v3374
      %s3376 = scalar_lea.vmem %s2, 66
      %v3377 = vld [vmem:[%s3376] ss:$8 sm:$0xf]
      %v3378 = vld [vmem:[%s3376] ss:$8 sm:$0x30]
      %v3379 = vor.u32 %v3377, %v3378
      %v3380 = vsub.f32 1.0, %v3375
      %v3381 = vsub.f32 1.0, %v3379
      %v3384 = vlaneseq
      %v3385 = vshrl.u32 %v3384, 7
      %v3386 = vsub.s32 0, %v3385
      %v3387 = vrot.slane %v3380, %v3386
      %v3388 = vlaneseq
      %v3389 = vshrl.u32 %v3388, 7
      %v3390 = vsub.s32 1, %v3389
      %v3391 = vrot.slane %v3380, %v3390
      %v3392 = vlaneseq
      %v3393 = vshrl.u32 %v3392, 7
      %v3394 = vsub.s32 2, %v3393
      %v3395 = vrot.slane %v3380, %v3394
      %v3396 = vlaneseq
      %v3397 = vshrl.u32 %v3396, 7
      %v3398 = vsub.s32 3, %v3397
      %v3399 = vrot.slane %v3380, %v3398
      %v3400 = vlaneseq
      %v3401 = vshrl.u32 %v3400, 7
      %v3402 = vsub.s32 4, %v3401
      %v3403 = vrot.slane %v3380, %v3402
      %v3404 = vlaneseq
      %v3405 = vshrl.u32 %v3404, 7
      %v3406 = vsub.s32 5, %v3405
      %v3407 = vrot.slane %v3380, %v3406
      %v3408 = vlaneseq
      %v3409 = vshrl.u32 %v3408, 7
      %v3410 = vsub.s32 6, %v3409
      %v3411 = vrot.slane %v3380, %v3410
      %v3412 = vlaneseq
      %v3413 = vshrl.u32 %v3412, 7
      %v3414 = vsub.s32 7, %v3413
      %v3415 = vrot.slane %v3380, %v3414
      %v3416 = vlaneseq
      %v3417 = vshrl.u32 %v3416, 7
      %v3418 = vsub.s32 0, %v3417
      %v3419 = vrot.slane %v3381, %v3418
      %v3420 = vlaneseq
      %v3421 = vshrl.u32 %v3420, 7
      %v3422 = vsub.s32 1, %v3421
      %v3423 = vrot.slane %v3381, %v3422
      %v3424 = vlaneseq
      %v3425 = vshrl.u32 %v3424, 7
      %v3426 = vsub.s32 2, %v3425
      %v3427 = vrot.slane %v3381, %v3426
      %v3428 = vlaneseq
      %v3429 = vshrl.u32 %v3428, 7
      %v3430 = vsub.s32 3, %v3429
      %v3431 = vrot.slane %v3381, %v3430
      %v3432 = vlaneseq
      %v3433 = vshrl.u32 %v3432, 7
      %v3434 = vsub.s32 4, %v3433
      %v3435 = vrot.slane %v3381, %v3434
      %v3436 = vlaneseq
      %v3437 = vshrl.u32 %v3436, 7
      %v3438 = vsub.s32 5, %v3437
      %v3439 = vrot.slane %v3381, %v3438
      %v3454 = vmul.f32 %v3358, %v3387
      %v3455 = vmul.f32 %v3359, %v3391
      %v3456 = vmul.f32 %v3360, %v3395
      %v3457 = vmul.f32 %v3361, %v3399
      %v3458 = vmul.f32 %v3362, %v3403
      %v3459 = vmul.f32 %v3363, %v3407
      %v3460 = vmul.f32 %v3364, %v3411
      %v3461 = vmul.f32 %v3365, %v3415
      %v3462 = vmul.f32 %v3366, %v3419
      %v3463 = vmul.f32 %v3367, %v3423
      %v3464 = vmul.f32 %v3368, %v3427
      %v3465 = vmul.f32 %v3369, %v3431
      %v3466 = vmul.f32 %v3370, %v3435
      %v3467 = vmul.f32 %v3371, %v3439
      %3482 = vrot.lane.b32.xlu0 %v3358, 104
      %v3483 = vpop.permute.xlu0 %3482
      %3484 = vrot.lane.b32.xlu0 %v3359, 104
      %v3485 = vpop.permute.xlu0 %3484
      %3486 = vrot.lane.b32.xlu0 %v3360, 104
      %v3487 = vpop.permute.xlu0 %3486
      %3488 = vrot.lane.b32.xlu0 %v3361, 104
      %v3489 = vpop.permute.xlu0 %3488
      %3490 = vrot.lane.b32.xlu0 %v3362, 104
      %v3491 = vpop.permute.xlu0 %3490
      %3492 = vrot.lane.b32.xlu0 %v3363, 104
      %v3493 = vpop.permute.xlu0 %3492
      %3494 = vrot.lane.b32.xlu0 %v3364, 104
      %v3495 = vpop.permute.xlu0 %3494
      %3496 = vrot.lane.b32.xlu0 %v3365, 104
      %v3497 = vpop.permute.xlu0 %3496
      %3498 = vrot.lane.b32.xlu0 %v3366, 104
      %v3499 = vpop.permute.xlu0 %3498
      %3500 = vrot.lane.b32.xlu0 %v3367, 104
      %v3501 = vpop.permute.xlu0 %3500
      %3502 = vrot.lane.b32.xlu0 %v3368, 104
      %v3503 = vpop.permute.xlu0 %3502
      %3504 = vrot.lane.b32.xlu0 %v3369, 104
      %v3505 = vpop.permute.xlu0 %3504
      %3506 = vrot.lane.b32.xlu0 %v3370, 104
      %v3507 = vpop.permute.xlu0 %3506
      %3508 = vrot.lane.b32.xlu0 %v3371, 104
      %v3509 = vpop.permute.xlu0 %3508
      %v3510 = vsel %vm462, %v3483, %v3485
      %v3511 = vsel %vm462, %v3485, %v3487
      %v3512 = vsel %vm462, %v3487, %v3489
      %v3513 = vsel %vm462, %v3489, %v3491
      %v3514 = vsel %vm462, %v3491, %v3493
      %v3515 = vsel %vm462, %v3493, %v3495
      %v3516 = vsel %vm462, %v3495, %v3497
      %v3517 = vsel %vm462, %v3497, %v3499
      %v3518 = vsel %vm462, %v3499, %v3501
      %v3519 = vsel %vm462, %v3501, %v3503
      %v3520 = vsel %vm462, %v3503, %v3505
      %v3521 = vsel %vm462, %v3505, %v3507
      %v3522 = vsel %vm462, %v3507, %v3509
      %3537 = vrot.lane.b32.xlu0 %v3358, 40
      %v3538 = vpop.permute.xlu0 %3537
      %v3540 = vsel %vm1644, %v3509, %v3538
      %v3543 = vlaneseq
      %v3544 = vshrl.u32 %v3543, 7
      %v3545 = vsub.s32 0, %v3544
      %v3546 = vrot.slane %v3375, %v3545
      %v3547 = vlaneseq
      %v3548 = vshrl.u32 %v3547, 7
      %v3549 = vsub.s32 1, %v3548
      %v3550 = vrot.slane %v3375, %v3549
      %v3551 = vlaneseq
      %v3552 = vshrl.u32 %v3551, 7
      %v3553 = vsub.s32 2, %v3552
      %v3554 = vrot.slane %v3375, %v3553
      %v3555 = vlaneseq
      %v3556 = vshrl.u32 %v3555, 7
      %v3557 = vsub.s32 3, %v3556
      %v3558 = vrot.slane %v3375, %v3557
      %v3559 = vlaneseq
      %v3560 = vshrl.u32 %v3559, 7
      %v3561 = vsub.s32 4, %v3560
      %v3562 = vrot.slane %v3375, %v3561
      %v3563 = vlaneseq
      %v3564 = vshrl.u32 %v3563, 7
      %v3565 = vsub.s32 5, %v3564
      %v3566 = vrot.slane %v3375, %v3565
      %v3567 = vlaneseq
      %v3568 = vshrl.u32 %v3567, 7
      %v3569 = vsub.s32 6, %v3568
      %v3570 = vrot.slane %v3375, %v3569
      %v3571 = vlaneseq
      %v3572 = vshrl.u32 %v3571, 7
      %v3573 = vsub.s32 7, %v3572
      %v3574 = vrot.slane %v3375, %v3573
      %v3575 = vlaneseq
      %v3576 = vshrl.u32 %v3575, 7
      %v3577 = vsub.s32 0, %v3576
      %v3578 = vrot.slane %v3379, %v3577
      %v3579 = vlaneseq
      %v3580 = vshrl.u32 %v3579, 7
      %v3581 = vsub.s32 1, %v3580
      %v3582 = vrot.slane %v3379, %v3581
      %v3583 = vlaneseq
      %v3584 = vshrl.u32 %v3583, 7
      %v3585 = vsub.s32 2, %v3584
      %v3586 = vrot.slane %v3379, %v3585
      %v3587 = vlaneseq
      %v3588 = vshrl.u32 %v3587, 7
      %v3589 = vsub.s32 3, %v3588
      %v3590 = vrot.slane %v3379, %v3589
      %v3591 = vlaneseq
      %v3592 = vshrl.u32 %v3591, 7
      %v3593 = vsub.s32 4, %v3592
      %v3594 = vrot.slane %v3379, %v3593
      %v3595 = vlaneseq
      %v3596 = vshrl.u32 %v3595, 7
      %v3597 = vsub.s32 5, %v3596
      %v3598 = vrot.slane %v3379, %v3597
      %v3613 = vmul.f32 %v3510, %v3546
      %v3614 = vmul.f32 %v3511, %v3550
      %v3615 = vmul.f32 %v3512, %v3554
      %v3616 = vmul.f32 %v3513, %v3558
      %v3617 = vmul.f32 %v3514, %v3562
      %v3618 = vmul.f32 %v3515, %v3566
      %v3619 = vmul.f32 %v3516, %v3570
      %v3620 = vmul.f32 %v3517, %v3574
      %v3621 = vmul.f32 %v3518, %v3578
      %v3622 = vmul.f32 %v3519, %v3582
      %v3623 = vmul.f32 %v3520, %v3586
      %v3624 = vmul.f32 %v3521, %v3590
      %v3625 = vmul.f32 %v3522, %v3594
      %v3626 = vmul.f32 %v3540, %v3598
      %v3627 = vadd.f32 %v3454, %v3613
      %v3628 = vadd.f32 %v3455, %v3614
      %v3629 = vadd.f32 %v3456, %v3615
      %v3630 = vadd.f32 %v3457, %v3616
      %v3631 = vadd.f32 %v3458, %v3617
      %v3632 = vadd.f32 %v3459, %v3618
      %v3633 = vadd.f32 %v3460, %v3619
      %v3634 = vadd.f32 %v3461, %v3620
      %v3635 = vadd.f32 %v3462, %v3621
      %v3636 = vadd.f32 %v3463, %v3622
      %v3637 = vadd.f32 %v3464, %v3623
      %v3638 = vadd.f32 %v3465, %v3624
      %v3639 = vadd.f32 %v3466, %v3625
      %v3640 = vadd.f32 %v3467, %v3626
      %s3641 = scalar_lea.vmem %s2, 3
      %v3642 = vld [vmem:[%s3641] ss:$8 sm:$0xf]
      %v3643 = vld [vmem:[%s3641] ss:$8 sm:$0xf0]
      %v3644 = vor.u32 %v3642, %v3643
      %s3645 = scalar_lea.vmem %s2, 67
      %v3646 = vld [vmem:[%s3645] ss:$8 sm:$0xf]
      %v3647 = vld [vmem:[%s3645] ss:$8 sm:$0x30]
      %v3648 = vor.u32 %v3646, %v3647
      %v3649 = vsub.f32 1.0, %v3644
      %v3650 = vsub.f32 1.0, %v3648
      %v3653 = vlaneseq
      %v3654 = vshrl.u32 %v3653, 7
      %v3655 = vsub.s32 0, %v3654
      %v3656 = vrot.slane %v3649, %v3655
      %v3657 = vlaneseq
      %v3658 = vshrl.u32 %v3657, 7
      %v3659 = vsub.s32 1, %v3658
      %v3660 = vrot.slane %v3649, %v3659
      %v3661 = vlaneseq
      %v3662 = vshrl.u32 %v3661, 7
      %v3663 = vsub.s32 2, %v3662
      %v3664 = vrot.slane %v3649, %v3663
      %v3665 = vlaneseq
      %v3666 = vshrl.u32 %v3665, 7
      %v3667 = vsub.s32 3, %v3666
      %v3668 = vrot.slane %v3649, %v3667
      %v3669 = vlaneseq
      %v3670 = vshrl.u32 %v3669, 7
      %v3671 = vsub.s32 4, %v3670
      %v3672 = vrot.slane %v3649, %v3671
      %v3673 = vlaneseq
      %v3674 = vshrl.u32 %v3673, 7
      %v3675 = vsub.s32 5, %v3674
      %v3676 = vrot.slane %v3649, %v3675
      %v3677 = vlaneseq
      %v3678 = vshrl.u32 %v3677, 7
      %v3679 = vsub.s32 6, %v3678
      %v3680 = vrot.slane %v3649, %v3679
      %v3681 = vlaneseq
      %v3682 = vshrl.u32 %v3681, 7
      %v3683 = vsub.s32 7, %v3682
      %v3684 = vrot.slane %v3649, %v3683
      %v3685 = vlaneseq
      %v3686 = vshrl.u32 %v3685, 7
      %v3687 = vsub.s32 0, %v3686
      %v3688 = vrot.slane %v3650, %v3687
      %v3689 = vlaneseq
      %v3690 = vshrl.u32 %v3689, 7
      %v3691 = vsub.s32 1, %v3690
      %v3692 = vrot.slane %v3650, %v3691
      %v3693 = vlaneseq
      %v3694 = vshrl.u32 %v3693, 7
      %v3695 = vsub.s32 2, %v3694
      %v3696 = vrot.slane %v3650, %v3695
      %v3697 = vlaneseq
      %v3698 = vshrl.u32 %v3697, 7
      %v3699 = vsub.s32 3, %v3698
      %v3700 = vrot.slane %v3650, %v3699
      %v3701 = vlaneseq
      %v3702 = vshrl.u32 %v3701, 7
      %v3703 = vsub.s32 4, %v3702
      %v3704 = vrot.slane %v3650, %v3703
      %v3705 = vlaneseq
      %v3706 = vshrl.u32 %v3705, 7
      %v3707 = vsub.s32 5, %v3706
      %v3708 = vrot.slane %v3650, %v3707
      %v3723 = vmul.f32 %v3627, %v3656
      %v3724 = vmul.f32 %v3628, %v3660
      %v3725 = vmul.f32 %v3629, %v3664
      %v3726 = vmul.f32 %v3630, %v3668
      %v3727 = vmul.f32 %v3631, %v3672
      %v3728 = vmul.f32 %v3632, %v3676
      %v3729 = vmul.f32 %v3633, %v3680
      %v3730 = vmul.f32 %v3634, %v3684
      %v3731 = vmul.f32 %v3635, %v3688
      %v3732 = vmul.f32 %v3636, %v3692
      %v3733 = vmul.f32 %v3637, %v3696
      %v3734 = vmul.f32 %v3638, %v3700
      %v3735 = vmul.f32 %v3639, %v3704
      %v3736 = vmul.f32 %v3640, %v3708
      %3738 = vrot.lane.b32.xlu0 %v3640, 88
      %v3739 = vpop.permute.xlu0 %3738
      %3754 = vrot.lane.b32.xlu0 %v3627, 24
      %v3755 = vpop.permute.xlu0 %3754
      %3756 = vrot.lane.b32.xlu0 %v3628, 24
      %v3757 = vpop.permute.xlu0 %3756
      %3758 = vrot.lane.b32.xlu0 %v3629, 24
      %v3759 = vpop.permute.xlu0 %3758
      %3760 = vrot.lane.b32.xlu0 %v3630, 24
      %v3761 = vpop.permute.xlu0 %3760
      %3762 = vrot.lane.b32.xlu0 %v3631, 24
      %v3763 = vpop.permute.xlu0 %3762
      %3764 = vrot.lane.b32.xlu0 %v3632, 24
      %v3765 = vpop.permute.xlu0 %3764
      %3766 = vrot.lane.b32.xlu0 %v3633, 24
      %v3767 = vpop.permute.xlu0 %3766
      %3768 = vrot.lane.b32.xlu0 %v3634, 24
      %v3769 = vpop.permute.xlu0 %3768
      %3770 = vrot.lane.b32.xlu0 %v3635, 24
      %v3771 = vpop.permute.xlu0 %3770
      %3772 = vrot.lane.b32.xlu0 %v3636, 24
      %v3773 = vpop.permute.xlu0 %3772
      %3774 = vrot.lane.b32.xlu0 %v3637, 24
      %v3775 = vpop.permute.xlu0 %3774
      %3776 = vrot.lane.b32.xlu0 %v3638, 24
      %v3777 = vpop.permute.xlu0 %3776
      %3778 = vrot.lane.b32.xlu0 %v3639, 24
      %v3779 = vpop.permute.xlu0 %3778
      %3780 = vrot.lane.b32.xlu0 %v3640, 24
      %v3781 = vpop.permute.xlu0 %3780
      %vm3782 = vcmask 195584
      %v3783 = vsel %vm3782, %v3755, %v3757
      %v3784 = vsel %vm3782, %v3757, %v3759
      %v3785 = vsel %vm3782, %v3759, %v3761
      %v3786 = vsel %vm3782, %v3761, %v3763
      %v3787 = vsel %vm3782, %v3763, %v3765
      %v3788 = vsel %vm3782, %v3765, %v3767
      %v3789 = vsel %vm3782, %v3767, %v3769
      %v3790 = vsel %vm3782, %v3769, %v3771
      %v3791 = vsel %vm3782, %v3771, %v3773
      %v3792 = vsel %vm3782, %v3773, %v3775
      %v3793 = vsel %vm3782, %v3775, %v3777
      %v3794 = vsel %vm3782, %v3777, %v3779
      %v3795 = vsel %vm3782, %v3779, %v3781
      %v3810 = vsel %vm3782, %v3739, %v3755
      %v3813 = vlaneseq
      %v3814 = vshrl.u32 %v3813, 7
      %v3815 = vsub.s32 0, %v3814
      %v3816 = vrot.slane %v3644, %v3815
      %v3817 = vlaneseq
      %v3818 = vshrl.u32 %v3817, 7
      %v3819 = vsub.s32 1, %v3818
      %v3820 = vrot.slane %v3644, %v3819
      %v3821 = vlaneseq
      %v3822 = vshrl.u32 %v3821, 7
      %v3823 = vsub.s32 2, %v3822
      %v3824 = vrot.slane %v3644, %v3823
      %v3825 = vlaneseq
      %v3826 = vshrl.u32 %v3825, 7
      %v3827 = vsub.s32 3, %v3826
      %v3828 = vrot.slane %v3644, %v3827
      %v3829 = vlaneseq
      %v3830 = vshrl.u32 %v3829, 7
      %v3831 = vsub.s32 4, %v3830
      %v3832 = vrot.slane %v3644, %v3831
      %v3833 = vlaneseq
      %v3834 = vshrl.u32 %v3833, 7
      %v3835 = vsub.s32 5, %v3834
      %v3836 = vrot.slane %v3644, %v3835
      %v3837 = vlaneseq
      %v3838 = vshrl.u32 %v3837, 7
      %v3839 = vsub.s32 6, %v3838
      %v3840 = vrot.slane %v3644, %v3839
      %v3841 = vlaneseq
      %v3842 = vshrl.u32 %v3841, 7
      %v3843 = vsub.s32 7, %v3842
      %v3844 = vrot.slane %v3644, %v3843
      %v3845 = vlaneseq
      %v3846 = vshrl.u32 %v3845, 7
      %v3847 = vsub.s32 0, %v3846
      %v3848 = vrot.slane %v3648, %v3847
      %v3849 = vlaneseq
      %v3850 = vshrl.u32 %v3849, 7
      %v3851 = vsub.s32 1, %v3850
      %v3852 = vrot.slane %v3648, %v3851
      %v3853 = vlaneseq
      %v3854 = vshrl.u32 %v3853, 7
      %v3855 = vsub.s32 2, %v3854
      %v3856 = vrot.slane %v3648, %v3855
      %v3857 = vlaneseq
      %v3858 = vshrl.u32 %v3857, 7
      %v3859 = vsub.s32 3, %v3858
      %v3860 = vrot.slane %v3648, %v3859
      %v3861 = vlaneseq
      %v3862 = vshrl.u32 %v3861, 7
      %v3863 = vsub.s32 4, %v3862
      %v3864 = vrot.slane %v3648, %v3863
      %v3865 = vlaneseq
      %v3866 = vshrl.u32 %v3865, 7
      %v3867 = vsub.s32 5, %v3866
      %v3868 = vrot.slane %v3648, %v3867
      %v3883 = vmul.f32 %v3810, %v3816
      %v3884 = vmul.f32 %v3783, %v3820
      %v3885 = vmul.f32 %v3784, %v3824
      %v3886 = vmul.f32 %v3785, %v3828
      %v3887 = vmul.f32 %v3786, %v3832
      %v3888 = vmul.f32 %v3787, %v3836
      %v3889 = vmul.f32 %v3788, %v3840
      %v3890 = vmul.f32 %v3789, %v3844
      %v3891 = vmul.f32 %v3790, %v3848
      %v3892 = vmul.f32 %v3791, %v3852
      %v3893 = vmul.f32 %v3792, %v3856
      %v3894 = vmul.f32 %v3793, %v3860
      %v3895 = vmul.f32 %v3794, %v3864
      %v3896 = vmul.f32 %v3795, %v3868
      %v3897 = vadd.f32 %v3723, %v3883
      %v3898 = vadd.f32 %v3724, %v3884
      %v3899 = vadd.f32 %v3725, %v3885
      %v3900 = vadd.f32 %v3726, %v3886
      %v3901 = vadd.f32 %v3727, %v3887
      %v3902 = vadd.f32 %v3728, %v3888
      %v3903 = vadd.f32 %v3729, %v3889
      %v3904 = vadd.f32 %v3730, %v3890
      %v3905 = vadd.f32 %v3731, %v3891
      %v3906 = vadd.f32 %v3732, %v3892
      %v3907 = vadd.f32 %v3733, %v3893
      %v3908 = vadd.f32 %v3734, %v3894
      %v3909 = vadd.f32 %v3735, %v3895
      %v3910 = vadd.f32 %v3736, %v3896
      %s3911 = scalar_lea.vmem %s2, 4
      %v3912 = vld [vmem:[%s3911] ss:$8 sm:$0xf]
      %v3913 = vld [vmem:[%s3911] ss:$8 sm:$0xf0]
      %v3914 = vor.u32 %v3912, %v3913
      %s3915 = scalar_lea.vmem %s2, 68
      %v3916 = vld [vmem:[%s3915] ss:$8 sm:$0xf]
      %v3917 = vld [vmem:[%s3915] ss:$8 sm:$0x30]
      %v3918 = vor.u32 %v3916, %v3917
      %v3919 = vsub.f32 1.0, %v3914
      %v3920 = vsub.f32 1.0, %v3918
      %v3923 = vlaneseq
      %v3924 = vshrl.u32 %v3923, 7
      %v3925 = vsub.s32 0, %v3924
      %v3926 = vrot.slane %v3919, %v3925
      %v3927 = vlaneseq
      %v3928 = vshrl.u32 %v3927, 7
      %v3929 = vsub.s32 1, %v3928
      %v3930 = vrot.slane %v3919, %v3929
      %v3931 = vlaneseq
      %v3932 = vshrl.u32 %v3931, 7
      %v3933 = vsub.s32 2, %v3932
      %v3934 = vrot.slane %v3919, %v3933
      %v3935 = vlaneseq
      %v3936 = vshrl.u32 %v3935, 7
      %v3937 = vsub.s32 3, %v3936
      %v3938 = vrot.slane %v3919, %v3937
      %v3939 = vlaneseq
      %v3940 = vshrl.u32 %v3939, 7
      %v3941 = vsub.s32 4, %v3940
      %v3942 = vrot.slane %v3919, %v3941
      %v3943 = vlaneseq
      %v3944 = vshrl.u32 %v3943, 7
      %v3945 = vsub.s32 5, %v3944
      %v3946 = vrot.slane %v3919, %v3945
      %v3947 = vlaneseq
      %v3948 = vshrl.u32 %v3947, 7
      %v3949 = vsub.s32 6, %v3948
      %v3950 = vrot.slane %v3919, %v3949
      %v3951 = vlaneseq
      %v3952 = vshrl.u32 %v3951, 7
      %v3953 = vsub.s32 7, %v3952
      %v3954 = vrot.slane %v3919, %v3953
      %v3955 = vlaneseq
      %v3956 = vshrl.u32 %v3955, 7
      %v3957 = vsub.s32 0, %v3956
      %v3958 = vrot.slane %v3920, %v3957
      %v3959 = vlaneseq
      %v3960 = vshrl.u32 %v3959, 7
      %v3961 = vsub.s32 1, %v3960
      %v3962 = vrot.slane %v3920, %v3961
      %v3963 = vlaneseq
      %v3964 = vshrl.u32 %v3963, 7
      %v3965 = vsub.s32 2, %v3964
      %v3966 = vrot.slane %v3920, %v3965
      %v3967 = vlaneseq
      %v3968 = vshrl.u32 %v3967, 7
      %v3969 = vsub.s32 3, %v3968
      %v3970 = vrot.slane %v3920, %v3969
      %v3971 = vlaneseq
      %v3972 = vshrl.u32 %v3971, 7
      %v3973 = vsub.s32 4, %v3972
      %v3974 = vrot.slane %v3920, %v3973
      %v3975 = vlaneseq
      %v3976 = vshrl.u32 %v3975, 7
      %v3977 = vsub.s32 5, %v3976
      %v3978 = vrot.slane %v3920, %v3977
      %v3993 = vmul.f32 %v3897, %v3926
      %v3994 = vmul.f32 %v3898, %v3930
      %v3995 = vmul.f32 %v3899, %v3934
      %v3996 = vmul.f32 %v3900, %v3938
      %v3997 = vmul.f32 %v3901, %v3942
      %v3998 = vmul.f32 %v3902, %v3946
      %v3999 = vmul.f32 %v3903, %v3950
      %v4000 = vmul.f32 %v3904, %v3954
      %v4001 = vmul.f32 %v3905, %v3958
      %v4002 = vmul.f32 %v3906, %v3962
      %v4003 = vmul.f32 %v3907, %v3966
      %v4004 = vmul.f32 %v3908, %v3970
      %v4005 = vmul.f32 %v3909, %v3974
      %v4006 = vmul.f32 %v3910, %v3978
      %4021 = vrot.lane.b32.xlu0 %v3897, 126
      %v4022 = vpop.permute.xlu0 %4021
      %4023 = vrot.lane.b32.xlu0 %v3898, 126
      %v4024 = vpop.permute.xlu0 %4023
      %4025 = vrot.lane.b32.xlu0 %v3899, 126
      %v4026 = vpop.permute.xlu0 %4025
      %4027 = vrot.lane.b32.xlu0 %v3900, 126
      %v4028 = vpop.permute.xlu0 %4027
      %4029 = vrot.lane.b32.xlu0 %v3901, 126
      %v4030 = vpop.permute.xlu0 %4029
      %4031 = vrot.lane.b32.xlu0 %v3902, 126
      %v4032 = vpop.permute.xlu0 %4031
      %4033 = vrot.lane.b32.xlu0 %v3903, 126
      %v4034 = vpop.permute.xlu0 %4033
      %4035 = vrot.lane.b32.xlu0 %v3904, 126
      %v4036 = vpop.permute.xlu0 %4035
      %4037 = vrot.lane.b32.xlu0 %v3905, 126
      %v4038 = vpop.permute.xlu0 %4037
      %4039 = vrot.lane.b32.xlu0 %v3906, 126
      %v4040 = vpop.permute.xlu0 %4039
      %4041 = vrot.lane.b32.xlu0 %v3907, 126
      %v4042 = vpop.permute.xlu0 %4041
      %4043 = vrot.lane.b32.xlu0 %v3908, 126
      %v4044 = vpop.permute.xlu0 %4043
      %4045 = vrot.lane.b32.xlu0 %v3909, 126
      %v4046 = vpop.permute.xlu0 %4045
      %4047 = vrot.lane.b32.xlu0 %v3910, 126
      %v4048 = vpop.permute.xlu0 %4047
      %v4049 = vsel %vm336, %v4022, %v4024
      %v4050 = vsel %vm336, %v4024, %v4026
      %v4051 = vsel %vm336, %v4026, %v4028
      %v4052 = vsel %vm336, %v4028, %v4030
      %v4053 = vsel %vm336, %v4030, %v4032
      %v4054 = vsel %vm336, %v4032, %v4034
      %v4055 = vsel %vm336, %v4034, %v4036
      %v4056 = vsel %vm336, %v4036, %v4038
      %v4057 = vsel %vm336, %v4038, %v4040
      %v4058 = vsel %vm336, %v4040, %v4042
      %v4059 = vsel %vm336, %v4042, %v4044
      %v4060 = vsel %vm336, %v4044, %v4046
      %v4061 = vsel %vm336, %v4046, %v4048
      %4076 = vrot.lane.b32.xlu0 %v3897, 62
      %v4077 = vpop.permute.xlu0 %4076
      %v4079 = vsel %vm1508, %v4048, %v4077
      %v4082 = vlaneseq
      %v4083 = vshrl.u32 %v4082, 7
      %v4084 = vsub.s32 0, %v4083
      %v4085 = vrot.slane %v3914, %v4084
      %v4086 = vlaneseq
      %v4087 = vshrl.u32 %v4086, 7
      %v4088 = vsub.s32 1, %v4087
      %v4089 = vrot.slane %v3914, %v4088
      %v4090 = vlaneseq
      %v4091 = vshrl.u32 %v4090, 7
      %v4092 = vsub.s32 2, %v4091
      %v4093 = vrot.slane %v3914, %v4092
      %v4094 = vlaneseq
      %v4095 = vshrl.u32 %v4094, 7
      %v4096 = vsub.s32 3, %v4095
      %v4097 = vrot.slane %v3914, %v4096
      %v4098 = vlaneseq
      %v4099 = vshrl.u32 %v4098, 7
      %v4100 = vsub.s32 4, %v4099
      %v4101 = vrot.slane %v3914, %v4100
      %v4102 = vlaneseq
      %v4103 = vshrl.u32 %v4102, 7
      %v4104 = vsub.s32 5, %v4103
      %v4105 = vrot.slane %v3914, %v4104
      %v4106 = vlaneseq
      %v4107 = vshrl.u32 %v4106, 7
      %v4108 = vsub.s32 6, %v4107
      %v4109 = vrot.slane %v3914, %v4108
      %v4110 = vlaneseq
      %v4111 = vshrl.u32 %v4110, 7
      %v4112 = vsub.s32 7, %v4111
      %v4113 = vrot.slane %v3914, %v4112
      %v4114 = vlaneseq
      %v4115 = vshrl.u32 %v4114, 7
      %v4116 = vsub.s32 0, %v4115
      %v4117 = vrot.slane %v3918, %v4116
      %v4118 = vlaneseq
      %v4119 = vshrl.u32 %v4118, 7
      %v4120 = vsub.s32 1, %v4119
      %v4121 = vrot.slane %v3918, %v4120
      %v4122 = vlaneseq
      %v4123 = vshrl.u32 %v4122, 7
      %v4124 = vsub.s32 2, %v4123
      %v4125 = vrot.slane %v3918, %v4124
      %v4126 = vlaneseq
      %v4127 = vshrl.u32 %v4126, 7
      %v4128 = vsub.s32 3, %v4127
      %v4129 = vrot.slane %v3918, %v4128
      %v4130 = vlaneseq
      %v4131 = vshrl.u32 %v4130, 7
      %v4132 = vsub.s32 4, %v4131
      %v4133 = vrot.slane %v3918, %v4132
      %v4134 = vlaneseq
      %v4135 = vshrl.u32 %v4134, 7
      %v4136 = vsub.s32 5, %v4135
      %v4137 = vrot.slane %v3918, %v4136
      %v4152 = vmul.f32 %v4049, %v4085
      %v4153 = vmul.f32 %v4050, %v4089
      %v4154 = vmul.f32 %v4051, %v4093
      %v4155 = vmul.f32 %v4052, %v4097
      %v4156 = vmul.f32 %v4053, %v4101
      %v4157 = vmul.f32 %v4054, %v4105
      %v4158 = vmul.f32 %v4055, %v4109
      %v4159 = vmul.f32 %v4056, %v4113
      %v4160 = vmul.f32 %v4057, %v4117
      %v4161 = vmul.f32 %v4058, %v4121
      %v4162 = vmul.f32 %v4059, %v4125
      %v4163 = vmul.f32 %v4060, %v4129
      %v4164 = vmul.f32 %v4061, %v4133
      %v4165 = vmul.f32 %v4079, %v4137
      %v4166 = vadd.f32 %v3993, %v4152
      %v4167 = vadd.f32 %v3994, %v4153
      %v4168 = vadd.f32 %v3995, %v4154
      %v4169 = vadd.f32 %v3996, %v4155
      %v4170 = vadd.f32 %v3997, %v4156
      %v4171 = vadd.f32 %v3998, %v4157
      %v4172 = vadd.f32 %v3999, %v4158
      %v4173 = vadd.f32 %v4000, %v4159
      %v4174 = vadd.f32 %v4001, %v4160
      %v4175 = vadd.f32 %v4002, %v4161
      %v4176 = vadd.f32 %v4003, %v4162
      %v4177 = vadd.f32 %v4004, %v4163
      %v4178 = vadd.f32 %v4005, %v4164
      %v4179 = vadd.f32 %v4006, %v4165
      %s4180 = scalar_lea.vmem %s2, 5
      %v4181 = vld [vmem:[%s4180] ss:$8 sm:$0xf]
      %v4182 = vld [vmem:[%s4180] ss:$8 sm:$0xf0]
      %v4183 = vor.u32 %v4181, %v4182
      %s4184 = scalar_lea.vmem %s2, 69
      %v4185 = vld [vmem:[%s4184] ss:$8 sm:$0xf]
      %v4186 = vld [vmem:[%s4184] ss:$8 sm:$0x30]
      %v4187 = vor.u32 %v4185, %v4186
      %v4188 = vsub.f32 1.0, %v4183
      %v4189 = vsub.f32 1.0, %v4187
      %v4192 = vlaneseq
      %v4193 = vshrl.u32 %v4192, 7
      %v4194 = vsub.s32 0, %v4193
      %v4195 = vrot.slane %v4188, %v4194
      %v4196 = vlaneseq
      %v4197 = vshrl.u32 %v4196, 7
      %v4198 = vsub.s32 1, %v4197
      %v4199 = vrot.slane %v4188, %v4198
      %v4200 = vlaneseq
      %v4201 = vshrl.u32 %v4200, 7
      %v4202 = vsub.s32 2, %v4201
      %v4203 = vrot.slane %v4188, %v4202
      %v4204 = vlaneseq
      %v4205 = vshrl.u32 %v4204, 7
      %v4206 = vsub.s32 3, %v4205
      %v4207 = vrot.slane %v4188, %v4206
      %v4208 = vlaneseq
      %v4209 = vshrl.u32 %v4208, 7
      %v4210 = vsub.s32 4, %v4209
      %v4211 = vrot.slane %v4188, %v4210
      %v4212 = vlaneseq
      %v4213 = vshrl.u32 %v4212, 7
      %v4214 = vsub.s32 5, %v4213
      %v4215 = vrot.slane %v4188, %v4214
      %v4216 = vlaneseq
      %v4217 = vshrl.u32 %v4216, 7
      %v4218 = vsub.s32 6, %v4217
      %v4219 = vrot.slane %v4188, %v4218
      %v4220 = vlaneseq
      %v4221 = vshrl.u32 %v4220, 7
      %v4222 = vsub.s32 7, %v4221
      %v4223 = vrot.slane %v4188, %v4222
      %v4224 = vlaneseq
      %v4225 = vshrl.u32 %v4224, 7
      %v4226 = vsub.s32 0, %v4225
      %v4227 = vrot.slane %v4189, %v4226
      %v4228 = vlaneseq
      %v4229 = vshrl.u32 %v4228, 7
      %v4230 = vsub.s32 1, %v4229
      %v4231 = vrot.slane %v4189, %v4230
      %v4232 = vlaneseq
      %v4233 = vshrl.u32 %v4232, 7
      %v4234 = vsub.s32 2, %v4233
      %v4235 = vrot.slane %v4189, %v4234
      %v4236 = vlaneseq
      %v4237 = vshrl.u32 %v4236, 7
      %v4238 = vsub.s32 3, %v4237
      %v4239 = vrot.slane %v4189, %v4238
      %v4240 = vlaneseq
      %v4241 = vshrl.u32 %v4240, 7
      %v4242 = vsub.s32 4, %v4241
      %v4243 = vrot.slane %v4189, %v4242
      %v4244 = vlaneseq
      %v4245 = vshrl.u32 %v4244, 7
      %v4246 = vsub.s32 5, %v4245
      %v4247 = vrot.slane %v4189, %v4246
      %v4262 = vmul.f32 %v4166, %v4195
      %v4263 = vmul.f32 %v4167, %v4199
      %v4264 = vmul.f32 %v4168, %v4203
      %v4265 = vmul.f32 %v4169, %v4207
      %v4266 = vmul.f32 %v4170, %v4211
      %v4267 = vmul.f32 %v4171, %v4215
      %v4268 = vmul.f32 %v4172, %v4219
      %v4269 = vmul.f32 %v4173, %v4223
      %v4270 = vmul.f32 %v4174, %v4227
      %v4271 = vmul.f32 %v4175, %v4231
      %v4272 = vmul.f32 %v4176, %v4235
      %v4273 = vmul.f32 %v4177, %v4239
      %v4274 = vmul.f32 %v4178, %v4243
      %v4275 = vmul.f32 %v4179, %v4247
      %4277 = vrot.lane.b32.xlu0 %v4179, 66
      %v4278 = vpop.permute.xlu0 %4277
      %4293 = vrot.lane.b32.xlu0 %v4166, 2
      %v4294 = vpop.permute.xlu0 %4293
      %4295 = vrot.lane.b32.xlu0 %v4167, 2
      %v4296 = vpop.permute.xlu0 %4295
      %4297 = vrot.lane.b32.xlu0 %v4168, 2
      %v4298 = vpop.permute.xlu0 %4297
      %4299 = vrot.lane.b32.xlu0 %v4169, 2
      %v4300 = vpop.permute.xlu0 %4299
      %4301 = vrot.lane.b32.xlu0 %v4170, 2
      %v4302 = vpop.permute.xlu0 %4301
      %4303 = vrot.lane.b32.xlu0 %v4171, 2
      %v4304 = vpop.permute.xlu0 %4303
      %4305 = vrot.lane.b32.xlu0 %v4172, 2
      %v4306 = vpop.permute.xlu0 %4305
      %4307 = vrot.lane.b32.xlu0 %v4173, 2
      %v4308 = vpop.permute.xlu0 %4307
      %4309 = vrot.lane.b32.xlu0 %v4174, 2
      %v4310 = vpop.permute.xlu0 %4309
      %4311 = vrot.lane.b32.xlu0 %v4175, 2
      %v4312 = vpop.permute.xlu0 %4311
      %4313 = vrot.lane.b32.xlu0 %v4176, 2
      %v4314 = vpop.permute.xlu0 %4313
      %4315 = vrot.lane.b32.xlu0 %v4177, 2
      %v4316 = vpop.permute.xlu0 %4315
      %4317 = vrot.lane.b32.xlu0 %v4178, 2
      %v4318 = vpop.permute.xlu0 %4317
      %4319 = vrot.lane.b32.xlu0 %v4179, 2
      %v4320 = vpop.permute.xlu0 %4319
      %vm4321 = vcmask 15360
      %v4322 = vsel %vm4321, %v4294, %v4296
      %v4323 = vsel %vm4321, %v4296, %v4298
      %v4324 = vsel %vm4321, %v4298, %v4300
      %v4325 = vsel %vm4321, %v4300, %v4302
      %v4326 = vsel %vm4321, %v4302, %v4304
      %v4327 = vsel %vm4321, %v4304, %v4306
      %v4328 = vsel %vm4321, %v4306, %v4308
      %v4329 = vsel %vm4321, %v4308, %v4310
      %v4330 = vsel %vm4321, %v4310, %v4312
      %v4331 = vsel %vm4321, %v4312, %v4314
      %v4332 = vsel %vm4321, %v4314, %v4316
      %v4333 = vsel %vm4321, %v4316, %v4318
      %v4334 = vsel %vm4321, %v4318, %v4320
      %v4349 = vsel %vm4321, %v4278, %v4294
      %v4352 = vlaneseq
      %v4353 = vshrl.u32 %v4352, 7
      %v4354 = vsub.s32 0, %v4353
      %v4355 = vrot.slane %v4183, %v4354
      %v4356 = vlaneseq
      %v4357 = vshrl.u32 %v4356, 7
      %v4358 = vsub.s32 1, %v4357
      %v4359 = vrot.slane %v4183, %v4358
      %v4360 = vlaneseq
      %v4361 = vshrl.u32 %v4360, 7
      %v4362 = vsub.s32 2, %v4361
      %v4363 = vrot.slane %v4183, %v4362
      %v4364 = vlaneseq
      %v4365 = vshrl.u32 %v4364, 7
      %v4366 = vsub.s32 3, %v4365
      %v4367 = vrot.slane %v4183, %v4366
      %v4368 = vlaneseq
      %v4369 = vshrl.u32 %v4368, 7
      %v4370 = vsub.s32 4, %v4369
      %v4371 = vrot.slane %v4183, %v4370
      %v4372 = vlaneseq
      %v4373 = vshrl.u32 %v4372, 7
      %v4374 = vsub.s32 5, %v4373
      %v4375 = vrot.slane %v4183, %v4374
      %v4376 = vlaneseq
      %v4377 = vshrl.u32 %v4376, 7
      %v4378 = vsub.s32 6, %v4377
      %v4379 = vrot.slane %v4183, %v4378
      %v4380 = vlaneseq
      %v4381 = vshrl.u32 %v4380, 7
      %v4382 = vsub.s32 7, %v4381
      %v4383 = vrot.slane %v4183, %v4382
      %v4384 = vlaneseq
      %v4385 = vshrl.u32 %v4384, 7
      %v4386 = vsub.s32 0, %v4385
      %v4387 = vrot.slane %v4187, %v4386
      %v4388 = vlaneseq
      %v4389 = vshrl.u32 %v4388, 7
      %v4390 = vsub.s32 1, %v4389
      %v4391 = vrot.slane %v4187, %v4390
      %v4392 = vlaneseq
      %v4393 = vshrl.u32 %v4392, 7
      %v4394 = vsub.s32 2, %v4393
      %v4395 = vrot.slane %v4187, %v4394
      %v4396 = vlaneseq
      %v4397 = vshrl.u32 %v4396, 7
      %v4398 = vsub.s32 3, %v4397
      %v4399 = vrot.slane %v4187, %v4398
      %v4400 = vlaneseq
      %v4401 = vshrl.u32 %v4400, 7
      %v4402 = vsub.s32 4, %v4401
      %v4403 = vrot.slane %v4187, %v4402
      %v4404 = vlaneseq
      %v4405 = vshrl.u32 %v4404, 7
      %v4406 = vsub.s32 5, %v4405
      %v4407 = vrot.slane %v4187, %v4406
      %v4422 = vmul.f32 %v4349, %v4355
      %v4423 = vmul.f32 %v4322, %v4359
      %v4424 = vmul.f32 %v4323, %v4363
      %v4425 = vmul.f32 %v4324, %v4367
      %v4426 = vmul.f32 %v4325, %v4371
      %v4427 = vmul.f32 %v4326, %v4375
      %v4428 = vmul.f32 %v4327, %v4379
      %v4429 = vmul.f32 %v4328, %v4383
      %v4430 = vmul.f32 %v4329, %v4387
      %v4431 = vmul.f32 %v4330, %v4391
      %v4432 = vmul.f32 %v4331, %v4395
      %v4433 = vmul.f32 %v4332, %v4399
      %v4434 = vmul.f32 %v4333, %v4403
      %v4435 = vmul.f32 %v4334, %v4407
      %v4436 = vadd.f32 %v4262, %v4422
      %v4437 = vadd.f32 %v4263, %v4423
      %v4438 = vadd.f32 %v4264, %v4424
      %v4439 = vadd.f32 %v4265, %v4425
      %v4440 = vadd.f32 %v4266, %v4426
      %v4441 = vadd.f32 %v4267, %v4427
      %v4442 = vadd.f32 %v4268, %v4428
      %v4443 = vadd.f32 %v4269, %v4429
      %v4444 = vadd.f32 %v4270, %v4430
      %v4445 = vadd.f32 %v4271, %v4431
      %v4446 = vadd.f32 %v4272, %v4432
      %v4447 = vadd.f32 %v4273, %v4433
      %v4448 = vadd.f32 %v4274, %v4434
      %v4449 = vadd.f32 %v4275, %v4435
      %4450 = vst [vmem:[#allocation3] sm:$0xff] %v4436
      %4451 = vst [vmem:[#allocation3 + $0x8] sm:$0xff] %v4437
      %4452 = vst [vmem:[#allocation3 + $0x10] sm:$0xff] %v4438
      %4453 = vst [vmem:[#allocation3 + $0x18] sm:$0xff] %v4439
      %4454 = vst [vmem:[#allocation3 + $0x20] sm:$0xff] %v4440
      %4455 = vst [vmem:[#allocation3 + $0x28] sm:$0xff] %v4441
      %4456 = vst [vmem:[#allocation3 + $0x30] sm:$0xff] %v4442
      %4457 = vst [vmem:[#allocation3 + $0x38] sm:$0xff] %v4443
      %4458 = vst [vmem:[#allocation3 + $0x40] sm:$0xff] %v4444
      %4459 = vst [vmem:[#allocation3 + $0x48] sm:$0xff] %v4445
      %4460 = vst [vmem:[#allocation3 + $0x50] sm:$0xff] %v4446
      %4461 = vst [vmem:[#allocation3 + $0x58] sm:$0xff] %v4447
      %4462 = vst [vmem:[#allocation3 + $0x60] sm:$0xff] %v4448
      %4463 = vst.msk [vmem:[#allocation3 + $0x68] sm:$0xff] %vm1440, %v4449
      %v4464 = vld [vmem:[#allocation3 + $0x8] sm:$0xff]
      %v4465 = vld [vmem:[#allocation3 + $0x10] sm:$0xff]
      %v4466 = vld [vmem:[#allocation3 + $0x18] sm:$0xff]
      %v4467 = vld [vmem:[#allocation3 + $0x20] sm:$0xff]
      %v4468 = vld [vmem:[#allocation3 + $0x28] sm:$0xff]
      %v4469 = vld [vmem:[#allocation3 + $0x30] sm:$0xff]
      %v4470 = vld [vmem:[#allocation3 + $0x38] sm:$0xff]
      %v4471 = vld [vmem:[#allocation3 + $0x40] sm:$0xff]
      %v4472 = vld [vmem:[#allocation3 + $0x48] sm:$0xff]
      %4482 = vrot.lane.b32.xlu0 %v4464, 99
      %v4483 = vpop.permute.xlu0 %4482
      %4484 = vrot.lane.b32.xlu0 %v4465, 99
      %v4485 = vpop.permute.xlu0 %4484
      %4486 = vrot.lane.b32.xlu0 %v4466, 99
      %v4487 = vpop.permute.xlu0 %4486
      %4488 = vrot.lane.b32.xlu0 %v4467, 99
      %v4489 = vpop.permute.xlu0 %4488
      %4490 = vrot.lane.b32.xlu0 %v4468, 99
      %v4491 = vpop.permute.xlu0 %4490
      %4492 = vrot.lane.b32.xlu0 %v4469, 99
      %v4493 = vpop.permute.xlu0 %4492
      %4494 = vrot.lane.b32.xlu0 %v4470, 99
      %v4495 = vpop.permute.xlu0 %4494
      %4496 = vrot.lane.b32.xlu0 %v4471, 99
      %v4497 = vpop.permute.xlu0 %4496
      %4498 = vrot.lane.b32.xlu0 %v4472, 99
      %v4499 = vpop.permute.xlu0 %4498
      %vm4500 = vcmask 809984
      %v4501 = vsel %vm4500, %v4483, %v4485
      %v4502 = vsel %vm4500, %v4485, %v4487
      %v4503 = vsel %vm4500, %v4487, %v4489
      %v4504 = vsel %vm4500, %v4489, %v4491
      %v4505 = vsel %vm4500, %v4491, %v4493
      %v4506 = vsel %vm4500, %v4493, %v4495
      %v4507 = vsel %vm4500, %v4495, %v4497
      %v4508 = vsel %vm4500, %v4497, %v4499
      %4518 = vst [vmem:[#allocation2] sm:$0xff] %v4501
      %4519 = vst [vmem:[#allocation2 + $0x8] sm:$0xff] %v4502
      %4520 = vst [vmem:[#allocation2 + $0x10] sm:$0xff] %v4503
      %4521 = vst [vmem:[#allocation2 + $0x18] sm:$0xff] %v4504
      %4522 = vst [vmem:[#allocation2 + $0x20] sm:$0xff] %v4505
      %4523 = vst [vmem:[#allocation2 + $0x28] sm:$0xff] %v4506
      %4524 = vst [vmem:[#allocation2 + $0x30] sm:$0xff] %v4507
      %4525 = vst [vmem:[#allocation2 + $0x38] sm:$0xff] %v4508
      %4526 = vst.msk [vmem:[#allocation2 + $0x40] sm:$0xff] %vm298, %v4499
      %v4527 = vld [vmem:[#allocation3 + $0x8] sm:$0xff]
      %v4528 = vld [vmem:[#allocation3 + $0x10] sm:$0xff]
      %v4529 = vld [vmem:[#allocation3 + $0x18] sm:$0xff]
      %v4530 = vld [vmem:[#allocation3 + $0x20] sm:$0xff]
      %v4531 = vld [vmem:[#allocation3 + $0x28] sm:$0xff]
      %v4532 = vld [vmem:[#allocation3 + $0x30] sm:$0xff]
      %v4533 = vld [vmem:[#allocation3 + $0x38] sm:$0xff]
      %v4534 = vld [vmem:[#allocation3 + $0x40] sm:$0xff]
      %v4535 = vld [vmem:[#allocation3 + $0x48] sm:$0xff]
      %4545 = vrot.lane.b32.xlu0 %v4527, 98
      %v4546 = vpop.permute.xlu0 %4545
      %4547 = vrot.lane.b32.xlu0 %v4528, 98
      %v4548 = vpop.permute.xlu0 %4547
      %4549 = vrot.lane.b32.xlu0 %v4529, 98
      %v4550 = vpop.permute.xlu0 %4549
      %4551 = vrot.lane.b32.xlu0 %v4530, 98
      %v4552 = vpop.permute.xlu0 %4551
      %4553 = vrot.lane.b32.xlu0 %v4531, 98
      %v4554 = vpop.permute.xlu0 %4553
      %4555 = vrot.lane.b32.xlu0 %v4532, 98
      %v4556 = vpop.permute.xlu0 %4555
      %4557 = vrot.lane.b32.xlu0 %v4533, 98
      %v4558 = vpop.permute.xlu0 %4557
      %4559 = vrot.lane.b32.xlu0 %v4534, 98
      %v4560 = vpop.permute.xlu0 %4559
      %4561 = vrot.lane.b32.xlu0 %v4535, 98
      %v4562 = vpop.permute.xlu0 %4561
      %vm4563 = vcmask 801792
      %v4564 = vsel %vm4563, %v4546, %v4548
      %v4565 = vsel %vm4563, %v4548, %v4550
      %v4566 = vsel %vm4563, %v4550, %v4552
      %v4567 = vsel %vm4563, %v4552, %v4554
      %v4568 = vsel %vm4563, %v4554, %v4556
      %v4569 = vsel %vm4563, %v4556, %v4558
      %v4570 = vsel %vm4563, %v4558, %v4560
      %v4571 = vsel %vm4563, %v4560, %v4562
      %4581 = vst [vmem:[#allocation2 + $0x48] sm:$0xff] %v4564
      %4582 = vst [vmem:[#allocation2 + $0x50] sm:$0xff] %v4565
      %4583 = vst [vmem:[#allocation2 + $0x58] sm:$0xff] %v4566
      %4584 = vst [vmem:[#allocation2 + $0x60] sm:$0xff] %v4567
      %4585 = vst [vmem:[#allocation2 + $0x68] sm:$0xff] %v4568
      %4586 = vst [vmem:[#allocation2 + $0x70] sm:$0xff] %v4569
      %4587 = vst [vmem:[#allocation2 + $0x78] sm:$0xff] %v4570
      %4588 = vst [vmem:[#allocation2 + $0x80] sm:$0xff] %v4571
      %4589 = vst.msk [vmem:[#allocation2 + $0x88] sm:$0xff] %vm298, %v4562
      %v4590 = vld [vmem:[#allocation3 + $0x8] sm:$0xff]
      %v4591 = vld [vmem:[#allocation3 + $0x10] sm:$0xff]
      %v4592 = vld [vmem:[#allocation3 + $0x18] sm:$0xff]
      %v4593 = vld [vmem:[#allocation3 + $0x20] sm:$0xff]
      %v4594 = vld [vmem:[#allocation3 + $0x28] sm:$0xff]
      %v4595 = vld [vmem:[#allocation3 + $0x30] sm:$0xff]
      %v4596 = vld [vmem:[#allocation3 + $0x38] sm:$0xff]
      %v4597 = vld [vmem:[#allocation3 + $0x40] sm:$0xff]
      %v4598 = vld [vmem:[#allocation3 + $0x48] sm:$0xff]
      %4608 = vrot.lane.b32.xlu0 %v4590, 97
      %v4609 = vpop.permute.xlu0 %4608
      %4610 = vrot.lane.b32.xlu0 %v4591, 97
      %v4611 = vpop.permute.xlu0 %4610
      %4612 = vrot.lane.b32.xlu0 %v4592, 97
      %v4613 = vpop.permute.xlu0 %4612
      %4614 = vrot.lane.b32.xlu0 %v4593, 97
      %v4615 = vpop.permute.xlu0 %4614
      %4616 = vrot.lane.b32.xlu0 %v4594, 97
      %v4617 = vpop.permute.xlu0 %4616
      %4618 = vrot.lane.b32.xlu0 %v4595, 97
      %v4619 = vpop.permute.xlu0 %4618
      %4620 = vrot.lane.b32.xlu0 %v4596, 97
      %v4621 = vpop.permute.xlu0 %4620
      %4622 = vrot.lane.b32.xlu0 %v4597, 97
      %v4623 = vpop.permute.xlu0 %4622
      %4624 = vrot.lane.b32.xlu0 %v4598, 97
      %v4625 = vpop.permute.xlu0 %4624
      %vm4626 = vcmask 793600
      %v4627 = vsel %vm4626, %v4609, %v4611
      %v4628 = vsel %vm4626, %v4611, %v4613
      %v4629 = vsel %vm4626, %v4613, %v4615
      %v4630 = vsel %vm4626, %v4615, %v4617
      %v4631 = vsel %vm4626, %v4617, %v4619
      %v4632 = vsel %vm4626, %v4619, %v4621
      %v4633 = vsel %vm4626, %v4621, %v4623
      %v4634 = vsel %vm4626, %v4623, %v4625
      %4644 = vst [vmem:[#allocation2 + $0x90] sm:$0xff] %v4627
      %4645 = vst [vmem:[#allocation2 + $0x98] sm:$0xff] %v4628
      %4646 = vst [vmem:[#allocation2 + $0xa0] sm:$0xff] %v4629
      %4647 = vst [vmem:[#allocation2 + $0xa8] sm:$0xff] %v4630
      %4648 = vst [vmem:[#allocation2 + $0xb0] sm:$0xff] %v4631
      %4649 = vst [vmem:[#allocation2 + $0xb8] sm:$0xff] %v4632
      %4650 = vst [vmem:[#allocation2 + $0xc0] sm:$0xff] %v4633
      %4651 = vst [vmem:[#allocation2 + $0xc8] sm:$0xff] %v4634
      %4652 = vst.msk [vmem:[#allocation2 + $0xd0] sm:$0xff] %vm298, %v4625
      %v4653 = vld [vmem:[#allocation3 + $0x8] sm:$0xff]
      %v4654 = vld [vmem:[#allocation3 + $0x10] sm:$0xff]
      %v4655 = vld [vmem:[#allocation3 + $0x18] sm:$0xff]
      %v4656 = vld [vmem:[#allocation3 + $0x20] sm:$0xff]
      %v4657 = vld [vmem:[#allocation3 + $0x28] sm:$0xff]
      %v4658 = vld [vmem:[#allocation3 + $0x30] sm:$0xff]
      %v4659 = vld [vmem:[#allocation3 + $0x38] sm:$0xff]
      %v4660 = vld [vmem:[#allocation3 + $0x40] sm:$0xff]
      %v4661 = vld [vmem:[#allocation3 + $0x48] sm:$0xff]
      %4671 = vrot.lane.b32.xlu0 %v4653, 87
      %v4672 = vpop.permute.xlu0 %4671
      %4673 = vrot.lane.b32.xlu0 %v4654, 87
      %v4674 = vpop.permute.xlu0 %4673
      %4675 = vrot.lane.b32.xlu0 %v4655, 87
      %v4676 = vpop.permute.xlu0 %4675
      %4677 = vrot.lane.b32.xlu0 %v4656, 87
      %v4678 = vpop.permute.xlu0 %4677
      %4679 = vrot.lane.b32.xlu0 %v4657, 87
      %v4680 = vpop.permute.xlu0 %4679
      %4681 = vrot.lane.b32.xlu0 %v4658, 87
      %v4682 = vpop.permute.xlu0 %4681
      %4683 = vrot.lane.b32.xlu0 %v4659, 87
      %v4684 = vpop.permute.xlu0 %4683
      %4685 = vrot.lane.b32.xlu0 %v4660, 87
      %v4686 = vpop.permute.xlu0 %4685
      %4687 = vrot.lane.b32.xlu0 %v4661, 87
      %v4688 = vpop.permute.xlu0 %4687
      %vm4689 = vcmask 711680
      %v4690 = vsel %vm4689, %v4672, %v4674
      %v4691 = vsel %vm4689, %v4674, %v4676
      %v4692 = vsel %vm4689, %v4676, %v4678
      %v4693 = vsel %vm4689, %v4678, %v4680
      %v4694 = vsel %vm4689, %v4680, %v4682
      %v4695 = vsel %vm4689, %v4682, %v4684
      %v4696 = vsel %vm4689, %v4684, %v4686
      %v4697 = vsel %vm4689, %v4686, %v4688
      %4707 = vst [vmem:[#allocation2 + $0xd8] sm:$0xff] %v4690
      %4708 = vst [vmem:[#allocation2 + $0xe0] sm:$0xff] %v4691
      %4709 = vst [vmem:[#allocation2 + $0xe8] sm:$0xff] %v4692
      %4710 = vst [vmem:[#allocation2 + $0xf0] sm:$0xff] %v4693
      %4711 = vst [vmem:[#allocation2 + $0xf8] sm:$0xff] %v4694
      %4712 = vst [vmem:[#allocation2 + $0x100] sm:$0xff] %v4695
      %4713 = vst [vmem:[#allocation2 + $0x108] sm:$0xff] %v4696
      %4714 = vst [vmem:[#allocation2 + $0x110] sm:$0xff] %v4697
      %4715 = vst.msk [vmem:[#allocation2 + $0x118] sm:$0xff] %vm298, %v4688
      %v4716 = vld [vmem:[#allocation3 + $0x8] sm:$0xff]
      %v4717 = vld [vmem:[#allocation3 + $0x10] sm:$0xff]
      %v4718 = vld [vmem:[#allocation3 + $0x18] sm:$0xff]
      %v4719 = vld [vmem:[#allocation3 + $0x20] sm:$0xff]
      %v4720 = vld [vmem:[#allocation3 + $0x28] sm:$0xff]
      %v4721 = vld [vmem:[#allocation3 + $0x30] sm:$0xff]
      %v4722 = vld [vmem:[#allocation3 + $0x38] sm:$0xff]
      %v4723 = vld [vmem:[#allocation3 + $0x40] sm:$0xff]
      %v4724 = vld [vmem:[#allocation3 + $0x48] sm:$0xff]
      %4734 = vrot.lane.b32.xlu0 %v4716, 86
      %v4735 = vpop.permute.xlu0 %4734
      %4736 = vrot.lane.b32.xlu0 %v4717, 86
      %v4737 = vpop.permute.xlu0 %4736
      %4738 = vrot.lane.b32.xlu0 %v4718, 86
      %v4739 = vpop.permute.xlu0 %4738
      %4740 = vrot.lane.b32.xlu0 %v4719, 86
      %v4741 = vpop.permute.xlu0 %4740
      %4742 = vrot.lane.b32.xlu0 %v4720, 86
      %v4743 = vpop.permute.xlu0 %4742
      %4744 = vrot.lane.b32.xlu0 %v4721, 86
      %v4745 = vpop.permute.xlu0 %4744
      %4746 = vrot.lane.b32.xlu0 %v4722, 86
      %v4747 = vpop.permute.xlu0 %4746
      %4748 = vrot.lane.b32.xlu0 %v4723, 86
      %v4749 = vpop.permute.xlu0 %4748
      %4750 = vrot.lane.b32.xlu0 %v4724, 86
      %v4751 = vpop.permute.xlu0 %4750
      %vm4752 = vcmask 703488
      %v4753 = vsel %vm4752, %v4735, %v4737
      %v4754 = vsel %vm4752, %v4737, %v4739
      %v4755 = vsel %vm4752, %v4739, %v4741
      %v4756 = vsel %vm4752, %v4741, %v4743
      %v4757 = vsel %vm4752, %v4743, %v4745
      %v4758 = vsel %vm4752, %v4745, %v4747
      %v4759 = vsel %vm4752, %v4747, %v4749
      %v4760 = vsel %vm4752, %v4749, %v4751
      %4770 = vst [vmem:[#allocation2 + $0x120] sm:$0xff] %v4753
      %4771 = vst [vmem:[#allocation2 + $0x128] sm:$0xff] %v4754
      %4772 = vst [vmem:[#allocation2 + $0x130] sm:$0xff] %v4755
      %4773 = vst [vmem:[#allocation2 + $0x138] sm:$0xff] %v4756
      %4774 = vst [vmem:[#allocation2 + $0x140] sm:$0xff] %v4757
      %4775 = vst [vmem:[#allocation2 + $0x148] sm:$0xff] %v4758
      %4776 = vst [vmem:[#allocation2 + $0x150] sm:$0xff] %v4759
      %4777 = vst [vmem:[#allocation2 + $0x158] sm:$0xff] %v4760
      %4778 = vst.msk [vmem:[#allocation2 + $0x160] sm:$0xff] %vm298, %v4751
      %v4779 = vld [vmem:[#allocation3 + $0x8] sm:$0xff]
      %v4780 = vld [vmem:[#allocation3 + $0x10] sm:$0xff]
      %v4781 = vld [vmem:[#allocation3 + $0x18] sm:$0xff]
      %v4782 = vld [vmem:[#allocation3 + $0x20] sm:$0xff]
      %v4783 = vld [vmem:[#allocation3 + $0x28] sm:$0xff]
      %v4784 = vld [vmem:[#allocation3 + $0x30] sm:$0xff]
      %v4785 = vld [vmem:[#allocation3 + $0x38] sm:$0xff]
      %v4786 = vld [vmem:[#allocation3 + $0x40] sm:$0xff]
      %v4787 = vld [vmem:[#allocation3 + $0x48] sm:$0xff]
      %4797 = vrot.lane.b32.xlu0 %v4779, 85
      %v4798 = vpop.permute.xlu0 %4797
      %4799 = vrot.lane.b32.xlu0 %v4780, 85
      %v4800 = vpop.permute.xlu0 %4799
      %4801 = vrot.lane.b32.xlu0 %v4781, 85
      %v4802 = vpop.permute.xlu0 %4801
      %4803 = vrot.lane.b32.xlu0 %v4782, 85
      %v4804 = vpop.permute.xlu0 %4803
      %4805 = vrot.lane.b32.xlu0 %v4783, 85
      %v4806 = vpop.permute.xlu0 %4805
      %4807 = vrot.lane.b32.xlu0 %v4784, 85
      %v4808 = vpop.permute.xlu0 %4807
      %4809 = vrot.lane.b32.xlu0 %v4785, 85
      %v4810 = vpop.permute.xlu0 %4809
      %4811 = vrot.lane.b32.xlu0 %v4786, 85
      %v4812 = vpop.permute.xlu0 %4811
      %4813 = vrot.lane.b32.xlu0 %v4787, 85
      %v4814 = vpop.permute.xlu0 %4813
      %vm4815 = vcmask 695296
      %v4816 = vsel %vm4815, %v4798, %v4800
      %v4817 = vsel %vm4815, %v4800, %v4802
      %v4818 = vsel %vm4815, %v4802, %v4804
      %v4819 = vsel %vm4815, %v4804, %v4806
      %v4820 = vsel %vm4815, %v4806, %v4808
      %v4821 = vsel %vm4815, %v4808, %v4810
      %v4822 = vsel %vm4815, %v4810, %v4812
      %v4823 = vsel %vm4815, %v4812, %v4814
      %4833 = vst [vmem:[#allocation2 + $0x168] sm:$0xff] %v4816
      %4834 = vst [vmem:[#allocation2 + $0x170] sm:$0xff] %v4817
      %4835 = vst [vmem:[#allocation2 + $0x178] sm:$0xff] %v4818
      %4836 = vst [vmem:[#allocation2 + $0x180] sm:$0xff] %v4819
      %4837 = vst [vmem:[#allocation2 + $0x188] sm:$0xff] %v4820
      %4838 = vst [vmem:[#allocation2 + $0x190] sm:$0xff] %v4821
      %4839 = vst [vmem:[#allocation2 + $0x198] sm:$0xff] %v4822
      %4840 = vst [vmem:[#allocation2 + $0x1a0] sm:$0xff] %v4823
      %4841 = vst.msk [vmem:[#allocation2 + $0x1a8] sm:$0xff] %vm298, %v4814
      %v4842 = vld [vmem:[#allocation3 + $0x8] sm:$0xff]
      %v4843 = vld [vmem:[#allocation3 + $0x10] sm:$0xff]
      %v4844 = vld [vmem:[#allocation3 + $0x18] sm:$0xff]
      %v4845 = vld [vmem:[#allocation3 + $0x20] sm:$0xff]
      %v4846 = vld [vmem:[#allocation3 + $0x28] sm:$0xff]
      %v4847 = vld [vmem:[#allocation3 + $0x30] sm:$0xff]
      %v4848 = vld [vmem:[#allocation3 + $0x38] sm:$0xff]
      %v4849 = vld [vmem:[#allocation3 + $0x40] sm:$0xff]
      %v4850 = vld [vmem:[#allocation3 + $0x48] sm:$0xff]
      %v4851 = vld [vmem:[#allocation3 + $0x50] sm:$0xff]
      %4862 = vrot.lane.b32.xlu0 %v4842, 75
      %v4863 = vpop.permute.xlu0 %4862
      %4864 = vrot.lane.b32.xlu0 %v4843, 75
      %v4865 = vpop.permute.xlu0 %4864
      %4866 = vrot.lane.b32.xlu0 %v4844, 75
      %v4867 = vpop.permute.xlu0 %4866
      %4868 = vrot.lane.b32.xlu0 %v4845, 75
      %v4869 = vpop.permute.xlu0 %4868
      %4870 = vrot.lane.b32.xlu0 %v4846, 75
      %v4871 = vpop.permute.xlu0 %4870
      %4872 = vrot.lane.b32.xlu0 %v4847, 75
      %v4873 = vpop.permute.xlu0 %4872
      %4874 = vrot.lane.b32.xlu0 %v4848, 75
      %v4875 = vpop.permute.xlu0 %4874
      %4876 = vrot.lane.b32.xlu0 %v4849, 75
      %v4877 = vpop.permute.xlu0 %4876
      %4878 = vrot.lane.b32.xlu0 %v4850, 75
      %v4879 = vpop.permute.xlu0 %4878
      %4880 = vrot.lane.b32.xlu0 %v4851, 75
      %v4881 = vpop.permute.xlu0 %4880
      %vm4882 = vcmask 613376
      %v4883 = vsel %vm4882, %v4863, %v4865
      %v4884 = vsel %vm4882, %v4865, %v4867
      %v4885 = vsel %vm4882, %v4867, %v4869
      %v4886 = vsel %vm4882, %v4869, %v4871
      %v4887 = vsel %vm4882, %v4871, %v4873
      %v4888 = vsel %vm4882, %v4873, %v4875
      %v4889 = vsel %vm4882, %v4875, %v4877
      %v4890 = vsel %vm4882, %v4877, %v4879
      %v4891 = vsel %vm4882, %v4879, %v4881
      %4901 = vst [vmem:[#allocation2 + $0x1b0] sm:$0xff] %v4883
      %4902 = vst [vmem:[#allocation2 + $0x1b8] sm:$0xff] %v4884
      %4903 = vst [vmem:[#allocation2 + $0x1c0] sm:$0xff] %v4885
      %4904 = vst [vmem:[#allocation2 + $0x1c8] sm:$0xff] %v4886
      %4905 = vst [vmem:[#allocation2 + $0x1d0] sm:$0xff] %v4887
      %4906 = vst [vmem:[#allocation2 + $0x1d8] sm:$0xff] %v4888
      %4907 = vst [vmem:[#allocation2 + $0x1e0] sm:$0xff] %v4889
      %4908 = vst [vmem:[#allocation2 + $0x1e8] sm:$0xff] %v4890
      %4909 = vst.msk [vmem:[#allocation2 + $0x1f0] sm:$0xff] %vm298, %v4891
      %v4910 = vld [vmem:[#allocation3 + $0x8] sm:$0xff]
      %v4911 = vld [vmem:[#allocation3 + $0x10] sm:$0xff]
      %v4912 = vld [vmem:[#allocation3 + $0x18] sm:$0xff]
      %v4913 = vld [vmem:[#allocation3 + $0x20] sm:$0xff]
      %v4914 = vld [vmem:[#allocation3 + $0x28] sm:$0xff]
      %v4915 = vld [vmem:[#allocation3 + $0x30] sm:$0xff]
      %v4916 = vld [vmem:[#allocation3 + $0x38] sm:$0xff]
      %v4917 = vld [vmem:[#allocation3 + $0x40] sm:$0xff]
      %v4918 = vld [vmem:[#allocation3 + $0x48] sm:$0xff]
      %v4919 = vld [vmem:[#allocation3 + $0x50] sm:$0xff]
      %4930 = vrot.lane.b32.xlu0 %v4910, 74
      %v4931 = vpop.permute.xlu0 %4930
      %4932 = vrot.lane.b32.xlu0 %v4911, 74
      %v4933 = vpop.permute.xlu0 %4932
      %4934 = vrot.lane.b32.xlu0 %v4912, 74
      %v4935 = vpop.permute.xlu0 %4934
      %4936 = vrot.lane.b32.xlu0 %v4913, 74
      %v4937 = vpop.permute.xlu0 %4936
      %4938 = vrot.lane.b32.xlu0 %v4914, 74
      %v4939 = vpop.permute.xlu0 %4938
      %4940 = vrot.lane.b32.xlu0 %v4915, 74
      %v4941 = vpop.permute.xlu0 %4940
      %4942 = vrot.lane.b32.xlu0 %v4916, 74
      %v4943 = vpop.permute.xlu0 %4942
      %4944 = vrot.lane.b32.xlu0 %v4917, 74
      %v4945 = vpop.permute.xlu0 %4944
      %4946 = vrot.lane.b32.xlu0 %v4918, 74
      %v4947 = vpop.permute.xlu0 %4946
      %4948 = vrot.lane.b32.xlu0 %v4919, 74
      %v4949 = vpop.permute.xlu0 %4948
      %vm4950 = vcmask 605184
      %v4951 = vsel %vm4950, %v4931, %v4933
      %v4952 = vsel %vm4950, %v4933, %v4935
      %v4953 = vsel %vm4950, %v4935, %v4937
      %v4954 = vsel %vm4950, %v4937, %v4939
      %v4955 = vsel %vm4950, %v4939, %v4941
      %v4956 = vsel %vm4950, %v4941, %v4943
      %v4957 = vsel %vm4950, %v4943, %v4945
      %v4958 = vsel %vm4950, %v4945, %v4947
      %v4959 = vsel %vm4950, %v4947, %v4949
      %4969 = vst [vmem:[#allocation2 + $0x1f8] sm:$0xff] %v4951
      %4970 = vst [vmem:[#allocation2 + $0x200] sm:$0xff] %v4952
      %4971 = vst [vmem:[#allocation2 + $0x208] sm:$0xff] %v4953
      %4972 = vst [vmem:[#allocation2 + $0x210] sm:$0xff] %v4954
      %4973 = vst [vmem:[#allocation2 + $0x218] sm:$0xff] %v4955
      %4974 = vst [vmem:[#allocation2 + $0x220] sm:$0xff] %v4956
      %4975 = vst [vmem:[#allocation2 + $0x228] sm:$0xff] %v4957
      %4976 = vst [vmem:[#allocation2 + $0x230] sm:$0xff] %v4958
      %4977 = vst.msk [vmem:[#allocation2 + $0x238] sm:$0xff] %vm298, %v4959
      %v4978 = vld [vmem:[#allocation3 + $0x8] sm:$0xff]
      %v4979 = vld [vmem:[#allocation3 + $0x10] sm:$0xff]
      %v4980 = vld [vmem:[#allocation3 + $0x18] sm:$0xff]
      %v4981 = vld [vmem:[#allocation3 + $0x20] sm:$0xff]
      %v4982 = vld [vmem:[#allocation3 + $0x28] sm:$0xff]
      %v4983 = vld [vmem:[#allocation3 + $0x30] sm:$0xff]
      %v4984 = vld [vmem:[#allocation3 + $0x38] sm:$0xff]
      %v4985 = vld [vmem:[#allocation3 + $0x40] sm:$0xff]
      %v4986 = vld [vmem:[#allocation3 + $0x48] sm:$0xff]
      %v4987 = vld [vmem:[#allocation3 + $0x50] sm:$0xff]
      %4998 = vrot.lane.b32.xlu0 %v4978, 73
      %v4999 = vpop.permute.xlu0 %4998
      %5000 = vrot.lane.b32.xlu0 %v4979, 73
      %v5001 = vpop.permute.xlu0 %5000
      %5002 = vrot.lane.b32.xlu0 %v4980, 73
      %v5003 = vpop.permute.xlu0 %5002
      %5004 = vrot.lane.b32.xlu0 %v4981, 73
      %v5005 = vpop.permute.xlu0 %5004
      %5006 = vrot.lane.b32.xlu0 %v4982, 73
      %v5007 = vpop.permute.xlu0 %5006
      %5008 = vrot.lane.b32.xlu0 %v4983, 73
      %v5009 = vpop.permute.xlu0 %5008
      %5010 = vrot.lane.b32.xlu0 %v4984, 73
      %v5011 = vpop.permute.xlu0 %5010
      %5012 = vrot.lane.b32.xlu0 %v4985, 73
      %v5013 = vpop.permute.xlu0 %5012
      %5014 = vrot.lane.b32.xlu0 %v4986, 73
      %v5015 = vpop.permute.xlu0 %5014
      %5016 = vrot.lane.b32.xlu0 %v4987, 73
      %v5017 = vpop.permute.xlu0 %5016
      %vm5018 = vcmask 596992
      %v5019 = vsel %vm5018, %v4999, %v5001
      %v5020 = vsel %vm5018, %v5001, %v5003
      %v5021 = vsel %vm5018, %v5003, %v5005
      %v5022 = vsel %vm5018, %v5005, %v5007
      %v5023 = vsel %vm5018, %v5007, %v5009
      %v5024 = vsel %vm5018, %v5009, %v5011
      %v5025 = vsel %vm5018, %v5011, %v5013
      %v5026 = vsel %vm5018, %v5013, %v5015
      %v5027 = vsel %vm5018, %v5015, %v5017
      %5037 = vst [vmem:[#allocation2 + $0x240] sm:$0xff] %v5019
      %5038 = vst [vmem:[#allocation2 + $0x248] sm:$0xff] %v5020
      %5039 = vst [vmem:[#allocation2 + $0x250] sm:$0xff] %v5021
      %5040 = vst [vmem:[#allocation2 + $0x258] sm:$0xff] %v5022
      %5041 = vst [vmem:[#allocation2 + $0x260] sm:$0xff] %v5023
      %5042 = vst [vmem:[#allocation2 + $0x268] sm:$0xff] %v5024
      %5043 = vst [vmem:[#allocation2 + $0x270] sm:$0xff] %v5025
      %5044 = vst [vmem:[#allocation2 + $0x278] sm:$0xff] %v5026
      %5045 = vst.msk [vmem:[#allocation2 + $0x280] sm:$0xff] %vm298, %v5027
      %v5046 = vld [vmem:[#allocation3 + $0x10] sm:$0xff]
      %v5047 = vld [vmem:[#allocation3 + $0x18] sm:$0xff]
      %v5048 = vld [vmem:[#allocation3 + $0x20] sm:$0xff]
      %v5049 = vld [vmem:[#allocation3 + $0x28] sm:$0xff]
      %v5050 = vld [vmem:[#allocation3 + $0x30] sm:$0xff]
      %v5051 = vld [vmem:[#allocation3 + $0x38] sm:$0xff]
      %v5052 = vld [vmem:[#allocation3 + $0x40] sm:$0xff]
      %v5053 = vld [vmem:[#allocation3 + $0x48] sm:$0xff]
      %v5054 = vld [vmem:[#allocation3 + $0x50] sm:$0xff]
      %5064 = vrot.lane.b32.xlu0 %v5046, 83
      %v5065 = vpop.permute.xlu0 %5064
      %5066 = vrot.lane.b32.xlu0 %v5047, 83
      %v5067 = vpop.permute.xlu0 %5066
      %5068 = vrot.lane.b32.xlu0 %v5048, 83
      %v5069 = vpop.permute.xlu0 %5068
      %5070 = vrot.lane.b32.xlu0 %v5049, 83
      %v5071 = vpop.permute.xlu0 %5070
      %5072 = vrot.lane.b32.xlu0 %v5050, 83
      %v5073 = vpop.permute.xlu0 %5072
      %5074 = vrot.lane.b32.xlu0 %v5051, 83
      %v5075 = vpop.permute.xlu0 %5074
      %5076 = vrot.lane.b32.xlu0 %v5052, 83
      %v5077 = vpop.permute.xlu0 %5076
      %5078 = vrot.lane.b32.xlu0 %v5053, 83
      %v5079 = vpop.permute.xlu0 %5078
      %5080 = vrot.lane.b32.xlu0 %v5054, 83
      %v5081 = vpop.permute.xlu0 %5080
      %vm5082 = vcmask 678912
      %v5083 = vsel %vm5082, %v5065, %v5067
      %v5084 = vsel %vm5082, %v5067, %v5069
      %v5085 = vsel %vm5082, %v5069, %v5071
      %v5086 = vsel %vm5082, %v5071, %v5073
      %v5087 = vsel %vm5082, %v5073, %v5075
      %v5088 = vsel %vm5082, %v5075, %v5077
      %v5089 = vsel %vm5082, %v5077, %v5079
      %v5090 = vsel %vm5082, %v5079, %v5081
      %5100 = vst [vmem:[#allocation2 + $0x288] sm:$0xff] %v5083
      %5101 = vst [vmem:[#allocation2 + $0x290] sm:$0xff] %v5084
      %5102 = vst [vmem:[#allocation2 + $0x298] sm:$0xff] %v5085
      %5103 = vst [vmem:[#allocation2 + $0x2a0] sm:$0xff] %v5086
      %5104 = vst [vmem:[#allocation2 + $0x2a8] sm:$0xff] %v5087
      %5105 = vst [vmem:[#allocation2 + $0x2b0] sm:$0xff] %v5088
      %5106 = vst [vmem:[#allocation2 + $0x2b8] sm:$0xff] %v5089
      %5107 = vst [vmem:[#allocation2 + $0x2c0] sm:$0xff] %v5090
      %5108 = vst.msk [vmem:[#allocation2 + $0x2c8] sm:$0xff] %vm298, %v5081
      %v5109 = vld [vmem:[#allocation3 + $0x10] sm:$0xff]
      %v5110 = vld [vmem:[#allocation3 + $0x18] sm:$0xff]
      %v5111 = vld [vmem:[#allocation3 + $0x20] sm:$0xff]
      %v5112 = vld [vmem:[#allocation3 + $0x28] sm:$0xff]
      %v5113 = vld [vmem:[#allocation3 + $0x30] sm:$0xff]
      %v5114 = vld [vmem:[#allocation3 + $0x38] sm:$0xff]
      %v5115 = vld [vmem:[#allocation3 + $0x40] sm:$0xff]
      %v5116 = vld [vmem:[#allocation3 + $0x48] sm:$0xff]
      %v5117 = vld [vmem:[#allocation3 + $0x50] sm:$0xff]
      %5127 = vrot.lane.b32.xlu0 %v5109, 82
      %v5128 = vpop.permute.xlu0 %5127
      %5129 = vrot.lane.b32.xlu0 %v5110, 82
      %v5130 = vpop.permute.xlu0 %5129
      %5131 = vrot.lane.b32.xlu0 %v5111, 82
      %v5132 = vpop.permute.xlu0 %5131
      %5133 = vrot.lane.b32.xlu0 %v5112, 82
      %v5134 = vpop.permute.xlu0 %5133
      %5135 = vrot.lane.b32.xlu0 %v5113, 82
      %v5136 = vpop.permute.xlu0 %5135
      %5137 = vrot.lane.b32.xlu0 %v5114, 82
      %v5138 = vpop.permute.xlu0 %5137
      %5139 = vrot.lane.b32.xlu0 %v5115, 82
      %v5140 = vpop.permute.xlu0 %5139
      %5141 = vrot.lane.b32.xlu0 %v5116, 82
      %v5142 = vpop.permute.xlu0 %5141
      %5143 = vrot.lane.b32.xlu0 %v5117, 82
      %v5144 = vpop.permute.xlu0 %5143
      %vm5145 = vcmask 670720
      %v5146 = vsel %vm5145, %v5128, %v5130
      %v5147 = vsel %vm5145, %v5130, %v5132
      %v5148 = vsel %vm5145, %v5132, %v5134
      %v5149 = vsel %vm5145, %v5134, %v5136
      %v5150 = vsel %vm5145, %v5136, %v5138
      %v5151 = vsel %vm5145, %v5138, %v5140
      %v5152 = vsel %vm5145, %v5140, %v5142
      %v5153 = vsel %vm5145, %v5142, %v5144
      %5163 = vst [vmem:[#allocation2 + $0x2d0] sm:$0xff] %v5146
      %5164 = vst [vmem:[#allocation2 + $0x2d8] sm:$0xff] %v5147
      %5165 = vst [vmem:[#allocation2 + $0x2e0] sm:$0xff] %v5148
      %5166 = vst [vmem:[#allocation2 + $0x2e8] sm:$0xff] %v5149
      %5167 = vst [vmem:[#allocation2 + $0x2f0] sm:$0xff] %v5150
      %5168 = vst [vmem:[#allocation2 + $0x2f8] sm:$0xff] %v5151
      %5169 = vst [vmem:[#allocation2 + $0x300] sm:$0xff] %v5152
      %5170 = vst [vmem:[#allocation2 + $0x308] sm:$0xff] %v5153
      %5171 = vst.msk [vmem:[#allocation2 + $0x310] sm:$0xff] %vm298, %v5144
      %v5172 = vld [vmem:[#allocation3 + $0x10] sm:$0xff]
      %v5173 = vld [vmem:[#allocation3 + $0x18] sm:$0xff]
      %v5174 = vld [vmem:[#allocation3 + $0x20] sm:$0xff]
      %v5175 = vld [vmem:[#allocation3 + $0x28] sm:$0xff]
      %v5176 = vld [vmem:[#allocation3 + $0x30] sm:$0xff]
      %v5177 = vld [vmem:[#allocation3 + $0x38] sm:$0xff]
      %v5178 = vld [vmem:[#allocation3 + $0x40] sm:$0xff]
      %v5179 = vld [vmem:[#allocation3 + $0x48] sm:$0xff]
      %v5180 = vld [vmem:[#allocation3 + $0x50] sm:$0xff]
      %5190 = vrot.lane.b32.xlu0 %v5172, 81
      %v5191 = vpop.permute.xlu0 %5190
      %5192 = vrot.lane.b32.xlu0 %v5173, 81
      %v5193 = vpop.permute.xlu0 %5192
      %5194 = vrot.lane.b32.xlu0 %v5174, 81
      %v5195 = vpop.permute.xlu0 %5194
      %5196 = vrot.lane.b32.xlu0 %v5175, 81
      %v5197 = vpop.permute.xlu0 %5196
      %5198 = vrot.lane.b32.xlu0 %v5176, 81
      %v5199 = vpop.permute.xlu0 %5198
      %5200 = vrot.lane.b32.xlu0 %v5177, 81
      %v5201 = vpop.permute.xlu0 %5200
      %5202 = vrot.lane.b32.xlu0 %v5178, 81
      %v5203 = vpop.permute.xlu0 %5202
      %5204 = vrot.lane.b32.xlu0 %v5179, 81
      %v5205 = vpop.permute.xlu0 %5204
      %5206 = vrot.lane.b32.xlu0 %v5180, 81
      %v5207 = vpop.permute.xlu0 %5206
      %vm5208 = vcmask 662528
      %v5209 = vsel %vm5208, %v5191, %v5193
      %v5210 = vsel %vm5208, %v5193, %v5195
      %v5211 = vsel %vm5208, %v5195, %v5197
      %v5212 = vsel %vm5208, %v5197, %v5199
      %v5213 = vsel %vm5208, %v5199, %v5201
      %v5214 = vsel %vm5208, %v5201, %v5203
      %v5215 = vsel %vm5208, %v5203, %v5205
      %v5216 = vsel %vm5208, %v5205, %v5207
      %5226 = vst [vmem:[#allocation2 + $0x318] sm:$0xff] %v5209
      %5227 = vst [vmem:[#allocation2 + $0x320] sm:$0xff] %v5210
      %5228 = vst [vmem:[#allocation2 + $0x328] sm:$0xff] %v5211
      %5229 = vst [vmem:[#allocation2 + $0x330] sm:$0xff] %v5212
      %5230 = vst [vmem:[#allocation2 + $0x338] sm:$0xff] %v5213
      %5231 = vst [vmem:[#allocation2 + $0x340] sm:$0xff] %v5214
      %5232 = vst [vmem:[#allocation2 + $0x348] sm:$0xff] %v5215
      %5233 = vst [vmem:[#allocation2 + $0x350] sm:$0xff] %v5216
      %5234 = vst.msk [vmem:[#allocation2 + $0x358] sm:$0xff] %vm298, %v5207
      %v5235 = vld [vmem:[#allocation3 + $0x10] sm:$0xff]
      %v5236 = vld [vmem:[#allocation3 + $0x18] sm:$0xff]
      %v5237 = vld [vmem:[#allocation3 + $0x20] sm:$0xff]
      %v5238 = vld [vmem:[#allocation3 + $0x28] sm:$0xff]
      %v5239 = vld [vmem:[#allocation3 + $0x30] sm:$0xff]
      %v5240 = vld [vmem:[#allocation3 + $0x38] sm:$0xff]
      %v5241 = vld [vmem:[#allocation3 + $0x40] sm:$0xff]
      %v5242 = vld [vmem:[#allocation3 + $0x48] sm:$0xff]
      %v5243 = vld [vmem:[#allocation3 + $0x50] sm:$0xff]
      %v5244 = vld [vmem:[#allocation3 + $0x58] sm:$0xff]
      %5255 = vrot.lane.b32.xlu0 %v5235, 71
      %v5256 = vpop.permute.xlu0 %5255
      %5257 = vrot.lane.b32.xlu0 %v5236, 71
      %v5258 = vpop.permute.xlu0 %5257
      %5259 = vrot.lane.b32.xlu0 %v5237, 71
      %v5260 = vpop.permute.xlu0 %5259
      %5261 = vrot.lane.b32.xlu0 %v5238, 71
      %v5262 = vpop.permute.xlu0 %5261
      %5263 = vrot.lane.b32.xlu0 %v5239, 71
      %v5264 = vpop.permute.xlu0 %5263
      %5265 = vrot.lane.b32.xlu0 %v5240, 71
      %v5266 = vpop.permute.xlu0 %5265
      %5267 = vrot.lane.b32.xlu0 %v5241, 71
      %v5268 = vpop.permute.xlu0 %5267
      %5269 = vrot.lane.b32.xlu0 %v5242, 71
      %v5270 = vpop.permute.xlu0 %5269
      %5271 = vrot.lane.b32.xlu0 %v5243, 71
      %v5272 = vpop.permute.xlu0 %5271
      %5273 = vrot.lane.b32.xlu0 %v5244, 71
      %v5274 = vpop.permute.xlu0 %5273
      %vm5275 = vcmask 580608
      %v5276 = vsel %vm5275, %v5256, %v5258
      %v5277 = vsel %vm5275, %v5258, %v5260
      %v5278 = vsel %vm5275, %v5260, %v5262
      %v5279 = vsel %vm5275, %v5262, %v5264
      %v5280 = vsel %vm5275, %v5264, %v5266
      %v5281 = vsel %vm5275, %v5266, %v5268
      %v5282 = vsel %vm5275, %v5268, %v5270
      %v5283 = vsel %vm5275, %v5270, %v5272
      %v5284 = vsel %vm5275, %v5272, %v5274
      %5294 = vst [vmem:[#allocation2 + $0x360] sm:$0xff] %v5276
      %5295 = vst [vmem:[#allocation2 + $0x368] sm:$0xff] %v5277
      %5296 = vst [vmem:[#allocation2 + $0x370] sm:$0xff] %v5278
      %5297 = vst [vmem:[#allocation2 + $0x378] sm:$0xff] %v5279
      %5298 = vst [vmem:[#allocation2 + $0x380] sm:$0xff] %v5280
      %5299 = vst [vmem:[#allocation2 + $0x388] sm:$0xff] %v5281
      %5300 = vst [vmem:[#allocation2 + $0x390] sm:$0xff] %v5282
      %5301 = vst [vmem:[#allocation2 + $0x398] sm:$0xff] %v5283
      %5302 = vst.msk [vmem:[#allocation2 + $0x3a0] sm:$0xff] %vm298, %v5284
      %v5303 = vld [vmem:[#allocation3 + $0x10] sm:$0xff]
      %v5304 = vld [vmem:[#allocation3 + $0x18] sm:$0xff]
      %v5305 = vld [vmem:[#allocation3 + $0x20] sm:$0xff]
      %v5306 = vld [vmem:[#allocation3 + $0x28] sm:$0xff]
      %v5307 = vld [vmem:[#allocation3 + $0x30] sm:$0xff]
      %v5308 = vld [vmem:[#allocation3 + $0x38] sm:$0xff]
      %v5309 = vld [vmem:[#allocation3 + $0x40] sm:$0xff]
      %v5310 = vld [vmem:[#allocation3 + $0x48] sm:$0xff]
      %v5311 = vld [vmem:[#allocation3 + $0x50] sm:$0xff]
      %v5312 = vld [vmem:[#allocation3 + $0x58] sm:$0xff]
      %5323 = vrot.lane.b32.xlu0 %v5303, 70
      %v5324 = vpop.permute.xlu0 %5323
      %5325 = vrot.lane.b32.xlu0 %v5304, 70
      %v5326 = vpop.permute.xlu0 %5325
      %5327 = vrot.lane.b32.xlu0 %v5305, 70
      %v5328 = vpop.permute.xlu0 %5327
      %5329 = vrot.lane.b32.xlu0 %v5306, 70
      %v5330 = vpop.permute.xlu0 %5329
      %5331 = vrot.lane.b32.xlu0 %v5307, 70
      %v5332 = vpop.permute.xlu0 %5331
      %5333 = vrot.lane.b32.xlu0 %v5308, 70
      %v5334 = vpop.permute.xlu0 %5333
      %5335 = vrot.lane.b32.xlu0 %v5309, 70
      %v5336 = vpop.permute.xlu0 %5335
      %5337 = vrot.lane.b32.xlu0 %v5310, 70
      %v5338 = vpop.permute.xlu0 %5337
      %5339 = vrot.lane.b32.xlu0 %v5311, 70
      %v5340 = vpop.permute.xlu0 %5339
      %5341 = vrot.lane.b32.xlu0 %v5312, 70
      %v5342 = vpop.permute.xlu0 %5341
      %v5343 = vsel %vm1100, %v5324, %v5326
      %v5344 = vsel %vm1100, %v5326, %v5328
      %v5345 = vsel %vm1100, %v5328, %v5330
      %v5346 = vsel %vm1100, %v5330, %v5332
      %v5347 = vsel %vm1100, %v5332, %v5334
      %v5348 = vsel %vm1100, %v5334, %v5336
      %v5349 = vsel %vm1100, %v5336, %v5338
      %v5350 = vsel %vm1100, %v5338, %v5340
      %v5351 = vsel %vm1100, %v5340, %v5342
      %5361 = vst [vmem:[#allocation2 + $0x3a8] sm:$0xff] %v5343
      %5362 = vst [vmem:[#allocation2 + $0x3b0] sm:$0xff] %v5344
      %5363 = vst [vmem:[#allocation2 + $0x3b8] sm:$0xff] %v5345
      %5364 = vst [vmem:[#allocation2 + $0x3c0] sm:$0xff] %v5346
      %5365 = vst [vmem:[#allocation2 + $0x3c8] sm:$0xff] %v5347
      %5366 = vst [vmem:[#allocation2 + $0x3d0] sm:$0xff] %v5348
      %5367 = vst [vmem:[#allocation2 + $0x3d8] sm:$0xff] %v5349
      %5368 = vst [vmem:[#allocation2 + $0x3e0] sm:$0xff] %v5350
      %5369 = vst.msk [vmem:[#allocation2 + $0x3e8] sm:$0xff] %vm298, %v5351
      %v5370 = vld [vmem:[#allocation3 + $0x10] sm:$0xff]
      %v5371 = vld [vmem:[#allocation3 + $0x18] sm:$0xff]
      %v5372 = vld [vmem:[#allocation3 + $0x20] sm:$0xff]
      %v5373 = vld [vmem:[#allocation3 + $0x28] sm:$0xff]
      %v5374 = vld [vmem:[#allocation3 + $0x30] sm:$0xff]
      %v5375 = vld [vmem:[#allocation3 + $0x38] sm:$0xff]
      %v5376 = vld [vmem:[#allocation3 + $0x40] sm:$0xff]
      %v5377 = vld [vmem:[#allocation3 + $0x48] sm:$0xff]
      %v5378 = vld [vmem:[#allocation3 + $0x50] sm:$0xff]
      %v5379 = vld [vmem:[#allocation3 + $0x58] sm:$0xff]
      %5390 = vrot.lane.b32.xlu0 %v5370, 69
      %v5391 = vpop.permute.xlu0 %5390
      %5392 = vrot.lane.b32.xlu0 %v5371, 69
      %v5393 = vpop.permute.xlu0 %5392
      %5394 = vrot.lane.b32.xlu0 %v5372, 69
      %v5395 = vpop.permute.xlu0 %5394
      %5396 = vrot.lane.b32.xlu0 %v5373, 69
      %v5397 = vpop.permute.xlu0 %5396
      %5398 = vrot.lane.b32.xlu0 %v5374, 69
      %v5399 = vpop.permute.xlu0 %5398
      %5400 = vrot.lane.b32.xlu0 %v5375, 69
      %v5401 = vpop.permute.xlu0 %5400
      %5402 = vrot.lane.b32.xlu0 %v5376, 69
      %v5403 = vpop.permute.xlu0 %5402
      %5404 = vrot.lane.b32.xlu0 %v5377, 69
      %v5405 = vpop.permute.xlu0 %5404
      %5406 = vrot.lane.b32.xlu0 %v5378, 69
      %v5407 = vpop.permute.xlu0 %5406
      %5408 = vrot.lane.b32.xlu0 %v5379, 69
      %v5409 = vpop.permute.xlu0 %5408
      %vm5410 = vcmask 564224
      %v5411 = vsel %vm5410, %v5391, %v5393
      %v5412 = vsel %vm5410, %v5393, %v5395
      %v5413 = vsel %vm5410, %v5395, %v5397
      %v5414 = vsel %vm5410, %v5397, %v5399
      %v5415 = vsel %vm5410, %v5399, %v5401
      %v5416 = vsel %vm5410, %v5401, %v5403
      %v5417 = vsel %vm5410, %v5403, %v5405
      %v5418 = vsel %vm5410, %v5405, %v5407
      %v5419 = vsel %vm5410, %v5407, %v5409
      %5429 = vst [vmem:[#allocation2 + $0x3f0] sm:$0xff] %v5411
      %5430 = vst [vmem:[#allocation2 + $0x3f8] sm:$0xff] %v5412
      %5431 = vst [vmem:[#allocation2 + $0x400] sm:$0xff] %v5413
      %5432 = vst [vmem:[#allocation2 + $0x408] sm:$0xff] %v5414
      %5433 = vst [vmem:[#allocation2 + $0x410] sm:$0xff] %v5415
      %5434 = vst [vmem:[#allocation2 + $0x418] sm:$0xff] %v5416
      %5435 = vst [vmem:[#allocation2 + $0x420] sm:$0xff] %v5417
      %5436 = vst [vmem:[#allocation2 + $0x428] sm:$0xff] %v5418
      %5437 = vst.msk [vmem:[#allocation2 + $0x430] sm:$0xff] %vm298, %v5419
      %v5438 = vld [vmem:[#allocation3 + $0x10] sm:$0xff]
      %v5439 = vld [vmem:[#allocation3 + $0x18] sm:$0xff]
      %v5440 = vld [vmem:[#allocation3 + $0x20] sm:$0xff]
      %v5441 = vld [vmem:[#allocation3 + $0x28] sm:$0xff]
      %v5442 = vld [vmem:[#allocation3 + $0x30] sm:$0xff]
      %v5443 = vld [vmem:[#allocation3 + $0x38] sm:$0xff]
      %v5444 = vld [vmem:[#allocation3 + $0x40] sm:$0xff]
      %v5445 = vld [vmem:[#allocation3 + $0x48] sm:$0xff]
      %v5446 = vld [vmem:[#allocation3 + $0x50] sm:$0xff]
      %v5447 = vld [vmem:[#allocation3 + $0x58] sm:$0xff]
      %5458 = vrot.lane.b32.xlu0 %v5438, 59
      %v5459 = vpop.permute.xlu0 %5458
      %5460 = vrot.lane.b32.xlu0 %v5439, 59
      %v5461 = vpop.permute.xlu0 %5460
      %5462 = vrot.lane.b32.xlu0 %v5440, 59
      %v5463 = vpop.permute.xlu0 %5462
      %5464 = vrot.lane.b32.xlu0 %v5441, 59
      %v5465 = vpop.permute.xlu0 %5464
      %5466 = vrot.lane.b32.xlu0 %v5442, 59
      %v5467 = vpop.permute.xlu0 %5466
      %5468 = vrot.lane.b32.xlu0 %v5443, 59
      %v5469 = vpop.permute.xlu0 %5468
      %5470 = vrot.lane.b32.xlu0 %v5444, 59
      %v5471 = vpop.permute.xlu0 %5470
      %5472 = vrot.lane.b32.xlu0 %v5445, 59
      %v5473 = vpop.permute.xlu0 %5472
      %5474 = vrot.lane.b32.xlu0 %v5446, 59
      %v5475 = vpop.permute.xlu0 %5474
      %5476 = vrot.lane.b32.xlu0 %v5447, 59
      %v5477 = vpop.permute.xlu0 %5476
      %vm5478 = vcmask 482304
      %v5479 = vsel %vm5478, %v5459, %v5461
      %v5480 = vsel %vm5478, %v5461, %v5463
      %v5481 = vsel %vm5478, %v5463, %v5465
      %v5482 = vsel %vm5478, %v5465, %v5467
      %v5483 = vsel %vm5478, %v5467, %v5469
      %v5484 = vsel %vm5478, %v5469, %v5471
      %v5485 = vsel %vm5478, %v5471, %v5473
      %v5486 = vsel %vm5478, %v5473, %v5475
      %v5487 = vsel %vm5478, %v5475, %v5477
      %5497 = vst [vmem:[#allocation2 + $0x438] sm:$0xff] %v5479
      %5498 = vst [vmem:[#allocation2 + $0x440] sm:$0xff] %v5480
      %5499 = vst [vmem:[#allocation2 + $0x448] sm:$0xff] %v5481
      %5500 = vst [vmem:[#allocation2 + $0x450] sm:$0xff] %v5482
      %5501 = vst [vmem:[#allocation2 + $0x458] sm:$0xff] %v5483
      %5502 = vst [vmem:[#allocation2 + $0x460] sm:$0xff] %v5484
      %5503 = vst [vmem:[#allocation2 + $0x468] sm:$0xff] %v5485
      %5504 = vst [vmem:[#allocation2 + $0x470] sm:$0xff] %v5486
      %5505 = vst.msk [vmem:[#allocation2 + $0x478] sm:$0xff] %vm298, %v5487
      %v5506 = vld [vmem:[#allocation3 + $0x10] sm:$0xff]
      %v5507 = vld [vmem:[#allocation3 + $0x18] sm:$0xff]
      %v5508 = vld [vmem:[#allocation3 + $0x20] sm:$0xff]
      %v5509 = vld [vmem:[#allocation3 + $0x28] sm:$0xff]
      %v5510 = vld [vmem:[#allocation3 + $0x30] sm:$0xff]
      %v5511 = vld [vmem:[#allocation3 + $0x38] sm:$0xff]
      %v5512 = vld [vmem:[#allocation3 + $0x40] sm:$0xff]
      %v5513 = vld [vmem:[#allocation3 + $0x48] sm:$0xff]
      %v5514 = vld [vmem:[#allocation3 + $0x50] sm:$0xff]
      %v5515 = vld [vmem:[#allocation3 + $0x58] sm:$0xff]
      %5526 = vrot.lane.b32.xlu0 %v5506, 58
      %v5527 = vpop.permute.xlu0 %5526
      %5528 = vrot.lane.b32.xlu0 %v5507, 58
      %v5529 = vpop.permute.xlu0 %5528
      %5530 = vrot.lane.b32.xlu0 %v5508, 58
      %v5531 = vpop.permute.xlu0 %5530
      %5532 = vrot.lane.b32.xlu0 %v5509, 58
      %v5533 = vpop.permute.xlu0 %5532
      %5534 = vrot.lane.b32.xlu0 %v5510, 58
      %v5535 = vpop.permute.xlu0 %5534
      %5536 = vrot.lane.b32.xlu0 %v5511, 58
      %v5537 = vpop.permute.xlu0 %5536
      %5538 = vrot.lane.b32.xlu0 %v5512, 58
      %v5539 = vpop.permute.xlu0 %5538
      %5540 = vrot.lane.b32.xlu0 %v5513, 58
      %v5541 = vpop.permute.xlu0 %5540
      %5542 = vrot.lane.b32.xlu0 %v5514, 58
      %v5543 = vpop.permute.xlu0 %5542
      %5544 = vrot.lane.b32.xlu0 %v5515, 58
      %v5545 = vpop.permute.xlu0 %5544
      %v5546 = vsel %vm2789, %v5527, %v5529
      %v5547 = vsel %vm2789, %v5529, %v5531
      %v5548 = vsel %vm2789, %v5531, %v5533
      %v5549 = vsel %vm2789, %v5533, %v5535
      %v5550 = vsel %vm2789, %v5535, %v5537
      %v5551 = vsel %vm2789, %v5537, %v5539
      %v5552 = vsel %vm2789, %v5539, %v5541
      %v5553 = vsel %vm2789, %v5541, %v5543
      %v5554 = vsel %vm2789, %v5543, %v5545
      %5564 = vst [vmem:[#allocation2 + $0x480] sm:$0xff] %v5546
      %5565 = vst [vmem:[#allocation2 + $0x488] sm:$0xff] %v5547
      %5566 = vst [vmem:[#allocation2 + $0x490] sm:$0xff] %v5548
      %5567 = vst [vmem:[#allocation2 + $0x498] sm:$0xff] %v5549
      %5568 = vst [vmem:[#allocation2 + $0x4a0] sm:$0xff] %v5550
      %5569 = vst [vmem:[#allocation2 + $0x4a8] sm:$0xff] %v5551
      %5570 = vst [vmem:[#allocation2 + $0x4b0] sm:$0xff] %v5552
      %5571 = vst [vmem:[#allocation2 + $0x4b8] sm:$0xff] %v5553
      %5572 = vst.msk [vmem:[#allocation2 + $0x4c0] sm:$0xff] %vm298, %v5554
      %v5573 = vld [vmem:[#allocation3 + $0x10] sm:$0xff]
      %v5574 = vld [vmem:[#allocation3 + $0x18] sm:$0xff]
      %v5575 = vld [vmem:[#allocation3 + $0x20] sm:$0xff]
      %v5576 = vld [vmem:[#allocation3 + $0x28] sm:$0xff]
      %v5577 = vld [vmem:[#allocation3 + $0x30] sm:$0xff]
      %v5578 = vld [vmem:[#allocation3 + $0x38] sm:$0xff]
      %v5579 = vld [vmem:[#allocation3 + $0x40] sm:$0xff]
      %v5580 = vld [vmem:[#allocation3 + $0x48] sm:$0xff]
      %v5581 = vld [vmem:[#allocation3 + $0x50] sm:$0xff]
      %v5582 = vld [vmem:[#allocation3 + $0x58] sm:$0xff]
      %5593 = vrot.lane.b32.xlu0 %v5573, 57
      %v5594 = vpop.permute.xlu0 %5593
      %5595 = vrot.lane.b32.xlu0 %v5574, 57
      %v5596 = vpop.permute.xlu0 %5595
      %5597 = vrot.lane.b32.xlu0 %v5575, 57
      %v5598 = vpop.permute.xlu0 %5597
      %5599 = vrot.lane.b32.xlu0 %v5576, 57
      %v5600 = vpop.permute.xlu0 %5599
      %5601 = vrot.lane.b32.xlu0 %v5577, 57
      %v5602 = vpop.permute.xlu0 %5601
      %5603 = vrot.lane.b32.xlu0 %v5578, 57
      %v5604 = vpop.permute.xlu0 %5603
      %5605 = vrot.lane.b32.xlu0 %v5579, 57
      %v5606 = vpop.permute.xlu0 %5605
      %5607 = vrot.lane.b32.xlu0 %v5580, 57
      %v5608 = vpop.permute.xlu0 %5607
      %5609 = vrot.lane.b32.xlu0 %v5581, 57
      %v5610 = vpop.permute.xlu0 %5609
      %5611 = vrot.lane.b32.xlu0 %v5582, 57
      %v5612 = vpop.permute.xlu0 %5611
      %vm5613 = vcmask 465920
      %v5614 = vsel %vm5613, %v5594, %v5596
      %v5615 = vsel %vm5613, %v5596, %v5598
      %v5616 = vsel %vm5613, %v5598, %v5600
      %v5617 = vsel %vm5613, %v5600, %v5602
      %v5618 = vsel %vm5613, %v5602, %v5604
      %v5619 = vsel %vm5613, %v5604, %v5606
      %v5620 = vsel %vm5613, %v5606, %v5608
      %v5621 = vsel %vm5613, %v5608, %v5610
      %v5622 = vsel %vm5613, %v5610, %v5612
      %5632 = vst [vmem:[#allocation2 + $0x4c8] sm:$0xff] %v5614
      %5633 = vst [vmem:[#allocation2 + $0x4d0] sm:$0xff] %v5615
      %5634 = vst [vmem:[#allocation2 + $0x4d8] sm:$0xff] %v5616
      %5635 = vst [vmem:[#allocation2 + $0x4e0] sm:$0xff] %v5617
      %5636 = vst [vmem:[#allocation2 + $0x4e8] sm:$0xff] %v5618
      %5637 = vst [vmem:[#allocation2 + $0x4f0] sm:$0xff] %v5619
      %5638 = vst [vmem:[#allocation2 + $0x4f8] sm:$0xff] %v5620
      %5639 = vst [vmem:[#allocation2 + $0x500] sm:$0xff] %v5621
      %5640 = vst.msk [vmem:[#allocation2 + $0x508] sm:$0xff] %vm298, %v5622
      %v5641 = vld [vmem:[#allocation3 + $0x18] sm:$0xff]
      %v5642 = vld [vmem:[#allocation3 + $0x20] sm:$0xff]
      %v5643 = vld [vmem:[#allocation3 + $0x28] sm:$0xff]
      %v5644 = vld [vmem:[#allocation3 + $0x30] sm:$0xff]
      %v5645 = vld [vmem:[#allocation3 + $0x38] sm:$0xff]
      %v5646 = vld [vmem:[#allocation3 + $0x40] sm:$0xff]
      %v5647 = vld [vmem:[#allocation3 + $0x48] sm:$0xff]
      %v5648 = vld [vmem:[#allocation3 + $0x50] sm:$0xff]
      %v5649 = vld [vmem:[#allocation3 + $0x58] sm:$0xff]
      %v5650 = vld [vmem:[#allocation3 + $0x60] sm:$0xff]
      %5661 = vrot.lane.b32.xlu0 %v5641, 67
      %v5662 = vpop.permute.xlu0 %5661
      %5663 = vrot.lane.b32.xlu0 %v5642, 67
      %v5664 = vpop.permute.xlu0 %5663
      %5665 = vrot.lane.b32.xlu0 %v5643, 67
      %v5666 = vpop.permute.xlu0 %5665
      %5667 = vrot.lane.b32.xlu0 %v5644, 67
      %v5668 = vpop.permute.xlu0 %5667
      %5669 = vrot.lane.b32.xlu0 %v5645, 67
      %v5670 = vpop.permute.xlu0 %5669
      %5671 = vrot.lane.b32.xlu0 %v5646, 67
      %v5672 = vpop.permute.xlu0 %5671
      %5673 = vrot.lane.b32.xlu0 %v5647, 67
      %v5674 = vpop.permute.xlu0 %5673
      %5675 = vrot.lane.b32.xlu0 %v5648, 67
      %v5676 = vpop.permute.xlu0 %5675
      %5677 = vrot.lane.b32.xlu0 %v5649, 67
      %v5678 = vpop.permute.xlu0 %5677
      %5679 = vrot.lane.b32.xlu0 %v5650, 67
      %v5680 = vpop.permute.xlu0 %5679
      %vm5681 = vcmask 547840
      %v5682 = vsel %vm5681, %v5662, %v5664
      %v5683 = vsel %vm5681, %v5664, %v5666
      %v5684 = vsel %vm5681, %v5666, %v5668
      %v5685 = vsel %vm5681, %v5668, %v5670
      %v5686 = vsel %vm5681, %v5670, %v5672
      %v5687 = vsel %vm5681, %v5672, %v5674
      %v5688 = vsel %vm5681, %v5674, %v5676
      %v5689 = vsel %vm5681, %v5676, %v5678
      %v5690 = vsel %vm5681, %v5678, %v5680
      %5700 = vst [vmem:[#allocation2 + $0x510] sm:$0xff] %v5682
      %5701 = vst [vmem:[#allocation2 + $0x518] sm:$0xff] %v5683
      %5702 = vst [vmem:[#allocation2 + $0x520] sm:$0xff] %v5684
      %5703 = vst [vmem:[#allocation2 + $0x528] sm:$0xff] %v5685
      %5704 = vst [vmem:[#allocation2 + $0x530] sm:$0xff] %v5686
      %5705 = vst [vmem:[#allocation2 + $0x538] sm:$0xff] %v5687
      %5706 = vst [vmem:[#allocation2 + $0x540] sm:$0xff] %v5688
      %5707 = vst [vmem:[#allocation2 + $0x548] sm:$0xff] %v5689
      %5708 = vst.msk [vmem:[#allocation2 + $0x550] sm:$0xff] %vm298, %v5690
      %v5709 = vld [vmem:[#allocation3 + $0x18] sm:$0xff]
      %v5710 = vld [vmem:[#allocation3 + $0x20] sm:$0xff]
      %v5711 = vld [vmem:[#allocation3 + $0x28] sm:$0xff]
      %v5712 = vld [vmem:[#allocation3 + $0x30] sm:$0xff]
      %v5713 = vld [vmem:[#allocation3 + $0x38] sm:$0xff]
      %v5714 = vld [vmem:[#allocation3 + $0x40] sm:$0xff]
      %v5715 = vld [vmem:[#allocation3 + $0x48] sm:$0xff]
      %v5716 = vld [vmem:[#allocation3 + $0x50] sm:$0xff]
      %v5717 = vld [vmem:[#allocation3 + $0x58] sm:$0xff]
      %v5718 = vld [vmem:[#allocation3 + $0x60] sm:$0xff]
      %5729 = vrot.lane.b32.xlu0 %v5709, 66
      %v5730 = vpop.permute.xlu0 %5729
      %5731 = vrot.lane.b32.xlu0 %v5710, 66
      %v5732 = vpop.permute.xlu0 %5731
      %5733 = vrot.lane.b32.xlu0 %v5711, 66
      %v5734 = vpop.permute.xlu0 %5733
      %5735 = vrot.lane.b32.xlu0 %v5712, 66
      %v5736 = vpop.permute.xlu0 %5735
      %5737 = vrot.lane.b32.xlu0 %v5713, 66
      %v5738 = vpop.permute.xlu0 %5737
      %5739 = vrot.lane.b32.xlu0 %v5714, 66
      %v5740 = vpop.permute.xlu0 %5739
      %5741 = vrot.lane.b32.xlu0 %v5715, 66
      %v5742 = vpop.permute.xlu0 %5741
      %5743 = vrot.lane.b32.xlu0 %v5716, 66
      %v5744 = vpop.permute.xlu0 %5743
      %5745 = vrot.lane.b32.xlu0 %v5717, 66
      %v5746 = vpop.permute.xlu0 %5745
      %5747 = vrot.lane.b32.xlu0 %v5718, 66
      %v5748 = vpop.permute.xlu0 %5747
      %vm5749 = vcmask 539648
      %v5750 = vsel %vm5749, %v5730, %v5732
      %v5751 = vsel %vm5749, %v5732, %v5734
      %v5752 = vsel %vm5749, %v5734, %v5736
      %v5753 = vsel %vm5749, %v5736, %v5738
      %v5754 = vsel %vm5749, %v5738, %v5740
      %v5755 = vsel %vm5749, %v5740, %v5742
      %v5756 = vsel %vm5749, %v5742, %v5744
      %v5757 = vsel %vm5749, %v5744, %v5746
      %v5758 = vsel %vm5749, %v5746, %v5748
      %5768 = vst [vmem:[#allocation2 + $0x558] sm:$0xff] %v5750
      %5769 = vst [vmem:[#allocation2 + $0x560] sm:$0xff] %v5751
      %5770 = vst [vmem:[#allocation2 + $0x568] sm:$0xff] %v5752
      %5771 = vst [vmem:[#allocation2 + $0x570] sm:$0xff] %v5753
      %5772 = vst [vmem:[#allocation2 + $0x578] sm:$0xff] %v5754
      %5773 = vst [vmem:[#allocation2 + $0x580] sm:$0xff] %v5755
      %5774 = vst [vmem:[#allocation2 + $0x588] sm:$0xff] %v5756
      %5775 = vst [vmem:[#allocation2 + $0x590] sm:$0xff] %v5757
      %5776 = vst.msk [vmem:[#allocation2 + $0x598] sm:$0xff] %vm298, %v5758
      %v5777 = vld [vmem:[#allocation3 + $0x18] sm:$0xff]
      %v5778 = vld [vmem:[#allocation3 + $0x20] sm:$0xff]
      %v5779 = vld [vmem:[#allocation3 + $0x28] sm:$0xff]
      %v5780 = vld [vmem:[#allocation3 + $0x30] sm:$0xff]
      %v5781 = vld [vmem:[#allocation3 + $0x38] sm:$0xff]
      %v5782 = vld [vmem:[#allocation3 + $0x40] sm:$0xff]
      %v5783 = vld [vmem:[#allocation3 + $0x48] sm:$0xff]
      %v5784 = vld [vmem:[#allocation3 + $0x50] sm:$0xff]
      %v5785 = vld [vmem:[#allocation3 + $0x58] sm:$0xff]
      %v5786 = vld [vmem:[#allocation3 + $0x60] sm:$0xff]
      %5797 = vrot.lane.b32.xlu0 %v5777, 65
      %v5798 = vpop.permute.xlu0 %5797
      %5799 = vrot.lane.b32.xlu0 %v5778, 65
      %v5800 = vpop.permute.xlu0 %5799
      %5801 = vrot.lane.b32.xlu0 %v5779, 65
      %v5802 = vpop.permute.xlu0 %5801
      %5803 = vrot.lane.b32.xlu0 %v5780, 65
      %v5804 = vpop.permute.xlu0 %5803
      %5805 = vrot.lane.b32.xlu0 %v5781, 65
      %v5806 = vpop.permute.xlu0 %5805
      %5807 = vrot.lane.b32.xlu0 %v5782, 65
      %v5808 = vpop.permute.xlu0 %5807
      %5809 = vrot.lane.b32.xlu0 %v5783, 65
      %v5810 = vpop.permute.xlu0 %5809
      %5811 = vrot.lane.b32.xlu0 %v5784, 65
      %v5812 = vpop.permute.xlu0 %5811
      %5813 = vrot.lane.b32.xlu0 %v5785, 65
      %v5814 = vpop.permute.xlu0 %5813
      %5815 = vrot.lane.b32.xlu0 %v5786, 65
      %v5816 = vpop.permute.xlu0 %5815
      %vm5817 = vcmask 531456
      %v5818 = vsel %vm5817, %v5798, %v5800
      %v5819 = vsel %vm5817, %v5800, %v5802
      %v5820 = vsel %vm5817, %v5802, %v5804
      %v5821 = vsel %vm5817, %v5804, %v5806
      %v5822 = vsel %vm5817, %v5806, %v5808
      %v5823 = vsel %vm5817, %v5808, %v5810
      %v5824 = vsel %vm5817, %v5810, %v5812
      %v5825 = vsel %vm5817, %v5812, %v5814
      %v5826 = vsel %vm5817, %v5814, %v5816
      %5836 = vst [vmem:[#allocation2 + $0x5a0] sm:$0xff] %v5818
      %5837 = vst [vmem:[#allocation2 + $0x5a8] sm:$0xff] %v5819
      %5838 = vst [vmem:[#allocation2 + $0x5b0] sm:$0xff] %v5820
      %5839 = vst [vmem:[#allocation2 + $0x5b8] sm:$0xff] %v5821
      %5840 = vst [vmem:[#allocation2 + $0x5c0] sm:$0xff] %v5822
      %5841 = vst [vmem:[#allocation2 + $0x5c8] sm:$0xff] %v5823
      %5842 = vst [vmem:[#allocation2 + $0x5d0] sm:$0xff] %v5824
      %5843 = vst [vmem:[#allocation2 + $0x5d8] sm:$0xff] %v5825
      %5844 = vst.msk [vmem:[#allocation2 + $0x5e0] sm:$0xff] %vm298, %v5826
      %v5845 = vld [vmem:[#allocation3 + $0x18] sm:$0xff]
      %v5846 = vld [vmem:[#allocation3 + $0x20] sm:$0xff]
      %v5847 = vld [vmem:[#allocation3 + $0x28] sm:$0xff]
      %v5848 = vld [vmem:[#allocation3 + $0x30] sm:$0xff]
      %v5849 = vld [vmem:[#allocation3 + $0x38] sm:$0xff]
      %v5850 = vld [vmem:[#allocation3 + $0x40] sm:$0xff]
      %v5851 = vld [vmem:[#allocation3 + $0x48] sm:$0xff]
      %v5852 = vld [vmem:[#allocation3 + $0x50] sm:$0xff]
      %v5853 = vld [vmem:[#allocation3 + $0x58] sm:$0xff]
      %v5854 = vld [vmem:[#allocation3 + $0x60] sm:$0xff]
      %5865 = vrot.lane.b32.xlu0 %v5845, 55
      %v5866 = vpop.permute.xlu0 %5865
      %5867 = vrot.lane.b32.xlu0 %v5846, 55
      %v5868 = vpop.permute.xlu0 %5867
      %5869 = vrot.lane.b32.xlu0 %v5847, 55
      %v5870 = vpop.permute.xlu0 %5869
      %5871 = vrot.lane.b32.xlu0 %v5848, 55
      %v5872 = vpop.permute.xlu0 %5871
      %5873 = vrot.lane.b32.xlu0 %v5849, 55
      %v5874 = vpop.permute.xlu0 %5873
      %5875 = vrot.lane.b32.xlu0 %v5850, 55
      %v5876 = vpop.permute.xlu0 %5875
      %5877 = vrot.lane.b32.xlu0 %v5851, 55
      %v5878 = vpop.permute.xlu0 %5877
      %5879 = vrot.lane.b32.xlu0 %v5852, 55
      %v5880 = vpop.permute.xlu0 %5879
      %5881 = vrot.lane.b32.xlu0 %v5853, 55
      %v5882 = vpop.permute.xlu0 %5881
      %5883 = vrot.lane.b32.xlu0 %v5854, 55
      %v5884 = vpop.permute.xlu0 %5883
      %vm5885 = vcmask 449536
      %v5886 = vsel %vm5885, %v5866, %v5868
      %v5887 = vsel %vm5885, %v5868, %v5870
      %v5888 = vsel %vm5885, %v5870, %v5872
      %v5889 = vsel %vm5885, %v5872, %v5874
      %v5890 = vsel %vm5885, %v5874, %v5876
      %v5891 = vsel %vm5885, %v5876, %v5878
      %v5892 = vsel %vm5885, %v5878, %v5880
      %v5893 = vsel %vm5885, %v5880, %v5882
      %v5894 = vsel %vm5885, %v5882, %v5884
      %5904 = vst [vmem:[#allocation2 + $0x5e8] sm:$0xff] %v5886
      %5905 = vst [vmem:[#allocation2 + $0x5f0] sm:$0xff] %v5887
      %5906 = vst [vmem:[#allocation2 + $0x5f8] sm:$0xff] %v5888
      %5907 = vst [vmem:[#allocation2 + $0x600] sm:$0xff] %v5889
      %5908 = vst [vmem:[#allocation2 + $0x608] sm:$0xff] %v5890
      %5909 = vst [vmem:[#allocation2 + $0x610] sm:$0xff] %v5891
      %5910 = vst [vmem:[#allocation2 + $0x618] sm:$0xff] %v5892
      %5911 = vst [vmem:[#allocation2 + $0x620] sm:$0xff] %v5893
      %5912 = vst.msk [vmem:[#allocation2 + $0x628] sm:$0xff] %vm298, %v5894
      %v5913 = vld [vmem:[#allocation3 + $0x18] sm:$0xff]
      %v5914 = vld [vmem:[#allocation3 + $0x20] sm:$0xff]
      %v5915 = vld [vmem:[#allocation3 + $0x28] sm:$0xff]
      %v5916 = vld [vmem:[#allocation3 + $0x30] sm:$0xff]
      %v5917 = vld [vmem:[#allocation3 + $0x38] sm:$0xff]
      %v5918 = vld [vmem:[#allocation3 + $0x40] sm:$0xff]
      %v5919 = vld [vmem:[#allocation3 + $0x48] sm:$0xff]
      %v5920 = vld [vmem:[#allocation3 + $0x50] sm:$0xff]
      %v5921 = vld [vmem:[#allocation3 + $0x58] sm:$0xff]
      %v5922 = vld [vmem:[#allocation3 + $0x60] sm:$0xff]
      %5933 = vrot.lane.b32.xlu0 %v5913, 54
      %v5934 = vpop.permute.xlu0 %5933
      %5935 = vrot.lane.b32.xlu0 %v5914, 54
      %v5936 = vpop.permute.xlu0 %5935
      %5937 = vrot.lane.b32.xlu0 %v5915, 54
      %v5938 = vpop.permute.xlu0 %5937
      %5939 = vrot.lane.b32.xlu0 %v5916, 54
      %v5940 = vpop.permute.xlu0 %5939
      %5941 = vrot.lane.b32.xlu0 %v5917, 54
      %v5942 = vpop.permute.xlu0 %5941
      %5943 = vrot.lane.b32.xlu0 %v5918, 54
      %v5944 = vpop.permute.xlu0 %5943
      %5945 = vrot.lane.b32.xlu0 %v5919, 54
      %v5946 = vpop.permute.xlu0 %5945
      %5947 = vrot.lane.b32.xlu0 %v5920, 54
      %v5948 = vpop.permute.xlu0 %5947
      %5949 = vrot.lane.b32.xlu0 %v5921, 54
      %v5950 = vpop.permute.xlu0 %5949
      %5951 = vrot.lane.b32.xlu0 %v5922, 54
      %v5952 = vpop.permute.xlu0 %5951
      %vm5953 = vcmask 441344
      %v5954 = vsel %vm5953, %v5934, %v5936
      %v5955 = vsel %vm5953, %v5936, %v5938
      %v5956 = vsel %vm5953, %v5938, %v5940
      %v5957 = vsel %vm5953, %v5940, %v5942
      %v5958 = vsel %vm5953, %v5942, %v5944
      %v5959 = vsel %vm5953, %v5944, %v5946
      %v5960 = vsel %vm5953, %v5946, %v5948
      %v5961 = vsel %vm5953, %v5948, %v5950
      %v5962 = vsel %vm5953, %v5950, %v5952
      %5972 = vst [vmem:[#allocation2 + $0x630] sm:$0xff] %v5954
      %5973 = vst [vmem:[#allocation2 + $0x638] sm:$0xff] %v5955
      %5974 = vst [vmem:[#allocation2 + $0x640] sm:$0xff] %v5956
      %5975 = vst [vmem:[#allocation2 + $0x648] sm:$0xff] %v5957
      %5976 = vst [vmem:[#allocation2 + $0x650] sm:$0xff] %v5958
      %5977 = vst [vmem:[#allocation2 + $0x658] sm:$0xff] %v5959
      %5978 = vst [vmem:[#allocation2 + $0x660] sm:$0xff] %v5960
      %5979 = vst [vmem:[#allocation2 + $0x668] sm:$0xff] %v5961
      %5980 = vst.msk [vmem:[#allocation2 + $0x670] sm:$0xff] %vm298, %v5962
      %v5981 = vld [vmem:[#allocation3 + $0x18] sm:$0xff]
      %v5982 = vld [vmem:[#allocation3 + $0x20] sm:$0xff]
      %v5983 = vld [vmem:[#allocation3 + $0x28] sm:$0xff]
      %v5984 = vld [vmem:[#allocation3 + $0x30] sm:$0xff]
      %v5985 = vld [vmem:[#allocation3 + $0x38] sm:$0xff]
      %v5986 = vld [vmem:[#allocation3 + $0x40] sm:$0xff]
      %v5987 = vld [vmem:[#allocation3 + $0x48] sm:$0xff]
      %v5988 = vld [vmem:[#allocation3 + $0x50] sm:$0xff]
      %v5989 = vld [vmem:[#allocation3 + $0x58] sm:$0xff]
      %v5990 = vld [vmem:[#allocation3 + $0x60] sm:$0xff]
      %6001 = vrot.lane.b32.xlu0 %v5981, 53
      %v6002 = vpop.permute.xlu0 %6001
      %6003 = vrot.lane.b32.xlu0 %v5982, 53
      %v6004 = vpop.permute.xlu0 %6003
      %6005 = vrot.lane.b32.xlu0 %v5983, 53
      %v6006 = vpop.permute.xlu0 %6005
      %6007 = vrot.lane.b32.xlu0 %v5984, 53
      %v6008 = vpop.permute.xlu0 %6007
      %6009 = vrot.lane.b32.xlu0 %v5985, 53
      %v6010 = vpop.permute.xlu0 %6009
      %6011 = vrot.lane.b32.xlu0 %v5986, 53
      %v6012 = vpop.permute.xlu0 %6011
      %6013 = vrot.lane.b32.xlu0 %v5987, 53
      %v6014 = vpop.permute.xlu0 %6013
      %6015 = vrot.lane.b32.xlu0 %v5988, 53
      %v6016 = vpop.permute.xlu0 %6015
      %6017 = vrot.lane.b32.xlu0 %v5989, 53
      %v6018 = vpop.permute.xlu0 %6017
      %6019 = vrot.lane.b32.xlu0 %v5990, 53
      %v6020 = vpop.permute.xlu0 %6019
      %vm6021 = vcmask 433152
      %v6022 = vsel %vm6021, %v6002, %v6004
      %v6023 = vsel %vm6021, %v6004, %v6006
      %v6024 = vsel %vm6021, %v6006, %v6008
      %v6025 = vsel %vm6021, %v6008, %v6010
      %v6026 = vsel %vm6021, %v6010, %v6012
      %v6027 = vsel %vm6021, %v6012, %v6014
      %v6028 = vsel %vm6021, %v6014, %v6016
      %v6029 = vsel %vm6021, %v6016, %v6018
      %v6030 = vsel %vm6021, %v6018, %v6020
      %6040 = vst [vmem:[#allocation2 + $0x678] sm:$0xff] %v6022
      %6041 = vst [vmem:[#allocation2 + $0x680] sm:$0xff] %v6023
      %6042 = vst [vmem:[#allocation2 + $0x688] sm:$0xff] %v6024
      %6043 = vst [vmem:[#allocation2 + $0x690] sm:$0xff] %v6025
      %6044 = vst [vmem:[#allocation2 + $0x698] sm:$0xff] %v6026
      %6045 = vst [vmem:[#allocation2 + $0x6a0] sm:$0xff] %v6027
      %6046 = vst [vmem:[#allocation2 + $0x6a8] sm:$0xff] %v6028
      %6047 = vst [vmem:[#allocation2 + $0x6b0] sm:$0xff] %v6029
      %6048 = vst.msk [vmem:[#allocation2 + $0x6b8] sm:$0xff] %vm298, %v6030
      %v6049 = vld [vmem:[#allocation3 + $0x18] sm:$0xff]
      %v6050 = vld [vmem:[#allocation3 + $0x20] sm:$0xff]
      %v6051 = vld [vmem:[#allocation3 + $0x28] sm:$0xff]
      %v6052 = vld [vmem:[#allocation3 + $0x30] sm:$0xff]
      %v6053 = vld [vmem:[#allocation3 + $0x38] sm:$0xff]
      %v6054 = vld [vmem:[#allocation3 + $0x40] sm:$0xff]
      %v6055 = vld [vmem:[#allocation3 + $0x48] sm:$0xff]
      %v6056 = vld [vmem:[#allocation3 + $0x50] sm:$0xff]
      %v6057 = vld [vmem:[#allocation3 + $0x58] sm:$0xff]
      %v6058 = vld [vmem:[#allocation3 + $0x60] sm:$0xff]
      %6069 = vrot.lane.b32.xlu0 %v6049, 43
      %v6070 = vpop.permute.xlu0 %6069
      %6071 = vrot.lane.b32.xlu0 %v6050, 43
      %v6072 = vpop.permute.xlu0 %6071
      %6073 = vrot.lane.b32.xlu0 %v6051, 43
      %v6074 = vpop.permute.xlu0 %6073
      %6075 = vrot.lane.b32.xlu0 %v6052, 43
      %v6076 = vpop.permute.xlu0 %6075
      %6077 = vrot.lane.b32.xlu0 %v6053, 43
      %v6078 = vpop.permute.xlu0 %6077
      %6079 = vrot.lane.b32.xlu0 %v6054, 43
      %v6080 = vpop.permute.xlu0 %6079
      %6081 = vrot.lane.b32.xlu0 %v6055, 43
      %v6082 = vpop.permute.xlu0 %6081
      %6083 = vrot.lane.b32.xlu0 %v6056, 43
      %v6084 = vpop.permute.xlu0 %6083
      %6085 = vrot.lane.b32.xlu0 %v6057, 43
      %v6086 = vpop.permute.xlu0 %6085
      %6087 = vrot.lane.b32.xlu0 %v6058, 43
      %v6088 = vpop.permute.xlu0 %6087
      %vm6089 = vcmask 351232
      %v6090 = vsel %vm6089, %v6070, %v6072
      %v6091 = vsel %vm6089, %v6072, %v6074
      %v6092 = vsel %vm6089, %v6074, %v6076
      %v6093 = vsel %vm6089, %v6076, %v6078
      %v6094 = vsel %vm6089, %v6078, %v6080
      %v6095 = vsel %vm6089, %v6080, %v6082
      %v6096 = vsel %vm6089, %v6082, %v6084
      %v6097 = vsel %vm6089, %v6084, %v6086
      %v6098 = vsel %vm6089, %v6086, %v6088
      %6108 = vst [vmem:[#allocation2 + $0x6c0] sm:$0xff] %v6090
      %6109 = vst [vmem:[#allocation2 + $0x6c8] sm:$0xff] %v6091
      %6110 = vst [vmem:[#allocation2 + $0x6d0] sm:$0xff] %v6092
      %6111 = vst [vmem:[#allocation2 + $0x6d8] sm:$0xff] %v6093
      %6112 = vst [vmem:[#allocation2 + $0x6e0] sm:$0xff] %v6094
      %6113 = vst [vmem:[#allocation2 + $0x6e8] sm:$0xff] %v6095
      %6114 = vst [vmem:[#allocation2 + $0x6f0] sm:$0xff] %v6096
      %6115 = vst [vmem:[#allocation2 + $0x6f8] sm:$0xff] %v6097
      %6116 = vst.msk [vmem:[#allocation2 + $0x700] sm:$0xff] %vm298, %v6098
      %v6117 = vld [vmem:[#allocation3 + $0x18] sm:$0xff]
      %v6118 = vld [vmem:[#allocation3 + $0x20] sm:$0xff]
      %v6119 = vld [vmem:[#allocation3 + $0x28] sm:$0xff]
      %v6120 = vld [vmem:[#allocation3 + $0x30] sm:$0xff]
      %v6121 = vld [vmem:[#allocation3 + $0x38] sm:$0xff]
      %v6122 = vld [vmem:[#allocation3 + $0x40] sm:$0xff]
      %v6123 = vld [vmem:[#allocation3 + $0x48] sm:$0xff]
      %v6124 = vld [vmem:[#allocation3 + $0x50] sm:$0xff]
      %v6125 = vld [vmem:[#allocation3 + $0x58] sm:$0xff]
      %v6126 = vld [vmem:[#allocation3 + $0x60] sm:$0xff]
      %6137 = vrot.lane.b32.xlu0 %v6117, 42
      %v6138 = vpop.permute.xlu0 %6137
      %6139 = vrot.lane.b32.xlu0 %v6118, 42
      %v6140 = vpop.permute.xlu0 %6139
      %6141 = vrot.lane.b32.xlu0 %v6119, 42
      %v6142 = vpop.permute.xlu0 %6141
      %6143 = vrot.lane.b32.xlu0 %v6120, 42
      %v6144 = vpop.permute.xlu0 %6143
      %6145 = vrot.lane.b32.xlu0 %v6121, 42
      %v6146 = vpop.permute.xlu0 %6145
      %6147 = vrot.lane.b32.xlu0 %v6122, 42
      %v6148 = vpop.permute.xlu0 %6147
      %6149 = vrot.lane.b32.xlu0 %v6123, 42
      %v6150 = vpop.permute.xlu0 %6149
      %6151 = vrot.lane.b32.xlu0 %v6124, 42
      %v6152 = vpop.permute.xlu0 %6151
      %6153 = vrot.lane.b32.xlu0 %v6125, 42
      %v6154 = vpop.permute.xlu0 %6153
      %6155 = vrot.lane.b32.xlu0 %v6126, 42
      %v6156 = vpop.permute.xlu0 %6155
      %vm6157 = vcmask 343040
      %v6158 = vsel %vm6157, %v6138, %v6140
      %v6159 = vsel %vm6157, %v6140, %v6142
      %v6160 = vsel %vm6157, %v6142, %v6144
      %v6161 = vsel %vm6157, %v6144, %v6146
      %v6162 = vsel %vm6157, %v6146, %v6148
      %v6163 = vsel %vm6157, %v6148, %v6150
      %v6164 = vsel %vm6157, %v6150, %v6152
      %v6165 = vsel %vm6157, %v6152, %v6154
      %v6166 = vsel %vm6157, %v6154, %v6156
      %6176 = vst [vmem:[#allocation2 + $0x708] sm:$0xff] %v6158
      %6177 = vst [vmem:[#allocation2 + $0x710] sm:$0xff] %v6159
      %6178 = vst [vmem:[#allocation2 + $0x718] sm:$0xff] %v6160
      %6179 = vst [vmem:[#allocation2 + $0x720] sm:$0xff] %v6161
      %6180 = vst [vmem:[#allocation2 + $0x728] sm:$0xff] %v6162
      %6181 = vst [vmem:[#allocation2 + $0x730] sm:$0xff] %v6163
      %6182 = vst [vmem:[#allocation2 + $0x738] sm:$0xff] %v6164
      %6183 = vst [vmem:[#allocation2 + $0x740] sm:$0xff] %v6165
      %6184 = vst.msk [vmem:[#allocation2 + $0x748] sm:$0xff] %vm298, %v6166
      %v6185 = vld [vmem:[#allocation3 + $0x18] sm:$0xff]
      %v6186 = vld [vmem:[#allocation3 + $0x20] sm:$0xff]
      %v6187 = vld [vmem:[#allocation3 + $0x28] sm:$0xff]
      %v6188 = vld [vmem:[#allocation3 + $0x30] sm:$0xff]
      %v6189 = vld [vmem:[#allocation3 + $0x38] sm:$0xff]
      %v6190 = vld [vmem:[#allocation3 + $0x40] sm:$0xff]
      %v6191 = vld [vmem:[#allocation3 + $0x48] sm:$0xff]
      %v6192 = vld [vmem:[#allocation3 + $0x50] sm:$0xff]
      %v6193 = vld [vmem:[#allocation3 + $0x58] sm:$0xff]
      %v6194 = vld [vmem:[#allocation3 + $0x60] sm:$0xff]
      %6205 = vrot.lane.b32.xlu0 %v6185, 41
      %v6206 = vpop.permute.xlu0 %6205
      %6207 = vrot.lane.b32.xlu0 %v6186, 41
      %v6208 = vpop.permute.xlu0 %6207
      %6209 = vrot.lane.b32.xlu0 %v6187, 41
      %v6210 = vpop.permute.xlu0 %6209
      %6211 = vrot.lane.b32.xlu0 %v6188, 41
      %v6212 = vpop.permute.xlu0 %6211
      %6213 = vrot.lane.b32.xlu0 %v6189, 41
      %v6214 = vpop.permute.xlu0 %6213
      %6215 = vrot.lane.b32.xlu0 %v6190, 41
      %v6216 = vpop.permute.xlu0 %6215
      %6217 = vrot.lane.b32.xlu0 %v6191, 41
      %v6218 = vpop.permute.xlu0 %6217
      %6219 = vrot.lane.b32.xlu0 %v6192, 41
      %v6220 = vpop.permute.xlu0 %6219
      %6221 = vrot.lane.b32.xlu0 %v6193, 41
      %v6222 = vpop.permute.xlu0 %6221
      %6223 = vrot.lane.b32.xlu0 %v6194, 41
      %v6224 = vpop.permute.xlu0 %6223
      %vm6225 = vcmask 334848
      %v6226 = vsel %vm6225, %v6206, %v6208
      %v6227 = vsel %vm6225, %v6208, %v6210
      %v6228 = vsel %vm6225, %v6210, %v6212
      %v6229 = vsel %vm6225, %v6212, %v6214
      %v6230 = vsel %vm6225, %v6214, %v6216
      %v6231 = vsel %vm6225, %v6216, %v6218
      %v6232 = vsel %vm6225, %v6218, %v6220
      %v6233 = vsel %vm6225, %v6220, %v6222
      %v6234 = vsel %vm6225, %v6222, %v6224
      %6244 = vst [vmem:[#allocation2 + $0x750] sm:$0xff] %v6226
      %6245 = vst [vmem:[#allocation2 + $0x758] sm:$0xff] %v6227
      %6246 = vst [vmem:[#allocation2 + $0x760] sm:$0xff] %v6228
      %6247 = vst [vmem:[#allocation2 + $0x768] sm:$0xff] %v6229
      %6248 = vst [vmem:[#allocation2 + $0x770] sm:$0xff] %v6230
      %6249 = vst [vmem:[#allocation2 + $0x778] sm:$0xff] %v6231
      %6250 = vst [vmem:[#allocation2 + $0x780] sm:$0xff] %v6232
      %6251 = vst [vmem:[#allocation2 + $0x788] sm:$0xff] %v6233
      %6252 = vst.msk [vmem:[#allocation2 + $0x790] sm:$0xff] %vm298, %v6234
      %v6253 = vld [vmem:[%s5] sm:$0xff]
      %v6254 = vld [vmem:[%s5 + $0x8] sm:$0xff]
      %v6255 = vld [vmem:[#allocation2] sm:$0xff]
      %v6256 = vld [vmem:[#allocation2 + $0x8] sm:$0xff]
      %v6257 = vld [vmem:[#allocation2 + $0x10] sm:$0xff]
      %v6258 = vld [vmem:[#allocation2 + $0x18] sm:$0xff]
      %v6259 = vld [vmem:[#allocation2 + $0x20] sm:$0xff]
      %v6260 = vld [vmem:[#allocation2 + $0x28] sm:$0xff]
      %v6261 = vld [vmem:[#allocation2 + $0x30] sm:$0xff]
      %v6262 = vld [vmem:[#allocation2 + $0x38] sm:$0xff]
      %v6263 = vld [vmem:[#allocation2 + $0x40] sm:$0xff]
      %v6264 = vld [vmem:[#allocation2 + $0x48] sm:$0xff]
      %v6265 = vld [vmem:[#allocation2 + $0x50] sm:$0xff]
      %v6266 = vld [vmem:[#allocation2 + $0x58] sm:$0xff]
      %v6267 = vld [vmem:[#allocation2 + $0x60] sm:$0xff]
      %v6268 = vld [vmem:[#allocation2 + $0x68] sm:$0xff]
      %v6269 = vld [vmem:[#allocation2 + $0x70] sm:$0xff]
      %v6270 = vld [vmem:[#allocation2 + $0x78] sm:$0xff]
      %v6271 = vld [vmem:[#allocation2 + $0x80] sm:$0xff]
      %v6272 = vld [vmem:[#allocation2 + $0x88] sm:$0xff]
      %v6273 = vld [vmem:[#allocation2 + $0x90] sm:$0xff]
      %v6274 = vld [vmem:[#allocation2 + $0x98] sm:$0xff]
      %v6275 = vld [vmem:[#allocation2 + $0xa0] sm:$0xff]
      %v6276 = vld [vmem:[#allocation2 + $0xa8] sm:$0xff]
      %v6277 = vld [vmem:[#allocation2 + $0xb0] sm:$0xff]
      %v6278 = vld [vmem:[#allocation2 + $0xb8] sm:$0xff]
      %v6279 = vld [vmem:[#allocation2 + $0xc0] sm:$0xff]
      %v6280 = vld [vmem:[#allocation2 + $0xc8] sm:$0xff]
      %v6281 = vld [vmem:[#allocation2 + $0xd0] sm:$0xff]
      %v6282 = vld [vmem:[#allocation2 + $0xd8] sm:$0xff]
      %v6283 = vld [vmem:[#allocation2 + $0xe0] sm:$0xff]
      %v6284 = vld [vmem:[#allocation2 + $0xe8] sm:$0xff]
      %v6285 = vld [vmem:[#allocation2 + $0xf0] sm:$0xff]
      %v6286 = vld [vmem:[#allocation2 + $0xf8] sm:$0xff]
      %v6287 = vld [vmem:[#allocation2 + $0x100] sm:$0xff]
      %v6288 = vld [vmem:[#allocation2 + $0x108] sm:$0xff]
      %v6289 = vld [vmem:[#allocation2 + $0x110] sm:$0xff]
      %v6290 = vld [vmem:[#allocation2 + $0x118] sm:$0xff]
      %v6291 = vld [vmem:[#allocation2 + $0x120] sm:$0xff]
      %v6292 = vld [vmem:[#allocation2 + $0x128] sm:$0xff]
      %v6293 = vld [vmem:[#allocation2 + $0x130] sm:$0xff]
      %v6294 = vld [vmem:[#allocation2 + $0x138] sm:$0xff]
      %v6295 = vld [vmem:[#allocation2 + $0x140] sm:$0xff]
      %v6296 = vld [vmem:[#allocation2 + $0x148] sm:$0xff]
      %v6297 = vld [vmem:[#allocation2 + $0x150] sm:$0xff]
      %v6298 = vld [vmem:[#allocation2 + $0x158] sm:$0xff]
      %v6299 = vld [vmem:[#allocation2 + $0x160] sm:$0xff]
      %v6300 = vld [vmem:[#allocation2 + $0x168] sm:$0xff]
      %v6301 = vld [vmem:[#allocation2 + $0x170] sm:$0xff]
      %v6302 = vld [vmem:[#allocation2 + $0x178] sm:$0xff]
      %v6303 = vld [vmem:[#allocation2 + $0x180] sm:$0xff]
      %v6304 = vld [vmem:[#allocation2 + $0x188] sm:$0xff]
      %v6305 = vld [vmem:[#allocation2 + $0x190] sm:$0xff]
      %v6306 = vld [vmem:[#allocation2 + $0x198] sm:$0xff]
      %v6307 = vld [vmem:[#allocation2 + $0x1a0] sm:$0xff]
      %v6308 = vld [vmem:[#allocation2 + $0x1a8] sm:$0xff]
      %v6309 = vld [vmem:[#allocation2 + $0x1b0] sm:$0xff]
      %v6310 = vld [vmem:[#allocation2 + $0x1b8] sm:$0xff]
      %v6311 = vld [vmem:[#allocation2 + $0x1c0] sm:$0xff]
      %v6312 = vld [vmem:[#allocation2 + $0x1c8] sm:$0xff]
      %v6313 = vld [vmem:[#allocation2 + $0x1d0] sm:$0xff]
      %v6314 = vld [vmem:[#allocation2 + $0x1d8] sm:$0xff]
      %v6315 = vld [vmem:[#allocation2 + $0x1e0] sm:$0xff]
      %v6316 = vld [vmem:[#allocation2 + $0x1e8] sm:$0xff]
      %v6317 = vld [vmem:[#allocation2 + $0x1f0] sm:$0xff]
      %v6318 = vld [vmem:[#allocation2 + $0x1f8] sm:$0xff]
      %v6319 = vld [vmem:[#allocation2 + $0x200] sm:$0xff]
      %v6320 = vld [vmem:[#allocation2 + $0x208] sm:$0xff]
      %v6321 = vld [vmem:[#allocation2 + $0x210] sm:$0xff]
      %v6322 = vld [vmem:[#allocation2 + $0x218] sm:$0xff]
      %v6323 = vld [vmem:[#allocation2 + $0x220] sm:$0xff]
      %v6324 = vld [vmem:[#allocation2 + $0x228] sm:$0xff]
      %v6325 = vld [vmem:[#allocation2 + $0x230] sm:$0xff]
      %v6326 = vld [vmem:[#allocation2 + $0x238] sm:$0xff]
      %v6327 = vld [vmem:[#allocation2 + $0x240] sm:$0xff]
      %v6328 = vld [vmem:[#allocation2 + $0x248] sm:$0xff]
      %v6329 = vld [vmem:[#allocation2 + $0x250] sm:$0xff]
      %v6330 = vld [vmem:[#allocation2 + $0x258] sm:$0xff]
      %v6331 = vld [vmem:[#allocation2 + $0x260] sm:$0xff]
      %v6332 = vld [vmem:[#allocation2 + $0x268] sm:$0xff]
      %v6333 = vld [vmem:[#allocation2 + $0x270] sm:$0xff]
      %v6334 = vld [vmem:[#allocation2 + $0x278] sm:$0xff]
      %v6335 = vld [vmem:[#allocation2 + $0x280] sm:$0xff]
      %v6336 = vld [vmem:[#allocation2 + $0x288] sm:$0xff]
      %v6337 = vld [vmem:[#allocation2 + $0x290] sm:$0xff]
      %v6338 = vld [vmem:[#allocation2 + $0x298] sm:$0xff]
      %v6339 = vld [vmem:[#allocation2 + $0x2a0] sm:$0xff]
      %v6340 = vld [vmem:[#allocation2 + $0x2a8] sm:$0xff]
      %v6341 = vld [vmem:[#allocation2 + $0x2b0] sm:$0xff]
      %v6342 = vld [vmem:[#allocation2 + $0x2b8] sm:$0xff]
      %v6343 = vld [vmem:[#allocation2 + $0x2c0] sm:$0xff]
      %v6344 = vld [vmem:[#allocation2 + $0x2c8] sm:$0xff]
      %v6345 = vld [vmem:[#allocation2 + $0x2d0] sm:$0xff]
      %v6346 = vld [vmem:[#allocation2 + $0x2d8] sm:$0xff]
      %v6347 = vld [vmem:[#allocation2 + $0x2e0] sm:$0xff]
      %v6348 = vld [vmem:[#allocation2 + $0x2e8] sm:$0xff]
      %v6349 = vld [vmem:[#allocation2 + $0x2f0] sm:$0xff]
      %v6350 = vld [vmem:[#allocation2 + $0x2f8] sm:$0xff]
      %v6351 = vld [vmem:[#allocation2 + $0x300] sm:$0xff]
      %v6352 = vld [vmem:[#allocation2 + $0x308] sm:$0xff]
      %v6353 = vld [vmem:[#allocation2 + $0x310] sm:$0xff]
      %v6354 = vld [vmem:[#allocation2 + $0x318] sm:$0xff]
      %v6355 = vld [vmem:[#allocation2 + $0x320] sm:$0xff]
      %v6356 = vld [vmem:[#allocation2 + $0x328] sm:$0xff]
      %v6357 = vld [vmem:[#allocation2 + $0x330] sm:$0xff]
      %v6358 = vld [vmem:[#allocation2 + $0x338] sm:$0xff]
      %v6359 = vld [vmem:[#allocation2 + $0x340] sm:$0xff]
      %v6360 = vld [vmem:[#allocation2 + $0x348] sm:$0xff]
      %v6361 = vld [vmem:[#allocation2 + $0x350] sm:$0xff]
      %v6362 = vld [vmem:[#allocation2 + $0x358] sm:$0xff]
      %v6363 = vld [vmem:[#allocation2 + $0x360] sm:$0xff]
      %v6364 = vld [vmem:[#allocation2 + $0x368] sm:$0xff]
      %v6365 = vld [vmem:[#allocation2 + $0x370] sm:$0xff]
      %v6366 = vld [vmem:[#allocation2 + $0x378] sm:$0xff]
      %v6367 = vld [vmem:[#allocation2 + $0x380] sm:$0xff]
      %v6368 = vld [vmem:[#allocation2 + $0x388] sm:$0xff]
      %v6369 = vld [vmem:[#allocation2 + $0x390] sm:$0xff]
      %v6370 = vld [vmem:[#allocation2 + $0x398] sm:$0xff]
      %v6371 = vld [vmem:[#allocation2 + $0x3a0] sm:$0xff]
      %v6372 = vld [vmem:[#allocation2 + $0x3a8] sm:$0xff]
      %v6373 = vld [vmem:[#allocation2 + $0x3b0] sm:$0xff]
      %v6374 = vld [vmem:[#allocation2 + $0x3b8] sm:$0xff]
      %v6375 = vld [vmem:[#allocation2 + $0x3c0] sm:$0xff]
      %v6376 = vld [vmem:[#allocation2 + $0x3c8] sm:$0xff]
      %v6377 = vld [vmem:[#allocation2 + $0x3d0] sm:$0xff]
      %v6378 = vld [vmem:[#allocation2 + $0x3d8] sm:$0xff]
      %v6379 = vld [vmem:[#allocation2 + $0x3e0] sm:$0xff]
      %v6380 = vld [vmem:[#allocation2 + $0x3e8] sm:$0xff]
      %v6381 = vld [vmem:[#allocation2 + $0x3f0] sm:$0xff]
      %v6382 = vld [vmem:[#allocation2 + $0x3f8] sm:$0xff]
      %v6383 = vld [vmem:[#allocation2 + $0x400] sm:$0xff]
      %v6384 = vld [vmem:[#allocation2 + $0x408] sm:$0xff]
      %v6385 = vld [vmem:[#allocation2 + $0x410] sm:$0xff]
      %v6386 = vld [vmem:[#allocation2 + $0x418] sm:$0xff]
      %v6387 = vld [vmem:[#allocation2 + $0x420] sm:$0xff]
      %v6388 = vld [vmem:[#allocation2 + $0x428] sm:$0xff]
      %v6389 = vld [vmem:[#allocation2 + $0x430] sm:$0xff]
      %v6390 = vld [vmem:[#allocation2 + $0x438] sm:$0xff]
      %v6391 = vld [vmem:[#allocation2 + $0x440] sm:$0xff]
      %v6392 = vld [vmem:[#allocation2 + $0x448] sm:$0xff]
      %v6393 = vld [vmem:[#allocation2 + $0x450] sm:$0xff]
      %v6394 = vld [vmem:[#allocation2 + $0x458] sm:$0xff]
      %v6395 = vld [vmem:[#allocation2 + $0x460] sm:$0xff]
      %v6396 = vld [vmem:[#allocation2 + $0x468] sm:$0xff]
      %v6397 = vld [vmem:[#allocation2 + $0x470] sm:$0xff]
      %v6398 = vld [vmem:[#allocation2 + $0x478] sm:$0xff]
      %v6399 = vld [vmem:[#allocation2 + $0x480] sm:$0xff]
      %v6400 = vld [vmem:[#allocation2 + $0x488] sm:$0xff]
      %v6401 = vld [vmem:[#allocation2 + $0x490] sm:$0xff]
      %v6402 = vld [vmem:[#allocation2 + $0x498] sm:$0xff]
      %v6403 = vld [vmem:[#allocation2 + $0x4a0] sm:$0xff]
      %v6404 = vld [vmem:[#allocation2 + $0x4a8] sm:$0xff]
      %v6405 = vld [vmem:[#allocation2 + $0x4b0] sm:$0xff]
      %v6406 = vld [vmem:[#allocation2 + $0x4b8] sm:$0xff]
      %v6407 = vld [vmem:[#allocation2 + $0x4c0] sm:$0xff]
      %v6408 = vld [vmem:[#allocation2 + $0x4c8] sm:$0xff]
      %v6409 = vld [vmem:[#allocation2 + $0x4d0] sm:$0xff]
      %v6410 = vld [vmem:[#allocation2 + $0x4d8] sm:$0xff]
      %v6411 = vld [vmem:[#allocation2 + $0x4e0] sm:$0xff]
      %v6412 = vld [vmem:[#allocation2 + $0x4e8] sm:$0xff]
      %v6413 = vld [vmem:[#allocation2 + $0x4f0] sm:$0xff]
      %v6414 = vld [vmem:[#allocation2 + $0x4f8] sm:$0xff]
      %v6415 = vld [vmem:[#allocation2 + $0x500] sm:$0xff]
      %v6416 = vld [vmem:[#allocation2 + $0x508] sm:$0xff]
      %v6417 = vld [vmem:[#allocation2 + $0x510] sm:$0xff]
      %v6418 = vld [vmem:[#allocation2 + $0x518] sm:$0xff]
      %v6419 = vld [vmem:[#allocation2 + $0x520] sm:$0xff]
      %v6420 = vld [vmem:[#allocation2 + $0x528] sm:$0xff]
      %v6421 = vld [vmem:[#allocation2 + $0x530] sm:$0xff]
      %v6422 = vld [vmem:[#allocation2 + $0x538] sm:$0xff]
      %v6423 = vld [vmem:[#allocation2 + $0x540] sm:$0xff]
      %v6424 = vld [vmem:[#allocation2 + $0x548] sm:$0xff]
      %v6425 = vld [vmem:[#allocation2 + $0x550] sm:$0xff]
      %v6426 = vld [vmem:[#allocation2 + $0x558] sm:$0xff]
      %v6427 = vld [vmem:[#allocation2 + $0x560] sm:$0xff]
      %v6428 = vld [vmem:[#allocation2 + $0x568] sm:$0xff]
      %v6429 = vld [vmem:[#allocation2 + $0x570] sm:$0xff]
      %v6430 = vld [vmem:[#allocation2 + $0x578] sm:$0xff]
      %v6431 = vld [vmem:[#allocation2 + $0x580] sm:$0xff]
      %v6432 = vld [vmem:[#allocation2 + $0x588] sm:$0xff]
      %v6433 = vld [vmem:[#allocation2 + $0x590] sm:$0xff]
      %v6434 = vld [vmem:[#allocation2 + $0x598] sm:$0xff]
      %v6435 = vld [vmem:[#allocation2 + $0x5a0] sm:$0xff]
      %v6436 = vld [vmem:[#allocation2 + $0x5a8] sm:$0xff]
      %v6437 = vld [vmem:[#allocation2 + $0x5b0] sm:$0xff]
      %v6438 = vld [vmem:[#allocation2 + $0x5b8] sm:$0xff]
      %v6439 = vld [vmem:[#allocation2 + $0x5c0] sm:$0xff]
      %v6440 = vld [vmem:[#allocation2 + $0x5c8] sm:$0xff]
      %v6441 = vld [vmem:[#allocation2 + $0x5d0] sm:$0xff]
      %v6442 = vld [vmem:[#allocation2 + $0x5d8] sm:$0xff]
      %v6443 = vld [vmem:[#allocation2 + $0x5e0] sm:$0xff]
      %v6444 = vld [vmem:[#allocation2 + $0x5e8] sm:$0xff]
      %v6445 = vld [vmem:[#allocation2 + $0x5f0] sm:$0xff]
      %v6446 = vld [vmem:[#allocation2 + $0x5f8] sm:$0xff]
      %v6447 = vld [vmem:[#allocation2 + $0x600] sm:$0xff]
      %v6448 = vld [vmem:[#allocation2 + $0x608] sm:$0xff]
      %v6449 = vld [vmem:[#allocation2 + $0x610] sm:$0xff]
      %v6450 = vld [vmem:[#allocation2 + $0x618] sm:$0xff]
      %v6451 = vld [vmem:[#allocation2 + $0x620] sm:$0xff]
      %v6452 = vld [vmem:[#allocation2 + $0x628] sm:$0xff]
      %v6453 = vld [vmem:[#allocation2 + $0x630] sm:$0xff]
      %v6454 = vld [vmem:[#allocation2 + $0x638] sm:$0xff]
      %v6455 = vld [vmem:[#allocation2 + $0x640] sm:$0xff]
      %v6456 = vld [vmem:[#allocation2 + $0x648] sm:$0xff]
      %v6457 = vld [vmem:[#allocation2 + $0x650] sm:$0xff]
      %v6458 = vld [vmem:[#allocation2 + $0x658] sm:$0xff]
      %v6459 = vld [vmem:[#allocation2 + $0x660] sm:$0xff]
      %v6460 = vld [vmem:[#allocation2 + $0x668] sm:$0xff]
      %v6461 = vld [vmem:[#allocation2 + $0x670] sm:$0xff]
      %v6462 = vld [vmem:[#allocation2 + $0x678] sm:$0xff]
      %v6463 = vld [vmem:[#allocation2 + $0x680] sm:$0xff]
      %v6464 = vld [vmem:[#allocation2 + $0x688] sm:$0xff]
      %v6465 = vld [vmem:[#allocation2 + $0x690] sm:$0xff]
      %v6466 = vld [vmem:[#allocation2 + $0x698] sm:$0xff]
      %v6467 = vld [vmem:[#allocation2 + $0x6a0] sm:$0xff]
      %v6468 = vld [vmem:[#allocation2 + $0x6a8] sm:$0xff]
      %v6469 = vld [vmem:[#allocation2 + $0x6b0] sm:$0xff]
      %v6470 = vld [vmem:[#allocation2 + $0x6b8] sm:$0xff]
      %v6471 = vld [vmem:[#allocation2 + $0x6c0] sm:$0xff]
      %v6472 = vld [vmem:[#allocation2 + $0x6c8] sm:$0xff]
      %v6473 = vld [vmem:[#allocation2 + $0x6d0] sm:$0xff]
      %v6474 = vld [vmem:[#allocation2 + $0x6d8] sm:$0xff]
      %v6475 = vld [vmem:[#allocation2 + $0x6e0] sm:$0xff]
      %v6476 = vld [vmem:[#allocation2 + $0x6e8] sm:$0xff]
      %v6477 = vld [vmem:[#allocation2 + $0x6f0] sm:$0xff]
      %v6478 = vld [vmem:[#allocation2 + $0x6f8] sm:$0xff]
      %v6479 = vld [vmem:[#allocation2 + $0x700] sm:$0xff]
      %v6480 = vld [vmem:[#allocation2 + $0x708] sm:$0xff]
      %v6481 = vld [vmem:[#allocation2 + $0x710] sm:$0xff]
      %v6482 = vld [vmem:[#allocation2 + $0x718] sm:$0xff]
      %v6483 = vld [vmem:[#allocation2 + $0x720] sm:$0xff]
      %v6484 = vld [vmem:[#allocation2 + $0x728] sm:$0xff]
      %v6485 = vld [vmem:[#allocation2 + $0x730] sm:$0xff]
      %v6486 = vld [vmem:[#allocation2 + $0x738] sm:$0xff]
      %v6487 = vld [vmem:[#allocation2 + $0x740] sm:$0xff]
      %v6488 = vld [vmem:[#allocation2 + $0x748] sm:$0xff]
      %v6489 = vld [vmem:[#allocation2 + $0x750] sm:$0xff]
      %v6490 = vld [vmem:[#allocation2 + $0x758] sm:$0xff]
      %v6491 = vld [vmem:[#allocation2 + $0x760] sm:$0xff]
      %v6492 = vld [vmem:[#allocation2 + $0x768] sm:$0xff]
      %v6493 = vld [vmem:[#allocation2 + $0x770] sm:$0xff]
      %v6494 = vld [vmem:[#allocation2 + $0x778] sm:$0xff]
      %v6495 = vld [vmem:[#allocation2 + $0x780] sm:$0xff]
      %v6496 = vld [vmem:[#allocation2 + $0x788] sm:$0xff]
      %v6497 = vld [vmem:[#allocation2 + $0x790] sm:$0xff]
      %v6498 = vld [vmem:[%s6] sm:$0xff]
      %6500 = vset.pattern.permute.xlu0 0
      %6501 = vperm.xlu0 %6500, %v6498
      %v6502 = vpop.permute.xlu0 %6501
      %v6505 = vsel %vm2263, %v6254, 0
      %6507 = vmatprep.subr.mxu0 %v6391
      %6508 = vmatpush1.msra.mxu0 %v6390
      %6509 = vmatprep.subr.mxu0 %v6382
      %6510 = vmatpush1.msra.mxu0 %v6381
      %6511 = vmatprep.subr.mxu0 %v6373
      %6512 = vmatpush1.msra.mxu0 %v6372
      %6513 = vmatprep.subr.mxu0 %v6364
      %6514 = vmatpush1.msra.mxu0 %v6363
      %6515 = vmatprep.subr.mxu0 %v6355
      %6516 = vmatpush1.msra.mxu0 %v6354
      %6517 = vmatprep.subr.mxu0 %v6346
      %6518 = vmatpush1.msra.mxu0 %v6345
      %6519 = vmatprep.subr.mxu0 %v6337
      %6520 = vmatpush1.msra.mxu0 %v6336
      %6521 = vmatprep.subr.mxu0 %v6328
      %6522 = vmatpush1.msra.mxu0 %v6327
      %6523 = vmatprep.subr.mxu0 %v6319
      %6524 = vmatpush1.msra.mxu0 %v6318
      %6525 = vmatprep.subr.mxu0 %v6310
      %6526 = vmatpush1.msra.mxu0 %v6309
      %6527 = vmatprep.subr.mxu0 %v6301
      %6528 = vmatpush1.msra.mxu0 %v6300
      %6529 = vmatprep.subr.mxu0 %v6292
      %6530 = vmatpush1.msra.mxu0 %v6291
      %6531 = vmatprep.subr.mxu0 %v6283
      %6532 = vmatpush1.msra.mxu0 %v6282
      %6533 = vmatprep.subr.mxu0 %v6274
      %6534 = vmatpush1.msra.mxu0 %v6273
      %6535 = vmatprep.subr.mxu0 %v6265
      %6536 = vmatpush1.msra.mxu0 %v6264
      %6537 = vmatprep.subr.mxu0 %v6256
      %6538 = vmatpush1.msra.mxu0 %v6255
      %6539 = vmatprep.subr.mxu0 0.0
      %6540 = vmatpush2.msra.mxu0 0.0
      %6541 = vmatprep.subr.mxu0 0.0
      %6542 = vmatpush2.msra.mxu0 0.0
      %6543 = vmatprep.subr.mxu0 0.0
      %6544 = vmatpush2.msra.mxu0 0.0
      %6545 = vmatprep.subr.mxu0 0.0
      %6546 = vmatpush2.msra.mxu0 0.0
      %6547 = vmatprep.subr.mxu0 0.0
      %6548 = vmatpush2.msra.mxu0 0.0
      %6549 = vmatprep.subr.mxu0 %v6490
      %6550 = vmatpush2.msra.mxu0 %v6489
      %6551 = vmatprep.subr.mxu0 %v6481
      %6552 = vmatpush2.msra.mxu0 %v6480
      %6553 = vmatprep.subr.mxu0 %v6472
      %6554 = vmatpush2.msra.mxu0 %v6471
      %6555 = vmatprep.subr.mxu0 %v6463
      %6556 = vmatpush2.msra.mxu0 %v6462
      %6557 = vmatprep.subr.mxu0 %v6454
      %6558 = vmatpush2.msra.mxu0 %v6453
      %6559 = vmatprep.subr.mxu0 %v6445
      %6560 = vmatpush2.msra.mxu0 %v6444
      %6561 = vmatprep.subr.mxu0 %v6436
      %6562 = vmatpush2.msra.mxu0 %v6435
      %6563 = vmatprep.subr.mxu0 %v6427
      %6564 = vmatpush2.msra.mxu0 %v6426
      %6565 = vmatprep.subr.mxu0 %v6418
      %6566 = vmatpush2.msra.mxu0 %v6417
      %6567 = vmatprep.subr.mxu0 %v6409
      %6568 = vmatpush2.msra.mxu0 %v6408
      %6569 = vmatprep.subr.mxu0 %v6400
      %6570 = vmatpush2.msra.mxu0 %v6399
      %6571 = vmatprep.mubr.f32.mxu0 %v6505
      %6572 = vmatmul.mubr.f32.gmra.mxu0 %v6253
      %v6573 = vpop.f32.mrf.mxu0
      %v6574 = vadd.f32 %v6502, %v6573
      %v6575 = vpop.f32.mrf.mxu0
      %v6576 = vadd.f32 %v6502, %v6575
      %6577 = vdwg.mxu0
      %6578 = vmatprep.subr.mxu0 %v6393
      %6579 = vmatpush1.msra.mxu0 %v6392
      %6580 = vmatprep.subr.mxu0 %v6384
      %6581 = vmatpush1.msra.mxu0 %v6383
      %6582 = vmatprep.subr.mxu0 %v6375
      %6583 = vmatpush1.msra.mxu0 %v6374
      %6584 = vmatprep.subr.mxu0 %v6366
      %6585 = vmatpush1.msra.mxu0 %v6365
      %6586 = vmatprep.subr.mxu0 %v6357
      %6587 = vmatpush1.msra.mxu0 %v6356
      %6588 = vmatprep.subr.mxu0 %v6348
      %6589 = vmatpush1.msra.mxu0 %v6347
      %6590 = vmatprep.subr.mxu0 %v6339
      %6591 = vmatpush1.msra.mxu0 %v6338
      %6592 = vmatprep.subr.mxu0 %v6330
      %6593 = vmatpush1.msra.mxu0 %v6329
      %6594 = vmatprep.subr.mxu0 %v6321
      %6595 = vmatpush1.msra.mxu0 %v6320
      %6596 = vmatprep.subr.mxu0 %v6312
      %6597 = vmatpush1.msra.mxu0 %v6311
      %6598 = vmatprep.subr.mxu0 %v6303
      %6599 = vmatpush1.msra.mxu0 %v6302
      %6600 = vmatprep.subr.mxu0 %v6294
      %6601 = vmatpush1.msra.mxu0 %v6293
      %6602 = vmatprep.subr.mxu0 %v6285
      %6603 = vmatpush1.msra.mxu0 %v6284
      %6604 = vmatprep.subr.mxu0 %v6276
      %6605 = vmatpush1.msra.mxu0 %v6275
      %6606 = vmatprep.subr.mxu0 %v6267
      %6607 = vmatpush1.msra.mxu0 %v6266
      %6608 = vmatprep.subr.mxu0 %v6258
      %6609 = vmatpush1.msra.mxu0 %v6257
      %6610 = vmatprep.subr.mxu0 0.0
      %6611 = vmatpush2.msra.mxu0 0.0
      %6612 = vmatprep.subr.mxu0 0.0
      %6613 = vmatpush2.msra.mxu0 0.0
      %6614 = vmatprep.subr.mxu0 0.0
      %6615 = vmatpush2.msra.mxu0 0.0
      %6616 = vmatprep.subr.mxu0 0.0
      %6617 = vmatpush2.msra.mxu0 0.0
      %6618 = vmatprep.subr.mxu0 0.0
      %6619 = vmatpush2.msra.mxu0 0.0
      %6620 = vmatprep.subr.mxu0 %v6492
      %6621 = vmatpush2.msra.mxu0 %v6491
      %6622 = vmatprep.subr.mxu0 %v6483
      %6623 = vmatpush2.msra.mxu0 %v6482
      %6624 = vmatprep.subr.mxu0 %v6474
      %6625 = vmatpush2.msra.mxu0 %v6473
      %6626 = vmatprep.subr.mxu0 %v6465
      %6627 = vmatpush2.msra.mxu0 %v6464
      %6628 = vmatprep.subr.mxu0 %v6456
      %6629 = vmatpush2.msra.mxu0 %v6455
      %6630 = vmatprep.subr.mxu0 %v6447
      %6631 = vmatpush2.msra.mxu0 %v6446
      %6632 = vmatprep.subr.mxu0 %v6438
      %6633 = vmatpush2.msra.mxu0 %v6437
      %6634 = vmatprep.subr.mxu0 %v6429
      %6635 = vmatpush2.msra.mxu0 %v6428
      %6636 = vmatprep.subr.mxu0 %v6420
      %6637 = vmatpush2.msra.mxu0 %v6419
      %6638 = vmatprep.subr.mxu0 %v6411
      %6639 = vmatpush2.msra.mxu0 %v6410
      %6640 = vmatprep.subr.mxu0 %v6402
      %6641 = vmatpush2.msra.mxu0 %v6401
      %6642 = vmatprep.mubr.f32.mxu0 %v6505
      %6643 = vmatmul.mubr.f32.gmra.mxu0 %v6253
      %v6644 = vpop.f32.mrf.mxu0
      %v6645 = vadd.f32 %v6502, %v6644
      %v6646 = vpop.f32.mrf.mxu0
      %v6647 = vadd.f32 %v6502, %v6646
      %6648 = vdwg.mxu0
      %6649 = vmatprep.subr.mxu0 %v6395
      %6650 = vmatpush1.msra.mxu0 %v6394
      %6651 = vmatprep.subr.mxu0 %v6386
      %6652 = vmatpush1.msra.mxu0 %v6385
      %6653 = vmatprep.subr.mxu0 %v6377
      %6654 = vmatpush1.msra.mxu0 %v6376
      %6655 = vmatprep.subr.mxu0 %v6368
      %6656 = vmatpush1.msra.mxu0 %v6367
      %6657 = vmatprep.subr.mxu0 %v6359
      %6658 = vmatpush1.msra.mxu0 %v6358
      %6659 = vmatprep.subr.mxu0 %v6350
      %6660 = vmatpush1.msra.mxu0 %v6349
      %6661 = vmatprep.subr.mxu0 %v6341
      %6662 = vmatpush1.msra.mxu0 %v6340
      %6663 = vmatprep.subr.mxu0 %v6332
      %6664 = vmatpush1.msra.mxu0 %v6331
      %6665 = vmatprep.subr.mxu0 %v6323
      %6666 = vmatpush1.msra.mxu0 %v6322
      %6667 = vmatprep.subr.mxu0 %v6314
      %6668 = vmatpush1.msra.mxu0 %v6313
      %6669 = vmatprep.subr.mxu0 %v6305
      %6670 = vmatpush1.msra.mxu0 %v6304
      %6671 = vmatprep.subr.mxu0 %v6296
      %6672 = vmatpush1.msra.mxu0 %v6295
      %6673 = vmatprep.subr.mxu0 %v6287
      %6674 = vmatpush1.msra.mxu0 %v6286
      %6675 = vmatprep.subr.mxu0 %v6278
      %6676 = vmatpush1.msra.mxu0 %v6277
      %6677 = vmatprep.subr.mxu0 %v6269
      %6678 = vmatpush1.msra.mxu0 %v6268
      %6679 = vmatprep.subr.mxu0 %v6260
      %6680 = vmatpush1.msra.mxu0 %v6259
      %6681 = vmatprep.subr.mxu0 0.0
      %6682 = vmatpush2.msra.mxu0 0.0
      %6683 = vmatprep.subr.mxu0 0.0
      %6684 = vmatpush2.msra.mxu0 0.0
      %6685 = vmatprep.subr.mxu0 0.0
      %6686 = vmatpush2.msra.mxu0 0.0
      %6687 = vmatprep.subr.mxu0 0.0
      %6688 = vmatpush2.msra.mxu0 0.0
      %6689 = vmatprep.subr.mxu0 0.0
      %6690 = vmatpush2.msra.mxu0 0.0
      %6691 = vmatprep.subr.mxu0 %v6494
      %6692 = vmatpush2.msra.mxu0 %v6493
      %6693 = vmatprep.subr.mxu0 %v6485
      %6694 = vmatpush2.msra.mxu0 %v6484
      %6695 = vmatprep.subr.mxu0 %v6476
      %6696 = vmatpush2.msra.mxu0 %v6475
      %6697 = vmatprep.subr.mxu0 %v6467
      %6698 = vmatpush2.msra.mxu0 %v6466
      %6699 = vmatprep.subr.mxu0 %v6458
      %6700 = vmatpush2.msra.mxu0 %v6457
      %6701 = vmatprep.subr.mxu0 %v6449
      %6702 = vmatpush2.msra.mxu0 %v6448
      %6703 = vmatprep.subr.mxu0 %v6440
      %6704 = vmatpush2.msra.mxu0 %v6439
      %6705 = vmatprep.subr.mxu0 %v6431
      %6706 = vmatpush2.msra.mxu0 %v6430
      %6707 = vmatprep.subr.mxu0 %v6422
      %6708 = vmatpush2.msra.mxu0 %v6421
      %6709 = vmatprep.subr.mxu0 %v6413
      %6710 = vmatpush2.msra.mxu0 %v6412
      %6711 = vmatprep.subr.mxu0 %v6404
      %6712 = vmatpush2.msra.mxu0 %v6403
      %6713 = vmatprep.mubr.f32.mxu0 %v6505
      %6714 = vmatmul.mubr.f32.gmra.mxu0 %v6253
      %v6715 = vpop.f32.mrf.mxu0
      %v6716 = vadd.f32 %v6502, %v6715
      %v6717 = vpop.f32.mrf.mxu0
      %v6718 = vadd.f32 %v6502, %v6717
      %6719 = vdwg.mxu0
      %6720 = vmatprep.subr.mxu0 %v6397
      %6721 = vmatpush1.msra.mxu0 %v6396
      %6722 = vmatprep.subr.mxu0 %v6388
      %6723 = vmatpush1.msra.mxu0 %v6387
      %6724 = vmatprep.subr.mxu0 %v6379
      %6725 = vmatpush1.msra.mxu0 %v6378
      %6726 = vmatprep.subr.mxu0 %v6370
      %6727 = vmatpush1.msra.mxu0 %v6369
      %6728 = vmatprep.subr.mxu0 %v6361
      %6729 = vmatpush1.msra.mxu0 %v6360
      %6730 = vmatprep.subr.mxu0 %v6352
      %6731 = vmatpush1.msra.mxu0 %v6351
      %6732 = vmatprep.subr.mxu0 %v6343
      %6733 = vmatpush1.msra.mxu0 %v6342
      %6734 = vmatprep.subr.mxu0 %v6334
      %6735 = vmatpush1.msra.mxu0 %v6333
      %6736 = vmatprep.subr.mxu0 %v6325
      %6737 = vmatpush1.msra.mxu0 %v6324
      %6738 = vmatprep.subr.mxu0 %v6316
      %6739 = vmatpush1.msra.mxu0 %v6315
      %6740 = vmatprep.subr.mxu0 %v6307
      %6741 = vmatpush1.msra.mxu0 %v6306
      %6742 = vmatprep.subr.mxu0 %v6298
      %6743 = vmatpush1.msra.mxu0 %v6297
      %6744 = vmatprep.subr.mxu0 %v6289
      %6745 = vmatpush1.msra.mxu0 %v6288
      %6746 = vmatprep.subr.mxu0 %v6280
      %6747 = vmatpush1.msra.mxu0 %v6279
      %6748 = vmatprep.subr.mxu0 %v6271
      %6749 = vmatpush1.msra.mxu0 %v6270
      %6750 = vmatprep.subr.mxu0 %v6262
      %6751 = vmatpush1.msra.mxu0 %v6261
      %6752 = vmatprep.subr.mxu0 0.0
      %6753 = vmatpush2.msra.mxu0 0.0
      %6754 = vmatprep.subr.mxu0 0.0
      %6755 = vmatpush2.msra.mxu0 0.0
      %6756 = vmatprep.subr.mxu0 0.0
      %6757 = vmatpush2.msra.mxu0 0.0
      %6758 = vmatprep.subr.mxu0 0.0
      %6759 = vmatpush2.msra.mxu0 0.0
      %6760 = vmatprep.subr.mxu0 0.0
      %6761 = vmatpush2.msra.mxu0 0.0
      %6762 = vmatprep.subr.mxu0 %v6496
      %6763 = vmatpush2.msra.mxu0 %v6495
      %6764 = vmatprep.subr.mxu0 %v6487
      %6765 = vmatpush2.msra.mxu0 %v6486
      %6766 = vmatprep.subr.mxu0 %v6478
      %6767 = vmatpush2.msra.mxu0 %v6477
      %6768 = vmatprep.subr.mxu0 %v6469
      %6769 = vmatpush2.msra.mxu0 %v6468
      %6770 = vmatprep.subr.mxu0 %v6460
      %6771 = vmatpush2.msra.mxu0 %v6459
      %6772 = vmatprep.subr.mxu0 %v6451
      %6773 = vmatpush2.msra.mxu0 %v6450
      %6774 = vmatprep.subr.mxu0 %v6442
      %6775 = vmatpush2.msra.mxu0 %v6441
      %6776 = vmatprep.subr.mxu0 %v6433
      %6777 = vmatpush2.msra.mxu0 %v6432
      %6778 = vmatprep.subr.mxu0 %v6424
      %6779 = vmatpush2.msra.mxu0 %v6423
      %6780 = vmatprep.subr.mxu0 %v6415
      %6781 = vmatpush2.msra.mxu0 %v6414
      %6782 = vmatprep.subr.mxu0 %v6406
      %6783 = vmatpush2.msra.mxu0 %v6405
      %6784 = vmatprep.mubr.f32.mxu0 %v6505
      %6785 = vmatmul.mubr.f32.gmra.mxu0 %v6253
      %v6786 = vpop.f32.mrf.mxu0
      %v6787 = vadd.f32 %v6502, %v6786
      %v6788 = vpop.f32.mrf.mxu0
      %v6789 = vadd.f32 %v6502, %v6788
      %6790 = vdwg.mxu0
      %6791 = vmatprep.subr.mxu0 0.0
      %6792 = vmatpush1.msra.mxu0 %v6398
      %6793 = vmatprep.subr.mxu0 0.0
      %6794 = vmatpush1.msra.mxu0 %v6389
      %6795 = vmatprep.subr.mxu0 0.0
      %6796 = vmatpush1.msra.mxu0 %v6380
      %6797 = vmatprep.subr.mxu0 0.0
      %6798 = vmatpush1.msra.mxu0 %v6371
      %6799 = vmatprep.subr.mxu0 0.0
      %6800 = vmatpush1.msra.mxu0 %v6362
      %6801 = vmatprep.subr.mxu0 0.0
      %6802 = vmatpush1.msra.mxu0 %v6353
      %6803 = vmatprep.subr.mxu0 0.0
      %6804 = vmatpush1.msra.mxu0 %v6344
      %6805 = vmatprep.subr.mxu0 0.0
      %6806 = vmatpush1.msra.mxu0 %v6335
      %6807 = vmatprep.subr.mxu0 0.0
      %6808 = vmatpush1.msra.mxu0 %v6326
      %6809 = vmatprep.subr.mxu0 0.0
      %6810 = vmatpush1.msra.mxu0 %v6317
      %6811 = vmatprep.subr.mxu0 0.0
      %6812 = vmatpush1.msra.mxu0 %v6308
      %6813 = vmatprep.subr.mxu0 0.0
      %6814 = vmatpush1.msra.mxu0 %v6299
      %6815 = vmatprep.subr.mxu0 0.0
      %6816 = vmatpush1.msra.mxu0 %v6290
      %6817 = vmatprep.subr.mxu0 0.0
      %6818 = vmatpush1.msra.mxu0 %v6281
      %6819 = vmatprep.subr.mxu0 0.0
      %6820 = vmatpush1.msra.mxu0 %v6272
      %6821 = vmatprep.subr.mxu0 0.0
      %6822 = vmatpush1.msra.mxu0 %v6263
      %6823 = vmatprep.subr.mxu0 0.0
      %6824 = vmatpush2.msra.mxu0 0.0
      %6825 = vmatprep.subr.mxu0 0.0
      %6826 = vmatpush2.msra.mxu0 0.0
      %6827 = vmatprep.subr.mxu0 0.0
      %6828 = vmatpush2.msra.mxu0 0.0
      %6829 = vmatprep.subr.mxu0 0.0
      %6830 = vmatpush2.msra.mxu0 0.0
      %6831 = vmatprep.subr.mxu0 0.0
      %6832 = vmatpush2.msra.mxu0 0.0
      %6833 = vmatprep.subr.mxu0 0.0
      %6834 = vmatpush2.msra.mxu0 %v6497
      %6835 = vmatprep.subr.mxu0 0.0
      %6836 = vmatpush2.msra.mxu0 %v6488
      %6837 = vmatprep.subr.mxu0 0.0
      %6838 = vmatpush2.msra.mxu0 %v6479
      %6839 = vmatprep.subr.mxu0 0.0
      %6840 = vmatpush2.msra.mxu0 %v6470
      %6841 = vmatprep.subr.mxu0 0.0
      %6842 = vmatpush2.msra.mxu0 %v6461
      %6843 = vmatprep.subr.mxu0 0.0
      %6844 = vmatpush2.msra.mxu0 %v6452
      %6845 = vmatprep.subr.mxu0 0.0
      %6846 = vmatpush2.msra.mxu0 %v6443
      %6847 = vmatprep.subr.mxu0 0.0
      %6848 = vmatpush2.msra.mxu0 %v6434
      %6849 = vmatprep.subr.mxu0 0.0
      %6850 = vmatpush2.msra.mxu0 %v6425
      %6851 = vmatprep.subr.mxu0 0.0
      %6852 = vmatpush2.msra.mxu0 %v6416
      %6853 = vmatprep.subr.mxu0 0.0
      %6854 = vmatpush2.msra.mxu0 %v6407
      %6855 = vmatprep.mubr.f32.mxu0 %v6505
      %6856 = vmatmul.mubr.f32.gmra.mxu0 %v6253
      %v6857 = vpop.f32.mrf.mxu0
      %v6858 = vadd.f32 %v6502, %v6857
      %v6859 = vpop.f32.mrf.mxu0
      %6860 = vdwg.mxu0
      %v6861 = vmul.f32 %v6574, %v2626
      %v6862 = vmul.f32 %v6576, %v2630
      %v6863 = vmul.f32 %v6645, %v2634
      %v6864 = vmul.f32 %v6647, %v2638
      %v6865 = vmul.f32 %v6716, %v2642
      %v6866 = vmul.f32 %v6718, %v2646
      %v6867 = vmul.f32 %v6787, %v2650
      %v6868 = vmul.f32 %v6789, %v2654
      %v6869 = vmul.f32 %v6858, %v2658
      %v6870 = vadd.f32 %v6861, %v6862
      %v6871 = vadd.f32 %v6870, %v6863
      %v6872 = vadd.f32 %v6871, %v6864
      %v6873 = vadd.f32 %v6872, %v6865
      %v6874 = vadd.f32 %v6873, %v6866
      %v6875 = vadd.f32 %v6874, %v6867
      %v6876 = vadd.f32 %v6875, %v6868
      %v6877 = vsel %vm298, %v6869, 0.0
      %v6878 = vadd.f32 %v6876, %v6877
      %6879 = vadd.xlane.f32.xlu0 %v6878
      %v6880 = vpop.xlane.xlu0 %6879
      %v6881 = vmul.f32 %v6880, 0.001953125
      %v6882 = vsub.f32 %v6574, %v6881
      %v6883 = vsub.f32 %v6576, %v6881
      %v6884 = vsub.f32 %v6645, %v6881
      %v6885 = vsub.f32 %v6647, %v6881
      %v6886 = vsub.f32 %v6716, %v6881
      %v6887 = vsub.f32 %v6718, %v6881
      %v6888 = vsub.f32 %v6787, %v6881
      %v6889 = vsub.f32 %v6789, %v6881
      %v6890 = vsub.f32 %v6858, %v6881
      %v6891 = vmul.f32 %v6882, %v6882
      %v6892 = vmul.f32 %v6883, %v6883
      %v6893 = vmul.f32 %v6884, %v6884
      %v6894 = vmul.f32 %v6885, %v6885
      %v6895 = vmul.f32 %v6886, %v6886
      %v6896 = vmul.f32 %v6887, %v6887
      %v6897 = vmul.f32 %v6888, %v6888
      %v6898 = vmul.f32 %v6889, %v6889
      %v6899 = vmul.f32 %v6890, %v6890
      %v6900 = vmul.f32 %v6891, %v2626
      %v6901 = vmul.f32 %v6892, %v2630
      %v6902 = vmul.f32 %v6893, %v2634
      %v6903 = vmul.f32 %v6894, %v2638
      %v6904 = vmul.f32 %v6895, %v2642
      %v6905 = vmul.f32 %v6896, %v2646
      %v6906 = vmul.f32 %v6897, %v2650
      %v6907 = vmul.f32 %v6898, %v2654
      %v6908 = vmul.f32 %v6899, %v2658
      %v6909 = vadd.f32 %v6900, %v6901
      %v6910 = vadd.f32 %v6909, %v6902
      %v6911 = vadd.f32 %v6910, %v6903
      %v6912 = vadd.f32 %v6911, %v6904
      %v6913 = vadd.f32 %v6912, %v6905
      %v6914 = vadd.f32 %v6913, %v6906
      %v6915 = vadd.f32 %v6914, %v6907
      %v6916 = vsel %vm298, %v6908, 0.0
      %v6917 = vadd.f32 %v6915, %v6916
      %6918 = vadd.xlane.f32.xlu0 %v6917
      %v6919 = vpop.xlane.xlu0 %6918
      %v6920 = vmul.f32 %v6919, 0.001953125
      %v6921 = vadd.f32 %v6920, 1e-05
      %v6922 = vrsqrt.pop %v6921
      %v6923 = vmul.f32 %v6882, %v6922
      %v6924 = vmul.f32 %v6883, %v6922
      %v6925 = vmul.f32 %v6884, %v6922
      %v6926 = vmul.f32 %v6885, %v6922
      %v6927 = vmul.f32 %v6886, %v6922
      %v6928 = vmul.f32 %v6887, %v6922
      %v6929 = vmul.f32 %v6888, %v6922
      %v6930 = vmul.f32 %v6889, %v6922
      %v6931 = vmul.f32 %v6890, %v6922
      %v6932 = vld [vmem:[%s273 + $0x10] sm:$0xff]
      %v6933 = vld [vmem:[%s273 + $0x18] sm:$0xff]
      %v6934 = vld [vmem:[%s273 + $0x20] sm:$0xff]
      %v6935 = vld [vmem:[%s273 + $0x28] sm:$0xff]
      %v6936 = vld [vmem:[%s273 + $0x30] sm:$0xff]
      %v6937 = vld [vmem:[%s273 + $0x38] sm:$0xff]
      %v6938 = vld [vmem:[%s273 + $0x40] sm:$0xff]
      %v6939 = vld [vmem:[%s273 + $0x48] sm:$0xff]
      %v6940 = vld [vmem:[%s273 + $0x50] sm:$0xff]
      %v6941 = vld [vmem:[%s273 + $0x58] sm:$0xff]
      %6952 = vrot.lane.b32.xlu0 %v6932, 70
      %v6953 = vpop.permute.xlu0 %6952
      %6954 = vrot.lane.b32.xlu0 %v6933, 70
      %v6955 = vpop.permute.xlu0 %6954
      %6956 = vrot.lane.b32.xlu0 %v6934, 70
      %v6957 = vpop.permute.xlu0 %6956
      %6958 = vrot.lane.b32.xlu0 %v6935, 70
      %v6959 = vpop.permute.xlu0 %6958
      %6960 = vrot.lane.b32.xlu0 %v6936, 70
      %v6961 = vpop.permute.xlu0 %6960
      %6962 = vrot.lane.b32.xlu0 %v6937, 70
      %v6963 = vpop.permute.xlu0 %6962
      %6964 = vrot.lane.b32.xlu0 %v6938, 70
      %v6965 = vpop.permute.xlu0 %6964
      %6966 = vrot.lane.b32.xlu0 %v6939, 70
      %v6967 = vpop.permute.xlu0 %6966
      %6968 = vrot.lane.b32.xlu0 %v6940, 70
      %v6969 = vpop.permute.xlu0 %6968
      %6970 = vrot.lane.b32.xlu0 %v6941, 70
      %v6971 = vpop.permute.xlu0 %6970
      %v6972 = vsel %vm1100, %v6953, %v6955
      %v6973 = vsel %vm1100, %v6955, %v6957
      %v6974 = vsel %vm1100, %v6957, %v6959
      %v6975 = vsel %vm1100, %v6959, %v6961
      %v6976 = vsel %vm1100, %v6961, %v6963
      %v6977 = vsel %vm1100, %v6963, %v6965
      %v6978 = vsel %vm1100, %v6965, %v6967
      %v6979 = vsel %vm1100, %v6967, %v6969
      %v6980 = vsel %vm1100, %v6969, %v6971
      %v6990 = vadd.f32 %v6923, %v6972
      %v6991 = vadd.f32 %v6924, %v6973
      %v6992 = vadd.f32 %v6925, %v6974
      %v6993 = vadd.f32 %v6926, %v6975
      %v6994 = vadd.f32 %v6927, %v6976
      %v6995 = vadd.f32 %v6928, %v6977
      %v6996 = vadd.f32 %v6929, %v6978
      %v6997 = vadd.f32 %v6930, %v6979
      %v6998 = vadd.f32 %v6931, %v6980
      %6999 = vst [vmem:[%s278] sm:$0xff] %v6990
      %7000 = vst [vmem:[%s278 + $0x8] sm:$0xff] %v6991
      %7001 = vst [vmem:[%s278 + $0x10] sm:$0xff] %v6992
      %7002 = vst [vmem:[%s278 + $0x18] sm:$0xff] %v6993
      %7003 = vst [vmem:[%s278 + $0x20] sm:$0xff] %v6994
      %7004 = vst [vmem:[%s278 + $0x28] sm:$0xff] %v6995
      %7005 = vst [vmem:[%s278 + $0x30] sm:$0xff] %v6996
      %7006 = vst [vmem:[%s278 + $0x38] sm:$0xff] %v6997
      %7007 = vst.msk [vmem:[%s278 + $0x40] sm:$0xff] %vm298, %v6998
      %p7008 = scmp.lt.s32.totalorder %s18, 1
      %s7009 = scalar_select %p7008, %s18, 1
      %s7010 = smul.addr %s7009, 9
      %s7011 = smul.addr %s7010, 8
      %s7012 = scalar_lea.vmem %s7, %s7011
      // Predicated region
      $region49: #{resnet_block_forward.1} parent=47 // pred_check
        %p7013 = pneg %p188
      $region50: #{resnet_block_forward.1} parent=47 // pred_check_branch
        %7015 = sbr.rel (%p7013) target = $region52
      $region51: #{resnet_block_forward.1} parent=47 // pred_region
        _
      $region52: #{resnet_block_forward.1} parent=47 // pred_fallthru
        _
    $region48: #{resnet_block_forward.1} parent=5 // pred_fallthru
      _
    %p7016 = scmp.le.s32.totalorder 2, %s13
    // Predicated region
    $region53: #{resnet_block_forward.1} parent=5 // pred_check
      %p7017 = pneg %p7016
    $region54: #{resnet_block_forward.1} parent=5 // pred_check_branch
      %7019 = sbr.rel (%p7017) target = $region56
    $region55: #{resnet_block_forward.1} parent=5 // pred_region
      %s7020 = ssub.s32 %s13, 2
      // Predicated region
      $region57: #{resnet_block_forward.1} parent=55 // pred_check
        %p7021 = pneg %p194
      $region58: #{resnet_block_forward.1} parent=55 // pred_check_branch
        %7023 = sbr.rel (%p7021) target = $region60
      $region59: #{resnet_block_forward.1} parent=55 // pred_region
        %p7024 = scmp.lt.s32.totalorder %s19, 1
        %s7025 = scalar_select %p7024, %s19, 1
        %s7026 = smul.addr %s7025, 9
        %s7027 = smul.addr %s7026, 8
        %s7028 = scalar_lea.vmem %s7, %s7027
      $region60: #{resnet_block_forward.1} parent=55 // pred_fallthru
        _
    $region56: #{resnet_block_forward.1} parent=5 // pred_fallthru
      _
  $region6: #{resnet_block_forward.1} parent=0 // loop_footer
    %s17 = sadd.s32 1, %s13
  $region7: #{resnet_block_forward.1} parent=0 // loop_footer_branch
    %12 = sbr.rel target = $region3
  $region8: #{resnet_block_forward.1} parent=0 // loop_exit
    _

</llo_original>
